<compile_context>
chip_gen: v7x
topology: tpu7x:2x2x1
jax: 0.10.0
libtpu: 0.0.40
codegen_flags: <defaults>
</compile_context>

<pallas_src>
import math
from functools import partial

import jax
import jax.numpy as jnp
from jax import lax
from jax.experimental import pallas as pl
from jax.experimental.pallas import tpu as pltpu


# ---------------------------------------------------------------------------
# Small helpers
# ---------------------------------------------------------------------------
_SQRT_2_OVER_PI = math.sqrt(2.0 / math.pi)


def _round_up(x, m):
    return (x + m - 1) // m * m


def _cp(dims):
    return pltpu.CompilerParams(dimension_semantics=dims,
                                vmem_limit_bytes=32 * 1024 * 1024)


# ---------------------------------------------------------------------------
# Pallas kernels
# ---------------------------------------------------------------------------
def _layernorm_kernel(x_ref, g_ref, b_ref, o_ref, *, eps):
    x = x_ref[...].astype(jnp.float32)
    mu = jnp.mean(x, axis=-1, keepdims=True)
    xc = x - mu
    var = jnp.mean(xc * xc, axis=-1, keepdims=True)
    inv = lax.rsqrt(var + eps)
    y = xc * inv * g_ref[...].astype(jnp.float32) + b_ref[...].astype(jnp.float32)
    o_ref[...] = y.astype(o_ref.dtype)


def _gelu_kernel(x_ref, o_ref):
    x = x_ref[...].astype(jnp.float32)
    y = 0.5 * x * (1.0 + jnp.tanh(_SQRT_2_OVER_PI * (x + 0.044715 * x * x * x)))
    o_ref[...] = y.astype(o_ref.dtype)


def _attn_core_kernel(q_ref, k_ref, v_ref, o_ref, *, scale):
    q = q_ref[...].astype(jnp.float32)          # (N, d)
    k = k_ref[...].astype(jnp.float32)          # (M, d)
    v = v_ref[...].astype(jnp.float32)          # (M, d)
    s = lax.dot_general(q, k, (((1,), (1,)), ((), ())),
                        preferred_element_type=jnp.float32) * scale
    m = jnp.max(s, axis=-1, keepdims=True)
    p = jnp.exp(s - m)
    p = p / jnp.sum(p, axis=-1, keepdims=True)
    o_ref[...] = jnp.dot(p, v, preferred_element_type=jnp.float32).astype(o_ref.dtype)


def _drop_path_kernel(mask_ref, x_ref, o_ref):
    # out = keep_scale * x  (keep_scale is (B, 1), broadcast over features)
    o_ref[...] = x_ref[...] * mask_ref[...]


def _drop_path_add_kernel(mask_ref, res_ref, branch_ref, o_ref):
    # Fused residual form used by the MixViT Block: out = residual + scale * branch
    o_ref[...] = res_ref[...] + branch_ref[...] * mask_ref[...]


# ---------------------------------------------------------------------------
# Pallas wrappers
# ---------------------------------------------------------------------------
def layer_norm(x, gamma, beta, eps=1e-5):
    shp = x.shape
    C = shp[-1]
    R = int(math.prod(shp[:-1]))
    x2 = x.reshape(R, C)
    TR = min(1024, _round_up(R, 8))
    Rp = _round_up(R, TR)
    if Rp > R:
        x2 = jnp.pad(x2, ((0, Rp - R), (0, 0)))
    out = pl.pallas_call(
        partial(_layernorm_kernel, eps=eps),
        out_shape=jax.ShapeDtypeStruct((Rp, C), x.dtype),
        grid=(Rp // TR,),
        in_specs=[pl.BlockSpec((TR, C), lambda i: (i, 0)),
                  pl.BlockSpec((1, C), lambda i: (0, 0)),
                  pl.BlockSpec((1, C), lambda i: (0, 0))],
        out_specs=pl.BlockSpec((TR, C), lambda i: (i, 0)),
        compiler_params=_cp(("parallel",)),
    )(x2, gamma.reshape(1, C), beta.reshape(1, C))
    if Rp > R:
        out = out[:R]
    return out.reshape(shp)


def gelu_tanh(x):
    shp = x.shape
    C = shp[-1]
    R = int(math.prod(shp[:-1]))
    x2 = x.reshape(R, C)
    TR = min(512, _round_up(R, 8))
    Rp = _round_up(R, TR)
    if Rp > R:
        x2 = jnp.pad(x2, ((0, Rp - R), (0, 0)))
    out = pl.pallas_call(
        _gelu_kernel,
        out_shape=jax.ShapeDtypeStruct((Rp, C), x.dtype),
        grid=(Rp // TR,),
        in_specs=[pl.BlockSpec((TR, C), lambda i: (i, 0))],
        out_specs=pl.BlockSpec((TR, C), lambda i: (i, 0)),
        compiler_params=_cp(("parallel",)),
    )(x2)
    if Rp > R:
        out = out[:R]
    return out.reshape(shp)


def attention_core(q, k, v, scale):
    """softmax(q k^T * scale) v,  q:(B,H,N,d)  k,v:(B,H,M,d) -> (B,H,N,d)."""
    B, H, N, d = q.shape
    M = k.shape[2]
    return pl.pallas_call(
        partial(_attn_core_kernel, scale=scale),
        out_shape=jax.ShapeDtypeStruct((B, H, N, d), q.dtype),
        grid=(B, H),
        in_specs=[pl.BlockSpec((None, None, N, d), lambda b, h: (b, h, 0, 0)),
                  pl.BlockSpec((None, None, M, d), lambda b, h: (b, h, 0, 0)),
                  pl.BlockSpec((None, None, M, d), lambda b, h: (b, h, 0, 0))],
        out_specs=pl.BlockSpec((None, None, N, d), lambda b, h: (b, h, 0, 0)),
        compiler_params=_cp(("parallel", "parallel")),
    )(q, k, v)


def _plan_feature_tiling(F, B, itemsize, n_tiled_buffers):
    """Lane-dense feature tile TF (multiple of 128) and padded F, VMEM-bounded."""
    F128 = _round_up(F, 128)
    budget = 12 * 1024 * 1024
    per_col = max(1, B * itemsize * 2 * n_tiled_buffers)
    cap = budget // per_col
    cap = max(128, min(8192, (cap // 128) * 128))
    if F128 <= cap:
        return F128, F128
    n = F128 // 128
    best = 1
    for kdiv in range(cap // 128, 0, -1):
        if n % kdiv == 0:
            best = kdiv
            break
    tf = best * 128
    if tf >= 1024:
        return tf, F128
    return cap, _round_up(F, cap)


def _keep_mask(key, batch, keep_prob, scale_by_keep, dtype):
    keep = jax.random.bernoulli(key, p=keep_prob, shape=(batch, 1))
    scale = (1.0 / keep_prob) if (keep_prob > 0.0 and scale_by_keep) else 1.0
    return (keep.astype(jnp.float32) * jnp.float32(scale)).astype(dtype)


def drop_path(x, key, drop_prob=0.0, training=False, scale_by_keep=True,
              residual=None):
    """Pallas DropPath; with `residual` it fuses residual + drop_path(x)."""
    if drop_prob == 0.0 or not training:
        return x if residual is None else residual + x

    keep_prob = 1.0 - drop_prob
    B = x.shape[0]
    F = int(math.prod(x.shape[1:])) if x.ndim > 1 else 1
    mask = _keep_mask(key, B, keep_prob, scale_by_keep, x.dtype)

    x2d = x.reshape(B, F)
    if residual is not None:
        res2d = residual.astype(x.dtype).reshape(B, F)
        n_tiled = 3
    else:
        res2d = None
        n_tiled = 2

    itemsize = jnp.dtype(x.dtype).itemsize
    TF, Fp = _plan_feature_tiling(F, B, itemsize, n_tiled)
    if Fp > F:
        pad = ((0, 0), (0, Fp - F))
        x2d = jnp.pad(x2d, pad)
        if res2d is not None:
            res2d = jnp.pad(res2d, pad)

    grid = (Fp // TF,)
    feat_spec = pl.BlockSpec((B, TF), lambda j: (0, j))
    mask_spec = pl.BlockSpec((B, 1), lambda j: (0, 0))
    out_shape = jax.ShapeDtypeStruct((B, Fp), x.dtype)

    if residual is None:
        out2d = pl.pallas_call(
            _drop_path_kernel, out_shape=out_shape, grid=grid,
            in_specs=[mask_spec, feat_spec], out_specs=feat_spec,
            input_output_aliases={1: 0}, compiler_params=_cp(("parallel",)),
        )(mask, x2d)
    else:
        out2d = pl.pallas_call(
            _drop_path_add_kernel, out_shape=out_shape, grid=grid,
            in_specs=[mask_spec, feat_spec, feat_spec], out_specs=feat_spec,
            input_output_aliases={1: 0}, compiler_params=_cp(("parallel",)),
        )(mask, res2d, x2d)

    if Fp > F:
        out2d = out2d[:, :F]
    return out2d.reshape(x.shape)


class DropPath:
    """Mirror of the PyTorch DropPath module (no parameters)."""

    def __init__(self, drop_prob=None, scale_by_keep=True):
        self.drop_prob = 0.0 if drop_prob is None else float(drop_prob)
        self.scale_by_keep = scale_by_keep
        self.training = True

    def __call__(self, x, key, residual=None):
        return drop_path(x, key, self.drop_prob, self.training,
                         self.scale_by_keep, residual=residual)


# ---------------------------------------------------------------------------
# Pure-JAX reference versions (for validation)
# ---------------------------------------------------------------------------
def _ref_layer_norm(x, gamma, beta, eps=1e-5):
    xf = x.astype(jnp.float32)
    mu = jnp.mean(xf, axis=-1, keepdims=True)
    var = jnp.mean((xf - mu) ** 2, axis=-1, keepdims=True)
    return ((xf - mu) * lax.rsqrt(var + eps) * gamma + beta).astype(x.dtype)


def _ref_gelu(x):
    xf = x.astype(jnp.float32)
    return (0.5 * xf * (1.0 + jnp.tanh(_SQRT_2_OVER_PI *
                                       (xf + 0.044715 * xf ** 3)))).astype(x.dtype)


def _ref_attention_core(q, k, v, scale):
    hp = lax.Precision.HIGHEST
    s = jnp.einsum("bhnd,bhmd->bhnm", q.astype(jnp.float32),
                   k.astype(jnp.float32), precision=hp) * scale
    s = s - jnp.max(s, axis=-1, keepdims=True)
    p = jnp.exp(s)
    p = p / jnp.sum(p, axis=-1, keepdims=True)
    o = jnp.einsum("bhnm,bhmd->bhnd", p, v.astype(jnp.float32), precision=hp)
    return o.astype(q.dtype)


def _ref_drop_path(x, key, drop_prob=0.0, training=False, scale_by_keep=True,
                   residual=None):
    if drop_prob == 0.0 or not training:
        return x if residual is None else residual + x
    keep_prob = 1.0 - drop_prob
    mask = _keep_mask(key, x.shape[0], keep_prob, scale_by_keep, x.dtype)
    y = x * mask.reshape((x.shape[0],) + (1,) * (x.ndim - 1))
    return y if residual is None else residual + y


# ---------------------------------------------------------------------------
# XLA-side building blocks (convs / linears, shared by Pallas and ref paths)
# ---------------------------------------------------------------------------
def _trunc_normal(key, shape, std=0.02):
    return std * jax.random.truncated_normal(key, -2.0, 2.0, shape, jnp.float32)


def init_ln(dim):
    return {"g": jnp.ones((dim,), jnp.float32), "b": jnp.zeros((dim,), jnp.float32)}


def init_linear(key, in_f, out_f, bias=True):
    p = {"w": _trunc_normal(key, (in_f, out_f))}
    if bias:
        p["b"] = jnp.zeros((out_f,), jnp.float32)
    return p


def linear(p, x):
    y = jnp.dot(x, p["w"])
    if "b" in p:
        y = y + p["b"]
    return y


def init_conv(key, in_c, out_c, k, groups=1):
    fan_out = (k * k * out_c) // groups
    w = jax.random.normal(key, (out_c, in_c // groups, k, k), jnp.float32)
    w = w * math.sqrt(2.0 / fan_out)
    return {"w": w, "b": jnp.zeros((out_c,), jnp.float32)}


def conv2d(p, x, *, stride, padding, groups=1):
    y = lax.conv_general_dilated(
        x, p["w"], window_strides=(stride, stride),
        padding=((padding, padding), (padding, padding)),
        dimension_numbers=("NCHW", "OIHW", "NCHW"),
        feature_group_count=groups)
    return y + p["b"].reshape(1, -1, 1, 1)


# ---------------------------------------------------------------------------
# Model: init + forward (forward mirrors the PyTorch module exactly)
# ---------------------------------------------------------------------------
def init_attention(key, dim, num_heads, qkv_bias, sr_ratio):
    k0, k1, k2, k3 = jax.random.split(key, 4)
    p = {"q": init_linear(k0, dim, dim, bias=qkv_bias),
         "kv": init_linear(k1, dim, dim * 2, bias=qkv_bias),
         "proj": init_linear(k2, dim, dim, bias=True)}
    if sr_ratio > 1:
        p["sr"] = init_conv(k3, dim, dim, sr_ratio)
        p["norm"] = init_ln(dim)
    return p


def init_mlp(key, in_f, hidden):
    k0, k1, k2 = jax.random.split(key, 3)
    return {"fc1": init_linear(k0, in_f, hidden),
            "dwconv": init_conv(k1, hidden, hidden, 3, groups=hidden),
            "fc2": init_linear(k2, hidden, in_f)}


def init_block(key, dim, num_heads, mlp_ratio, qkv_bias, sr_ratio):
    ka, km = jax.random.split(key)
    return {"norm1": init_ln(dim),
            "attn": init_attention(ka, dim, num_heads, qkv_bias, sr_ratio),
            "norm2": init_ln(dim),
            "mlp": init_mlp(km, dim, int(dim * mlp_ratio))}


def init_mix_vit(key, cfg):
    ed = cfg["embed_dims"]
    pe_cfg = [(7, cfg["in_chans"], ed[0]), (3, ed[0], ed[1]),
              (3, ed[1], ed[2]), (3, ed[2], ed[3])]
    keys = jax.random.split(key, 5)
    params = {}
    for i, (ps, ic, e) in enumerate(pe_cfg):
        params[f"patch_embed{i + 1}"] = {"proj": init_conv(keys[i], ic, e, ps),
                                         "norm": init_ln(e)}
    bkeys = jax.random.split(keys[4], sum(cfg["depths"]))
    cur = 0
    for s in range(4):
        blocks = []
        for j in range(cfg["depths"][s]):
            blocks.append(init_block(bkeys[cur + j], ed[s], cfg["num_heads"][s],
                                     cfg["mlp_ratios"][s], cfg["qkv_bias"],
                                     cfg["sr_ratios"][s]))
        params[f"block{s + 1}"] = blocks
        params[f"norm{s + 1}"] = init_ln(ed[s])
        cur += cfg["depths"][s]
    return params


def attention_forward(p, x, H, W, *, num_heads, sr_ratio, ln_fn, attn_fn):
    B, N, C = x.shape
    d = C // num_heads
    scale = d ** (-0.5)
    q = linear(p["q"], x).reshape(B, N, num_heads, d).transpose(0, 2, 1, 3)
    if sr_ratio > 1:
        x_ = x.transpose(0, 2, 1).reshape(B, C, H, W)
        x_ = conv2d(p["sr"], x_, stride=sr_ratio, padding=0)
        x_ = x_.reshape(B, C, -1).transpose(0, 2, 1)
        x_ = ln_fn(x_, p["norm"]["g"], p["norm"]["b"])
    else:
        x_ = x
    M = x_.shape[1]
    kv = linear(p["kv"], x_).reshape(B, M, 2, num_heads, d).transpose(2, 0, 3, 1, 4)
    k, v = kv[0], kv[1]
    out = attn_fn(q, k, v, scale)                    # (B, nh, N, d)
    out = out.transpose(0, 2, 1, 3).reshape(B, N, C)
    return linear(p["proj"], out)


def mlp_forward(p, x, H, W, *, act_fn):
    x = linear(p["fc1"], x)
    B, N, Ch = x.shape
    xc = x.transpose(0, 2, 1).reshape(B, Ch, H, W)
    xc = conv2d(p["dwconv"], xc, stride=1, padding=1, groups=Ch)
    x = xc.reshape(B, Ch, N).transpose(0, 2, 1)
    x = act_fn(x)
    return linear(p["fc2"], x)


def block_forward(p, x, H, W, *, num_heads, sr_ratio, drop_prob, training, keys,
                  ln_fn, attn_fn, act_fn, drop_fn):
    h = ln_fn(x, p["norm1"]["g"], p["norm1"]["b"])
    branch = attention_forward(p["attn"], h, H, W, num_heads=num_heads,
                               sr_ratio=sr_ratio, ln_fn=ln_fn, attn_fn=attn_fn)
    if training and drop_prob > 0.0:
        x = drop_fn(branch, keys[0], drop_prob, training=True, residual=x)
    else:
        x = x + branch
    h = ln_fn(x, p["norm2"]["g"], p["norm2"]["b"])
    branch = mlp_forward(p["mlp"], h, H, W, act_fn=act_fn)
    if training and drop_prob > 0.0:
        x = drop_fn(branch, keys[1], drop_prob, training=True, residual=x)
    else:
        x = x + branch
    return x


def mix_vit_forward(params, cfg, x, *, ln_fn, attn_fn, act_fn, drop_fn,
                    training=False, rng=None):
    if rng is None:
        rng = jax.random.PRNGKey(0)
    B = x.shape[0]
    depths = cfg["depths"]
    total = sum(depths)
    dpr = [cfg["drop_path_rate"] * i / max(total - 1, 1) for i in range(total)]
    pe_specs = [(7, 4), (3, 2), (3, 2), (3, 2)]
    outs, cur = [], 0
    for s in range(4):
        pe = params[f"patch_embed{s + 1}"]
        ps, st = pe_specs[s]
        x = conv2d(pe["proj"], x, stride=st, padding=ps // 2)
        _, C, H, W = x.shape
        x = x.reshape(B, C, H * W).transpose(0, 2, 1)          # (B, N, C)
        x = ln_fn(x, pe["norm"]["g"], pe["norm"]["b"])
        for j, bp in enumerate(params[f"block{s + 1}"]):
            rng, k1, k2 = jax.random.split(rng, 3)
            x = block_forward(bp, x, H, W,
                              num_heads=cfg["num_heads"][s],
                              sr_ratio=cfg["sr_ratios"][s],
                              drop_prob=dpr[cur + j],
                              training=training, keys=(k1, k2),
                              ln_fn=ln_fn, attn_fn=attn_fn,
                              act_fn=act_fn, drop_fn=drop_fn)
        cur += depths[s]
        nrm = params[f"norm{s + 1}"]
        x = ln_fn(x, nrm["g"], nrm["b"])
        x = x.reshape(B, H, W, C).transpose(0, 3, 1, 2)        # (B, C, H, W)
        outs.append(x)
    return outs


# ---------------------------------------------------------------------------
# Demo / validation
# ---------------------------------------------------------------------------
if __name__ == "__main__":
    root = jax.random.PRNGKey(0)
    k_param, k_in, k_train, k_dp_x, k_dp_res, k_dp_mask = jax.random.split(root, 6)

    cfg = dict(in_chans=3, embed_dims=[32, 64, 160, 256], num_heads=[1, 2, 5, 8],
               mlp_ratios=[4, 4, 4, 4], qkv_bias=False, depths=[1, 1, 1, 1],
               sr_ratios=[8, 4, 2, 1], drop_path_rate=0.1)
    params = init_mix_vit(k_param, cfg)
    x = jax.random.normal(k_in, (2, 3, 64, 64), jnp.float32)

    pallas_fns = dict(ln_fn=layer_norm, attn_fn=attention_core,
                      act_fn=gelu_tanh, drop_fn=drop_path)
    ref_fns = dict(ln_fn=_ref_layer_norm, attn_fn=_ref_attention_core,
                   act_fn=_ref_gelu, drop_fn=_ref_drop_path)

    @jax.jit
    def fwd_eval(p, xx):
        return mix_vit_forward(p, cfg, xx, training=False, **pallas_fns)

    @jax.jit
    def fwd_eval_ref(p, xx):
        return mix_vit_forward(p, cfg, xx, training=False, **ref_fns)

    @jax.jit
    def fwd_train(p, xx, key):
        return mix_vit_forward(p, cfg, xx, training=True, rng=key, **pallas_fns)

    @jax.jit
    def fwd_train_ref(p, xx, key):
        return mix_vit_forward(p, cfg, xx, training=True, rng=key, **ref_fns)

    ok = True

    # 1) Full eval-mode forward (Pallas kernels) vs. pure-JAX reference.
    outs = jax.block_until_ready(fwd_eval(params, x))
    refs = jax.block_until_ready(fwd_eval_ref(params, x))
    for o, r in zip(outs, refs):
        ok &= bool(jnp.allclose(o, r, atol=5e-3, rtol=5e-3))
    for o, ed, hw in zip(outs, cfg["embed_dims"], [16, 8, 4, 2]):
        ok &= (o.shape == (2, ed, hw, hw))

    # 2) Training-mode forward (exercises the fused residual+DropPath kernel;
    #    both paths draw identical per-sample keep masks from the same keys).
    outs_t = jax.block_until_ready(fwd_train(params, x, k_train))
    refs_t = jax.block_until_ready(fwd_train_ref(params, x, k_train))
    for o, r in zip(outs_t, refs_t):
        ok &= bool(jnp.allclose(o, r, atol=5e-3, rtol=5e-3))

    # 3) Standalone DropPath kernel checks (plain and fused-residual forms).
    dp = DropPath(drop_prob=0.25)
    xb = jax.random.normal(k_dp_x, (2, 8, 16, 16), jnp.float32)
    rb = jax.random.normal(k_dp_res, xb.shape, jnp.float32)
    y = jax.block_until_ready(dp(xb, k_dp_mask))
    ok &= bool(jnp.allclose(y, _ref_drop_path(xb, k_dp_mask, 0.25, training=True),
                            atol=1e-6, rtol=1e-6))
    yf = jax.block_until_ready(dp(xb, k_dp_mask, residual=rb))
    ok &= bool(jnp.allclose(
        yf, _ref_drop_path(xb, k_dp_mask, 0.25, training=True, residual=rb),
        atol=1e-6, rtol=1e-6))

    assert ok, "Pallas MixVisionTransformer outputs do not match the JAX reference"
    print("KERNEL_OK")
</pallas_src>

<mosaic_0001>
module attributes {stable_mosaic.version = 11 : i64} {
  func.func @_layernorm_kernel(%arg0: i32, %arg1: memref<512x32xf32, #tpu.memory_space<vmem>>, %arg2: memref<1x32xf32, #tpu.memory_space<vmem>>, %arg3: memref<1x32xf32, #tpu.memory_space<vmem>>, %arg4: memref<512x32xf32, #tpu.memory_space<vmem>>) attributes {dimension_semantics = [#tpu.dimension_semantics<parallel>], iteration_bounds = array<i64: 1>, scalar_prefetch = 0 : i64, scratch_operands = 0 : i64, tpu.core_type = #tpu.core_type<tc>, window_params = [{transform_indices = @transform_0, window_bounds = array<i64: 512, 32>}, {pipeline_mode = #tpu.pipeline_mode<synchronous>, transform_indices = @transform_1, window_bounds = array<i64: 1, 32>}, {pipeline_mode = #tpu.pipeline_mode<synchronous>, transform_indices = @transform_2, window_bounds = array<i64: 1, 32>}, {transform_indices = @transform_3, window_bounds = array<i64: 512, 32>}]} {
    %c0 = arith.constant 0 : index
    %c0_0 = arith.constant 0 : index
    %0 = vector.load %arg1[%c0, %c0_0] : memref<512x32xf32, #tpu.memory_space<vmem>>, vector<512x32xf32>
    %cst = arith.constant dense<0.000000e+00> : vector<512xf32>
    %1 = vector.multi_reduction <add>, %0, %cst [1] : vector<512x32xf32> to vector<512xf32>
    %2 = vector.shape_cast %1 : vector<512xf32> to vector<512x1xf32>
    %cst_1 = arith.constant 3.200000e+01 : f32
    %3 = vector.broadcast %cst_1 : f32 to vector<512x1xf32>
    %4 = arith.divf %2, %3 : vector<512x1xf32>
    %5 = vector.broadcast %4 : vector<512x1xf32> to vector<512x32xf32>
    %6 = arith.subf %0, %5 : vector<512x32xf32>
    %7 = arith.mulf %6, %6 : vector<512x32xf32>
    %cst_2 = arith.constant dense<0.000000e+00> : vector<512xf32>
    %8 = vector.multi_reduction <add>, %7, %cst_2 [1] : vector<512x32xf32> to vector<512xf32>
    %9 = vector.shape_cast %8 : vector<512xf32> to vector<512x1xf32>
    %cst_3 = arith.constant 3.200000e+01 : f32
    %10 = vector.broadcast %cst_3 : f32 to vector<512x1xf32>
    %11 = arith.divf %9, %10 : vector<512x1xf32>
    %cst_4 = arith.constant 9.99999974E-6 : f32
    %12 = vector.broadcast %cst_4 : f32 to vector<512x1xf32>
    %13 = arith.addf %11, %12 : vector<512x1xf32>
    %14 = math.rsqrt %13 : vector<512x1xf32>
    %15 = vector.broadcast %14 : vector<512x1xf32> to vector<512x32xf32>
    %16 = arith.mulf %6, %15 : vector<512x32xf32>
    %c0_5 = arith.constant 0 : index
    %c0_6 = arith.constant 0 : index
    %17 = vector.load %arg2[%c0_5, %c0_6] : memref<1x32xf32, #tpu.memory_space<vmem>>, vector<1x32xf32>
    %18 = vector.broadcast %17 : vector<1x32xf32> to vector<512x32xf32>
    %19 = arith.mulf %16, %18 : vector<512x32xf32>
    %c0_7 = arith.constant 0 : index
    %c0_8 = arith.constant 0 : index
    %20 = vector.load %arg3[%c0_7, %c0_8] : memref<1x32xf32, #tpu.memory_space<vmem>>, vector<1x32xf32>
    %21 = vector.broadcast %20 : vector<1x32xf32> to vector<512x32xf32>
    %22 = arith.addf %19, %21 : vector<512x32xf32>
    %c0_9 = arith.constant 0 : index
    %c0_10 = arith.constant 0 : index
    %23 = vector.load %arg4[%c0_9, %c0_10] : memref<512x32xf32, #tpu.memory_space<vmem>>, vector<512x32xf32>
    tpu.vector_store %arg4[%c0_9, %c0_10], %22 {strides = array<i32>} : memref<512x32xf32, #tpu.memory_space<vmem>>, vector<512x32xf32>,
    return
  }
  func.func @transform_0(%arg0: i32) -> (i32, i32) {
    %c0_i32 = arith.constant 0 : i32
    %c0_i32_0 = arith.constant 0 : i32
    return %arg0, %c0_i32 : i32, i32
  }
  func.func @transform_1(%arg0: i32) -> (i32, i32) {
    %c0_i32 = arith.constant 0 : i32
    %c0_i32_0 = arith.constant 0 : i32
    %c0_i32_1 = arith.constant 0 : i32
    return %c0_i32, %c0_i32_0 : i32, i32
  }
  func.func @transform_2(%arg0: i32) -> (i32, i32) {
    %c0_i32 = arith.constant 0 : i32
    %c0_i32_0 = arith.constant 0 : i32
    %c0_i32_1 = arith.constant 0 : i32
    return %c0_i32, %c0_i32_0 : i32, i32
  }
  func.func @transform_3(%arg0: i32) -> (i32, i32) {
    %c0_i32 = arith.constant 0 : i32
    %c0_i32_0 = arith.constant 0 : i32
    return %arg0, %c0_i32 : i32, i32
  }
}

module attributes {stable_mosaic.version = 11 : i64} {
  func.func @_layernorm_kernel(%arg0: i32, %arg1: memref<8x32xf32, #tpu.memory_space<vmem>>, %arg2: memref<1x32xf32, #tpu.memory_space<vmem>>, %arg3: memref<1x32xf32, #tpu.memory_space<vmem>>, %arg4: memref<8x32xf32, #tpu.memory_space<vmem>>) attributes {dimension_semantics = [#tpu.dimension_semantics<parallel>], iteration_bounds = array<i64: 1>, scalar_prefetch = 0 : i64, scratch_operands = 0 : i64, tpu.core_type = #tpu.core_type<tc>, window_params = [{transform_indices = @transform_0, window_bounds = array<i64: 8, 32>}, {pipeline_mode = #tpu.pipeline_mode<synchronous>, transform_indices = @transform_1, window_bounds = array<i64: 1, 32>}, {pipeline_mode = #tpu.pipeline_mode<synchronous>, transform_indices = @transform_2, window_bounds = array<i64: 1, 32>}, {transform_indices = @transform_3, window_bounds = array<i64: 8, 32>}]} {
    %c0 = arith.constant 0 : index
    %c0_0 = arith.constant 0 : index
    %0 = vector.load %arg1[%c0, %c0_0] : memref<8x32xf32, #tpu.memory_space<vmem>>, vector<8x32xf32>
    %cst = arith.constant dense<0.000000e+00> : vector<8xf32>
    %1 = vector.multi_reduction <add>, %0, %cst [1] : vector<8x32xf32> to vector<8xf32>
    %2 = vector.shape_cast %1 : vector<8xf32> to vector<8x1xf32>
    %cst_1 = arith.constant 3.200000e+01 : f32
    %3 = vector.broadcast %cst_1 : f32 to vector<8x1xf32>
    %4 = arith.divf %2, %3 : vector<8x1xf32>
    %5 = vector.broadcast %4 : vector<8x1xf32> to vector<8x32xf32>
    %6 = arith.subf %0, %5 : vector<8x32xf32>
    %7 = arith.mulf %6, %6 : vector<8x32xf32>
    %cst_2 = arith.constant dense<0.000000e+00> : vector<8xf32>
    %8 = vector.multi_reduction <add>, %7, %cst_2 [1] : vector<8x32xf32> to vector<8xf32>
    %9 = vector.shape_cast %8 : vector<8xf32> to vector<8x1xf32>
    %cst_3 = arith.constant 3.200000e+01 : f32
    %10 = vector.broadcast %cst_3 : f32 to vector<8x1xf32>
    %11 = arith.divf %9, %10 : vector<8x1xf32>
    %cst_4 = arith.constant 9.99999974E-6 : f32
    %12 = vector.broadcast %cst_4 : f32 to vector<8x1xf32>
    %13 = arith.addf %11, %12 : vector<8x1xf32>
    %14 = math.rsqrt %13 : vector<8x1xf32>
    %15 = vector.broadcast %14 : vector<8x1xf32> to vector<8x32xf32>
    %16 = arith.mulf %6, %15 : vector<8x32xf32>
    %c0_5 = arith.constant 0 : index
    %c0_6 = arith.constant 0 : index
    %17 = vector.load %arg2[%c0_5, %c0_6] : memref<1x32xf32, #tpu.memory_space<vmem>>, vector<1x32xf32>
    %18 = vector.broadcast %17 : vector<1x32xf32> to vector<8x32xf32>
    %19 = arith.mulf %16, %18 : vector<8x32xf32>
    %c0_7 = arith.constant 0 : index
    %c0_8 = arith.constant 0 : index
    %20 = vector.load %arg3[%c0_7, %c0_8] : memref<1x32xf32, #tpu.memory_space<vmem>>, vector<1x32xf32>
    %21 = vector.broadcast %20 : vector<1x32xf32> to vector<8x32xf32>
    %22 = arith.addf %19, %21 : vector<8x32xf32>
    %c0_9 = arith.constant 0 : index
    %c0_10 = arith.constant 0 : index
    %23 = vector.load %arg4[%c0_9, %c0_10] : memref<8x32xf32, #tpu.memory_space<vmem>>, vector<8x32xf32>
    tpu.vector_store %arg4[%c0_9, %c0_10], %22 {strides = array<i32>} : memref<8x32xf32, #tpu.memory_space<vmem>>, vector<8x32xf32>,
    return
  }
  func.func @transform_0(%arg0: i32) -> (i32, i32) {
    %c0_i32 = arith.constant 0 : i32
    %c0_i32_0 = arith.constant 0 : i32
    return %arg0, %c0_i32 : i32, i32
  }
  func.func @transform_1(%arg0: i32) -> (i32, i32) {
    %c0_i32 = arith.constant 0 : i32
    %c0_i32_0 = arith.constant 0 : i32
    %c0_i32_1 = arith.constant 0 : i32
    return %c0_i32, %c0_i32_0 : i32, i32
  }
  func.func @transform_2(%arg0: i32) -> (i32, i32) {
    %c0_i32 = arith.constant 0 : i32
    %c0_i32_0 = arith.constant 0 : i32
    %c0_i32_1 = arith.constant 0 : i32
    return %c0_i32, %c0_i32_0 : i32, i32
  }
  func.func @transform_3(%arg0: i32) -> (i32, i32) {
    %c0_i32 = arith.constant 0 : i32
    %c0_i32_0 = arith.constant 0 : i32
    return %arg0, %c0_i32 : i32, i32
  }
}

module attributes {stable_mosaic.version = 11 : i64} {
  func.func @_attn_core_kernel(%arg0: i32, %arg1: i32, %arg2: memref<1x1x256x32xf32, #tpu.memory_space<vmem>>, %arg3: memref<1x1x4x32xf32, #tpu.memory_space<vmem>>, %arg4: memref<1x1x4x32xf32, #tpu.memory_space<vmem>>, %arg5: memref<1x1x256x32xf32, #tpu.memory_space<vmem>>) attributes {dimension_semantics = [#tpu.dimension_semantics<parallel>, #tpu.dimension_semantics<parallel>], iteration_bounds = array<i64: 2, 1>, scalar_prefetch = 0 : i64, scratch_operands = 0 : i64, tpu.core_type = #tpu.core_type<tc>, window_params = [{transform_indices = @transform_0, window_bounds = array<i64: 1, 1, 256, 32>}, {transform_indices = @transform_1, window_bounds = array<i64: 1, 1, 4, 32>}, {transform_indices = @transform_2, window_bounds = array<i64: 1, 1, 4, 32>}, {transform_indices = @transform_3, window_bounds = array<i64: 1, 1, 256, 32>}]} {
    %c0 = arith.constant 0 : index
    %c0_0 = arith.constant 0 : index
    %c0_1 = arith.constant 0 : index
    %c0_2 = arith.constant 0 : index
    %0 = vector.load %arg2[%c0, %c0_0, %c0_1, %c0_2] : memref<1x1x256x32xf32, #tpu.memory_space<vmem>>, vector<1x1x256x32xf32>
    %1 = vector.shape_cast %0 : vector<1x1x256x32xf32> to vector<256x32xf32>
    %c0_3 = arith.constant 0 : index
    %c0_4 = arith.constant 0 : index
    %c0_5 = arith.constant 0 : index
    %c0_6 = arith.constant 0 : index
    %2 = vector.load %arg3[%c0_3, %c0_4, %c0_5, %c0_6] : memref<1x1x4x32xf32, #tpu.memory_space<vmem>>, vector<1x1x4x32xf32>
    %3 = vector.shape_cast %2 : vector<1x1x4x32xf32> to vector<4x32xf32>
    %c0_7 = arith.constant 0 : index
    %c0_8 = arith.constant 0 : index
    %c0_9 = arith.constant 0 : index
    %c0_10 = arith.constant 0 : index
    %4 = vector.load %arg4[%c0_7, %c0_8, %c0_9, %c0_10] : memref<1x1x4x32xf32, #tpu.memory_space<vmem>>, vector<1x1x4x32xf32>
    %5 = vector.shape_cast %4 : vector<1x1x4x32xf32> to vector<4x32xf32>
    %cst = arith.constant dense<0.000000e+00> : vector<256x4xf32>
    %6 = tpu.matmul %1, %3, %cst {dimension_numbers = #tpu.dot_dimension_numbers<[1], [1], [0], [0], [0, 0, 1, 0], [], []>} : vector<256x32xf32>, vector<4x32xf32>, vector<256x4xf32> -> vector<256x4xf32>
    %cst_11 = arith.constant 0.176776692 : f32
    %7 = vector.broadcast %cst_11 : f32 to vector<256x4xf32>
    %8 = arith.mulf %6, %7 : vector<256x4xf32>
    %cst_12 = arith.constant dense<0xFF800000> : vector<256xf32>
    %9 = vector.multi_reduction <maximumf>, %8, %cst_12 [1] : vector<256x4xf32> to vector<256xf32>
    %10 = vector.shape_cast %9 : vector<256xf32> to vector<256x1xf32>
    %11 = vector.broadcast %10 : vector<256x1xf32> to vector<256x4xf32>
    %12 = arith.subf %8, %11 : vector<256x4xf32>
    %13 = math.exp %12 : vector<256x4xf32>
    %cst_13 = arith.constant dense<0.000000e+00> : vector<256xf32>
    %14 = vector.multi_reduction <add>, %13, %cst_13 [1] : vector<256x4xf32> to vector<256xf32>
    %15 = vector.shape_cast %14 : vector<256xf32> to vector<256x1xf32>
    %16 = vector.broadcast %15 : vector<256x1xf32> to vector<256x4xf32>
    %17 = arith.divf %13, %16 : vector<256x4xf32>
    %cst_14 = arith.constant dense<0.000000e+00> : vector<256x32xf32>
    %18 = tpu.matmul %17, %5, %cst_14 {dimension_numbers = #tpu.dot_dimension_numbers<[1], [0], [0], [1], [0, 0, 1, 1], [], []>} : vector<256x4xf32>, vector<4x32xf32>, vector<256x32xf32> -> vector<256x32xf32>
    %c0_15 = arith.constant 0 : index
    %c0_16 = arith.constant 0 : index
    %c0_17 = arith.constant 0 : index
    %c0_18 = arith.constant 0 : index
    %19 = vector.load %arg5[%c0_15, %c0_16, %c0_17, %c0_18] : memref<1x1x256x32xf32, #tpu.memory_space<vmem>>, vector<1x1x256x32xf32>
    %20 = vector.shape_cast %19 : vector<1x1x256x32xf32> to vector<256x32xf32>
    %21 = vector.shape_cast %18 : vector<256x32xf32> to vector<1x1x256x32xf32>
    tpu.vector_store %arg5[%c0_15, %c0_16, %c0_17, %c0_18], %21 {strides = array<i32>} : memref<1x1x256x32xf32, #tpu.memory_space<vmem>>, vector<1x1x256x32xf32>,
    return
  }
  func.func @transform_0(%arg0: i32, %arg1: i32) -> (i32, i32, i32, i32) {
    %c0_i32 = arith.constant 0 : i32
    %c0_i32_0 = arith.constant 0 : i32
    %c0_i32_1 = arith.constant 0 : i32
    return %arg0, %arg1, %c0_i32, %c0_i32_0 : i32, i32, i32, i32
  }
  func.func @transform_1(%arg0: i32, %arg1: i32) -> (i32, i32, i32, i32) {
    %c0_i32 = arith.constant 0 : i32
    %c0_i32_0 = arith.constant 0 : i32
    %c0_i32_1 = arith.constant 0 : i32
    return %arg0, %arg1, %c0_i32, %c0_i32_0 : i32, i32, i32, i32
  }
  func.func @transform_2(%arg0: i32, %arg1: i32) -> (i32, i32, i32, i32) {
    %c0_i32 = arith.constant 0 : i32
    %c0_i32_0 = arith.constant 0 : i32
    %c0_i32_1 = arith.constant 0 : i32
    return %arg0, %arg1, %c0_i32, %c0_i32_0 : i32, i32, i32, i32
  }
  func.func @transform_3(%arg0: i32, %arg1: i32) -> (i32, i32, i32, i32) {
    %c0_i32 = arith.constant 0 : i32
    %c0_i32_0 = arith.constant 0 : i32
    %c0_i32_1 = arith.constant 0 : i32
    return %arg0, %arg1, %c0_i32, %c0_i32_0 : i32, i32, i32, i32
  }
}

module attributes {stable_mosaic.version = 11 : i64} {
  func.func @_gelu_kernel(%arg0: i32, %arg1: memref<512x128xf32, #tpu.memory_space<vmem>>, %arg2: memref<512x128xf32, #tpu.memory_space<vmem>>) attributes {dimension_semantics = [#tpu.dimension_semantics<parallel>], iteration_bounds = array<i64: 1>, scalar_prefetch = 0 : i64, scratch_operands = 0 : i64, tpu.core_type = #tpu.core_type<tc>, window_params = [{transform_indices = @transform_0, window_bounds = array<i64: 512, 128>}, {transform_indices = @transform_1, window_bounds = array<i64: 512, 128>}]} {
    %c0 = arith.constant 0 : index
    %c0_0 = arith.constant 0 : index
    %0 = vector.load %arg1[%c0, %c0_0] : memref<512x128xf32, #tpu.memory_space<vmem>>, vector<512x128xf32>
    %cst = arith.constant 5.000000e-01 : f32
    %1 = vector.broadcast %cst : f32 to vector<512x128xf32>
    %2 = arith.mulf %1, %0 : vector<512x128xf32>
    %cst_1 = arith.constant 4.471500e-02 : f32
    %3 = vector.broadcast %cst_1 : f32 to vector<512x128xf32>
    %4 = arith.mulf %3, %0 : vector<512x128xf32>
    %5 = arith.mulf %4, %0 : vector<512x128xf32>
    %6 = arith.mulf %5, %0 : vector<512x128xf32>
    %7 = arith.addf %0, %6 : vector<512x128xf32>
    %cst_2 = arith.constant 0.797884583 : f32
    %8 = vector.broadcast %cst_2 : f32 to vector<512x128xf32>
    %9 = arith.mulf %8, %7 : vector<512x128xf32>
    %10 = math.tanh %9 : vector<512x128xf32>
    %cst_3 = arith.constant 1.000000e+00 : f32
    %11 = vector.broadcast %cst_3 : f32 to vector<512x128xf32>
    %12 = arith.addf %11, %10 : vector<512x128xf32>
    %13 = arith.mulf %2, %12 : vector<512x128xf32>
    %c0_4 = arith.constant 0 : index
    %c0_5 = arith.constant 0 : index
    %14 = vector.load %arg2[%c0_4, %c0_5] : memref<512x128xf32, #tpu.memory_space<vmem>>, vector<512x128xf32>
    tpu.vector_store %arg2[%c0_4, %c0_5], %13 {strides = array<i32>} : memref<512x128xf32, #tpu.memory_space<vmem>>, vector<512x128xf32>,
    return
  }
  func.func @transform_0(%arg0: i32) -> (i32, i32) {
    %c0_i32 = arith.constant 0 : i32
    %c0_i32_0 = arith.constant 0 : i32
    return %arg0, %c0_i32 : i32, i32
  }
  func.func @transform_1(%arg0: i32) -> (i32, i32) {
    %c0_i32 = arith.constant 0 : i32
    %c0_i32_0 = arith.constant 0 : i32
    return %arg0, %c0_i32 : i32, i32
  }
}

module attributes {stable_mosaic.version = 11 : i64} {
  func.func @_layernorm_kernel(%arg0: i32, %arg1: memref<128x64xf32, #tpu.memory_space<vmem>>, %arg2: memref<1x64xf32, #tpu.memory_space<vmem>>, %arg3: memref<1x64xf32, #tpu.memory_space<vmem>>, %arg4: memref<128x64xf32, #tpu.memory_space<vmem>>) attributes {dimension_semantics = [#tpu.dimension_semantics<parallel>], iteration_bounds = array<i64: 1>, scalar_prefetch = 0 : i64, scratch_operands = 0 : i64, tpu.core_type = #tpu.core_type<tc>, window_params = [{transform_indices = @transform_0, window_bounds = array<i64: 128, 64>}, {pipeline_mode = #tpu.pipeline_mode<synchronous>, transform_indices = @transform_1, window_bounds = array<i64: 1, 64>}, {pipeline_mode = #tpu.pipeline_mode<synchronous>, transform_indices = @transform_2, window_bounds = array<i64: 1, 64>}, {transform_indices = @transform_3, window_bounds = array<i64: 128, 64>}]} {
    %c0 = arith.constant 0 : index
    %c0_0 = arith.constant 0 : index
    %0 = vector.load %arg1[%c0, %c0_0] : memref<128x64xf32, #tpu.memory_space<vmem>>, vector<128x64xf32>
    %cst = arith.constant dense<0.000000e+00> : vector<128xf32>
    %1 = vector.multi_reduction <add>, %0, %cst [1] : vector<128x64xf32> to vector<128xf32>
    %2 = vector.shape_cast %1 : vector<128xf32> to vector<128x1xf32>
    %cst_1 = arith.constant 6.400000e+01 : f32
    %3 = vector.broadcast %cst_1 : f32 to vector<128x1xf32>
    %4 = arith.divf %2, %3 : vector<128x1xf32>
    %5 = vector.broadcast %4 : vector<128x1xf32> to vector<128x64xf32>
    %6 = arith.subf %0, %5 : vector<128x64xf32>
    %7 = arith.mulf %6, %6 : vector<128x64xf32>
    %cst_2 = arith.constant dense<0.000000e+00> : vector<128xf32>
    %8 = vector.multi_reduction <add>, %7, %cst_2 [1] : vector<128x64xf32> to vector<128xf32>
    %9 = vector.shape_cast %8 : vector<128xf32> to vector<128x1xf32>
    %cst_3 = arith.constant 6.400000e+01 : f32
    %10 = vector.broadcast %cst_3 : f32 to vector<128x1xf32>
    %11 = arith.divf %9, %10 : vector<128x1xf32>
    %cst_4 = arith.constant 9.99999974E-6 : f32
    %12 = vector.broadcast %cst_4 : f32 to vector<128x1xf32>
    %13 = arith.addf %11, %12 : vector<128x1xf32>
    %14 = math.rsqrt %13 : vector<128x1xf32>
    %15 = vector.broadcast %14 : vector<128x1xf32> to vector<128x64xf32>
    %16 = arith.mulf %6, %15 : vector<128x64xf32>
    %c0_5 = arith.constant 0 : index
    %c0_6 = arith.constant 0 : index
    %17 = vector.load %arg2[%c0_5, %c0_6] : memref<1x64xf32, #tpu.memory_space<vmem>>, vector<1x64xf32>
    %18 = vector.broadcast %17 : vector<1x64xf32> to vector<128x64xf32>
    %19 = arith.mulf %16, %18 : vector<128x64xf32>
    %c0_7 = arith.constant 0 : index
    %c0_8 = arith.constant 0 : index
    %20 = vector.load %arg3[%c0_7, %c0_8] : memref<1x64xf32, #tpu.memory_space<vmem>>, vector<1x64xf32>
    %21 = vector.broadcast %20 : vector<1x64xf32> to vector<128x64xf32>
    %22 = arith.addf %19, %21 : vector<128x64xf32>
    %c0_9 = arith.constant 0 : index
    %c0_10 = arith.constant 0 : index
    %23 = vector.load %arg4[%c0_9, %c0_10] : memref<128x64xf32, #tpu.memory_space<vmem>>, vector<128x64xf32>
    tpu.vector_store %arg4[%c0_9, %c0_10], %22 {strides = array<i32>} : memref<128x64xf32, #tpu.memory_space<vmem>>, vector<128x64xf32>,
    return
  }
  func.func @transform_0(%arg0: i32) -> (i32, i32) {
    %c0_i32 = arith.constant 0 : i32
    %c0_i32_0 = arith.constant 0 : i32
    return %arg0, %c0_i32 : i32, i32
  }
  func.func @transform_1(%arg0: i32) -> (i32, i32) {
    %c0_i32 = arith.constant 0 : i32
    %c0_i32_0 = arith.constant 0 : i32
    %c0_i32_1 = arith.constant 0 : i32
    return %c0_i32, %c0_i32_0 : i32, i32
  }
  func.func @transform_2(%arg0: i32) -> (i32, i32) {
    %c0_i32 = arith.constant 0 : i32
    %c0_i32_0 = arith.constant 0 : i32
    %c0_i32_1 = arith.constant 0 : i32
    return %c0_i32, %c0_i32_0 : i32, i32
  }
  func.func @transform_3(%arg0: i32) -> (i32, i32) {
    %c0_i32 = arith.constant 0 : i32
    %c0_i32_0 = arith.constant 0 : i32
    return %arg0, %c0_i32 : i32, i32
  }
}

module attributes {stable_mosaic.version = 11 : i64} {
  func.func @_layernorm_kernel(%arg0: i32, %arg1: memref<8x64xf32, #tpu.memory_space<vmem>>, %arg2: memref<1x64xf32, #tpu.memory_space<vmem>>, %arg3: memref<1x64xf32, #tpu.memory_space<vmem>>, %arg4: memref<8x64xf32, #tpu.memory_space<vmem>>) attributes {dimension_semantics = [#tpu.dimension_semantics<parallel>], iteration_bounds = array<i64: 1>, scalar_prefetch = 0 : i64, scratch_operands = 0 : i64, tpu.core_type = #tpu.core_type<tc>, window_params = [{transform_indices = @transform_0, window_bounds = array<i64: 8, 64>}, {pipeline_mode = #tpu.pipeline_mode<synchronous>, transform_indices = @transform_1, window_bounds = array<i64: 1, 64>}, {pipeline_mode = #tpu.pipeline_mode<synchronous>, transform_indices = @transform_2, window_bounds = array<i64: 1, 64>}, {transform_indices = @transform_3, window_bounds = array<i64: 8, 64>}]} {
    %c0 = arith.constant 0 : index
    %c0_0 = arith.constant 0 : index
    %0 = vector.load %arg1[%c0, %c0_0] : memref<8x64xf32, #tpu.memory_space<vmem>>, vector<8x64xf32>
    %cst = arith.constant dense<0.000000e+00> : vector<8xf32>
    %1 = vector.multi_reduction <add>, %0, %cst [1] : vector<8x64xf32> to vector<8xf32>
    %2 = vector.shape_cast %1 : vector<8xf32> to vector<8x1xf32>
    %cst_1 = arith.constant 6.400000e+01 : f32
    %3 = vector.broadcast %cst_1 : f32 to vector<8x1xf32>
    %4 = arith.divf %2, %3 : vector<8x1xf32>
    %5 = vector.broadcast %4 : vector<8x1xf32> to vector<8x64xf32>
    %6 = arith.subf %0, %5 : vector<8x64xf32>
    %7 = arith.mulf %6, %6 : vector<8x64xf32>
    %cst_2 = arith.constant dense<0.000000e+00> : vector<8xf32>
    %8 = vector.multi_reduction <add>, %7, %cst_2 [1] : vector<8x64xf32> to vector<8xf32>
    %9 = vector.shape_cast %8 : vector<8xf32> to vector<8x1xf32>
    %cst_3 = arith.constant 6.400000e+01 : f32
    %10 = vector.broadcast %cst_3 : f32 to vector<8x1xf32>
    %11 = arith.divf %9, %10 : vector<8x1xf32>
    %cst_4 = arith.constant 9.99999974E-6 : f32
    %12 = vector.broadcast %cst_4 : f32 to vector<8x1xf32>
    %13 = arith.addf %11, %12 : vector<8x1xf32>
    %14 = math.rsqrt %13 : vector<8x1xf32>
    %15 = vector.broadcast %14 : vector<8x1xf32> to vector<8x64xf32>
    %16 = arith.mulf %6, %15 : vector<8x64xf32>
    %c0_5 = arith.constant 0 : index
    %c0_6 = arith.constant 0 : index
    %17 = vector.load %arg2[%c0_5, %c0_6] : memref<1x64xf32, #tpu.memory_space<vmem>>, vector<1x64xf32>
    %18 = vector.broadcast %17 : vector<1x64xf32> to vector<8x64xf32>
    %19 = arith.mulf %16, %18 : vector<8x64xf32>
    %c0_7 = arith.constant 0 : index
    %c0_8 = arith.constant 0 : index
    %20 = vector.load %arg3[%c0_7, %c0_8] : memref<1x64xf32, #tpu.memory_space<vmem>>, vector<1x64xf32>
    %21 = vector.broadcast %20 : vector<1x64xf32> to vector<8x64xf32>
    %22 = arith.addf %19, %21 : vector<8x64xf32>
    %c0_9 = arith.constant 0 : index
    %c0_10 = arith.constant 0 : index
    %23 = vector.load %arg4[%c0_9, %c0_10] : memref<8x64xf32, #tpu.memory_space<vmem>>, vector<8x64xf32>
    tpu.vector_store %arg4[%c0_9, %c0_10], %22 {strides = array<i32>} : memref<8x64xf32, #tpu.memory_space<vmem>>, vector<8x64xf32>,
    return
  }
  func.func @transform_0(%arg0: i32) -> (i32, i32) {
    %c0_i32 = arith.constant 0 : i32
    %c0_i32_0 = arith.constant 0 : i32
    return %arg0, %c0_i32 : i32, i32
  }
  func.func @transform_1(%arg0: i32) -> (i32, i32) {
    %c0_i32 = arith.constant 0 : i32
    %c0_i32_0 = arith.constant 0 : i32
    %c0_i32_1 = arith.constant 0 : i32
    return %c0_i32, %c0_i32_0 : i32, i32
  }
  func.func @transform_2(%arg0: i32) -> (i32, i32) {
    %c0_i32 = arith.constant 0 : i32
    %c0_i32_0 = arith.constant 0 : i32
    %c0_i32_1 = arith.constant 0 : i32
    return %c0_i32, %c0_i32_0 : i32, i32
  }
  func.func @transform_3(%arg0: i32) -> (i32, i32) {
    %c0_i32 = arith.constant 0 : i32
    %c0_i32_0 = arith.constant 0 : i32
    return %arg0, %c0_i32 : i32, i32
  }
}

module attributes {stable_mosaic.version = 11 : i64} {
  func.func @_attn_core_kernel(%arg0: i32, %arg1: i32, %arg2: memref<1x1x64x32xf32, #tpu.memory_space<vmem>>, %arg3: memref<1x1x4x32xf32, #tpu.memory_space<vmem>>, %arg4: memref<1x1x4x32xf32, #tpu.memory_space<vmem>>, %arg5: memref<1x1x64x32xf32, #tpu.memory_space<vmem>>) attributes {dimension_semantics = [#tpu.dimension_semantics<parallel>, #tpu.dimension_semantics<parallel>], iteration_bounds = array<i64: 2, 2>, scalar_prefetch = 0 : i64, scratch_operands = 0 : i64, tpu.core_type = #tpu.core_type<tc>, window_params = [{transform_indices = @transform_0, window_bounds = array<i64: 1, 1, 64, 32>}, {transform_indices = @transform_1, window_bounds = array<i64: 1, 1, 4, 32>}, {transform_indices = @transform_2, window_bounds = array<i64: 1, 1, 4, 32>}, {transform_indices = @transform_3, window_bounds = array<i64: 1, 1, 64, 32>}]} {
    %c0 = arith.constant 0 : index
    %c0_0 = arith.constant 0 : index
    %c0_1 = arith.constant 0 : index
    %c0_2 = arith.constant 0 : index
    %0 = vector.load %arg2[%c0, %c0_0, %c0_1, %c0_2] : memref<1x1x64x32xf32, #tpu.memory_space<vmem>>, vector<1x1x64x32xf32>
    %1 = vector.shape_cast %0 : vector<1x1x64x32xf32> to vector<64x32xf32>
    %c0_3 = arith.constant 0 : index
    %c0_4 = arith.constant 0 : index
    %c0_5 = arith.constant 0 : index
    %c0_6 = arith.constant 0 : index
    %2 = vector.load %arg3[%c0_3, %c0_4, %c0_5, %c0_6] : memref<1x1x4x32xf32, #tpu.memory_space<vmem>>, vector<1x1x4x32xf32>
    %3 = vector.shape_cast %2 : vector<1x1x4x32xf32> to vector<4x32xf32>
    %c0_7 = arith.constant 0 : index
    %c0_8 = arith.constant 0 : index
    %c0_9 = arith.constant 0 : index
    %c0_10 = arith.constant 0 : index
    %4 = vector.load %arg4[%c0_7, %c0_8, %c0_9, %c0_10] : memref<1x1x4x32xf32, #tpu.memory_space<vmem>>, vector<1x1x4x32xf32>
    %5 = vector.shape_cast %4 : vector<1x1x4x32xf32> to vector<4x32xf32>
    %cst = arith.constant dense<0.000000e+00> : vector<64x4xf32>
    %6 = tpu.matmul %1, %3, %cst {dimension_numbers = #tpu.dot_dimension_numbers<[1], [1], [0], [0], [0, 0, 1, 0], [], []>} : vector<64x32xf32>, vector<4x32xf32>, vector<64x4xf32> -> vector<64x4xf32>
    %cst_11 = arith.constant 0.176776692 : f32
    %7 = vector.broadcast %cst_11 : f32 to vector<64x4xf32>
    %8 = arith.mulf %6, %7 : vector<64x4xf32>
    %cst_12 = arith.constant dense<0xFF800000> : vector<64xf32>
    %9 = vector.multi_reduction <maximumf>, %8, %cst_12 [1] : vector<64x4xf32> to vector<64xf32>
    %10 = vector.shape_cast %9 : vector<64xf32> to vector<64x1xf32>
    %11 = vector.broadcast %10 : vector<64x1xf32> to vector<64x4xf32>
    %12 = arith.subf %8, %11 : vector<64x4xf32>
    %13 = math.exp %12 : vector<64x4xf32>
    %cst_13 = arith.constant dense<0.000000e+00> : vector<64xf32>
    %14 = vector.multi_reduction <add>, %13, %cst_13 [1] : vector<64x4xf32> to vector<64xf32>
    %15 = vector.shape_cast %14 : vector<64xf32> to vector<64x1xf32>
    %16 = vector.broadcast %15 : vector<64x1xf32> to vector<64x4xf32>
    %17 = arith.divf %13, %16 : vector<64x4xf32>
    %cst_14 = arith.constant dense<0.000000e+00> : vector<64x32xf32>
    %18 = tpu.matmul %17, %5, %cst_14 {dimension_numbers = #tpu.dot_dimension_numbers<[1], [0], [0], [1], [0, 0, 1, 1], [], []>} : vector<64x4xf32>, vector<4x32xf32>, vector<64x32xf32> -> vector<64x32xf32>
    %c0_15 = arith.constant 0 : index
    %c0_16 = arith.constant 0 : index
    %c0_17 = arith.constant 0 : index
    %c0_18 = arith.constant 0 : index
    %19 = vector.load %arg5[%c0_15, %c0_16, %c0_17, %c0_18] : memref<1x1x64x32xf32, #tpu.memory_space<vmem>>, vector<1x1x64x32xf32>
    %20 = vector.shape_cast %19 : vector<1x1x64x32xf32> to vector<64x32xf32>
    %21 = vector.shape_cast %18 : vector<64x32xf32> to vector<1x1x64x32xf32>
    tpu.vector_store %arg5[%c0_15, %c0_16, %c0_17, %c0_18], %21 {strides = array<i32>} : memref<1x1x64x32xf32, #tpu.memory_space<vmem>>, vector<1x1x64x32xf32>,
    return
  }
  func.func @transform_0(%arg0: i32, %arg1: i32) -> (i32, i32, i32, i32) {
    %c0_i32 = arith.constant 0 : i32
    %c0_i32_0 = arith.constant 0 : i32
    %c0_i32_1 = arith.constant 0 : i32
    return %arg0, %arg1, %c0_i32, %c0_i32_0 : i32, i32, i32, i32
  }
  func.func @transform_1(%arg0: i32, %arg1: i32) -> (i32, i32, i32, i32) {
    %c0_i32 = arith.constant 0 : i32
    %c0_i32_0 = arith.constant 0 : i32
    %c0_i32_1 = arith.constant 0 : i32
    return %arg0, %arg1, %c0_i32, %c0_i32_0 : i32, i32, i32, i32
  }
  func.func @transform_2(%arg0: i32, %arg1: i32) -> (i32, i32, i32, i32) {
    %c0_i32 = arith.constant 0 : i32
    %c0_i32_0 = arith.constant 0 : i32
    %c0_i32_1 = arith.constant 0 : i32
    return %arg0, %arg1, %c0_i32, %c0_i32_0 : i32, i32, i32, i32
  }
  func.func @transform_3(%arg0: i32, %arg1: i32) -> (i32, i32, i32, i32) {
    %c0_i32 = arith.constant 0 : i32
    %c0_i32_0 = arith.constant 0 : i32
    %c0_i32_1 = arith.constant 0 : i32
    return %arg0, %arg1, %c0_i32, %c0_i32_0 : i32, i32, i32, i32
  }
}

module attributes {stable_mosaic.version = 11 : i64} {
  func.func @_gelu_kernel(%arg0: i32, %arg1: memref<128x256xf32, #tpu.memory_space<vmem>>, %arg2: memref<128x256xf32, #tpu.memory_space<vmem>>) attributes {dimension_semantics = [#tpu.dimension_semantics<parallel>], iteration_bounds = array<i64: 1>, scalar_prefetch = 0 : i64, scratch_operands = 0 : i64, tpu.core_type = #tpu.core_type<tc>, window_params = [{transform_indices = @transform_0, window_bounds = array<i64: 128, 256>}, {transform_indices = @transform_1, window_bounds = array<i64: 128, 256>}]} {
    %c0 = arith.constant 0 : index
    %c0_0 = arith.constant 0 : index
    %0 = vector.load %arg1[%c0, %c0_0] : memref<128x256xf32, #tpu.memory_space<vmem>>, vector<128x256xf32>
    %cst = arith.constant 5.000000e-01 : f32
    %1 = vector.broadcast %cst : f32 to vector<128x256xf32>
    %2 = arith.mulf %1, %0 : vector<128x256xf32>
    %cst_1 = arith.constant 4.471500e-02 : f32
    %3 = vector.broadcast %cst_1 : f32 to vector<128x256xf32>
    %4 = arith.mulf %3, %0 : vector<128x256xf32>
    %5 = arith.mulf %4, %0 : vector<128x256xf32>
    %6 = arith.mulf %5, %0 : vector<128x256xf32>
    %7 = arith.addf %0, %6 : vector<128x256xf32>
    %cst_2 = arith.constant 0.797884583 : f32
    %8 = vector.broadcast %cst_2 : f32 to vector<128x256xf32>
    %9 = arith.mulf %8, %7 : vector<128x256xf32>
    %10 = math.tanh %9 : vector<128x256xf32>
    %cst_3 = arith.constant 1.000000e+00 : f32
    %11 = vector.broadcast %cst_3 : f32 to vector<128x256xf32>
    %12 = arith.addf %11, %10 : vector<128x256xf32>
    %13 = arith.mulf %2, %12 : vector<128x256xf32>
    %c0_4 = arith.constant 0 : index
    %c0_5 = arith.constant 0 : index
    %14 = vector.load %arg2[%c0_4, %c0_5] : memref<128x256xf32, #tpu.memory_space<vmem>>, vector<128x256xf32>
    tpu.vector_store %arg2[%c0_4, %c0_5], %13 {strides = array<i32>} : memref<128x256xf32, #tpu.memory_space<vmem>>, vector<128x256xf32>,
    return
  }
  func.func @transform_0(%arg0: i32) -> (i32, i32) {
    %c0_i32 = arith.constant 0 : i32
    %c0_i32_0 = arith.constant 0 : i32
    return %arg0, %c0_i32 : i32, i32
  }
  func.func @transform_1(%arg0: i32) -> (i32, i32) {
    %c0_i32 = arith.constant 0 : i32
    %c0_i32_0 = arith.constant 0 : i32
    return %arg0, %c0_i32 : i32, i32
  }
}

module attributes {stable_mosaic.version = 11 : i64} {
  func.func @_layernorm_kernel(%arg0: i32, %arg1: memref<32x160xf32, #tpu.memory_space<vmem>>, %arg2: memref<1x160xf32, #tpu.memory_space<vmem>>, %arg3: memref<1x160xf32, #tpu.memory_space<vmem>>, %arg4: memref<32x160xf32, #tpu.memory_space<vmem>>) attributes {dimension_semantics = [#tpu.dimension_semantics<parallel>], iteration_bounds = array<i64: 1>, scalar_prefetch = 0 : i64, scratch_operands = 0 : i64, tpu.core_type = #tpu.core_type<tc>, window_params = [{transform_indices = @transform_0, window_bounds = array<i64: 32, 160>}, {pipeline_mode = #tpu.pipeline_mode<synchronous>, transform_indices = @transform_1, window_bounds = array<i64: 1, 160>}, {pipeline_mode = #tpu.pipeline_mode<synchronous>, transform_indices = @transform_2, window_bounds = array<i64: 1, 160>}, {transform_indices = @transform_3, window_bounds = array<i64: 32, 160>}]} {
    %c0 = arith.constant 0 : index
    %c0_0 = arith.constant 0 : index
    %0 = vector.load %arg1[%c0, %c0_0] : memref<32x160xf32, #tpu.memory_space<vmem>>, vector<32x160xf32>
    %cst = arith.constant dense<0.000000e+00> : vector<32xf32>
    %1 = vector.multi_reduction <add>, %0, %cst [1] : vector<32x160xf32> to vector<32xf32>
    %2 = vector.shape_cast %1 : vector<32xf32> to vector<32x1xf32>
    %cst_1 = arith.constant 1.600000e+02 : f32
    %3 = vector.broadcast %cst_1 : f32 to vector<32x1xf32>
    %4 = arith.divf %2, %3 : vector<32x1xf32>
    %5 = vector.broadcast %4 : vector<32x1xf32> to vector<32x160xf32>
    %6 = arith.subf %0, %5 : vector<32x160xf32>
    %7 = arith.mulf %6, %6 : vector<32x160xf32>
    %cst_2 = arith.constant dense<0.000000e+00> : vector<32xf32>
    %8 = vector.multi_reduction <add>, %7, %cst_2 [1] : vector<32x160xf32> to vector<32xf32>
    %9 = vector.shape_cast %8 : vector<32xf32> to vector<32x1xf32>
    %cst_3 = arith.constant 1.600000e+02 : f32
    %10 = vector.broadcast %cst_3 : f32 to vector<32x1xf32>
    %11 = arith.divf %9, %10 : vector<32x1xf32>
    %cst_4 = arith.constant 9.99999974E-6 : f32
    %12 = vector.broadcast %cst_4 : f32 to vector<32x1xf32>
    %13 = arith.addf %11, %12 : vector<32x1xf32>
    %14 = math.rsqrt %13 : vector<32x1xf32>
    %15 = vector.broadcast %14 : vector<32x1xf32> to vector<32x160xf32>
    %16 = arith.mulf %6, %15 : vector<32x160xf32>
    %c0_5 = arith.constant 0 : index
    %c0_6 = arith.constant 0 : index
    %17 = vector.load %arg2[%c0_5, %c0_6] : memref<1x160xf32, #tpu.memory_space<vmem>>, vector<1x160xf32>
    %18 = vector.broadcast %17 : vector<1x160xf32> to vector<32x160xf32>
    %19 = arith.mulf %16, %18 : vector<32x160xf32>
    %c0_7 = arith.constant 0 : index
    %c0_8 = arith.constant 0 : index
    %20 = vector.load %arg3[%c0_7, %c0_8] : memref<1x160xf32, #tpu.memory_space<vmem>>, vector<1x160xf32>
    %21 = vector.broadcast %20 : vector<1x160xf32> to vector<32x160xf32>
    %22 = arith.addf %19, %21 : vector<32x160xf32>
    %c0_9 = arith.constant 0 : index
    %c0_10 = arith.constant 0 : index
    %23 = vector.load %arg4[%c0_9, %c0_10] : memref<32x160xf32, #tpu.memory_space<vmem>>, vector<32x160xf32>
    tpu.vector_store %arg4[%c0_9, %c0_10], %22 {strides = array<i32>} : memref<32x160xf32, #tpu.memory_space<vmem>>, vector<32x160xf32>,
    return
  }
  func.func @transform_0(%arg0: i32) -> (i32, i32) {
    %c0_i32 = arith.constant 0 : i32
    %c0_i32_0 = arith.constant 0 : i32
    return %arg0, %c0_i32 : i32, i32
  }
  func.func @transform_1(%arg0: i32) -> (i32, i32) {
    %c0_i32 = arith.constant 0 : i32
    %c0_i32_0 = arith.constant 0 : i32
    %c0_i32_1 = arith.constant 0 : i32
    return %c0_i32, %c0_i32_0 : i32, i32
  }
  func.func @transform_2(%arg0: i32) -> (i32, i32) {
    %c0_i32 = arith.constant 0 : i32
    %c0_i32_0 = arith.constant 0 : i32
    %c0_i32_1 = arith.constant 0 : i32
    return %c0_i32, %c0_i32_0 : i32, i32
  }
  func.func @transform_3(%arg0: i32) -> (i32, i32) {
    %c0_i32 = arith.constant 0 : i32
    %c0_i32_0 = arith.constant 0 : i32
    return %arg0, %c0_i32 : i32, i32
  }
}

module attributes {stable_mosaic.version = 11 : i64} {
  func.func @_layernorm_kernel(%arg0: i32, %arg1: memref<8x160xf32, #tpu.memory_space<vmem>>, %arg2: memref<1x160xf32, #tpu.memory_space<vmem>>, %arg3: memref<1x160xf32, #tpu.memory_space<vmem>>, %arg4: memref<8x160xf32, #tpu.memory_space<vmem>>) attributes {dimension_semantics = [#tpu.dimension_semantics<parallel>], iteration_bounds = array<i64: 1>, scalar_prefetch = 0 : i64, scratch_operands = 0 : i64, tpu.core_type = #tpu.core_type<tc>, window_params = [{transform_indices = @transform_0, window_bounds = array<i64: 8, 160>}, {pipeline_mode = #tpu.pipeline_mode<synchronous>, transform_indices = @transform_1, window_bounds = array<i64: 1, 160>}, {pipeline_mode = #tpu.pipeline_mode<synchronous>, transform_indices = @transform_2, window_bounds = array<i64: 1, 160>}, {transform_indices = @transform_3, window_bounds = array<i64: 8, 160>}]} {
    %c0 = arith.constant 0 : index
    %c0_0 = arith.constant 0 : index
    %0 = vector.load %arg1[%c0, %c0_0] : memref<8x160xf32, #tpu.memory_space<vmem>>, vector<8x160xf32>
    %cst = arith.constant dense<0.000000e+00> : vector<8xf32>
    %1 = vector.multi_reduction <add>, %0, %cst [1] : vector<8x160xf32> to vector<8xf32>
    %2 = vector.shape_cast %1 : vector<8xf32> to vector<8x1xf32>
    %cst_1 = arith.constant 1.600000e+02 : f32
    %3 = vector.broadcast %cst_1 : f32 to vector<8x1xf32>
    %4 = arith.divf %2, %3 : vector<8x1xf32>
    %5 = vector.broadcast %4 : vector<8x1xf32> to vector<8x160xf32>
    %6 = arith.subf %0, %5 : vector<8x160xf32>
    %7 = arith.mulf %6, %6 : vector<8x160xf32>
    %cst_2 = arith.constant dense<0.000000e+00> : vector<8xf32>
    %8 = vector.multi_reduction <add>, %7, %cst_2 [1] : vector<8x160xf32> to vector<8xf32>
    %9 = vector.shape_cast %8 : vector<8xf32> to vector<8x1xf32>
    %cst_3 = arith.constant 1.600000e+02 : f32
    %10 = vector.broadcast %cst_3 : f32 to vector<8x1xf32>
    %11 = arith.divf %9, %10 : vector<8x1xf32>
    %cst_4 = arith.constant 9.99999974E-6 : f32
    %12 = vector.broadcast %cst_4 : f32 to vector<8x1xf32>
    %13 = arith.addf %11, %12 : vector<8x1xf32>
    %14 = math.rsqrt %13 : vector<8x1xf32>
    %15 = vector.broadcast %14 : vector<8x1xf32> to vector<8x160xf32>
    %16 = arith.mulf %6, %15 : vector<8x160xf32>
    %c0_5 = arith.constant 0 : index
    %c0_6 = arith.constant 0 : index
    %17 = vector.load %arg2[%c0_5, %c0_6] : memref<1x160xf32, #tpu.memory_space<vmem>>, vector<1x160xf32>
    %18 = vector.broadcast %17 : vector<1x160xf32> to vector<8x160xf32>
    %19 = arith.mulf %16, %18 : vector<8x160xf32>
    %c0_7 = arith.constant 0 : index
    %c0_8 = arith.constant 0 : index
    %20 = vector.load %arg3[%c0_7, %c0_8] : memref<1x160xf32, #tpu.memory_space<vmem>>, vector<1x160xf32>
    %21 = vector.broadcast %20 : vector<1x160xf32> to vector<8x160xf32>
    %22 = arith.addf %19, %21 : vector<8x160xf32>
    %c0_9 = arith.constant 0 : index
    %c0_10 = arith.constant 0 : index
    %23 = vector.load %arg4[%c0_9, %c0_10] : memref<8x160xf32, #tpu.memory_space<vmem>>, vector<8x160xf32>
    tpu.vector_store %arg4[%c0_9, %c0_10], %22 {strides = array<i32>} : memref<8x160xf32, #tpu.memory_space<vmem>>, vector<8x160xf32>,
    return
  }
  func.func @transform_0(%arg0: i32) -> (i32, i32) {
    %c0_i32 = arith.constant 0 : i32
    %c0_i32_0 = arith.constant 0 : i32
    return %arg0, %c0_i32 : i32, i32
  }
  func.func @transform_1(%arg0: i32) -> (i32, i32) {
    %c0_i32 = arith.constant 0 : i32
    %c0_i32_0 = arith.constant 0 : i32
    %c0_i32_1 = arith.constant 0 : i32
    return %c0_i32, %c0_i32_0 : i32, i32
  }
  func.func @transform_2(%arg0: i32) -> (i32, i32) {
    %c0_i32 = arith.constant 0 : i32
    %c0_i32_0 = arith.constant 0 : i32
    %c0_i32_1 = arith.constant 0 : i32
    return %c0_i32, %c0_i32_0 : i32, i32
  }
  func.func @transform_3(%arg0: i32) -> (i32, i32) {
    %c0_i32 = arith.constant 0 : i32
    %c0_i32_0 = arith.constant 0 : i32
    return %arg0, %c0_i32 : i32, i32
  }
}

module attributes {stable_mosaic.version = 11 : i64} {
  func.func @_attn_core_kernel(%arg0: i32, %arg1: i32, %arg2: memref<1x1x16x32xf32, #tpu.memory_space<vmem>>, %arg3: memref<1x1x4x32xf32, #tpu.memory_space<vmem>>, %arg4: memref<1x1x4x32xf32, #tpu.memory_space<vmem>>, %arg5: memref<1x1x16x32xf32, #tpu.memory_space<vmem>>) attributes {dimension_semantics = [#tpu.dimension_semantics<parallel>, #tpu.dimension_semantics<parallel>], iteration_bounds = array<i64: 2, 5>, scalar_prefetch = 0 : i64, scratch_operands = 0 : i64, tpu.core_type = #tpu.core_type<tc>, window_params = [{transform_indices = @transform_0, window_bounds = array<i64: 1, 1, 16, 32>}, {transform_indices = @transform_1, window_bounds = array<i64: 1, 1, 4, 32>}, {transform_indices = @transform_2, window_bounds = array<i64: 1, 1, 4, 32>}, {transform_indices = @transform_3, window_bounds = array<i64: 1, 1, 16, 32>}]} {
    %c0 = arith.constant 0 : index
    %c0_0 = arith.constant 0 : index
    %c0_1 = arith.constant 0 : index
    %c0_2 = arith.constant 0 : index
    %0 = vector.load %arg2[%c0, %c0_0, %c0_1, %c0_2] : memref<1x1x16x32xf32, #tpu.memory_space<vmem>>, vector<1x1x16x32xf32>
    %1 = vector.shape_cast %0 : vector<1x1x16x32xf32> to vector<16x32xf32>
    %c0_3 = arith.constant 0 : index
    %c0_4 = arith.constant 0 : index
    %c0_5 = arith.constant 0 : index
    %c0_6 = arith.constant 0 : index
    %2 = vector.load %arg3[%c0_3, %c0_4, %c0_5, %c0_6] : memref<1x1x4x32xf32, #tpu.memory_space<vmem>>, vector<1x1x4x32xf32>
    %3 = vector.shape_cast %2 : vector<1x1x4x32xf32> to vector<4x32xf32>
    %c0_7 = arith.constant 0 : index
    %c0_8 = arith.constant 0 : index
    %c0_9 = arith.constant 0 : index
    %c0_10 = arith.constant 0 : index
    %4 = vector.load %arg4[%c0_7, %c0_8, %c0_9, %c0_10] : memref<1x1x4x32xf32, #tpu.memory_space<vmem>>, vector<1x1x4x32xf32>
    %5 = vector.shape_cast %4 : vector<1x1x4x32xf32> to vector<4x32xf32>
    %cst = arith.constant dense<0.000000e+00> : vector<16x4xf32>
    %6 = tpu.matmul %1, %3, %cst {dimension_numbers = #tpu.dot_dimension_numbers<[1], [1], [0], [0], [0, 0, 1, 0], [], []>} : vector<16x32xf32>, vector<4x32xf32>, vector<16x4xf32> -> vector<16x4xf32>
    %cst_11 = arith.constant 0.176776692 : f32
    %7 = vector.broadcast %cst_11 : f32 to vector<16x4xf32>
    %8 = arith.mulf %6, %7 : vector<16x4xf32>
    %cst_12 = arith.constant dense<0xFF800000> : vector<16xf32>
    %9 = vector.multi_reduction <maximumf>, %8, %cst_12 [1] : vector<16x4xf32> to vector<16xf32>
    %10 = vector.shape_cast %9 : vector<16xf32> to vector<16x1xf32>
    %11 = vector.broadcast %10 : vector<16x1xf32> to vector<16x4xf32>
    %12 = arith.subf %8, %11 : vector<16x4xf32>
    %13 = math.exp %12 : vector<16x4xf32>
    %cst_13 = arith.constant dense<0.000000e+00> : vector<16xf32>
    %14 = vector.multi_reduction <add>, %13, %cst_13 [1] : vector<16x4xf32> to vector<16xf32>
    %15 = vector.shape_cast %14 : vector<16xf32> to vector<16x1xf32>
    %16 = vector.broadcast %15 : vector<16x1xf32> to vector<16x4xf32>
    %17 = arith.divf %13, %16 : vector<16x4xf32>
    %cst_14 = arith.constant dense<0.000000e+00> : vector<16x32xf32>
    %18 = tpu.matmul %17, %5, %cst_14 {dimension_numbers = #tpu.dot_dimension_numbers<[1], [0], [0], [1], [0, 0, 1, 1], [], []>} : vector<16x4xf32>, vector<4x32xf32>, vector<16x32xf32> -> vector<16x32xf32>
    %c0_15 = arith.constant 0 : index
    %c0_16 = arith.constant 0 : index
    %c0_17 = arith.constant 0 : index
    %c0_18 = arith.constant 0 : index
    %19 = vector.load %arg5[%c0_15, %c0_16, %c0_17, %c0_18] : memref<1x1x16x32xf32, #tpu.memory_space<vmem>>, vector<1x1x16x32xf32>
    %20 = vector.shape_cast %19 : vector<1x1x16x32xf32> to vector<16x32xf32>
    %21 = vector.shape_cast %18 : vector<16x32xf32> to vector<1x1x16x32xf32>
    tpu.vector_store %arg5[%c0_15, %c0_16, %c0_17, %c0_18], %21 {strides = array<i32>} : memref<1x1x16x32xf32, #tpu.memory_space<vmem>>, vector<1x1x16x32xf32>,
    return
  }
  func.func @transform_0(%arg0: i32, %arg1: i32) -> (i32, i32, i32, i32) {
    %c0_i32 = arith.constant 0 : i32
    %c0_i32_0 = arith.constant 0 : i32
    %c0_i32_1 = arith.constant 0 : i32
    return %arg0, %arg1, %c0_i32, %c0_i32_0 : i32, i32, i32, i32
  }
  func.func @transform_1(%arg0: i32, %arg1: i32) -> (i32, i32, i32, i32) {
    %c0_i32 = arith.constant 0 : i32
    %c0_i32_0 = arith.constant 0 : i32
    %c0_i32_1 = arith.constant 0 : i32
    return %arg0, %arg1, %c0_i32, %c0_i32_0 : i32, i32, i32, i32
  }
  func.func @transform_2(%arg0: i32, %arg1: i32) -> (i32, i32, i32, i32) {
    %c0_i32 = arith.constant 0 : i32
    %c0_i32_0 = arith.constant 0 : i32
    %c0_i32_1 = arith.constant 0 : i32
    return %arg0, %arg1, %c0_i32, %c0_i32_0 : i32, i32, i32, i32
  }
  func.func @transform_3(%arg0: i32, %arg1: i32) -> (i32, i32, i32, i32) {
    %c0_i32 = arith.constant 0 : i32
    %c0_i32_0 = arith.constant 0 : i32
    %c0_i32_1 = arith.constant 0 : i32
    return %arg0, %arg1, %c0_i32, %c0_i32_0 : i32, i32, i32, i32
  }
}

module attributes {stable_mosaic.version = 11 : i64} {
  func.func @_gelu_kernel(%arg0: i32, %arg1: memref<32x640xf32, #tpu.memory_space<vmem>>, %arg2: memref<32x640xf32, #tpu.memory_space<vmem>>) attributes {dimension_semantics = [#tpu.dimension_semantics<parallel>], iteration_bounds = array<i64: 1>, scalar_prefetch = 0 : i64, scratch_operands = 0 : i64, tpu.core_type = #tpu.core_type<tc>, window_params = [{transform_indices = @transform_0, window_bounds = array<i64: 32, 640>}, {transform_indices = @transform_1, window_bounds = array<i64: 32, 640>}]} {
    %c0 = arith.constant 0 : index
    %c0_0 = arith.constant 0 : index
    %0 = vector.load %arg1[%c0, %c0_0] : memref<32x640xf32, #tpu.memory_space<vmem>>, vector<32x640xf32>
    %cst = arith.constant 5.000000e-01 : f32
    %1 = vector.broadcast %cst : f32 to vector<32x640xf32>
    %2 = arith.mulf %1, %0 : vector<32x640xf32>
    %cst_1 = arith.constant 4.471500e-02 : f32
    %3 = vector.broadcast %cst_1 : f32 to vector<32x640xf32>
    %4 = arith.mulf %3, %0 : vector<32x640xf32>
    %5 = arith.mulf %4, %0 : vector<32x640xf32>
    %6 = arith.mulf %5, %0 : vector<32x640xf32>
    %7 = arith.addf %0, %6 : vector<32x640xf32>
    %cst_2 = arith.constant 0.797884583 : f32
    %8 = vector.broadcast %cst_2 : f32 to vector<32x640xf32>
    %9 = arith.mulf %8, %7 : vector<32x640xf32>
    %10 = math.tanh %9 : vector<32x640xf32>
    %cst_3 = arith.constant 1.000000e+00 : f32
    %11 = vector.broadcast %cst_3 : f32 to vector<32x640xf32>
    %12 = arith.addf %11, %10 : vector<32x640xf32>
    %13 = arith.mulf %2, %12 : vector<32x640xf32>
    %c0_4 = arith.constant 0 : index
    %c0_5 = arith.constant 0 : index
    %14 = vector.load %arg2[%c0_4, %c0_5] : memref<32x640xf32, #tpu.memory_space<vmem>>, vector<32x640xf32>
    tpu.vector_store %arg2[%c0_4, %c0_5], %13 {strides = array<i32>} : memref<32x640xf32, #tpu.memory_space<vmem>>, vector<32x640xf32>,
    return
  }
  func.func @transform_0(%arg0: i32) -> (i32, i32) {
    %c0_i32 = arith.constant 0 : i32
    %c0_i32_0 = arith.constant 0 : i32
    return %arg0, %c0_i32 : i32, i32
  }
  func.func @transform_1(%arg0: i32) -> (i32, i32) {
    %c0_i32 = arith.constant 0 : i32
    %c0_i32_0 = arith.constant 0 : i32
    return %arg0, %c0_i32 : i32, i32
  }
}

module attributes {stable_mosaic.version = 11 : i64} {
  func.func @_layernorm_kernel(%arg0: i32, %arg1: memref<8x256xf32, #tpu.memory_space<vmem>>, %arg2: memref<1x256xf32, #tpu.memory_space<vmem>>, %arg3: memref<1x256xf32, #tpu.memory_space<vmem>>, %arg4: memref<8x256xf32, #tpu.memory_space<vmem>>) attributes {dimension_semantics = [#tpu.dimension_semantics<parallel>], iteration_bounds = array<i64: 1>, scalar_prefetch = 0 : i64, scratch_operands = 0 : i64, tpu.core_type = #tpu.core_type<tc>, window_params = [{transform_indices = @transform_0, window_bounds = array<i64: 8, 256>}, {pipeline_mode = #tpu.pipeline_mode<synchronous>, transform_indices = @transform_1, window_bounds = array<i64: 1, 256>}, {pipeline_mode = #tpu.pipeline_mode<synchronous>, transform_indices = @transform_2, window_bounds = array<i64: 1, 256>}, {transform_indices = @transform_3, window_bounds = array<i64: 8, 256>}]} {
    %c0 = arith.constant 0 : index
    %c0_0 = arith.constant 0 : index
    %0 = vector.load %arg1[%c0, %c0_0] : memref<8x256xf32, #tpu.memory_space<vmem>>, vector<8x256xf32>
    %cst = arith.constant dense<0.000000e+00> : vector<8xf32>
    %1 = vector.multi_reduction <add>, %0, %cst [1] : vector<8x256xf32> to vector<8xf32>
    %2 = vector.shape_cast %1 : vector<8xf32> to vector<8x1xf32>
    %cst_1 = arith.constant 2.560000e+02 : f32
    %3 = vector.broadcast %cst_1 : f32 to vector<8x1xf32>
    %4 = arith.divf %2, %3 : vector<8x1xf32>
    %5 = vector.broadcast %4 : vector<8x1xf32> to vector<8x256xf32>
    %6 = arith.subf %0, %5 : vector<8x256xf32>
    %7 = arith.mulf %6, %6 : vector<8x256xf32>
    %cst_2 = arith.constant dense<0.000000e+00> : vector<8xf32>
    %8 = vector.multi_reduction <add>, %7, %cst_2 [1] : vector<8x256xf32> to vector<8xf32>
    %9 = vector.shape_cast %8 : vector<8xf32> to vector<8x1xf32>
    %cst_3 = arith.constant 2.560000e+02 : f32
    %10 = vector.broadcast %cst_3 : f32 to vector<8x1xf32>
    %11 = arith.divf %9, %10 : vector<8x1xf32>
    %cst_4 = arith.constant 9.99999974E-6 : f32
    %12 = vector.broadcast %cst_4 : f32 to vector<8x1xf32>
    %13 = arith.addf %11, %12 : vector<8x1xf32>
    %14 = math.rsqrt %13 : vector<8x1xf32>
    %15 = vector.broadcast %14 : vector<8x1xf32> to vector<8x256xf32>
    %16 = arith.mulf %6, %15 : vector<8x256xf32>
    %c0_5 = arith.constant 0 : index
    %c0_6 = arith.constant 0 : index
    %17 = vector.load %arg2[%c0_5, %c0_6] : memref<1x256xf32, #tpu.memory_space<vmem>>, vector<1x256xf32>
    %18 = vector.broadcast %17 : vector<1x256xf32> to vector<8x256xf32>
    %19 = arith.mulf %16, %18 : vector<8x256xf32>
    %c0_7 = arith.constant 0 : index
    %c0_8 = arith.constant 0 : index
    %20 = vector.load %arg3[%c0_7, %c0_8] : memref<1x256xf32, #tpu.memory_space<vmem>>, vector<1x256xf32>
    %21 = vector.broadcast %20 : vector<1x256xf32> to vector<8x256xf32>
    %22 = arith.addf %19, %21 : vector<8x256xf32>
    %c0_9 = arith.constant 0 : index
    %c0_10 = arith.constant 0 : index
    %23 = vector.load %arg4[%c0_9, %c0_10] : memref<8x256xf32, #tpu.memory_space<vmem>>, vector<8x256xf32>
    tpu.vector_store %arg4[%c0_9, %c0_10], %22 {strides = array<i32>} : memref<8x256xf32, #tpu.memory_space<vmem>>, vector<8x256xf32>,
    return
  }
  func.func @transform_0(%arg0: i32) -> (i32, i32) {
    %c0_i32 = arith.constant 0 : i32
    %c0_i32_0 = arith.constant 0 : i32
    return %arg0, %c0_i32 : i32, i32
  }
  func.func @transform_1(%arg0: i32) -> (i32, i32) {
    %c0_i32 = arith.constant 0 : i32
    %c0_i32_0 = arith.constant 0 : i32
    %c0_i32_1 = arith.constant 0 : i32
    return %c0_i32, %c0_i32_0 : i32, i32
  }
  func.func @transform_2(%arg0: i32) -> (i32, i32) {
    %c0_i32 = arith.constant 0 : i32
    %c0_i32_0 = arith.constant 0 : i32
    %c0_i32_1 = arith.constant 0 : i32
    return %c0_i32, %c0_i32_0 : i32, i32
  }
  func.func @transform_3(%arg0: i32) -> (i32, i32) {
    %c0_i32 = arith.constant 0 : i32
    %c0_i32_0 = arith.constant 0 : i32
    return %arg0, %c0_i32 : i32, i32
  }
}

module attributes {stable_mosaic.version = 11 : i64} {
  func.func @_attn_core_kernel(%arg0: i32, %arg1: i32, %arg2: memref<1x1x4x32xf32, #tpu.memory_space<vmem>>, %arg3: memref<1x1x4x32xf32, #tpu.memory_space<vmem>>, %arg4: memref<1x1x4x32xf32, #tpu.memory_space<vmem>>, %arg5: memref<1x1x4x32xf32, #tpu.memory_space<vmem>>) attributes {dimension_semantics = [#tpu.dimension_semantics<parallel>, #tpu.dimension_semantics<parallel>], iteration_bounds = array<i64: 2, 8>, scalar_prefetch = 0 : i64, scratch_operands = 0 : i64, tpu.core_type = #tpu.core_type<tc>, window_params = [{transform_indices = @transform_0, window_bounds = array<i64: 1, 1, 4, 32>}, {transform_indices = @transform_1, window_bounds = array<i64: 1, 1, 4, 32>}, {transform_indices = @transform_2, window_bounds = array<i64: 1, 1, 4, 32>}, {transform_indices = @transform_3, window_bounds = array<i64: 1, 1, 4, 32>}]} {
    %c0 = arith.constant 0 : index
    %c0_0 = arith.constant 0 : index
    %c0_1 = arith.constant 0 : index
    %c0_2 = arith.constant 0 : index
    %0 = vector.load %arg2[%c0, %c0_0, %c0_1, %c0_2] : memref<1x1x4x32xf32, #tpu.memory_space<vmem>>, vector<1x1x4x32xf32>
    %1 = vector.shape_cast %0 : vector<1x1x4x32xf32> to vector<4x32xf32>
    %c0_3 = arith.constant 0 : index
    %c0_4 = arith.constant 0 : index
    %c0_5 = arith.constant 0 : index
    %c0_6 = arith.constant 0 : index
    %2 = vector.load %arg3[%c0_3, %c0_4, %c0_5, %c0_6] : memref<1x1x4x32xf32, #tpu.memory_space<vmem>>, vector<1x1x4x32xf32>
    %3 = vector.shape_cast %2 : vector<1x1x4x32xf32> to vector<4x32xf32>
    %c0_7 = arith.constant 0 : index
    %c0_8 = arith.constant 0 : index
    %c0_9 = arith.constant 0 : index
    %c0_10 = arith.constant 0 : index
    %4 = vector.load %arg4[%c0_7, %c0_8, %c0_9, %c0_10] : memref<1x1x4x32xf32, #tpu.memory_space<vmem>>, vector<1x1x4x32xf32>
    %5 = vector.shape_cast %4 : vector<1x1x4x32xf32> to vector<4x32xf32>
    %cst = arith.constant dense<0.000000e+00> : vector<4x4xf32>
    %6 = tpu.matmul %1, %3, %cst {dimension_numbers = #tpu.dot_dimension_numbers<[1], [1], [0], [0], [0, 0, 1, 0], [], []>} : vector<4x32xf32>, vector<4x32xf32>, vector<4x4xf32> -> vector<4x4xf32>
    %cst_11 = arith.constant 0.176776692 : f32
    %7 = vector.broadcast %cst_11 : f32 to vector<4x4xf32>
    %8 = arith.mulf %6, %7 : vector<4x4xf32>
    %cst_12 = arith.constant dense<0xFF800000> : vector<4xf32>
    %9 = vector.multi_reduction <maximumf>, %8, %cst_12 [1] : vector<4x4xf32> to vector<4xf32>
    %10 = vector.shape_cast %9 : vector<4xf32> to vector<4x1xf32>
    %11 = vector.broadcast %10 : vector<4x1xf32> to vector<4x4xf32>
    %12 = arith.subf %8, %11 : vector<4x4xf32>
    %13 = math.exp %12 : vector<4x4xf32>
    %cst_13 = arith.constant dense<0.000000e+00> : vector<4xf32>
    %14 = vector.multi_reduction <add>, %13, %cst_13 [1] : vector<4x4xf32> to vector<4xf32>
    %15 = vector.shape_cast %14 : vector<4xf32> to vector<4x1xf32>
    %16 = vector.broadcast %15 : vector<4x1xf32> to vector<4x4xf32>
    %17 = arith.divf %13, %16 : vector<4x4xf32>
    %cst_14 = arith.constant dense<0.000000e+00> : vector<4x32xf32>
    %18 = tpu.matmul %17, %5, %cst_14 {dimension_numbers = #tpu.dot_dimension_numbers<[1], [0], [0], [1], [0, 0, 1, 1], [], []>} : vector<4x4xf32>, vector<4x32xf32>, vector<4x32xf32> -> vector<4x32xf32>
    %c0_15 = arith.constant 0 : index
    %c0_16 = arith.constant 0 : index
    %c0_17 = arith.constant 0 : index
    %c0_18 = arith.constant 0 : index
    %19 = vector.load %arg5[%c0_15, %c0_16, %c0_17, %c0_18] : memref<1x1x4x32xf32, #tpu.memory_space<vmem>>, vector<1x1x4x32xf32>
    %20 = vector.shape_cast %19 : vector<1x1x4x32xf32> to vector<4x32xf32>
    %21 = vector.shape_cast %18 : vector<4x32xf32> to vector<1x1x4x32xf32>
    tpu.vector_store %arg5[%c0_15, %c0_16, %c0_17, %c0_18], %21 {strides = array<i32>} : memref<1x1x4x32xf32, #tpu.memory_space<vmem>>, vector<1x1x4x32xf32>,
    return
  }
  func.func @transform_0(%arg0: i32, %arg1: i32) -> (i32, i32, i32, i32) {
    %c0_i32 = arith.constant 0 : i32
    %c0_i32_0 = arith.constant 0 : i32
    %c0_i32_1 = arith.constant 0 : i32
    return %arg0, %arg1, %c0_i32, %c0_i32_0 : i32, i32, i32, i32
  }
  func.func @transform_1(%arg0: i32, %arg1: i32) -> (i32, i32, i32, i32) {
    %c0_i32 = arith.constant 0 : i32
    %c0_i32_0 = arith.constant 0 : i32
    %c0_i32_1 = arith.constant 0 : i32
    return %arg0, %arg1, %c0_i32, %c0_i32_0 : i32, i32, i32, i32
  }
  func.func @transform_2(%arg0: i32, %arg1: i32) -> (i32, i32, i32, i32) {
    %c0_i32 = arith.constant 0 : i32
    %c0_i32_0 = arith.constant 0 : i32
    %c0_i32_1 = arith.constant 0 : i32
    return %arg0, %arg1, %c0_i32, %c0_i32_0 : i32, i32, i32, i32
  }
  func.func @transform_3(%arg0: i32, %arg1: i32) -> (i32, i32, i32, i32) {
    %c0_i32 = arith.constant 0 : i32
    %c0_i32_0 = arith.constant 0 : i32
    %c0_i32_1 = arith.constant 0 : i32
    return %arg0, %arg1, %c0_i32, %c0_i32_0 : i32, i32, i32, i32
  }
}

module attributes {stable_mosaic.version = 11 : i64} {
  func.func @_gelu_kernel(%arg0: i32, %arg1: memref<8x1024xf32, #tpu.memory_space<vmem>>, %arg2: memref<8x1024xf32, #tpu.memory_space<vmem>>) attributes {dimension_semantics = [#tpu.dimension_semantics<parallel>], iteration_bounds = array<i64: 1>, scalar_prefetch = 0 : i64, scratch_operands = 0 : i64, tpu.core_type = #tpu.core_type<tc>, window_params = [{transform_indices = @transform_0, window_bounds = array<i64: 8, 1024>}, {transform_indices = @transform_1, window_bounds = array<i64: 8, 1024>}]} {
    %c0 = arith.constant 0 : index
    %c0_0 = arith.constant 0 : index
    %0 = vector.load %arg1[%c0, %c0_0] : memref<8x1024xf32, #tpu.memory_space<vmem>>, vector<8x1024xf32>
    %cst = arith.constant 5.000000e-01 : f32
    %1 = vector.broadcast %cst : f32 to vector<8x1024xf32>
    %2 = arith.mulf %1, %0 : vector<8x1024xf32>
    %cst_1 = arith.constant 4.471500e-02 : f32
    %3 = vector.broadcast %cst_1 : f32 to vector<8x1024xf32>
    %4 = arith.mulf %3, %0 : vector<8x1024xf32>
    %5 = arith.mulf %4, %0 : vector<8x1024xf32>
    %6 = arith.mulf %5, %0 : vector<8x1024xf32>
    %7 = arith.addf %0, %6 : vector<8x1024xf32>
    %cst_2 = arith.constant 0.797884583 : f32
    %8 = vector.broadcast %cst_2 : f32 to vector<8x1024xf32>
    %9 = arith.mulf %8, %7 : vector<8x1024xf32>
    %10 = math.tanh %9 : vector<8x1024xf32>
    %cst_3 = arith.constant 1.000000e+00 : f32
    %11 = vector.broadcast %cst_3 : f32 to vector<8x1024xf32>
    %12 = arith.addf %11, %10 : vector<8x1024xf32>
    %13 = arith.mulf %2, %12 : vector<8x1024xf32>
    %c0_4 = arith.constant 0 : index
    %c0_5 = arith.constant 0 : index
    %14 = vector.load %arg2[%c0_4, %c0_5] : memref<8x1024xf32, #tpu.memory_space<vmem>>, vector<8x1024xf32>
    tpu.vector_store %arg2[%c0_4, %c0_5], %13 {strides = array<i32>} : memref<8x1024xf32, #tpu.memory_space<vmem>>, vector<8x1024xf32>,
    return
  }
  func.func @transform_0(%arg0: i32) -> (i32, i32) {
    %c0_i32 = arith.constant 0 : i32
    %c0_i32_0 = arith.constant 0 : i32
    return %arg0, %c0_i32 : i32, i32
  }
  func.func @transform_1(%arg0: i32) -> (i32, i32) {
    %c0_i32 = arith.constant 0 : i32
    %c0_i32_0 = arith.constant 0 : i32
    return %arg0, %c0_i32 : i32, i32
  }
}

</mosaic_0001>

<llo_original>
// kernel: fwd_eval.27
$region0: #{fwd_eval.27}
  #allocation0 [shape = 'u32[]', space=smem, size = 0x4, offset = 0x4, fixed_abs, tag = 'smem constant byte address 0x4 - core index']
  #allocation1 [shape = 'u32[144,128]{1,0:T(1,128)}', space=vmem, size = 0x12000, scoped, tag = 'internal scratch']
  %s0 = inlined_call_operand.vmem [shape: f32[512,32], index: 0, kind: input, shape index: {}]
  %s1 = inlined_call_operand.vmem [shape: f32[1,32], index: 1, kind: input, shape index: {}]
  %s2 = inlined_call_operand.vmem [shape: f32[1,32], index: 2, kind: input, shape index: {}]
  %s3 = inlined_call_operand.vmem [shape: f32[512,32], index: 3, kind: output, shape index: {}]
  %s4 = sld [smem:[#allocation0]]
  $region22: #{fwd_eval.27} parent=0
    _
  %s6 = ssub.s32 1, %s4
  %s7 = scalar_select 0, %s6, %s4
  // Predicated region
  $region2: #{fwd_eval.27} parent=0 // pred_check
    _
  $region3: #{fwd_eval.27} parent=0 // pred_check_branch
    %9 = sbr.rel (0) target = $region5
  $region4: #{fwd_eval.27} parent=0 // pred_region
    _
  $region5: #{fwd_eval.27} parent=0 // pred_fallthru
    _
  // Predicated region
  $region6: #{fwd_eval.27} parent=0 // pred_check
    _
  $region7: #{fwd_eval.27} parent=0 // pred_check_branch
    %11 = sbr.rel (0) target = $region9
  $region8: #{fwd_eval.27} parent=0 // pred_region
    _
  $region9: #{fwd_eval.27} parent=0 // pred_fallthru
    _
  // Predicated region
  $region10: #{fwd_eval.27} parent=0 // pred_check
    _
  $region11: #{fwd_eval.27} parent=0 // pred_check_branch
    %13 = sbr.rel (0) target = $region13
  $region12: #{fwd_eval.27} parent=0 // pred_region
    _
  $region13: #{fwd_eval.27} parent=0 // pred_fallthru
    _
  %v14 = vld [vmem:[%s0] sm:$0xff]
  %v15 = vld [vmem:[%s0 + $0x8] sm:$0xff]
  %v16 = vld [vmem:[%s0 + $0x10] sm:$0xff]
  %v17 = vld [vmem:[%s0 + $0x18] sm:$0xff]
  %v18 = vld [vmem:[%s0 + $0x20] sm:$0xff]
  %v19 = vld [vmem:[%s0 + $0x28] sm:$0xff]
  %v20 = vld [vmem:[%s0 + $0x30] sm:$0xff]
  %v21 = vld [vmem:[%s0 + $0x38] sm:$0xff]
  %v22 = vld [vmem:[%s0 + $0x40] sm:$0xff]
  %v23 = vld [vmem:[%s0 + $0x48] sm:$0xff]
  %v24 = vld [vmem:[%s0 + $0x50] sm:$0xff]
  %v25 = vld [vmem:[%s0 + $0x58] sm:$0xff]
  %v26 = vld [vmem:[%s0 + $0x60] sm:$0xff]
  %v27 = vld [vmem:[%s0 + $0x68] sm:$0xff]
  %v28 = vld [vmem:[%s0 + $0x70] sm:$0xff]
  %v29 = vld [vmem:[%s0 + $0x78] sm:$0xff]
  %v30 = vld [vmem:[%s0 + $0x80] sm:$0xff]
  %v31 = vld [vmem:[%s0 + $0x88] sm:$0xff]
  %v32 = vld [vmem:[%s0 + $0x90] sm:$0xff]
  %v33 = vld [vmem:[%s0 + $0x98] sm:$0xff]
  %v34 = vld [vmem:[%s0 + $0xa0] sm:$0xff]
  %v35 = vld [vmem:[%s0 + $0xa8] sm:$0xff]
  %v36 = vld [vmem:[%s0 + $0xb0] sm:$0xff]
  %v37 = vld [vmem:[%s0 + $0xb8] sm:$0xff]
  %v38 = vld [vmem:[%s0 + $0xc0] sm:$0xff]
  %v39 = vld [vmem:[%s0 + $0xc8] sm:$0xff]
  %v40 = vld [vmem:[%s0 + $0xd0] sm:$0xff]
  %v41 = vld [vmem:[%s0 + $0xd8] sm:$0xff]
  %v42 = vld [vmem:[%s0 + $0xe0] sm:$0xff]
  %v43 = vld [vmem:[%s0 + $0xe8] sm:$0xff]
  %v44 = vld [vmem:[%s0 + $0xf0] sm:$0xff]
  %v45 = vld [vmem:[%s0 + $0xf8] sm:$0xff]
  %v46 = vld [vmem:[%s0 + $0x100] sm:$0xff]
  %v47 = vld [vmem:[%s0 + $0x108] sm:$0xff]
  %v48 = vld [vmem:[%s0 + $0x110] sm:$0xff]
  %v49 = vld [vmem:[%s0 + $0x118] sm:$0xff]
  %v50 = vld [vmem:[%s0 + $0x120] sm:$0xff]
  %v51 = vld [vmem:[%s0 + $0x128] sm:$0xff]
  %v52 = vld [vmem:[%s0 + $0x130] sm:$0xff]
  %v53 = vld [vmem:[%s0 + $0x138] sm:$0xff]
  %v54 = vld [vmem:[%s0 + $0x140] sm:$0xff]
  %v55 = vld [vmem:[%s0 + $0x148] sm:$0xff]
  %v56 = vld [vmem:[%s0 + $0x150] sm:$0xff]
  %v57 = vld [vmem:[%s0 + $0x158] sm:$0xff]
  %v58 = vld [vmem:[%s0 + $0x160] sm:$0xff]
  %v59 = vld [vmem:[%s0 + $0x168] sm:$0xff]
  %v60 = vld [vmem:[%s0 + $0x170] sm:$0xff]
  %v61 = vld [vmem:[%s0 + $0x178] sm:$0xff]
  %v62 = vld [vmem:[%s0 + $0x180] sm:$0xff]
  %v63 = vld [vmem:[%s0 + $0x188] sm:$0xff]
  %v64 = vld [vmem:[%s0 + $0x190] sm:$0xff]
  %v65 = vld [vmem:[%s0 + $0x198] sm:$0xff]
  %v66 = vld [vmem:[%s0 + $0x1a0] sm:$0xff]
  %v67 = vld [vmem:[%s0 + $0x1a8] sm:$0xff]
  %v68 = vld [vmem:[%s0 + $0x1b0] sm:$0xff]
  %v69 = vld [vmem:[%s0 + $0x1b8] sm:$0xff]
  %v70 = vld [vmem:[%s0 + $0x1c0] sm:$0xff]
  %v71 = vld [vmem:[%s0 + $0x1c8] sm:$0xff]
  %v72 = vld [vmem:[%s0 + $0x1d0] sm:$0xff]
  %v73 = vld [vmem:[%s0 + $0x1d8] sm:$0xff]
  %v74 = vld [vmem:[%s0 + $0x1e0] sm:$0xff]
  %v75 = vld [vmem:[%s0 + $0x1e8] sm:$0xff]
  %v76 = vld [vmem:[%s0 + $0x1f0] sm:$0xff]
  %v77 = vld [vmem:[%s0 + $0x1f8] sm:$0xff]
  %vm78 = vcmask 261120
  %v79 = vsel %vm78, %v14, 0.0
  %80 = vadd.xlane.f32.xlu0 %v79
  %v81 = vpop.xlane.xlu0 %80
  %v82 = vsel %vm78, %v15, 0.0
  %83 = vadd.xlane.f32.xlu0 %v82
  %v84 = vpop.xlane.xlu0 %83
  %v85 = vsel %vm78, %v16, 0.0
  %86 = vadd.xlane.f32.xlu0 %v85
  %v87 = vpop.xlane.xlu0 %86
  %v88 = vsel %vm78, %v17, 0.0
  %89 = vadd.xlane.f32.xlu0 %v88
  %v90 = vpop.xlane.xlu0 %89
  %v91 = vsel %vm78, %v18, 0.0
  %92 = vadd.xlane.f32.xlu0 %v91
  %v93 = vpop.xlane.xlu0 %92
  %v94 = vsel %vm78, %v19, 0.0
  %95 = vadd.xlane.f32.xlu0 %v94
  %v96 = vpop.xlane.xlu0 %95
  %v97 = vsel %vm78, %v20, 0.0
  %98 = vadd.xlane.f32.xlu0 %v97
  %v99 = vpop.xlane.xlu0 %98
  %v100 = vsel %vm78, %v21, 0.0
  %101 = vadd.xlane.f32.xlu0 %v100
  %v102 = vpop.xlane.xlu0 %101
  %v103 = vsel %vm78, %v22, 0.0
  %104 = vadd.xlane.f32.xlu0 %v103
  %v105 = vpop.xlane.xlu0 %104
  %v106 = vsel %vm78, %v23, 0.0
  %107 = vadd.xlane.f32.xlu0 %v106
  %v108 = vpop.xlane.xlu0 %107
  %v109 = vsel %vm78, %v24, 0.0
  %110 = vadd.xlane.f32.xlu0 %v109
  %v111 = vpop.xlane.xlu0 %110
  %v112 = vsel %vm78, %v25, 0.0
  %113 = vadd.xlane.f32.xlu0 %v112
  %v114 = vpop.xlane.xlu0 %113
  %v115 = vsel %vm78, %v26, 0.0
  %116 = vadd.xlane.f32.xlu0 %v115
  %v117 = vpop.xlane.xlu0 %116
  %v118 = vsel %vm78, %v27, 0.0
  %119 = vadd.xlane.f32.xlu0 %v118
  %v120 = vpop.xlane.xlu0 %119
  %v121 = vsel %vm78, %v28, 0.0
  %122 = vadd.xlane.f32.xlu0 %v121
  %v123 = vpop.xlane.xlu0 %122
  %v124 = vsel %vm78, %v29, 0.0
  %125 = vadd.xlane.f32.xlu0 %v124
  %v126 = vpop.xlane.xlu0 %125
  %v127 = vsel %vm78, %v30, 0.0
  %128 = vadd.xlane.f32.xlu0 %v127
  %v129 = vpop.xlane.xlu0 %128
  %v130 = vsel %vm78, %v31, 0.0
  %131 = vadd.xlane.f32.xlu0 %v130
  %v132 = vpop.xlane.xlu0 %131
  %v133 = vsel %vm78, %v32, 0.0
  %134 = vadd.xlane.f32.xlu0 %v133
  %v135 = vpop.xlane.xlu0 %134
  %v136 = vsel %vm78, %v33, 0.0
  %137 = vadd.xlane.f32.xlu0 %v136
  %v138 = vpop.xlane.xlu0 %137
  %v139 = vsel %vm78, %v34, 0.0
  %140 = vadd.xlane.f32.xlu0 %v139
  %v141 = vpop.xlane.xlu0 %140
  %v142 = vsel %vm78, %v35, 0.0
  %143 = vadd.xlane.f32.xlu0 %v142
  %v144 = vpop.xlane.xlu0 %143
  %v145 = vsel %vm78, %v36, 0.0
  %146 = vadd.xlane.f32.xlu0 %v145
  %v147 = vpop.xlane.xlu0 %146
  %v148 = vsel %vm78, %v37, 0.0
  %149 = vadd.xlane.f32.xlu0 %v148
  %v150 = vpop.xlane.xlu0 %149
  %v151 = vsel %vm78, %v38, 0.0
  %152 = vadd.xlane.f32.xlu0 %v151
  %v153 = vpop.xlane.xlu0 %152
  %v154 = vsel %vm78, %v39, 0.0
  %155 = vadd.xlane.f32.xlu0 %v154
  %v156 = vpop.xlane.xlu0 %155
  %v157 = vsel %vm78, %v40, 0.0
  %158 = vadd.xlane.f32.xlu0 %v157
  %v159 = vpop.xlane.xlu0 %158
  %v160 = vsel %vm78, %v41, 0.0
  %161 = vadd.xlane.f32.xlu0 %v160
  %v162 = vpop.xlane.xlu0 %161
  %v163 = vsel %vm78, %v42, 0.0
  %164 = vadd.xlane.f32.xlu0 %v163
  %v165 = vpop.xlane.xlu0 %164
  %v166 = vsel %vm78, %v43, 0.0
  %167 = vadd.xlane.f32.xlu0 %v166
  %v168 = vpop.xlane.xlu0 %167
  %v169 = vsel %vm78, %v44, 0.0
  %170 = vadd.xlane.f32.xlu0 %v169
  %v171 = vpop.xlane.xlu0 %170
  %v172 = vsel %vm78, %v45, 0.0
  %173 = vadd.xlane.f32.xlu0 %v172
  %v174 = vpop.xlane.xlu0 %173
  %v175 = vsel %vm78, %v46, 0.0
  %176 = vadd.xlane.f32.xlu0 %v175
  %v177 = vpop.xlane.xlu0 %176
  %v178 = vsel %vm78, %v47, 0.0
  %179 = vadd.xlane.f32.xlu0 %v178
  %v180 = vpop.xlane.xlu0 %179
  %v181 = vsel %vm78, %v48, 0.0
  %182 = vadd.xlane.f32.xlu0 %v181
  %v183 = vpop.xlane.xlu0 %182
  %v184 = vsel %vm78, %v49, 0.0
  %185 = vadd.xlane.f32.xlu0 %v184
  %v186 = vpop.xlane.xlu0 %185
  %v187 = vsel %vm78, %v50, 0.0
  %188 = vadd.xlane.f32.xlu0 %v187
  %v189 = vpop.xlane.xlu0 %188
  %v190 = vsel %vm78, %v51, 0.0
  %191 = vadd.xlane.f32.xlu0 %v190
  %v192 = vpop.xlane.xlu0 %191
  %v193 = vsel %vm78, %v52, 0.0
  %194 = vadd.xlane.f32.xlu0 %v193
  %v195 = vpop.xlane.xlu0 %194
  %v196 = vsel %vm78, %v53, 0.0
  %197 = vadd.xlane.f32.xlu0 %v196
  %v198 = vpop.xlane.xlu0 %197
  %v199 = vsel %vm78, %v54, 0.0
  %200 = vadd.xlane.f32.xlu0 %v199
  %v201 = vpop.xlane.xlu0 %200
  %v202 = vsel %vm78, %v55, 0.0
  %203 = vadd.xlane.f32.xlu0 %v202
  %v204 = vpop.xlane.xlu0 %203
  %v205 = vsel %vm78, %v56, 0.0
  %206 = vadd.xlane.f32.xlu0 %v205
  %v207 = vpop.xlane.xlu0 %206
  %v208 = vsel %vm78, %v57, 0.0
  %209 = vadd.xlane.f32.xlu0 %v208
  %v210 = vpop.xlane.xlu0 %209
  %v211 = vsel %vm78, %v58, 0.0
  %212 = vadd.xlane.f32.xlu0 %v211
  %v213 = vpop.xlane.xlu0 %212
  %v214 = vsel %vm78, %v59, 0.0
  %215 = vadd.xlane.f32.xlu0 %v214
  %v216 = vpop.xlane.xlu0 %215
  %v217 = vsel %vm78, %v60, 0.0
  %218 = vadd.xlane.f32.xlu0 %v217
  %v219 = vpop.xlane.xlu0 %218
  %v220 = vsel %vm78, %v61, 0.0
  %221 = vadd.xlane.f32.xlu0 %v220
  %v222 = vpop.xlane.xlu0 %221
  %v223 = vsel %vm78, %v62, 0.0
  %224 = vadd.xlane.f32.xlu0 %v223
  %v225 = vpop.xlane.xlu0 %224
  %v226 = vsel %vm78, %v63, 0.0
  %227 = vadd.xlane.f32.xlu0 %v226
  %v228 = vpop.xlane.xlu0 %227
  %v229 = vsel %vm78, %v64, 0.0
  %230 = vadd.xlane.f32.xlu0 %v229
  %v231 = vpop.xlane.xlu0 %230
  %v232 = vsel %vm78, %v65, 0.0
  %233 = vadd.xlane.f32.xlu0 %v232
  %v234 = vpop.xlane.xlu0 %233
  %v235 = vsel %vm78, %v66, 0.0
  %236 = vadd.xlane.f32.xlu0 %v235
  %v237 = vpop.xlane.xlu0 %236
  %v238 = vsel %vm78, %v67, 0.0
  %239 = vadd.xlane.f32.xlu0 %v238
  %v240 = vpop.xlane.xlu0 %239
  %v241 = vsel %vm78, %v68, 0.0
  %242 = vadd.xlane.f32.xlu0 %v241
  %v243 = vpop.xlane.xlu0 %242
  %v244 = vsel %vm78, %v69, 0.0
  %245 = vadd.xlane.f32.xlu0 %v244
  %v246 = vpop.xlane.xlu0 %245
  %v247 = vsel %vm78, %v70, 0.0
  %248 = vadd.xlane.f32.xlu0 %v247
  %v249 = vpop.xlane.xlu0 %248
  %v250 = vsel %vm78, %v71, 0.0
  %251 = vadd.xlane.f32.xlu0 %v250
  %v252 = vpop.xlane.xlu0 %251
  %v253 = vsel %vm78, %v72, 0.0
  %254 = vadd.xlane.f32.xlu0 %v253
  %v255 = vpop.xlane.xlu0 %254
  %v256 = vsel %vm78, %v73, 0.0
  %257 = vadd.xlane.f32.xlu0 %v256
  %v258 = vpop.xlane.xlu0 %257
  %v259 = vsel %vm78, %v74, 0.0
  %260 = vadd.xlane.f32.xlu0 %v259
  %v261 = vpop.xlane.xlu0 %260
  %v262 = vsel %vm78, %v75, 0.0
  %263 = vadd.xlane.f32.xlu0 %v262
  %v264 = vpop.xlane.xlu0 %263
  %v265 = vsel %vm78, %v76, 0.0
  %266 = vadd.xlane.f32.xlu0 %v265
  %v267 = vpop.xlane.xlu0 %266
  %v268 = vsel %vm78, %v77, 0.0
  %269 = vadd.xlane.f32.xlu0 %v268
  %v270 = vpop.xlane.xlu0 %269
  %v271 = vrcp.pop 32.0
  %v272 = vmul.f32 %v81, %v271
  %v273 = vmul.f32 %v84, %v271
  %v274 = vmul.f32 %v87, %v271
  %v275 = vmul.f32 %v90, %v271
  %v276 = vmul.f32 %v93, %v271
  %v277 = vmul.f32 %v96, %v271
  %v278 = vmul.f32 %v99, %v271
  %v279 = vmul.f32 %v102, %v271
  %v280 = vmul.f32 %v105, %v271
  %v281 = vmul.f32 %v108, %v271
  %v282 = vmul.f32 %v111, %v271
  %v283 = vmul.f32 %v114, %v271
  %v284 = vmul.f32 %v117, %v271
  %v285 = vmul.f32 %v120, %v271
  %v286 = vmul.f32 %v123, %v271
  %v287 = vmul.f32 %v126, %v271
  %v288 = vmul.f32 %v129, %v271
  %v289 = vmul.f32 %v132, %v271
  %v290 = vmul.f32 %v135, %v271
  %v291 = vmul.f32 %v138, %v271
  %v292 = vmul.f32 %v141, %v271
  %v293 = vmul.f32 %v144, %v271
  %v294 = vmul.f32 %v147, %v271
  %v295 = vmul.f32 %v150, %v271
  %v296 = vmul.f32 %v153, %v271
  %v297 = vmul.f32 %v156, %v271
  %v298 = vmul.f32 %v159, %v271
  %v299 = vmul.f32 %v162, %v271
  %v300 = vmul.f32 %v165, %v271
  %v301 = vmul.f32 %v168, %v271
  %v302 = vmul.f32 %v171, %v271
  %v303 = vmul.f32 %v174, %v271
  %v304 = vmul.f32 %v177, %v271
  %v305 = vmul.f32 %v180, %v271
  %v306 = vmul.f32 %v183, %v271
  %v307 = vmul.f32 %v186, %v271
  %v308 = vmul.f32 %v189, %v271
  %v309 = vmul.f32 %v192, %v271
  %v310 = vmul.f32 %v195, %v271
  %v311 = vmul.f32 %v198, %v271
  %v312 = vmul.f32 %v201, %v271
  %v313 = vmul.f32 %v204, %v271
  %v314 = vmul.f32 %v207, %v271
  %v315 = vmul.f32 %v210, %v271
  %v316 = vmul.f32 %v213, %v271
  %v317 = vmul.f32 %v216, %v271
  %v318 = vmul.f32 %v219, %v271
  %v319 = vmul.f32 %v222, %v271
  %v320 = vmul.f32 %v225, %v271
  %v321 = vmul.f32 %v228, %v271
  %v322 = vmul.f32 %v231, %v271
  %v323 = vmul.f32 %v234, %v271
  %v324 = vmul.f32 %v237, %v271
  %v325 = vmul.f32 %v240, %v271
  %v326 = vmul.f32 %v243, %v271
  %v327 = vmul.f32 %v246, %v271
  %v328 = vmul.f32 %v249, %v271
  %v329 = vmul.f32 %v252, %v271
  %v330 = vmul.f32 %v255, %v271
  %v331 = vmul.f32 %v258, %v271
  %v332 = vmul.f32 %v261, %v271
  %v333 = vmul.f32 %v264, %v271
  %v334 = vmul.f32 %v267, %v271
  %v335 = vmul.f32 %v270, %v271
  %v336 = vsub.f32 %v14, %v272
  %v337 = vsub.f32 %v15, %v273
  %v338 = vsub.f32 %v16, %v274
  %v339 = vsub.f32 %v17, %v275
  %v340 = vsub.f32 %v18, %v276
  %v341 = vsub.f32 %v19, %v277
  %v342 = vsub.f32 %v20, %v278
  %v343 = vsub.f32 %v21, %v279
  %v344 = vsub.f32 %v22, %v280
  %v345 = vsub.f32 %v23, %v281
  %v346 = vsub.f32 %v24, %v282
  %v347 = vsub.f32 %v25, %v283
  %v348 = vsub.f32 %v26, %v284
  %v349 = vsub.f32 %v27, %v285
  %v350 = vsub.f32 %v28, %v286
  %v351 = vsub.f32 %v29, %v287
  %v352 = vsub.f32 %v30, %v288
  %v353 = vsub.f32 %v31, %v289
  %v354 = vsub.f32 %v32, %v290
  %v355 = vsub.f32 %v33, %v291
  %v356 = vsub.f32 %v34, %v292
  %v357 = vsub.f32 %v35, %v293
  %v358 = vsub.f32 %v36, %v294
  %v359 = vsub.f32 %v37, %v295
  %v360 = vsub.f32 %v38, %v296
  %v361 = vsub.f32 %v39, %v297
  %v362 = vsub.f32 %v40, %v298
  %v363 = vsub.f32 %v41, %v299
  %v364 = vsub.f32 %v42, %v300
  %v365 = vsub.f32 %v43, %v301
  %v366 = vsub.f32 %v44, %v302
  %v367 = vsub.f32 %v45, %v303
  %v368 = vsub.f32 %v46, %v304
  %v369 = vsub.f32 %v47, %v305
  %v370 = vsub.f32 %v48, %v306
  %v371 = vsub.f32 %v49, %v307
  %v372 = vsub.f32 %v50, %v308
  %v373 = vsub.f32 %v51, %v309
  %v374 = vsub.f32 %v52, %v310
  %v375 = vsub.f32 %v53, %v311
  %v376 = vsub.f32 %v54, %v312
  %v377 = vsub.f32 %v55, %v313
  %v378 = vsub.f32 %v56, %v314
  %v379 = vsub.f32 %v57, %v315
  %v380 = vsub.f32 %v58, %v316
  %v381 = vsub.f32 %v59, %v317
  %v382 = vsub.f32 %v60, %v318
  %v383 = vsub.f32 %v61, %v319
  %v384 = vsub.f32 %v62, %v320
  %v385 = vsub.f32 %v63, %v321
  %v386 = vsub.f32 %v64, %v322
  %v387 = vsub.f32 %v65, %v323
  %v388 = vsub.f32 %v66, %v324
  %v389 = vsub.f32 %v67, %v325
  %v390 = vsub.f32 %v68, %v326
  %v391 = vsub.f32 %v69, %v327
  %v392 = vsub.f32 %v70, %v328
  %v393 = vsub.f32 %v71, %v329
  %v394 = vsub.f32 %v72, %v330
  %v395 = vsub.f32 %v73, %v331
  %v396 = vsub.f32 %v74, %v332
  %v397 = vsub.f32 %v75, %v333
  %v398 = vsub.f32 %v76, %v334
  %v399 = vsub.f32 %v77, %v335
  %v400 = vmul.f32 %v336, %v336
  %v401 = vmul.f32 %v337, %v337
  %v402 = vmul.f32 %v338, %v338
  %v403 = vmul.f32 %v339, %v339
  %v404 = vmul.f32 %v340, %v340
  %v405 = vmul.f32 %v341, %v341
  %v406 = vmul.f32 %v342, %v342
  %v407 = vmul.f32 %v343, %v343
  %v408 = vmul.f32 %v344, %v344
  %v409 = vmul.f32 %v345, %v345
  %v410 = vmul.f32 %v346, %v346
  %v411 = vmul.f32 %v347, %v347
  %v412 = vmul.f32 %v348, %v348
  %v413 = vmul.f32 %v349, %v349
  %v414 = vmul.f32 %v350, %v350
  %v415 = vmul.f32 %v351, %v351
  %v416 = vmul.f32 %v352, %v352
  %v417 = vmul.f32 %v353, %v353
  %v418 = vmul.f32 %v354, %v354
  %v419 = vmul.f32 %v355, %v355
  %v420 = vmul.f32 %v356, %v356
  %v421 = vmul.f32 %v357, %v357
  %v422 = vmul.f32 %v358, %v358
  %v423 = vmul.f32 %v359, %v359
  %v424 = vmul.f32 %v360, %v360
  %v425 = vmul.f32 %v361, %v361
  %v426 = vmul.f32 %v362, %v362
  %v427 = vmul.f32 %v363, %v363
  %v428 = vmul.f32 %v364, %v364
  %v429 = vmul.f32 %v365, %v365
  %v430 = vmul.f32 %v366, %v366
  %v431 = vmul.f32 %v367, %v367
  %v432 = vmul.f32 %v368, %v368
  %v433 = vmul.f32 %v369, %v369
  %v434 = vmul.f32 %v370, %v370
  %v435 = vmul.f32 %v371, %v371
  %v436 = vmul.f32 %v372, %v372
  %v437 = vmul.f32 %v373, %v373
  %v438 = vmul.f32 %v374, %v374
  %v439 = vmul.f32 %v375, %v375
  %v440 = vmul.f32 %v376, %v376
  %v441 = vmul.f32 %v377, %v377
  %v442 = vmul.f32 %v378, %v378
  %v443 = vmul.f32 %v379, %v379
  %v444 = vmul.f32 %v380, %v380
  %v445 = vmul.f32 %v381, %v381
  %v446 = vmul.f32 %v382, %v382
  %v447 = vmul.f32 %v383, %v383
  %v448 = vmul.f32 %v384, %v384
  %v449 = vmul.f32 %v385, %v385
  %v450 = vmul.f32 %v386, %v386
  %v451 = vmul.f32 %v387, %v387
  %v452 = vmul.f32 %v388, %v388
  %v453 = vmul.f32 %v389, %v389
  %v454 = vmul.f32 %v390, %v390
  %v455 = vmul.f32 %v391, %v391
  %v456 = vmul.f32 %v392, %v392
  %v457 = vmul.f32 %v393, %v393
  %v458 = vmul.f32 %v394, %v394
  %v459 = vmul.f32 %v395, %v395
  %v460 = vmul.f32 %v396, %v396
  %v461 = vmul.f32 %v397, %v397
  %v462 = vmul.f32 %v398, %v398
  %v463 = vmul.f32 %v399, %v399
  %v464 = vsel %vm78, %v400, 0.0
  %465 = vadd.xlane.f32.xlu0 %v464
  %v466 = vpop.xlane.xlu0 %465
  %v467 = vsel %vm78, %v401, 0.0
  %468 = vadd.xlane.f32.xlu0 %v467
  %v469 = vpop.xlane.xlu0 %468
  %v470 = vsel %vm78, %v402, 0.0
  %471 = vadd.xlane.f32.xlu0 %v470
  %v472 = vpop.xlane.xlu0 %471
  %v473 = vsel %vm78, %v403, 0.0
  %474 = vadd.xlane.f32.xlu0 %v473
  %v475 = vpop.xlane.xlu0 %474
  %v476 = vsel %vm78, %v404, 0.0
  %477 = vadd.xlane.f32.xlu0 %v476
  %v478 = vpop.xlane.xlu0 %477
  %v479 = vsel %vm78, %v405, 0.0
  %480 = vadd.xlane.f32.xlu0 %v479
  %v481 = vpop.xlane.xlu0 %480
  %v482 = vsel %vm78, %v406, 0.0
  %483 = vadd.xlane.f32.xlu0 %v482
  %v484 = vpop.xlane.xlu0 %483
  %v485 = vsel %vm78, %v407, 0.0
  %486 = vadd.xlane.f32.xlu0 %v485
  %v487 = vpop.xlane.xlu0 %486
  %v488 = vsel %vm78, %v408, 0.0
  %489 = vadd.xlane.f32.xlu0 %v488
  %v490 = vpop.xlane.xlu0 %489
  %v491 = vsel %vm78, %v409, 0.0
  %492 = vadd.xlane.f32.xlu0 %v491
  %v493 = vpop.xlane.xlu0 %492
  %v494 = vsel %vm78, %v410, 0.0
  %495 = vadd.xlane.f32.xlu0 %v494
  %v496 = vpop.xlane.xlu0 %495
  %v497 = vsel %vm78, %v411, 0.0
  %498 = vadd.xlane.f32.xlu0 %v497
  %v499 = vpop.xlane.xlu0 %498
  %v500 = vsel %vm78, %v412, 0.0
  %501 = vadd.xlane.f32.xlu0 %v500
  %v502 = vpop.xlane.xlu0 %501
  %v503 = vsel %vm78, %v413, 0.0
  %504 = vadd.xlane.f32.xlu0 %v503
  %v505 = vpop.xlane.xlu0 %504
  %v506 = vsel %vm78, %v414, 0.0
  %507 = vadd.xlane.f32.xlu0 %v506
  %v508 = vpop.xlane.xlu0 %507
  %v509 = vsel %vm78, %v415, 0.0
  %510 = vadd.xlane.f32.xlu0 %v509
  %v511 = vpop.xlane.xlu0 %510
  %v512 = vsel %vm78, %v416, 0.0
  %513 = vadd.xlane.f32.xlu0 %v512
  %v514 = vpop.xlane.xlu0 %513
  %v515 = vsel %vm78, %v417, 0.0
  %516 = vadd.xlane.f32.xlu0 %v515
  %v517 = vpop.xlane.xlu0 %516
  %v518 = vsel %vm78, %v418, 0.0
  %519 = vadd.xlane.f32.xlu0 %v518
  %v520 = vpop.xlane.xlu0 %519
  %v521 = vsel %vm78, %v419, 0.0
  %522 = vadd.xlane.f32.xlu0 %v521
  %v523 = vpop.xlane.xlu0 %522
  %v524 = vsel %vm78, %v420, 0.0
  %525 = vadd.xlane.f32.xlu0 %v524
  %v526 = vpop.xlane.xlu0 %525
  %v527 = vsel %vm78, %v421, 0.0
  %528 = vadd.xlane.f32.xlu0 %v527
  %v529 = vpop.xlane.xlu0 %528
  %v530 = vsel %vm78, %v422, 0.0
  %531 = vadd.xlane.f32.xlu0 %v530
  %v532 = vpop.xlane.xlu0 %531
  %v533 = vsel %vm78, %v423, 0.0
  %534 = vadd.xlane.f32.xlu0 %v533
  %v535 = vpop.xlane.xlu0 %534
  %v536 = vsel %vm78, %v424, 0.0
  %537 = vadd.xlane.f32.xlu0 %v536
  %v538 = vpop.xlane.xlu0 %537
  %v539 = vsel %vm78, %v425, 0.0
  %540 = vadd.xlane.f32.xlu0 %v539
  %v541 = vpop.xlane.xlu0 %540
  %v542 = vsel %vm78, %v426, 0.0
  %543 = vadd.xlane.f32.xlu0 %v542
  %v544 = vpop.xlane.xlu0 %543
  %v545 = vsel %vm78, %v427, 0.0
  %546 = vadd.xlane.f32.xlu0 %v545
  %v547 = vpop.xlane.xlu0 %546
  %v548 = vsel %vm78, %v428, 0.0
  %549 = vadd.xlane.f32.xlu0 %v548
  %v550 = vpop.xlane.xlu0 %549
  %v551 = vsel %vm78, %v429, 0.0
  %552 = vadd.xlane.f32.xlu0 %v551
  %v553 = vpop.xlane.xlu0 %552
  %v554 = vsel %vm78, %v430, 0.0
  %555 = vadd.xlane.f32.xlu0 %v554
  %v556 = vpop.xlane.xlu0 %555
  %v557 = vsel %vm78, %v431, 0.0
  %558 = vadd.xlane.f32.xlu0 %v557
  %v559 = vpop.xlane.xlu0 %558
  %v560 = vsel %vm78, %v432, 0.0
  %561 = vadd.xlane.f32.xlu0 %v560
  %v562 = vpop.xlane.xlu0 %561
  %v563 = vsel %vm78, %v433, 0.0
  %564 = vadd.xlane.f32.xlu0 %v563
  %v565 = vpop.xlane.xlu0 %564
  %v566 = vsel %vm78, %v434, 0.0
  %567 = vadd.xlane.f32.xlu0 %v566
  %v568 = vpop.xlane.xlu0 %567
  %v569 = vsel %vm78, %v435, 0.0
  %570 = vadd.xlane.f32.xlu0 %v569
  %v571 = vpop.xlane.xlu0 %570
  %v572 = vsel %vm78, %v436, 0.0
  %573 = vadd.xlane.f32.xlu0 %v572
  %v574 = vpop.xlane.xlu0 %573
  %v575 = vsel %vm78, %v437, 0.0
  %576 = vadd.xlane.f32.xlu0 %v575
  %v577 = vpop.xlane.xlu0 %576
  %v578 = vsel %vm78, %v438, 0.0
  %579 = vadd.xlane.f32.xlu0 %v578
  %v580 = vpop.xlane.xlu0 %579
  %v581 = vsel %vm78, %v439, 0.0
  %582 = vadd.xlane.f32.xlu0 %v581
  %v583 = vpop.xlane.xlu0 %582
  %v584 = vsel %vm78, %v440, 0.0
  %585 = vadd.xlane.f32.xlu0 %v584
  %v586 = vpop.xlane.xlu0 %585
  %v587 = vsel %vm78, %v441, 0.0
  %588 = vadd.xlane.f32.xlu0 %v587
  %v589 = vpop.xlane.xlu0 %588
  %v590 = vsel %vm78, %v442, 0.0
  %591 = vadd.xlane.f32.xlu0 %v590
  %v592 = vpop.xlane.xlu0 %591
  %v593 = vsel %vm78, %v443, 0.0
  %594 = vadd.xlane.f32.xlu0 %v593
  %v595 = vpop.xlane.xlu0 %594
  %v596 = vsel %vm78, %v444, 0.0
  %597 = vadd.xlane.f32.xlu0 %v596
  %v598 = vpop.xlane.xlu0 %597
  %v599 = vsel %vm78, %v445, 0.0
  %600 = vadd.xlane.f32.xlu0 %v599
  %v601 = vpop.xlane.xlu0 %600
  %v602 = vsel %vm78, %v446, 0.0
  %603 = vadd.xlane.f32.xlu0 %v602
  %v604 = vpop.xlane.xlu0 %603
  %v605 = vsel %vm78, %v447, 0.0
  %606 = vadd.xlane.f32.xlu0 %v605
  %v607 = vpop.xlane.xlu0 %606
  %v608 = vsel %vm78, %v448, 0.0
  %609 = vadd.xlane.f32.xlu0 %v608
  %v610 = vpop.xlane.xlu0 %609
  %v611 = vsel %vm78, %v449, 0.0
  %612 = vadd.xlane.f32.xlu0 %v611
  %v613 = vpop.xlane.xlu0 %612
  %v614 = vsel %vm78, %v450, 0.0
  %615 = vadd.xlane.f32.xlu0 %v614
  %v616 = vpop.xlane.xlu0 %615
  %v617 = vsel %vm78, %v451, 0.0
  %618 = vadd.xlane.f32.xlu0 %v617
  %v619 = vpop.xlane.xlu0 %618
  %v620 = vsel %vm78, %v452, 0.0
  %621 = vadd.xlane.f32.xlu0 %v620
  %v622 = vpop.xlane.xlu0 %621
  %v623 = vsel %vm78, %v453, 0.0
  %624 = vadd.xlane.f32.xlu0 %v623
  %v625 = vpop.xlane.xlu0 %624
  %v626 = vsel %vm78, %v454, 0.0
  %627 = vadd.xlane.f32.xlu0 %v626
  %v628 = vpop.xlane.xlu0 %627
  %v629 = vsel %vm78, %v455, 0.0
  %630 = vadd.xlane.f32.xlu0 %v629
  %v631 = vpop.xlane.xlu0 %630
  %v632 = vsel %vm78, %v456, 0.0
  %633 = vadd.xlane.f32.xlu0 %v632
  %v634 = vpop.xlane.xlu0 %633
  %v635 = vsel %vm78, %v457, 0.0
  %636 = vadd.xlane.f32.xlu0 %v635
  %v637 = vpop.xlane.xlu0 %636
  %v638 = vsel %vm78, %v458, 0.0
  %639 = vadd.xlane.f32.xlu0 %v638
  %v640 = vpop.xlane.xlu0 %639
  %v641 = vsel %vm78, %v459, 0.0
  %642 = vadd.xlane.f32.xlu0 %v641
  %v643 = vpop.xlane.xlu0 %642
  %v644 = vsel %vm78, %v460, 0.0
  %645 = vadd.xlane.f32.xlu0 %v644
  %v646 = vpop.xlane.xlu0 %645
  %v647 = vsel %vm78, %v461, 0.0
  %648 = vadd.xlane.f32.xlu0 %v647
  %v649 = vpop.xlane.xlu0 %648
  %v650 = vsel %vm78, %v462, 0.0
  %651 = vadd.xlane.f32.xlu0 %v650
  %v652 = vpop.xlane.xlu0 %651
  %v653 = vsel %vm78, %v463, 0.0
  %654 = vadd.xlane.f32.xlu0 %v653
  %v655 = vpop.xlane.xlu0 %654
  %v656 = vmul.f32 %v466, %v271
  %v657 = vmul.f32 %v469, %v271
  %v658 = vmul.f32 %v472, %v271
  %v659 = vmul.f32 %v475, %v271
  %v660 = vmul.f32 %v478, %v271
  %v661 = vmul.f32 %v481, %v271
  %v662 = vmul.f32 %v484, %v271
  %v663 = vmul.f32 %v487, %v271
  %v664 = vmul.f32 %v490, %v271
  %v665 = vmul.f32 %v493, %v271
  %v666 = vmul.f32 %v496, %v271
  %v667 = vmul.f32 %v499, %v271
  %v668 = vmul.f32 %v502, %v271
  %v669 = vmul.f32 %v505, %v271
  %v670 = vmul.f32 %v508, %v271
  %v671 = vmul.f32 %v511, %v271
  %v672 = vmul.f32 %v514, %v271
  %v673 = vmul.f32 %v517, %v271
  %v674 = vmul.f32 %v520, %v271
  %v675 = vmul.f32 %v523, %v271
  %v676 = vmul.f32 %v526, %v271
  %v677 = vmul.f32 %v529, %v271
  %v678 = vmul.f32 %v532, %v271
  %v679 = vmul.f32 %v535, %v271
  %v680 = vmul.f32 %v538, %v271
  %v681 = vmul.f32 %v541, %v271
  %v682 = vmul.f32 %v544, %v271
  %v683 = vmul.f32 %v547, %v271
  %v684 = vmul.f32 %v550, %v271
  %v685 = vmul.f32 %v553, %v271
  %v686 = vmul.f32 %v556, %v271
  %v687 = vmul.f32 %v559, %v271
  %v688 = vmul.f32 %v562, %v271
  %v689 = vmul.f32 %v565, %v271
  %v690 = vmul.f32 %v568, %v271
  %v691 = vmul.f32 %v571, %v271
  %v692 = vmul.f32 %v574, %v271
  %v693 = vmul.f32 %v577, %v271
  %v694 = vmul.f32 %v580, %v271
  %v695 = vmul.f32 %v583, %v271
  %v696 = vmul.f32 %v586, %v271
  %v697 = vmul.f32 %v589, %v271
  %v698 = vmul.f32 %v592, %v271
  %v699 = vmul.f32 %v595, %v271
  %v700 = vmul.f32 %v598, %v271
  %v701 = vmul.f32 %v601, %v271
  %v702 = vmul.f32 %v604, %v271
  %v703 = vmul.f32 %v607, %v271
  %v704 = vmul.f32 %v610, %v271
  %v705 = vmul.f32 %v613, %v271
  %v706 = vmul.f32 %v616, %v271
  %v707 = vmul.f32 %v619, %v271
  %v708 = vmul.f32 %v622, %v271
  %v709 = vmul.f32 %v625, %v271
  %v710 = vmul.f32 %v628, %v271
  %v711 = vmul.f32 %v631, %v271
  %v712 = vmul.f32 %v634, %v271
  %v713 = vmul.f32 %v637, %v271
  %v714 = vmul.f32 %v640, %v271
  %v715 = vmul.f32 %v643, %v271
  %v716 = vmul.f32 %v646, %v271
  %v717 = vmul.f32 %v649, %v271
  %v718 = vmul.f32 %v652, %v271
  %v719 = vmul.f32 %v655, %v271
  %v720 = vadd.f32 %v656, 1e-05
  %v721 = vadd.f32 %v657, 1e-05
  %v722 = vadd.f32 %v658, 1e-05
  %v723 = vadd.f32 %v659, 1e-05
  %v724 = vadd.f32 %v660, 1e-05
  %v725 = vadd.f32 %v661, 1e-05
  %v726 = vadd.f32 %v662, 1e-05
  %v727 = vadd.f32 %v663, 1e-05
  %v728 = vadd.f32 %v664, 1e-05
  %v729 = vadd.f32 %v665, 1e-05
  %v730 = vadd.f32 %v666, 1e-05
  %v731 = vadd.f32 %v667, 1e-05
  %v732 = vadd.f32 %v668, 1e-05
  %v733 = vadd.f32 %v669, 1e-05
  %v734 = vadd.f32 %v670, 1e-05
  %v735 = vadd.f32 %v671, 1e-05
  %v736 = vadd.f32 %v672, 1e-05
  %v737 = vadd.f32 %v673, 1e-05
  %v738 = vadd.f32 %v674, 1e-05
  %v739 = vadd.f32 %v675, 1e-05
  %v740 = vadd.f32 %v676, 1e-05
  %v741 = vadd.f32 %v677, 1e-05
  %v742 = vadd.f32 %v678, 1e-05
  %v743 = vadd.f32 %v679, 1e-05
  %v744 = vadd.f32 %v680, 1e-05
  %v745 = vadd.f32 %v681, 1e-05
  %v746 = vadd.f32 %v682, 1e-05
  %v747 = vadd.f32 %v683, 1e-05
  %v748 = vadd.f32 %v684, 1e-05
  %v749 = vadd.f32 %v685, 1e-05
  %v750 = vadd.f32 %v686, 1e-05
  %v751 = vadd.f32 %v687, 1e-05
  %v752 = vadd.f32 %v688, 1e-05
  %v753 = vadd.f32 %v689, 1e-05
  %v754 = vadd.f32 %v690, 1e-05
  %v755 = vadd.f32 %v691, 1e-05
  %v756 = vadd.f32 %v692, 1e-05
  %v757 = vadd.f32 %v693, 1e-05
  %v758 = vadd.f32 %v694, 1e-05
  %v759 = vadd.f32 %v695, 1e-05
  %v760 = vadd.f32 %v696, 1e-05
  %v761 = vadd.f32 %v697, 1e-05
  %v762 = vadd.f32 %v698, 1e-05
  %v763 = vadd.f32 %v699, 1e-05
  %v764 = vadd.f32 %v700, 1e-05
  %v765 = vadd.f32 %v701, 1e-05
  %v766 = vadd.f32 %v702, 1e-05
  %v767 = vadd.f32 %v703, 1e-05
  %v768 = vadd.f32 %v704, 1e-05
  %v769 = vadd.f32 %v705, 1e-05
  %v770 = vadd.f32 %v706, 1e-05
  %v771 = vadd.f32 %v707, 1e-05
  %v772 = vadd.f32 %v708, 1e-05
  %v773 = vadd.f32 %v709, 1e-05
  %v774 = vadd.f32 %v710, 1e-05
  %v775 = vadd.f32 %v711, 1e-05
  %v776 = vadd.f32 %v712, 1e-05
  %v777 = vadd.f32 %v713, 1e-05
  %v778 = vadd.f32 %v714, 1e-05
  %v779 = vadd.f32 %v715, 1e-05
  %v780 = vadd.f32 %v716, 1e-05
  %v781 = vadd.f32 %v717, 1e-05
  %v782 = vadd.f32 %v718, 1e-05
  %v783 = vadd.f32 %v719, 1e-05
  %v784 = vrsqrt.pop %v720
  %v785 = vrsqrt.pop %v721
  %v786 = vrsqrt.pop %v722
  %v787 = vrsqrt.pop %v723
  %v788 = vrsqrt.pop %v724
  %v789 = vrsqrt.pop %v725
  %v790 = vrsqrt.pop %v726
  %v791 = vrsqrt.pop %v727
  %v792 = vrsqrt.pop %v728
  %v793 = vrsqrt.pop %v729
  %v794 = vrsqrt.pop %v730
  %v795 = vrsqrt.pop %v731
  %v796 = vrsqrt.pop %v732
  %v797 = vrsqrt.pop %v733
  %v798 = vrsqrt.pop %v734
  %v799 = vrsqrt.pop %v735
  %v800 = vrsqrt.pop %v736
  %v801 = vrsqrt.pop %v737
  %v802 = vrsqrt.pop %v738
  %v803 = vrsqrt.pop %v739
  %v804 = vrsqrt.pop %v740
  %v805 = vrsqrt.pop %v741
  %v806 = vrsqrt.pop %v742
  %v807 = vrsqrt.pop %v743
  %v808 = vrsqrt.pop %v744
  %v809 = vrsqrt.pop %v745
  %v810 = vrsqrt.pop %v746
  %v811 = vrsqrt.pop %v747
  %v812 = vrsqrt.pop %v748
  %v813 = vrsqrt.pop %v749
  %v814 = vrsqrt.pop %v750
  %v815 = vrsqrt.pop %v751
  %v816 = vrsqrt.pop %v752
  %v817 = vrsqrt.pop %v753
  %v818 = vrsqrt.pop %v754
  %v819 = vrsqrt.pop %v755
  %v820 = vrsqrt.pop %v756
  %v821 = vrsqrt.pop %v757
  %v822 = vrsqrt.pop %v758
  %v823 = vrsqrt.pop %v759
  %v824 = vrsqrt.pop %v760
  %v825 = vrsqrt.pop %v761
  %v826 = vrsqrt.pop %v762
  %v827 = vrsqrt.pop %v763
  %v828 = vrsqrt.pop %v764
  %v829 = vrsqrt.pop %v765
  %v830 = vrsqrt.pop %v766
  %v831 = vrsqrt.pop %v767
  %v832 = vrsqrt.pop %v768
  %v833 = vrsqrt.pop %v769
  %v834 = vrsqrt.pop %v770
  %v835 = vrsqrt.pop %v771
  %v836 = vrsqrt.pop %v772
  %v837 = vrsqrt.pop %v773
  %v838 = vrsqrt.pop %v774
  %v839 = vrsqrt.pop %v775
  %v840 = vrsqrt.pop %v776
  %v841 = vrsqrt.pop %v777
  %v842 = vrsqrt.pop %v778
  %v843 = vrsqrt.pop %v779
  %v844 = vrsqrt.pop %v780
  %v845 = vrsqrt.pop %v781
  %v846 = vrsqrt.pop %v782
  %v847 = vrsqrt.pop %v783
  %v848 = vmul.f32 %v336, %v784
  %v849 = vmul.f32 %v337, %v785
  %v850 = vmul.f32 %v338, %v786
  %v851 = vmul.f32 %v339, %v787
  %v852 = vmul.f32 %v340, %v788
  %v853 = vmul.f32 %v341, %v789
  %v854 = vmul.f32 %v342, %v790
  %v855 = vmul.f32 %v343, %v791
  %v856 = vmul.f32 %v344, %v792
  %v857 = vmul.f32 %v345, %v793
  %v858 = vmul.f32 %v346, %v794
  %v859 = vmul.f32 %v347, %v795
  %v860 = vmul.f32 %v348, %v796
  %v861 = vmul.f32 %v349, %v797
  %v862 = vmul.f32 %v350, %v798
  %v863 = vmul.f32 %v351, %v799
  %v864 = vmul.f32 %v352, %v800
  %v865 = vmul.f32 %v353, %v801
  %v866 = vmul.f32 %v354, %v802
  %v867 = vmul.f32 %v355, %v803
  %v868 = vmul.f32 %v356, %v804
  %v869 = vmul.f32 %v357, %v805
  %v870 = vmul.f32 %v358, %v806
  %v871 = vmul.f32 %v359, %v807
  %v872 = vmul.f32 %v360, %v808
  %v873 = vmul.f32 %v361, %v809
  %v874 = vmul.f32 %v362, %v810
  %v875 = vmul.f32 %v363, %v811
  %v876 = vmul.f32 %v364, %v812
  %v877 = vmul.f32 %v365, %v813
  %v878 = vmul.f32 %v366, %v814
  %v879 = vmul.f32 %v367, %v815
  %v880 = vmul.f32 %v368, %v816
  %v881 = vmul.f32 %v369, %v817
  %v882 = vmul.f32 %v370, %v818
  %v883 = vmul.f32 %v371, %v819
  %v884 = vmul.f32 %v372, %v820
  %v885 = vmul.f32 %v373, %v821
  %v886 = vmul.f32 %v374, %v822
  %v887 = vmul.f32 %v375, %v823
  %v888 = vmul.f32 %v376, %v824
  %v889 = vmul.f32 %v377, %v825
  %v890 = vmul.f32 %v378, %v826
  %v891 = vmul.f32 %v379, %v827
  %v892 = vmul.f32 %v380, %v828
  %v893 = vmul.f32 %v381, %v829
  %v894 = vmul.f32 %v382, %v830
  %v895 = vmul.f32 %v383, %v831
  %v896 = vmul.f32 %v384, %v832
  %v897 = vmul.f32 %v385, %v833
  %v898 = vmul.f32 %v386, %v834
  %v899 = vmul.f32 %v387, %v835
  %v900 = vmul.f32 %v388, %v836
  %v901 = vmul.f32 %v389, %v837
  %v902 = vmul.f32 %v390, %v838
  %v903 = vmul.f32 %v391, %v839
  %v904 = vmul.f32 %v392, %v840
  %v905 = vmul.f32 %v393, %v841
  %v906 = vmul.f32 %v394, %v842
  %v907 = vmul.f32 %v395, %v843
  %v908 = vmul.f32 %v396, %v844
  %v909 = vmul.f32 %v397, %v845
  %v910 = vmul.f32 %v398, %v846
  %v911 = vmul.f32 %v399, %v847
  %v912 = vld [vmem:[%s1] sm:$0x1]
  %v914 = vlaneseq
  %v915 = vshrl.u32 %v914, 7
  %v916 = vsub.s32 0, %v915
  %v917 = vrot.slane %v912, %v916
  %v919 = vmul.f32 %v848, %v917
  %v920 = vmul.f32 %v849, %v917
  %v921 = vmul.f32 %v850, %v917
  %v922 = vmul.f32 %v851, %v917
  %v923 = vmul.f32 %v852, %v917
  %v924 = vmul.f32 %v853, %v917
  %v925 = vmul.f32 %v854, %v917
  %v926 = vmul.f32 %v855, %v917
  %v927 = vmul.f32 %v856, %v917
  %v928 = vmul.f32 %v857, %v917
  %v929 = vmul.f32 %v858, %v917
  %v930 = vmul.f32 %v859, %v917
  %v931 = vmul.f32 %v860, %v917
  %v932 = vmul.f32 %v861, %v917
  %v933 = vmul.f32 %v862, %v917
  %v934 = vmul.f32 %v863, %v917
  %v935 = vmul.f32 %v864, %v917
  %v936 = vmul.f32 %v865, %v917
  %v937 = vmul.f32 %v866, %v917
  %v938 = vmul.f32 %v867, %v917
  %v939 = vmul.f32 %v868, %v917
  %v940 = vmul.f32 %v869, %v917
  %v941 = vmul.f32 %v870, %v917
  %v942 = vmul.f32 %v871, %v917
  %v943 = vmul.f32 %v872, %v917
  %v944 = vmul.f32 %v873, %v917
  %v945 = vmul.f32 %v874, %v917
  %v946 = vmul.f32 %v875, %v917
  %v947 = vmul.f32 %v876, %v917
  %v948 = vmul.f32 %v877, %v917
  %v949 = vmul.f32 %v878, %v917
  %v950 = vmul.f32 %v879, %v917
  %v951 = vmul.f32 %v880, %v917
  %v952 = vmul.f32 %v881, %v917
  %v953 = vmul.f32 %v882, %v917
  %v954 = vmul.f32 %v883, %v917
  %v955 = vmul.f32 %v884, %v917
  %v956 = vmul.f32 %v885, %v917
  %v957 = vmul.f32 %v886, %v917
  %v958 = vmul.f32 %v887, %v917
  %v959 = vmul.f32 %v888, %v917
  %v960 = vmul.f32 %v889, %v917
  %v961 = vmul.f32 %v890, %v917
  %v962 = vmul.f32 %v891, %v917
  %v963 = vmul.f32 %v892, %v917
  %v964 = vmul.f32 %v893, %v917
  %v965 = vmul.f32 %v894, %v917
  %v966 = vmul.f32 %v895, %v917
  %v967 = vmul.f32 %v896, %v917
  %v968 = vmul.f32 %v897, %v917
  %v969 = vmul.f32 %v898, %v917
  %v970 = vmul.f32 %v899, %v917
  %v971 = vmul.f32 %v900, %v917
  %v972 = vmul.f32 %v901, %v917
  %v973 = vmul.f32 %v902, %v917
  %v974 = vmul.f32 %v903, %v917
  %v975 = vmul.f32 %v904, %v917
  %v976 = vmul.f32 %v905, %v917
  %v977 = vmul.f32 %v906, %v917
  %v978 = vmul.f32 %v907, %v917
  %v979 = vmul.f32 %v908, %v917
  %v980 = vmul.f32 %v909, %v917
  %v981 = vmul.f32 %v910, %v917
  %v982 = vmul.f32 %v911, %v917
  %v983 = vld [vmem:[%s2] sm:$0x1]
  %v985 = vlaneseq
  %v986 = vshrl.u32 %v985, 7
  %v987 = vsub.s32 0, %v986
  %v988 = vrot.slane %v983, %v987
  %v990 = vadd.f32 %v919, %v988
  %v991 = vadd.f32 %v920, %v988
  %v992 = vadd.f32 %v921, %v988
  %v993 = vadd.f32 %v922, %v988
  %v994 = vadd.f32 %v923, %v988
  %v995 = vadd.f32 %v924, %v988
  %v996 = vadd.f32 %v925, %v988
  %v997 = vadd.f32 %v926, %v988
  %v998 = vadd.f32 %v927, %v988
  %v999 = vadd.f32 %v928, %v988
  %v1000 = vadd.f32 %v929, %v988
  %v1001 = vadd.f32 %v930, %v988
  %v1002 = vadd.f32 %v931, %v988
  %v1003 = vadd.f32 %v932, %v988
  %v1004 = vadd.f32 %v933, %v988
  %v1005 = vadd.f32 %v934, %v988
  %v1006 = vadd.f32 %v935, %v988
  %v1007 = vadd.f32 %v936, %v988
  %v1008 = vadd.f32 %v937, %v988
  %v1009 = vadd.f32 %v938, %v988
  %v1010 = vadd.f32 %v939, %v988
  %v1011 = vadd.f32 %v940, %v988
  %v1012 = vadd.f32 %v941, %v988
  %v1013 = vadd.f32 %v942, %v988
  %v1014 = vadd.f32 %v943, %v988
  %v1015 = vadd.f32 %v944, %v988
  %v1016 = vadd.f32 %v945, %v988
  %v1017 = vadd.f32 %v946, %v988
  %v1018 = vadd.f32 %v947, %v988
  %v1019 = vadd.f32 %v948, %v988
  %v1020 = vadd.f32 %v949, %v988
  %v1021 = vadd.f32 %v950, %v988
  %v1022 = vadd.f32 %v951, %v988
  %v1023 = vadd.f32 %v952, %v988
  %v1024 = vadd.f32 %v953, %v988
  %v1025 = vadd.f32 %v954, %v988
  %v1026 = vadd.f32 %v955, %v988
  %v1027 = vadd.f32 %v956, %v988
  %v1028 = vadd.f32 %v957, %v988
  %v1029 = vadd.f32 %v958, %v988
  %v1030 = vadd.f32 %v959, %v988
  %v1031 = vadd.f32 %v960, %v988
  %v1032 = vadd.f32 %v961, %v988
  %v1033 = vadd.f32 %v962, %v988
  %v1034 = vadd.f32 %v963, %v988
  %v1035 = vadd.f32 %v964, %v988
  %v1036 = vadd.f32 %v965, %v988
  %v1037 = vadd.f32 %v966, %v988
  %v1038 = vadd.f32 %v967, %v988
  %v1039 = vadd.f32 %v968, %v988
  %v1040 = vadd.f32 %v969, %v988
  %v1041 = vadd.f32 %v970, %v988
  %v1042 = vadd.f32 %v971, %v988
  %v1043 = vadd.f32 %v972, %v988
  %v1044 = vadd.f32 %v973, %v988
  %v1045 = vadd.f32 %v974, %v988
  %v1046 = vadd.f32 %v975, %v988
  %v1047 = vadd.f32 %v976, %v988
  %v1048 = vadd.f32 %v977, %v988
  %v1049 = vadd.f32 %v978, %v988
  %v1050 = vadd.f32 %v979, %v988
  %v1051 = vadd.f32 %v980, %v988
  %v1052 = vadd.f32 %v981, %v988
  %v1053 = vadd.f32 %v982, %v988
  %1054 = vst.msk [vmem:[%s3] sm:$0xff] %vm78, %v990
  %1055 = vst.msk [vmem:[%s3 + $0x8] sm:$0xff] %vm78, %v991
  %1056 = vst.msk [vmem:[%s3 + $0x10] sm:$0xff] %vm78, %v992
  %1057 = vst.msk [vmem:[%s3 + $0x18] sm:$0xff] %vm78, %v993
  %1058 = vst.msk [vmem:[%s3 + $0x20] sm:$0xff] %vm78, %v994
  %1059 = vst.msk [vmem:[%s3 + $0x28] sm:$0xff] %vm78, %v995
  %1060 = vst.msk [vmem:[%s3 + $0x30] sm:$0xff] %vm78, %v996
  %1061 = vst.msk [vmem:[%s3 + $0x38] sm:$0xff] %vm78, %v997
  %1062 = vst.msk [vmem:[%s3 + $0x40] sm:$0xff] %vm78, %v998
  %1063 = vst.msk [vmem:[%s3 + $0x48] sm:$0xff] %vm78, %v999
  %1064 = vst.msk [vmem:[%s3 + $0x50] sm:$0xff] %vm78, %v1000
  %1065 = vst.msk [vmem:[%s3 + $0x58] sm:$0xff] %vm78, %v1001
  %1066 = vst.msk [vmem:[%s3 + $0x60] sm:$0xff] %vm78, %v1002
  %1067 = vst.msk [vmem:[%s3 + $0x68] sm:$0xff] %vm78, %v1003
  %1068 = vst.msk [vmem:[%s3 + $0x70] sm:$0xff] %vm78, %v1004
  %1069 = vst.msk [vmem:[%s3 + $0x78] sm:$0xff] %vm78, %v1005
  %1070 = vst.msk [vmem:[%s3 + $0x80] sm:$0xff] %vm78, %v1006
  %1071 = vst.msk [vmem:[%s3 + $0x88] sm:$0xff] %vm78, %v1007
  %1072 = vst.msk [vmem:[%s3 + $0x90] sm:$0xff] %vm78, %v1008
  %1073 = vst.msk [vmem:[%s3 + $0x98] sm:$0xff] %vm78, %v1009
  %1074 = vst.msk [vmem:[%s3 + $0xa0] sm:$0xff] %vm78, %v1010
  %1075 = vst.msk [vmem:[%s3 + $0xa8] sm:$0xff] %vm78, %v1011
  %1076 = vst.msk [vmem:[%s3 + $0xb0] sm:$0xff] %vm78, %v1012
  %1077 = vst.msk [vmem:[%s3 + $0xb8] sm:$0xff] %vm78, %v1013
  %1078 = vst.msk [vmem:[%s3 + $0xc0] sm:$0xff] %vm78, %v1014
  %1079 = vst.msk [vmem:[%s3 + $0xc8] sm:$0xff] %vm78, %v1015
  %1080 = vst.msk [vmem:[%s3 + $0xd0] sm:$0xff] %vm78, %v1016
  %1081 = vst.msk [vmem:[%s3 + $0xd8] sm:$0xff] %vm78, %v1017
  %1082 = vst.msk [vmem:[%s3 + $0xe0] sm:$0xff] %vm78, %v1018
  %1083 = vst.msk [vmem:[%s3 + $0xe8] sm:$0xff] %vm78, %v1019
  %1084 = vst.msk [vmem:[%s3 + $0xf0] sm:$0xff] %vm78, %v1020
  %1085 = vst.msk [vmem:[%s3 + $0xf8] sm:$0xff] %vm78, %v1021
  %1086 = vst.msk [vmem:[%s3 + $0x100] sm:$0xff] %vm78, %v1022
  %1087 = vst.msk [vmem:[%s3 + $0x108] sm:$0xff] %vm78, %v1023
  %1088 = vst.msk [vmem:[%s3 + $0x110] sm:$0xff] %vm78, %v1024
  %1089 = vst.msk [vmem:[%s3 + $0x118] sm:$0xff] %vm78, %v1025
  %1090 = vst.msk [vmem:[%s3 + $0x120] sm:$0xff] %vm78, %v1026
  %1091 = vst.msk [vmem:[%s3 + $0x128] sm:$0xff] %vm78, %v1027
  %1092 = vst.msk [vmem:[%s3 + $0x130] sm:$0xff] %vm78, %v1028
  %1093 = vst.msk [vmem:[%s3 + $0x138] sm:$0xff] %vm78, %v1029
  %1094 = vst.msk [vmem:[%s3 + $0x140] sm:$0xff] %vm78, %v1030
  %1095 = vst.msk [vmem:[%s3 + $0x148] sm:$0xff] %vm78, %v1031
  %1096 = vst.msk [vmem:[%s3 + $0x150] sm:$0xff] %vm78, %v1032
  %1097 = vst.msk [vmem:[%s3 + $0x158] sm:$0xff] %vm78, %v1033
  %1098 = vst.msk [vmem:[%s3 + $0x160] sm:$0xff] %vm78, %v1034
  %1099 = vst.msk [vmem:[%s3 + $0x168] sm:$0xff] %vm78, %v1035
  %1100 = vst.msk [vmem:[%s3 + $0x170] sm:$0xff] %vm78, %v1036
  %1101 = vst.msk [vmem:[%s3 + $0x178] sm:$0xff] %vm78, %v1037
  %1102 = vst.msk [vmem:[%s3 + $0x180] sm:$0xff] %vm78, %v1038
  %1103 = vst.msk [vmem:[%s3 + $0x188] sm:$0xff] %vm78, %v1039
  %1104 = vst.msk [vmem:[%s3 + $0x190] sm:$0xff] %vm78, %v1040
  %1105 = vst.msk [vmem:[%s3 + $0x198] sm:$0xff] %vm78, %v1041
  %1106 = vst.msk [vmem:[%s3 + $0x1a0] sm:$0xff] %vm78, %v1042
  %1107 = vst.msk [vmem:[%s3 + $0x1a8] sm:$0xff] %vm78, %v1043
  %1108 = vst.msk [vmem:[%s3 + $0x1b0] sm:$0xff] %vm78, %v1044
  %1109 = vst.msk [vmem:[%s3 + $0x1b8] sm:$0xff] %vm78, %v1045
  %1110 = vst.msk [vmem:[%s3 + $0x1c0] sm:$0xff] %vm78, %v1046
  %1111 = vst.msk [vmem:[%s3 + $0x1c8] sm:$0xff] %vm78, %v1047
  %1112 = vst.msk [vmem:[%s3 + $0x1d0] sm:$0xff] %vm78, %v1048
  %1113 = vst.msk [vmem:[%s3 + $0x1d8] sm:$0xff] %vm78, %v1049
  %1114 = vst.msk [vmem:[%s3 + $0x1e0] sm:$0xff] %vm78, %v1050
  %1115 = vst.msk [vmem:[%s3 + $0x1e8] sm:$0xff] %vm78, %v1051
  %1116 = vst.msk [vmem:[%s3 + $0x1f0] sm:$0xff] %vm78, %v1052
  %1117 = vst.msk [vmem:[%s3 + $0x1f8] sm:$0xff] %vm78, %v1053
  // Predicated region
  $region14: #{fwd_eval.27} parent=0 // pred_check
    _
  $region15: #{fwd_eval.27} parent=0 // pred_check_branch
    %1119 = sbr.rel (0) target = $region17
  $region16: #{fwd_eval.27} parent=0 // pred_region
    _
  $region17: #{fwd_eval.27} parent=0 // pred_fallthru
    _
  // Predicated region
  $region18: #{fwd_eval.27} parent=0 // pred_check
    _
  $region19: #{fwd_eval.27} parent=0 // pred_check_branch
    %1121 = sbr.rel (0) target = $region21
  $region20: #{fwd_eval.27} parent=0 // pred_region
    _
  $region21: #{fwd_eval.27} parent=0 // pred_fallthru
    _

// kernel: fwd_eval.29
$region0: #{fwd_eval.29}
  #allocation0 [shape = 'u32[]', space=smem, size = 0x4, offset = 0x4, fixed_abs, tag = 'smem constant byte address 0x4 - core index']
  #allocation1 [shape = 'u32[144,128]{1,0:T(1,128)}', space=vmem, size = 0x12000, scoped, tag = 'internal scratch']
  %s0 = inlined_call_operand.vmem [shape: f32[8,32], index: 0, kind: input, shape index: {}]
  %s1 = inlined_call_operand.vmem [shape: f32[1,32], index: 1, kind: input, shape index: {}]
  %s2 = inlined_call_operand.vmem [shape: f32[1,32], index: 2, kind: input, shape index: {}]
  %s3 = inlined_call_operand.vmem [shape: f32[8,32], index: 3, kind: output, shape index: {}]
  %s4 = sld [smem:[#allocation0]]
  $region22: #{fwd_eval.29} parent=0
    _
  %s6 = ssub.s32 1, %s4
  %s7 = scalar_select 0, %s6, %s4
  // Predicated region
  $region2: #{fwd_eval.29} parent=0 // pred_check
    _
  $region3: #{fwd_eval.29} parent=0 // pred_check_branch
    %9 = sbr.rel (0) target = $region5
  $region4: #{fwd_eval.29} parent=0 // pred_region
    _
  $region5: #{fwd_eval.29} parent=0 // pred_fallthru
    _
  // Predicated region
  $region6: #{fwd_eval.29} parent=0 // pred_check
    _
  $region7: #{fwd_eval.29} parent=0 // pred_check_branch
    %11 = sbr.rel (0) target = $region9
  $region8: #{fwd_eval.29} parent=0 // pred_region
    _
  $region9: #{fwd_eval.29} parent=0 // pred_fallthru
    _
  // Predicated region
  $region10: #{fwd_eval.29} parent=0 // pred_check
    _
  $region11: #{fwd_eval.29} parent=0 // pred_check_branch
    %13 = sbr.rel (0) target = $region13
  $region12: #{fwd_eval.29} parent=0 // pred_region
    _
  $region13: #{fwd_eval.29} parent=0 // pred_fallthru
    _
  %v14 = vld [vmem:[%s0] sm:$0xff]
  %vm15 = vcmask 261120
  %v16 = vsel %vm15, %v14, 0.0
  %17 = vadd.xlane.f32.xlu0 %v16
  %v18 = vpop.xlane.xlu0 %17
  %v19 = vrcp.pop 32.0
  %v20 = vmul.f32 %v18, %v19
  %v21 = vsub.f32 %v14, %v20
  %v22 = vmul.f32 %v21, %v21
  %v23 = vsel %vm15, %v22, 0.0
  %24 = vadd.xlane.f32.xlu0 %v23
  %v25 = vpop.xlane.xlu0 %24
  %v26 = vmul.f32 %v25, %v19
  %v27 = vadd.f32 %v26, 1e-05
  %v28 = vrsqrt.pop %v27
  %v29 = vmul.f32 %v21, %v28
  %v30 = vld [vmem:[%s1] sm:$0x1]
  %v32 = vlaneseq
  %v33 = vshrl.u32 %v32, 7
  %v34 = vsub.s32 0, %v33
  %v35 = vrot.slane %v30, %v34
  %v37 = vmul.f32 %v29, %v35
  %v38 = vld [vmem:[%s2] sm:$0x1]
  %v40 = vlaneseq
  %v41 = vshrl.u32 %v40, 7
  %v42 = vsub.s32 0, %v41
  %v43 = vrot.slane %v38, %v42
  %v45 = vadd.f32 %v37, %v43
  %46 = vst.msk [vmem:[%s3] sm:$0xff] %vm15, %v45
  // Predicated region
  $region14: #{fwd_eval.29} parent=0 // pred_check
    _
  $region15: #{fwd_eval.29} parent=0 // pred_check_branch
    %48 = sbr.rel (0) target = $region17
  $region16: #{fwd_eval.29} parent=0 // pred_region
    _
  $region17: #{fwd_eval.29} parent=0 // pred_fallthru
    _
  // Predicated region
  $region18: #{fwd_eval.29} parent=0 // pred_check
    _
  $region19: #{fwd_eval.29} parent=0 // pred_check_branch
    %50 = sbr.rel (0) target = $region21
  $region20: #{fwd_eval.29} parent=0 // pred_region
    _
  $region21: #{fwd_eval.29} parent=0 // pred_fallthru
    _

// kernel: fwd_eval.30
$region0: #{fwd_eval.30}
  #allocation0 [shape = 'u32[]', space=smem, size = 0x4, offset = 0x4, fixed_abs, tag = 'smem constant byte address 0x4 - core index']
  #allocation1 [shape = 'u32[144,128]{1,0:T(1,128)}', space=vmem, size = 0x12000, scoped, tag = 'internal scratch']
  %s0 = inlined_call_operand.vmem [shape: f32[2,1,256,32], index: 0, kind: input, shape index: {}]
  %s1 = inlined_call_operand.vmem [shape: f32[2,1,4,32], index: 1, kind: input, shape index: {}]
  %s2 = inlined_call_operand.vmem [shape: f32[2,1,4,32], index: 2, kind: input, shape index: {}]
  %s3 = inlined_call_operand.vmem [shape: f32[2,1,256,32], index: 3, kind: output, shape index: {}]
  %s4 = sld [smem:[#allocation0]]
  $region45: #{fwd_eval.30} parent=0
    _
  %s6 = ssub.s32 1, %s4
  %s7 = scalar_select 0, %s6, %s4
  loop: start=0, step=1, limit=4
  $region2: #{fwd_eval.30} parent=0 // loop_pre_header
    _
  $region3: #{fwd_eval.30} parent=0 // loop_header
    %s9 = sphi 0, %s13
    %p10 = scmp.ge.s32.totalorder %s9, 4
    %s16 = sphi 0, %s28
    %s17 = sphi 0, %s24
    %s18 = sphi 0, %s16
    %s19 = sphi 0, %s17
    %s20 = sphi 0, %s18
    %s21 = sphi 0, %s19
    %s33 = sphi 0, %s35
    %s36 = sphi 0, %s33
    %s37 = sphi 0, %s36
    %s53 = sphi 0, %s37
    %s61 = sphi 0, %s63
    %s64 = sphi 0, %s61
    %s65 = sphi 0, %s64
    %s81 = sphi 0, %s65
    %s89 = sphi 0, %s91
    %s92 = sphi 0, %s89
    %s93 = sphi 0, %s92
    %s109 = sphi 0, %s93
    %s117 = sphi 0, %s119
    %s120 = sphi 0, %s117
    %s121 = sphi 0, %s120
    %s137 = sphi 0, %s121
  $region4: #{fwd_eval.30} parent=0 // loop_header_branch
    %12 = sbr.rel (%p10) target = $region8
  $region5: #{fwd_eval.30} parent=0 // loop_body
    %s14 = ssub.s32 %s9, 1
    %s15 = ssub.s32 %s9, 2
    %s22 = sadd.s32 1, %s17
    %p23 = scmp.ge.s32.totalorder %s22, 1
    %s24 = scalar_select %p23, 0, %s22
    %s25 = sadd.s32 1, %s16
    %s26 = scalar_select %p23, %s25, %s16
    %p27 = scmp.ge.s32.totalorder %s26, 2
    %s28 = scalar_select %p27, 0, %s26
    %s29 = ssub.s32 %s16, %s28
    %s30 = ssub.s32 %s17, %s24
    %s31 = sor.u32 %s29, %s30
    %p32 = scmp.eq.s32.totalorder %s31, 0
    %s34 = sadd.s32 %s33, 1
    %s35 = scalar_select %p32, %s33, %s34
    %p38 = pneg %p32
    %p39 = scmp.eq.s32.totalorder %s9, 1
    %p40 = por %p38, %p39
    %p41 = scmp.ne.s32.totalorder %s33, %s36
    %p42 = scmp.eq.s32.totalorder %s9, 0
    %p43 = por %p41, %p42
    %p44 = scmp.ne.s32.totalorder %s33, %s36
    %p45 = scmp.eq.s32.totalorder %s14, 1
    %p46 = por %p44, %p45
    %p47 = scmp.ne.s32.totalorder %s36, %s37
    %p48 = scmp.eq.s32.totalorder %s14, 0
    %p49 = por %p47, %p48
    %p50 = scmp.ne.s32.totalorder %s36, %s37
    %p51 = scmp.eq.s32.totalorder %s15, 1
    %p52 = por %p50, %p51
    %p54 = scmp.ne.s32.totalorder %s37, %s53
    %p55 = scmp.eq.s32.totalorder %s15, 0
    %p56 = por %p54, %p55
    %s57 = ssub.s32 %s16, %s28
    %s58 = ssub.s32 %s17, %s24
    %s59 = sor.u32 %s57, %s58
    %p60 = scmp.eq.s32.totalorder %s59, 0
    %s62 = sadd.s32 %s61, 1
    %s63 = scalar_select %p60, %s61, %s62
    %p66 = pneg %p60
    %p67 = scmp.eq.s32.totalorder %s9, 1
    %p68 = por %p66, %p67
    %p69 = scmp.ne.s32.totalorder %s61, %s64
    %p70 = scmp.eq.s32.totalorder %s9, 0
    %p71 = por %p69, %p70
    %p72 = scmp.ne.s32.totalorder %s61, %s64
    %p73 = scmp.eq.s32.totalorder %s14, 1
    %p74 = por %p72, %p73
    %p75 = scmp.ne.s32.totalorder %s64, %s65
    %p76 = scmp.eq.s32.totalorder %s14, 0
    %p77 = por %p75, %p76
    %p78 = scmp.ne.s32.totalorder %s64, %s65
    %p79 = scmp.eq.s32.totalorder %s15, 1
    %p80 = por %p78, %p79
    %p82 = scmp.ne.s32.totalorder %s65, %s81
    %p83 = scmp.eq.s32.totalorder %s15, 0
    %p84 = por %p82, %p83
    %s85 = ssub.s32 %s16, %s28
    %s86 = ssub.s32 %s17, %s24
    %s87 = sor.u32 %s85, %s86
    %p88 = scmp.eq.s32.totalorder %s87, 0
    %s90 = sadd.s32 %s89, 1
    %s91 = scalar_select %p88, %s89, %s90
    %p94 = pneg %p88
    %p95 = scmp.eq.s32.totalorder %s9, 1
    %p96 = por %p94, %p95
    %p97 = scmp.ne.s32.totalorder %s89, %s92
    %p98 = scmp.eq.s32.totalorder %s9, 0
    %p99 = por %p97, %p98
    %p100 = scmp.ne.s32.totalorder %s89, %s92
    %p101 = scmp.eq.s32.totalorder %s14, 1
    %p102 = por %p100, %p101
    %p103 = scmp.ne.s32.totalorder %s92, %s93
    %p104 = scmp.eq.s32.totalorder %s14, 0
    %p105 = por %p103, %p104
    %p106 = scmp.ne.s32.totalorder %s92, %s93
    %p107 = scmp.eq.s32.totalorder %s15, 1
    %p108 = por %p106, %p107
    %p110 = scmp.ne.s32.totalorder %s93, %s109
    %p111 = scmp.eq.s32.totalorder %s15, 0
    %p112 = por %p110, %p111
    %s113 = ssub.s32 %s16, %s28
    %s114 = ssub.s32 %s17, %s24
    %s115 = sor.u32 %s113, %s114
    %p116 = scmp.eq.s32.totalorder %s115, 0
    %s118 = sadd.s32 %s117, 1
    %s119 = scalar_select %p116, %s117, %s118
    %p122 = pneg %p116
    %p123 = scmp.eq.s32.totalorder %s9, 1
    %p124 = por %p122, %p123
    %p125 = scmp.ne.s32.totalorder %s117, %s120
    %p126 = scmp.eq.s32.totalorder %s9, 0
    %p127 = por %p125, %p126
    %p128 = scmp.ne.s32.totalorder %s117, %s120
    %p129 = scmp.eq.s32.totalorder %s14, 1
    %p130 = por %p128, %p129
    %p131 = scmp.ne.s32.totalorder %s120, %s121
    %p132 = scmp.eq.s32.totalorder %s14, 0
    %p133 = por %p131, %p132
    %p134 = scmp.ne.s32.totalorder %s120, %s121
    %p135 = scmp.eq.s32.totalorder %s15, 1
    %p136 = por %p134, %p135
    %p138 = scmp.ne.s32.totalorder %s121, %s137
    %p139 = scmp.eq.s32.totalorder %s15, 0
    %p140 = por %p138, %p139
    %p141 = scmp.le.s32.totalorder 1, %s9
    %p142 = scmp.lt.s32.totalorder %s9, 3
    %p143 = pnand %p141, %p142
    %p144 = pneg %p143
    // Predicated region
    $region9: #{fwd_eval.30} parent=5 // pred_check
      _
    $region10: #{fwd_eval.30} parent=5 // pred_check_branch
      %146 = sbr.rel (%p143) target = $region12
    $region11: #{fwd_eval.30} parent=5 // pred_region
      %s147 = ssub.s32 %s9, 1
    $region12: #{fwd_eval.30} parent=5 // pred_fallthru
      _
    %p148 = scmp.lt.s32.totalorder %s9, 2
    // Predicated region
    $region13: #{fwd_eval.30} parent=5 // pred_check
      %p149 = pneg %p148
    $region14: #{fwd_eval.30} parent=5 // pred_check_branch
      %151 = sbr.rel (%p149) target = $region16
    $region15: #{fwd_eval.30} parent=5 // pred_region
      // Predicated region
      $region17: #{fwd_eval.30} parent=15 // pred_check
        %p152 = pneg %p43
      $region18: #{fwd_eval.30} parent=15 // pred_check_branch
        %154 = sbr.rel (%p152) target = $region20
      $region19: #{fwd_eval.30} parent=15 // pred_region
        %p155 = scmp.lt.s32.totalorder %s16, 1
        %s156 = scalar_select %p155, %s16, 1
        %p157 = scmp.lt.s32.totalorder %s17, 0
        %s158 = scalar_select %p157, %s17, 0
        %s159 = smul.addr %s158, 32
        %s160 = smul.addr %s156, 32
        %s161 = sadd.s32 %s159, %s160
        %s162 = smul.addr %s161, 8
        %s163 = scalar_lea.vmem %s0, %s162
      $region20: #{fwd_eval.30} parent=15 // pred_fallthru
        _
      // Predicated region
      $region21: #{fwd_eval.30} parent=15 // pred_check
        %p164 = pneg %p71
      $region22: #{fwd_eval.30} parent=15 // pred_check_branch
        %166 = sbr.rel (%p164) target = $region24
      $region23: #{fwd_eval.30} parent=15 // pred_region
        %p167 = scmp.lt.s32.totalorder %s16, 1
        %s168 = scalar_select %p167, %s16, 1
        %p169 = scmp.lt.s32.totalorder %s17, 0
        %s170 = scalar_select %p169, %s17, 0
        %s171 = sadd.s32 %s170, %s168
        %s172 = smul.addr %s171, 4
        %s173 = scalar_lea.vmem %s1, %s172
      $region24: #{fwd_eval.30} parent=15 // pred_fallthru
        _
      // Predicated region
      $region25: #{fwd_eval.30} parent=15 // pred_check
        %p174 = pneg %p99
      $region26: #{fwd_eval.30} parent=15 // pred_check_branch
        %176 = sbr.rel (%p174) target = $region28
      $region27: #{fwd_eval.30} parent=15 // pred_region
        %p177 = scmp.lt.s32.totalorder %s16, 1
        %s178 = scalar_select %p177, %s16, 1
        %p179 = scmp.lt.s32.totalorder %s17, 0
        %s180 = scalar_select %p179, %s17, 0
        %s181 = sadd.s32 %s180, %s178
        %s182 = smul.addr %s181, 4
        %s183 = scalar_lea.vmem %s2, %s182
      $region28: #{fwd_eval.30} parent=15 // pred_fallthru
        _
    $region16: #{fwd_eval.30} parent=5 // pred_fallthru
      _
    %p184 = scmp.le.s32.totalorder 1, %s9
    %p185 = scmp.lt.s32.totalorder %s9, 3
    %p186 = pnand %p184, %p185
    %p187 = pneg %p186
    // Predicated region
    $region29: #{fwd_eval.30} parent=5 // pred_check
      _
    $region30: #{fwd_eval.30} parent=5 // pred_check_branch
      %189 = sbr.rel (%p186) target = $region32
    $region31: #{fwd_eval.30} parent=5 // pred_region
      %s190 = ssub.s32 %s9, 1
      %p191 = scmp.lt.s32.totalorder %s18, 1
      %s192 = scalar_select %p191, %s18, 1
      %p193 = scmp.lt.s32.totalorder %s19, 0
      %s194 = scalar_select %p193, %s19, 0
      %s195 = smul.addr %s194, 32
      %s196 = smul.addr %s192, 32
      %s197 = sadd.s32 %s195, %s196
      %s198 = smul.addr %s197, 8
      %s199 = scalar_lea.vmem %s0, %s198
      %p200 = pneg %p49
      %p201 = pneg %p46
      %p202 = scmp.lt.s32.totalorder %s18, 1
      %s203 = scalar_select %p202, %s18, 1
      %p204 = scmp.lt.s32.totalorder %s19, 0
      %s205 = scalar_select %p204, %s19, 0
      %s206 = sadd.s32 %s205, %s203
      %s207 = smul.addr %s206, 4
      %s208 = scalar_lea.vmem %s1, %s207
      %p209 = pneg %p77
      %p210 = pneg %p74
      %p211 = scmp.lt.s32.totalorder %s18, 1
      %s212 = scalar_select %p211, %s18, 1
      %p213 = scmp.lt.s32.totalorder %s19, 0
      %s214 = scalar_select %p213, %s19, 0
      %s215 = sadd.s32 %s214, %s212
      %s216 = smul.addr %s215, 4
      %s217 = scalar_lea.vmem %s2, %s216
      %p218 = pneg %p105
      %p219 = pneg %p102
      %p220 = pneg %p133
      %p221 = pneg %p130
      %p222 = scmp.lt.s32.totalorder %s18, 1
      %s223 = scalar_select %p222, %s18, 1
      %p224 = scmp.lt.s32.totalorder %s19, 0
      %s225 = scalar_select %p224, %s19, 0
      %s226 = smul.addr %s225, 32
      %s227 = smul.addr %s223, 32
      %s228 = sadd.s32 %s226, %s227
      %s229 = smul.addr %s228, 8
      %s230 = scalar_lea.vmem %s3, %s229
      %p231 = scmp.lt.s32.totalorder %s18, 1
      %s232 = scalar_select %p231, %s18, 1
      %p233 = scmp.lt.s32.totalorder %s19, 0
      %s234 = scalar_select %p233, %s19, 0
      %s235 = smul.addr %s234, 32
      %s236 = smul.addr %s232, 32
      %s237 = sadd.s32 %s235, %s236
      %s238 = smul.addr %s237, 8
      %s239 = scalar_lea.vmem %s0, %s238
      %p240 = scmp.lt.s32.totalorder %s18, 1
      %s241 = scalar_select %p240, %s18, 1
      %p242 = scmp.lt.s32.totalorder %s19, 0
      %s243 = scalar_select %p242, %s19, 0
      %s244 = sadd.s32 %s243, %s241
      %s245 = smul.addr %s244, 4
      %s246 = scalar_lea.vmem %s1, %s245
      %p247 = scmp.lt.s32.totalorder %s18, 1
      %s248 = scalar_select %p247, %s18, 1
      %p249 = scmp.lt.s32.totalorder %s19, 0
      %s250 = scalar_select %p249, %s19, 0
      %s251 = sadd.s32 %s250, %s248
      %s252 = smul.addr %s251, 4
      %s253 = scalar_lea.vmem %s2, %s252
      %p254 = scmp.lt.s32.totalorder %s18, 1
      %s255 = scalar_select %p254, %s18, 1
      %p256 = scmp.lt.s32.totalorder %s19, 0
      %s257 = scalar_select %p256, %s19, 0
      %s258 = smul.addr %s257, 32
      %s259 = smul.addr %s255, 32
      %s260 = sadd.s32 %s258, %s259
      %s261 = smul.addr %s260, 8
      %s262 = scalar_lea.vmem %s3, %s261
      %v263 = vld [vmem:[%s239] sm:$0xff]
      %v264 = vld [vmem:[%s239 + $0x8] sm:$0xff]
      %v265 = vld [vmem:[%s239 + $0x10] sm:$0xff]
      %v266 = vld [vmem:[%s239 + $0x18] sm:$0xff]
      %v267 = vld [vmem:[%s239 + $0x20] sm:$0xff]
      %v268 = vld [vmem:[%s239 + $0x28] sm:$0xff]
      %v269 = vld [vmem:[%s239 + $0x30] sm:$0xff]
      %v270 = vld [vmem:[%s239 + $0x38] sm:$0xff]
      %v271 = vld [vmem:[%s239 + $0x40] sm:$0xff]
      %v272 = vld [vmem:[%s239 + $0x48] sm:$0xff]
      %v273 = vld [vmem:[%s239 + $0x50] sm:$0xff]
      %v274 = vld [vmem:[%s239 + $0x58] sm:$0xff]
      %v275 = vld [vmem:[%s239 + $0x60] sm:$0xff]
      %v276 = vld [vmem:[%s239 + $0x68] sm:$0xff]
      %v277 = vld [vmem:[%s239 + $0x70] sm:$0xff]
      %v278 = vld [vmem:[%s239 + $0x78] sm:$0xff]
      %v279 = vld [vmem:[%s239 + $0x80] sm:$0xff]
      %v280 = vld [vmem:[%s239 + $0x88] sm:$0xff]
      %v281 = vld [vmem:[%s239 + $0x90] sm:$0xff]
      %v282 = vld [vmem:[%s239 + $0x98] sm:$0xff]
      %v283 = vld [vmem:[%s239 + $0xa0] sm:$0xff]
      %v284 = vld [vmem:[%s239 + $0xa8] sm:$0xff]
      %v285 = vld [vmem:[%s239 + $0xb0] sm:$0xff]
      %v286 = vld [vmem:[%s239 + $0xb8] sm:$0xff]
      %v287 = vld [vmem:[%s239 + $0xc0] sm:$0xff]
      %v288 = vld [vmem:[%s239 + $0xc8] sm:$0xff]
      %v289 = vld [vmem:[%s239 + $0xd0] sm:$0xff]
      %v290 = vld [vmem:[%s239 + $0xd8] sm:$0xff]
      %v291 = vld [vmem:[%s239 + $0xe0] sm:$0xff]
      %v292 = vld [vmem:[%s239 + $0xe8] sm:$0xff]
      %v293 = vld [vmem:[%s239 + $0xf0] sm:$0xff]
      %v294 = vld [vmem:[%s239 + $0xf8] sm:$0xff]
      %v295 = vld [vmem:[%s246] sm:$0xf]
      %v296 = vld [vmem:[%s253] sm:$0xf]
      %vm297 = vcmask 261120
      %v299 = vsel %vm297, %v263, 0
      %v302 = vsel %vm297, %v264, 0
      %v305 = vsel %vm297, %v265, 0
      %v308 = vsel %vm297, %v266, 0
      %v311 = vsel %vm297, %v267, 0
      %v314 = vsel %vm297, %v268, 0
      %v317 = vsel %vm297, %v269, 0
      %v320 = vsel %vm297, %v270, 0
      %v323 = vsel %vm297, %v271, 0
      %v326 = vsel %vm297, %v272, 0
      %v329 = vsel %vm297, %v273, 0
      %v332 = vsel %vm297, %v274, 0
      %v335 = vsel %vm297, %v275, 0
      %v338 = vsel %vm297, %v276, 0
      %v341 = vsel %vm297, %v277, 0
      %v344 = vsel %vm297, %v278, 0
      %v347 = vsel %vm297, %v279, 0
      %v350 = vsel %vm297, %v280, 0
      %v353 = vsel %vm297, %v281, 0
      %v356 = vsel %vm297, %v282, 0
      %v359 = vsel %vm297, %v283, 0
      %v362 = vsel %vm297, %v284, 0
      %v365 = vsel %vm297, %v285, 0
      %v368 = vsel %vm297, %v286, 0
      %v371 = vsel %vm297, %v287, 0
      %v374 = vsel %vm297, %v288, 0
      %v377 = vsel %vm297, %v289, 0
      %v380 = vsel %vm297, %v290, 0
      %v383 = vsel %vm297, %v291, 0
      %v386 = vsel %vm297, %v292, 0
      %v389 = vsel %vm297, %v293, 0
      %v392 = vsel %vm297, %v294, 0
      %v395 = vsel %vm297, %v295, 0
      %397 = vmatprep.subr.mxu0 0.0
      %398 = vmatpush1.xpose.msra.mxu0 %v395
      %399 = vmatprep.subr.mxu0 0.0
      %400 = vmatpush1.xpose.msra.mxu0 0.0
      %401 = vmatprep.subr.mxu0 0.0
      %402 = vmatpush1.xpose.msra.mxu0 0.0
      %403 = vmatprep.subr.mxu0 0.0
      %404 = vmatpush1.xpose.msra.mxu0 0.0
      %405 = vmatprep.subr.mxu0 0.0
      %406 = vmatpush1.xpose.msra.mxu0 0.0
      %407 = vmatprep.subr.mxu0 0.0
      %408 = vmatpush1.xpose.msra.mxu0 0.0
      %409 = vmatprep.subr.mxu0 0.0
      %410 = vmatpush1.xpose.msra.mxu0 0.0
      %411 = vmatprep.subr.mxu0 0.0
      %412 = vmatpush1.xpose.msra.mxu0 0.0
      %413 = vmatprep.subr.mxu0 0.0
      %414 = vmatpush1.xpose.msra.mxu0 0.0
      %415 = vmatprep.subr.mxu0 0.0
      %416 = vmatpush1.xpose.msra.mxu0 0.0
      %417 = vmatprep.subr.mxu0 0.0
      %418 = vmatpush1.xpose.msra.mxu0 0.0
      %419 = vmatprep.subr.mxu0 0.0
      %420 = vmatpush1.xpose.msra.mxu0 0.0
      %421 = vmatprep.subr.mxu0 0.0
      %422 = vmatpush1.xpose.msra.mxu0 0.0
      %423 = vmatprep.subr.mxu0 0.0
      %424 = vmatpush1.xpose.msra.mxu0 0.0
      %425 = vmatprep.subr.mxu0 0.0
      %426 = vmatpush1.xpose.msra.mxu0 0.0
      %427 = vmatprep.subr.mxu0 0.0
      %428 = vmatpush1.xpose.msra.mxu0 0.0
      %429 = vmatprep.subr.mxu0 0.0
      %430 = vmatpush1.xpose.msra.mxu0 0.0
      %431 = vmatprep.subr.mxu0 0.0
      %432 = vmatpush1.xpose.msra.mxu0 0.0
      %433 = vmatprep.subr.mxu0 0.0
      %434 = vmatpush1.xpose.msra.mxu0 0.0
      %435 = vmatprep.subr.mxu0 0.0
      %436 = vmatpush1.xpose.msra.mxu0 0.0
      %437 = vmatprep.subr.mxu0 0.0
      %438 = vmatpush1.xpose.msra.mxu0 0.0
      %439 = vmatprep.subr.mxu0 0.0
      %440 = vmatpush1.xpose.msra.mxu0 0.0
      %441 = vmatprep.subr.mxu0 0.0
      %442 = vmatpush1.xpose.msra.mxu0 0.0
      %443 = vmatprep.subr.mxu0 0.0
      %444 = vmatpush1.xpose.msra.mxu0 0.0
      %445 = vmatprep.subr.mxu0 0.0
      %446 = vmatpush1.xpose.msra.mxu0 0.0
      %447 = vmatprep.subr.mxu0 0.0
      %448 = vmatpush1.xpose.msra.mxu0 0.0
      %449 = vmatprep.subr.mxu0 0.0
      %450 = vmatpush1.xpose.msra.mxu0 0.0
      %451 = vmatprep.subr.mxu0 0.0
      %452 = vmatpush1.xpose.msra.mxu0 0.0
      %453 = vmatprep.subr.mxu0 0.0
      %454 = vmatpush1.xpose.msra.mxu0 0.0
      %455 = vmatprep.subr.mxu0 0.0
      %456 = vmatpush1.xpose.msra.mxu0 0.0
      %457 = vmatprep.subr.mxu0 0.0
      %458 = vmatpush1.xpose.msra.mxu0 0.0
      %459 = vmatprep.subr.mxu0 0.0
      %460 = vmatpush1.xpose.msra.mxu0 0.0
      %461 = vmatprep.mubr.f32.mxu0 0.0
      %462 = vmatmul.mubr.f32.gmra.mrb[0].mxu0 %v299
      %v463 = vpop.f32.mrb[0].mxu0
      %v464 = vadd.f32 0.0, %v463
      %v465 = vpop.f32.mrb[0].mxu0
      %466 = vmatprep.mubr.f32.mxu0 0.0
      %467 = vmatmul.mubr.f32.gmra.mrb[0].mxu0 %v302
      %v468 = vpop.f32.mrb[0].mxu0
      %v469 = vadd.f32 0.0, %v468
      %v470 = vpop.f32.mrb[0].mxu0
      %471 = vmatprep.mubr.f32.mxu0 0.0
      %472 = vmatmul.mubr.f32.gmra.mrb[0].mxu0 %v305
      %v473 = vpop.f32.mrb[0].mxu0
      %v474 = vadd.f32 0.0, %v473
      %v475 = vpop.f32.mrb[0].mxu0
      %476 = vmatprep.mubr.f32.mxu0 0.0
      %477 = vmatmul.mubr.f32.gmra.mrb[0].mxu0 %v308
      %v478 = vpop.f32.mrb[0].mxu0
      %v479 = vadd.f32 0.0, %v478
      %v480 = vpop.f32.mrb[0].mxu0
      %481 = vmatprep.mubr.f32.mxu0 0.0
      %482 = vmatmul.mubr.f32.gmra.mrb[0].mxu0 %v311
      %v483 = vpop.f32.mrb[0].mxu0
      %v484 = vadd.f32 0.0, %v483
      %v485 = vpop.f32.mrb[0].mxu0
      %486 = vmatprep.mubr.f32.mxu0 0.0
      %487 = vmatmul.mubr.f32.gmra.mrb[0].mxu0 %v314
      %v488 = vpop.f32.mrb[0].mxu0
      %v489 = vadd.f32 0.0, %v488
      %v490 = vpop.f32.mrb[0].mxu0
      %491 = vmatprep.mubr.f32.mxu0 0.0
      %492 = vmatmul.mubr.f32.gmra.mrb[0].mxu0 %v317
      %v493 = vpop.f32.mrb[0].mxu0
      %v494 = vadd.f32 0.0, %v493
      %v495 = vpop.f32.mrb[0].mxu0
      %496 = vmatprep.mubr.f32.mxu0 0.0
      %497 = vmatmul.mubr.f32.gmra.mrb[0].mxu0 %v320
      %v498 = vpop.f32.mrb[0].mxu0
      %v499 = vadd.f32 0.0, %v498
      %v500 = vpop.f32.mrb[0].mxu0
      %501 = vmatprep.mubr.f32.mxu0 0.0
      %502 = vmatmul.mubr.f32.gmra.mrb[0].mxu0 %v323
      %v503 = vpop.f32.mrb[0].mxu0
      %v504 = vadd.f32 0.0, %v503
      %v505 = vpop.f32.mrb[0].mxu0
      %506 = vmatprep.mubr.f32.mxu0 0.0
      %507 = vmatmul.mubr.f32.gmra.mrb[0].mxu0 %v326
      %v508 = vpop.f32.mrb[0].mxu0
      %v509 = vadd.f32 0.0, %v508
      %v510 = vpop.f32.mrb[0].mxu0
      %511 = vmatprep.mubr.f32.mxu0 0.0
      %512 = vmatmul.mubr.f32.gmra.mrb[0].mxu0 %v329
      %v513 = vpop.f32.mrb[0].mxu0
      %v514 = vadd.f32 0.0, %v513
      %v515 = vpop.f32.mrb[0].mxu0
      %516 = vmatprep.mubr.f32.mxu0 0.0
      %517 = vmatmul.mubr.f32.gmra.mrb[0].mxu0 %v332
      %v518 = vpop.f32.mrb[0].mxu0
      %v519 = vadd.f32 0.0, %v518
      %v520 = vpop.f32.mrb[0].mxu0
      %521 = vmatprep.mubr.f32.mxu0 0.0
      %522 = vmatmul.mubr.f32.gmra.mrb[0].mxu0 %v335
      %v523 = vpop.f32.mrb[0].mxu0
      %v524 = vadd.f32 0.0, %v523
      %v525 = vpop.f32.mrb[0].mxu0
      %526 = vmatprep.mubr.f32.mxu0 0.0
      %527 = vmatmul.mubr.f32.gmra.mrb[0].mxu0 %v338
      %v528 = vpop.f32.mrb[0].mxu0
      %v529 = vadd.f32 0.0, %v528
      %v530 = vpop.f32.mrb[0].mxu0
      %531 = vmatprep.mubr.f32.mxu0 0.0
      %532 = vmatmul.mubr.f32.gmra.mrb[0].mxu0 %v341
      %v533 = vpop.f32.mrb[0].mxu0
      %v534 = vadd.f32 0.0, %v533
      %v535 = vpop.f32.mrb[0].mxu0
      %536 = vmatprep.mubr.f32.mxu0 0.0
      %537 = vmatmul.mubr.f32.gmra.mrb[0].mxu0 %v344
      %v538 = vpop.f32.mrb[0].mxu0
      %v539 = vadd.f32 0.0, %v538
      %v540 = vpop.f32.mrb[0].mxu0
      %541 = vmatprep.mubr.f32.mxu0 0.0
      %542 = vmatmul.mubr.f32.gmra.mrb[0].mxu0 %v347
      %v543 = vpop.f32.mrb[0].mxu0
      %v544 = vadd.f32 0.0, %v543
      %v545 = vpop.f32.mrb[0].mxu0
      %546 = vmatprep.mubr.f32.mxu0 0.0
      %547 = vmatmul.mubr.f32.gmra.mrb[0].mxu0 %v350
      %v548 = vpop.f32.mrb[0].mxu0
      %v549 = vadd.f32 0.0, %v548
      %v550 = vpop.f32.mrb[0].mxu0
      %551 = vmatprep.mubr.f32.mxu0 0.0
      %552 = vmatmul.mubr.f32.gmra.mrb[0].mxu0 %v353
      %v553 = vpop.f32.mrb[0].mxu0
      %v554 = vadd.f32 0.0, %v553
      %v555 = vpop.f32.mrb[0].mxu0
      %556 = vmatprep.mubr.f32.mxu0 0.0
      %557 = vmatmul.mubr.f32.gmra.mrb[0].mxu0 %v356
      %v558 = vpop.f32.mrb[0].mxu0
      %v559 = vadd.f32 0.0, %v558
      %v560 = vpop.f32.mrb[0].mxu0
      %561 = vmatprep.mubr.f32.mxu0 0.0
      %562 = vmatmul.mubr.f32.gmra.mrb[0].mxu0 %v359
      %v563 = vpop.f32.mrb[0].mxu0
      %v564 = vadd.f32 0.0, %v563
      %v565 = vpop.f32.mrb[0].mxu0
      %566 = vmatprep.mubr.f32.mxu0 0.0
      %567 = vmatmul.mubr.f32.gmra.mrb[0].mxu0 %v362
      %v568 = vpop.f32.mrb[0].mxu0
      %v569 = vadd.f32 0.0, %v568
      %v570 = vpop.f32.mrb[0].mxu0
      %571 = vmatprep.mubr.f32.mxu0 0.0
      %572 = vmatmul.mubr.f32.gmra.mrb[0].mxu0 %v365
      %v573 = vpop.f32.mrb[0].mxu0
      %v574 = vadd.f32 0.0, %v573
      %v575 = vpop.f32.mrb[0].mxu0
      %576 = vmatprep.mubr.f32.mxu0 0.0
      %577 = vmatmul.mubr.f32.gmra.mrb[0].mxu0 %v368
      %v578 = vpop.f32.mrb[0].mxu0
      %v579 = vadd.f32 0.0, %v578
      %v580 = vpop.f32.mrb[0].mxu0
      %581 = vmatprep.mubr.f32.mxu0 0.0
      %582 = vmatmul.mubr.f32.gmra.mrb[0].mxu0 %v371
      %v583 = vpop.f32.mrb[0].mxu0
      %v584 = vadd.f32 0.0, %v583
      %v585 = vpop.f32.mrb[0].mxu0
      %586 = vmatprep.mubr.f32.mxu0 0.0
      %587 = vmatmul.mubr.f32.gmra.mrb[0].mxu0 %v374
      %v588 = vpop.f32.mrb[0].mxu0
      %v589 = vadd.f32 0.0, %v588
      %v590 = vpop.f32.mrb[0].mxu0
      %591 = vmatprep.mubr.f32.mxu0 0.0
      %592 = vmatmul.mubr.f32.gmra.mrb[0].mxu0 %v377
      %v593 = vpop.f32.mrb[0].mxu0
      %v594 = vadd.f32 0.0, %v593
      %v595 = vpop.f32.mrb[0].mxu0
      %596 = vmatprep.mubr.f32.mxu0 0.0
      %597 = vmatmul.mubr.f32.gmra.mrb[0].mxu0 %v380
      %v598 = vpop.f32.mrb[0].mxu0
      %v599 = vadd.f32 0.0, %v598
      %v600 = vpop.f32.mrb[0].mxu0
      %601 = vmatprep.mubr.f32.mxu0 0.0
      %602 = vmatmul.mubr.f32.gmra.mrb[0].mxu0 %v383
      %v603 = vpop.f32.mrb[0].mxu0
      %v604 = vadd.f32 0.0, %v603
      %v605 = vpop.f32.mrb[0].mxu0
      %606 = vmatprep.mubr.f32.mxu0 0.0
      %607 = vmatmul.mubr.f32.gmra.mrb[0].mxu0 %v386
      %v608 = vpop.f32.mrb[0].mxu0
      %v609 = vadd.f32 0.0, %v608
      %v610 = vpop.f32.mrb[0].mxu0
      %611 = vmatprep.mubr.f32.mxu0 0.0
      %612 = vmatmul.mubr.f32.gmra.mrb[0].mxu0 %v389
      %v613 = vpop.f32.mrb[0].mxu0
      %v614 = vadd.f32 0.0, %v613
      %v615 = vpop.f32.mrb[0].mxu0
      %616 = vmatprep.mubr.f32.mxu0 0.0
      %617 = vmatmul.mubr.f32.gmra.mrb[0].mxu0 %v392
      %v618 = vpop.f32.mrb[0].mxu0
      %v619 = vadd.f32 0.0, %v618
      %v620 = vpop.f32.mrb[0].mxu0
      %621 = vdwg.mxu0
      %v622 = vmul.f32 %v464, 0.17677669
      %v623 = vmul.f32 %v469, 0.17677669
      %v624 = vmul.f32 %v474, 0.17677669
      %v625 = vmul.f32 %v479, 0.17677669
      %v626 = vmul.f32 %v484, 0.17677669
      %v627 = vmul.f32 %v489, 0.17677669
      %v628 = vmul.f32 %v494, 0.17677669
      %v629 = vmul.f32 %v499, 0.17677669
      %v630 = vmul.f32 %v504, 0.17677669
      %v631 = vmul.f32 %v509, 0.17677669
      %v632 = vmul.f32 %v514, 0.17677669
      %v633 = vmul.f32 %v519, 0.17677669
      %v634 = vmul.f32 %v524, 0.17677669
      %v635 = vmul.f32 %v529, 0.17677669
      %v636 = vmul.f32 %v534, 0.17677669
      %v637 = vmul.f32 %v539, 0.17677669
      %v638 = vmul.f32 %v544, 0.17677669
      %v639 = vmul.f32 %v549, 0.17677669
      %v640 = vmul.f32 %v554, 0.17677669
      %v641 = vmul.f32 %v559, 0.17677669
      %v642 = vmul.f32 %v564, 0.17677669
      %v643 = vmul.f32 %v569, 0.17677669
      %v644 = vmul.f32 %v574, 0.17677669
      %v645 = vmul.f32 %v579, 0.17677669
      %v646 = vmul.f32 %v584, 0.17677669
      %v647 = vmul.f32 %v589, 0.17677669
      %v648 = vmul.f32 %v594, 0.17677669
      %v649 = vmul.f32 %v599, 0.17677669
      %v650 = vmul.f32 %v604, 0.17677669
      %v651 = vmul.f32 %v609, 0.17677669
      %v652 = vmul.f32 %v614, 0.17677669
      %v653 = vmul.f32 %v619, 0.17677669
      %vm654 = vcmask 31744
      %v655 = vsel %vm654, %v622, -inf
      %656 = vmax.xlane.f32.xlu0 %v655
      %v657 = vpop.xlane.xlu0 %656
      %v658 = vsel %vm654, %v623, -inf
      %659 = vmax.xlane.f32.xlu0 %v658
      %v660 = vpop.xlane.xlu0 %659
      %v661 = vsel %vm654, %v624, -inf
      %662 = vmax.xlane.f32.xlu0 %v661
      %v663 = vpop.xlane.xlu0 %662
      %v664 = vsel %vm654, %v625, -inf
      %665 = vmax.xlane.f32.xlu0 %v664
      %v666 = vpop.xlane.xlu0 %665
      %v667 = vsel %vm654, %v626, -inf
      %668 = vmax.xlane.f32.xlu0 %v667
      %v669 = vpop.xlane.xlu0 %668
      %v670 = vsel %vm654, %v627, -inf
      %671 = vmax.xlane.f32.xlu0 %v670
      %v672 = vpop.xlane.xlu0 %671
      %v673 = vsel %vm654, %v628, -inf
      %674 = vmax.xlane.f32.xlu0 %v673
      %v675 = vpop.xlane.xlu0 %674
      %v676 = vsel %vm654, %v629, -inf
      %677 = vmax.xlane.f32.xlu0 %v676
      %v678 = vpop.xlane.xlu0 %677
      %v679 = vsel %vm654, %v630, -inf
      %680 = vmax.xlane.f32.xlu0 %v679
      %v681 = vpop.xlane.xlu0 %680
      %v682 = vsel %vm654, %v631, -inf
      %683 = vmax.xlane.f32.xlu0 %v682
      %v684 = vpop.xlane.xlu0 %683
      %v685 = vsel %vm654, %v632, -inf
      %686 = vmax.xlane.f32.xlu0 %v685
      %v687 = vpop.xlane.xlu0 %686
      %v688 = vsel %vm654, %v633, -inf
      %689 = vmax.xlane.f32.xlu0 %v688
      %v690 = vpop.xlane.xlu0 %689
      %v691 = vsel %vm654, %v634, -inf
      %692 = vmax.xlane.f32.xlu0 %v691
      %v693 = vpop.xlane.xlu0 %692
      %v694 = vsel %vm654, %v635, -inf
      %695 = vmax.xlane.f32.xlu0 %v694
      %v696 = vpop.xlane.xlu0 %695
      %v697 = vsel %vm654, %v636, -inf
      %698 = vmax.xlane.f32.xlu0 %v697
      %v699 = vpop.xlane.xlu0 %698
      %v700 = vsel %vm654, %v637, -inf
      %701 = vmax.xlane.f32.xlu0 %v700
      %v702 = vpop.xlane.xlu0 %701
      %v703 = vsel %vm654, %v638, -inf
      %704 = vmax.xlane.f32.xlu0 %v703
      %v705 = vpop.xlane.xlu0 %704
      %v706 = vsel %vm654, %v639, -inf
      %707 = vmax.xlane.f32.xlu0 %v706
      %v708 = vpop.xlane.xlu0 %707
      %v709 = vsel %vm654, %v640, -inf
      %710 = vmax.xlane.f32.xlu0 %v709
      %v711 = vpop.xlane.xlu0 %710
      %v712 = vsel %vm654, %v641, -inf
      %713 = vmax.xlane.f32.xlu0 %v712
      %v714 = vpop.xlane.xlu0 %713
      %v715 = vsel %vm654, %v642, -inf
      %716 = vmax.xlane.f32.xlu0 %v715
      %v717 = vpop.xlane.xlu0 %716
      %v718 = vsel %vm654, %v643, -inf
      %719 = vmax.xlane.f32.xlu0 %v718
      %v720 = vpop.xlane.xlu0 %719
      %v721 = vsel %vm654, %v644, -inf
      %722 = vmax.xlane.f32.xlu0 %v721
      %v723 = vpop.xlane.xlu0 %722
      %v724 = vsel %vm654, %v645, -inf
      %725 = vmax.xlane.f32.xlu0 %v724
      %v726 = vpop.xlane.xlu0 %725
      %v727 = vsel %vm654, %v646, -inf
      %728 = vmax.xlane.f32.xlu0 %v727
      %v729 = vpop.xlane.xlu0 %728
      %v730 = vsel %vm654, %v647, -inf
      %731 = vmax.xlane.f32.xlu0 %v730
      %v732 = vpop.xlane.xlu0 %731
      %v733 = vsel %vm654, %v648, -inf
      %734 = vmax.xlane.f32.xlu0 %v733
      %v735 = vpop.xlane.xlu0 %734
      %v736 = vsel %vm654, %v649, -inf
      %737 = vmax.xlane.f32.xlu0 %v736
      %v738 = vpop.xlane.xlu0 %737
      %v739 = vsel %vm654, %v650, -inf
      %740 = vmax.xlane.f32.xlu0 %v739
      %v741 = vpop.xlane.xlu0 %740
      %v742 = vsel %vm654, %v651, -inf
      %743 = vmax.xlane.f32.xlu0 %v742
      %v744 = vpop.xlane.xlu0 %743
      %v745 = vsel %vm654, %v652, -inf
      %746 = vmax.xlane.f32.xlu0 %v745
      %v747 = vpop.xlane.xlu0 %746
      %v748 = vsel %vm654, %v653, -inf
      %749 = vmax.xlane.f32.xlu0 %v748
      %v750 = vpop.xlane.xlu0 %749
      %v751 = vsub.f32 %v622, %v657
      %v752 = vsub.f32 %v623, %v660
      %v753 = vsub.f32 %v624, %v663
      %v754 = vsub.f32 %v625, %v666
      %v755 = vsub.f32 %v626, %v669
      %v756 = vsub.f32 %v627, %v672
      %v757 = vsub.f32 %v628, %v675
      %v758 = vsub.f32 %v629, %v678
      %v759 = vsub.f32 %v630, %v681
      %v760 = vsub.f32 %v631, %v684
      %v761 = vsub.f32 %v632, %v687
      %v762 = vsub.f32 %v633, %v690
      %v763 = vsub.f32 %v634, %v693
      %v764 = vsub.f32 %v635, %v696
      %v765 = vsub.f32 %v636, %v699
      %v766 = vsub.f32 %v637, %v702
      %v767 = vsub.f32 %v638, %v705
      %v768 = vsub.f32 %v639, %v708
      %v769 = vsub.f32 %v640, %v711
      %v770 = vsub.f32 %v641, %v714
      %v771 = vsub.f32 %v642, %v717
      %v772 = vsub.f32 %v643, %v720
      %v773 = vsub.f32 %v644, %v723
      %v774 = vsub.f32 %v645, %v726
      %v775 = vsub.f32 %v646, %v729
      %v776 = vsub.f32 %v647, %v732
      %v777 = vsub.f32 %v648, %v735
      %v778 = vsub.f32 %v649, %v738
      %v779 = vsub.f32 %v650, %v741
      %v780 = vsub.f32 %v651, %v744
      %v781 = vsub.f32 %v652, %v747
      %v782 = vsub.f32 %v653, %v750
      %v783 = vmul.f32 %v751, 1.442695
      %v784 = vpow.pop %v783
      %v785 = vmul.f32 %v752, 1.442695
      %v786 = vpow.pop %v785
      %v787 = vmul.f32 %v753, 1.442695
      %v788 = vpow.pop %v787
      %v789 = vmul.f32 %v754, 1.442695
      %v790 = vpow.pop %v789
      %v791 = vmul.f32 %v755, 1.442695
      %v792 = vpow.pop %v791
      %v793 = vmul.f32 %v756, 1.442695
      %v794 = vpow.pop %v793
      %v795 = vmul.f32 %v757, 1.442695
      %v796 = vpow.pop %v795
      %v797 = vmul.f32 %v758, 1.442695
      %v798 = vpow.pop %v797
      %v799 = vmul.f32 %v759, 1.442695
      %v800 = vpow.pop %v799
      %v801 = vmul.f32 %v760, 1.442695
      %v802 = vpow.pop %v801
      %v803 = vmul.f32 %v761, 1.442695
      %v804 = vpow.pop %v803
      %v805 = vmul.f32 %v762, 1.442695
      %v806 = vpow.pop %v805
      %v807 = vmul.f32 %v763, 1.442695
      %v808 = vpow.pop %v807
      %v809 = vmul.f32 %v764, 1.442695
      %v810 = vpow.pop %v809
      %v811 = vmul.f32 %v765, 1.442695
      %v812 = vpow.pop %v811
      %v813 = vmul.f32 %v766, 1.442695
      %v814 = vpow.pop %v813
      %v815 = vmul.f32 %v767, 1.442695
      %v816 = vpow.pop %v815
      %v817 = vmul.f32 %v768, 1.442695
      %v818 = vpow.pop %v817
      %v819 = vmul.f32 %v769, 1.442695
      %v820 = vpow.pop %v819
      %v821 = vmul.f32 %v770, 1.442695
      %v822 = vpow.pop %v821
      %v823 = vmul.f32 %v771, 1.442695
      %v824 = vpow.pop %v823
      %v825 = vmul.f32 %v772, 1.442695
      %v826 = vpow.pop %v825
      %v827 = vmul.f32 %v773, 1.442695
      %v828 = vpow.pop %v827
      %v829 = vmul.f32 %v774, 1.442695
      %v830 = vpow.pop %v829
      %v831 = vmul.f32 %v775, 1.442695
      %v832 = vpow.pop %v831
      %v833 = vmul.f32 %v776, 1.442695
      %v834 = vpow.pop %v833
      %v835 = vmul.f32 %v777, 1.442695
      %v836 = vpow.pop %v835
      %v837 = vmul.f32 %v778, 1.442695
      %v838 = vpow.pop %v837
      %v839 = vmul.f32 %v779, 1.442695
      %v840 = vpow.pop %v839
      %v841 = vmul.f32 %v780, 1.442695
      %v842 = vpow.pop %v841
      %v843 = vmul.f32 %v781, 1.442695
      %v844 = vpow.pop %v843
      %v845 = vmul.f32 %v782, 1.442695
      %v846 = vpow.pop %v845
      %v847 = vsel %vm654, %v784, 0.0
      %848 = vadd.xlane.f32.xlu0 %v847
      %v849 = vpop.xlane.xlu0 %848
      %v850 = vsel %vm654, %v786, 0.0
      %851 = vadd.xlane.f32.xlu0 %v850
      %v852 = vpop.xlane.xlu0 %851
      %v853 = vsel %vm654, %v788, 0.0
      %854 = vadd.xlane.f32.xlu0 %v853
      %v855 = vpop.xlane.xlu0 %854
      %v856 = vsel %vm654, %v790, 0.0
      %857 = vadd.xlane.f32.xlu0 %v856
      %v858 = vpop.xlane.xlu0 %857
      %v859 = vsel %vm654, %v792, 0.0
      %860 = vadd.xlane.f32.xlu0 %v859
      %v861 = vpop.xlane.xlu0 %860
      %v862 = vsel %vm654, %v794, 0.0
      %863 = vadd.xlane.f32.xlu0 %v862
      %v864 = vpop.xlane.xlu0 %863
      %v865 = vsel %vm654, %v796, 0.0
      %866 = vadd.xlane.f32.xlu0 %v865
      %v867 = vpop.xlane.xlu0 %866
      %v868 = vsel %vm654, %v798, 0.0
      %869 = vadd.xlane.f32.xlu0 %v868
      %v870 = vpop.xlane.xlu0 %869
      %v871 = vsel %vm654, %v800, 0.0
      %872 = vadd.xlane.f32.xlu0 %v871
      %v873 = vpop.xlane.xlu0 %872
      %v874 = vsel %vm654, %v802, 0.0
      %875 = vadd.xlane.f32.xlu0 %v874
      %v876 = vpop.xlane.xlu0 %875
      %v877 = vsel %vm654, %v804, 0.0
      %878 = vadd.xlane.f32.xlu0 %v877
      %v879 = vpop.xlane.xlu0 %878
      %v880 = vsel %vm654, %v806, 0.0
      %881 = vadd.xlane.f32.xlu0 %v880
      %v882 = vpop.xlane.xlu0 %881
      %v883 = vsel %vm654, %v808, 0.0
      %884 = vadd.xlane.f32.xlu0 %v883
      %v885 = vpop.xlane.xlu0 %884
      %v886 = vsel %vm654, %v810, 0.0
      %887 = vadd.xlane.f32.xlu0 %v886
      %v888 = vpop.xlane.xlu0 %887
      %v889 = vsel %vm654, %v812, 0.0
      %890 = vadd.xlane.f32.xlu0 %v889
      %v891 = vpop.xlane.xlu0 %890
      %v892 = vsel %vm654, %v814, 0.0
      %893 = vadd.xlane.f32.xlu0 %v892
      %v894 = vpop.xlane.xlu0 %893
      %v895 = vsel %vm654, %v816, 0.0
      %896 = vadd.xlane.f32.xlu0 %v895
      %v897 = vpop.xlane.xlu0 %896
      %v898 = vsel %vm654, %v818, 0.0
      %899 = vadd.xlane.f32.xlu0 %v898
      %v900 = vpop.xlane.xlu0 %899
      %v901 = vsel %vm654, %v820, 0.0
      %902 = vadd.xlane.f32.xlu0 %v901
      %v903 = vpop.xlane.xlu0 %902
      %v904 = vsel %vm654, %v822, 0.0
      %905 = vadd.xlane.f32.xlu0 %v904
      %v906 = vpop.xlane.xlu0 %905
      %v907 = vsel %vm654, %v824, 0.0
      %908 = vadd.xlane.f32.xlu0 %v907
      %v909 = vpop.xlane.xlu0 %908
      %v910 = vsel %vm654, %v826, 0.0
      %911 = vadd.xlane.f32.xlu0 %v910
      %v912 = vpop.xlane.xlu0 %911
      %v913 = vsel %vm654, %v828, 0.0
      %914 = vadd.xlane.f32.xlu0 %v913
      %v915 = vpop.xlane.xlu0 %914
      %v916 = vsel %vm654, %v830, 0.0
      %917 = vadd.xlane.f32.xlu0 %v916
      %v918 = vpop.xlane.xlu0 %917
      %v919 = vsel %vm654, %v832, 0.0
      %920 = vadd.xlane.f32.xlu0 %v919
      %v921 = vpop.xlane.xlu0 %920
      %v922 = vsel %vm654, %v834, 0.0
      %923 = vadd.xlane.f32.xlu0 %v922
      %v924 = vpop.xlane.xlu0 %923
      %v925 = vsel %vm654, %v836, 0.0
      %926 = vadd.xlane.f32.xlu0 %v925
      %v927 = vpop.xlane.xlu0 %926
      %v928 = vsel %vm654, %v838, 0.0
      %929 = vadd.xlane.f32.xlu0 %v928
      %v930 = vpop.xlane.xlu0 %929
      %v931 = vsel %vm654, %v840, 0.0
      %932 = vadd.xlane.f32.xlu0 %v931
      %v933 = vpop.xlane.xlu0 %932
      %v934 = vsel %vm654, %v842, 0.0
      %935 = vadd.xlane.f32.xlu0 %v934
      %v936 = vpop.xlane.xlu0 %935
      %v937 = vsel %vm654, %v844, 0.0
      %938 = vadd.xlane.f32.xlu0 %v937
      %v939 = vpop.xlane.xlu0 %938
      %v940 = vsel %vm654, %v846, 0.0
      %941 = vadd.xlane.f32.xlu0 %v940
      %v942 = vpop.xlane.xlu0 %941
      %v943 = vrcp.pop %v849
      %v944 = vmul.f32 %v784, %v943
      %v945 = vrcp.pop %v852
      %v946 = vmul.f32 %v786, %v945
      %v947 = vrcp.pop %v855
      %v948 = vmul.f32 %v788, %v947
      %v949 = vrcp.pop %v858
      %v950 = vmul.f32 %v790, %v949
      %v951 = vrcp.pop %v861
      %v952 = vmul.f32 %v792, %v951
      %v953 = vrcp.pop %v864
      %v954 = vmul.f32 %v794, %v953
      %v955 = vrcp.pop %v867
      %v956 = vmul.f32 %v796, %v955
      %v957 = vrcp.pop %v870
      %v958 = vmul.f32 %v798, %v957
      %v959 = vrcp.pop %v873
      %v960 = vmul.f32 %v800, %v959
      %v961 = vrcp.pop %v876
      %v962 = vmul.f32 %v802, %v961
      %v963 = vrcp.pop %v879
      %v964 = vmul.f32 %v804, %v963
      %v965 = vrcp.pop %v882
      %v966 = vmul.f32 %v806, %v965
      %v967 = vrcp.pop %v885
      %v968 = vmul.f32 %v808, %v967
      %v969 = vrcp.pop %v888
      %v970 = vmul.f32 %v810, %v969
      %v971 = vrcp.pop %v891
      %v972 = vmul.f32 %v812, %v971
      %v973 = vrcp.pop %v894
      %v974 = vmul.f32 %v814, %v973
      %v975 = vrcp.pop %v897
      %v976 = vmul.f32 %v816, %v975
      %v977 = vrcp.pop %v900
      %v978 = vmul.f32 %v818, %v977
      %v979 = vrcp.pop %v903
      %v980 = vmul.f32 %v820, %v979
      %v981 = vrcp.pop %v906
      %v982 = vmul.f32 %v822, %v981
      %v983 = vrcp.pop %v909
      %v984 = vmul.f32 %v824, %v983
      %v985 = vrcp.pop %v912
      %v986 = vmul.f32 %v826, %v985
      %v987 = vrcp.pop %v915
      %v988 = vmul.f32 %v828, %v987
      %v989 = vrcp.pop %v918
      %v990 = vmul.f32 %v830, %v989
      %v991 = vrcp.pop %v921
      %v992 = vmul.f32 %v832, %v991
      %v993 = vrcp.pop %v924
      %v994 = vmul.f32 %v834, %v993
      %v995 = vrcp.pop %v927
      %v996 = vmul.f32 %v836, %v995
      %v997 = vrcp.pop %v930
      %v998 = vmul.f32 %v838, %v997
      %v999 = vrcp.pop %v933
      %v1000 = vmul.f32 %v840, %v999
      %v1001 = vrcp.pop %v936
      %v1002 = vmul.f32 %v842, %v1001
      %v1003 = vrcp.pop %v939
      %v1004 = vmul.f32 %v844, %v1003
      %v1005 = vrcp.pop %v942
      %v1006 = vmul.f32 %v846, %v1005
      %v1008 = vsel %vm654, %v944, 0
      %v1011 = vsel %vm654, %v946, 0
      %v1014 = vsel %vm654, %v948, 0
      %v1017 = vsel %vm654, %v950, 0
      %v1020 = vsel %vm654, %v952, 0
      %v1023 = vsel %vm654, %v954, 0
      %v1026 = vsel %vm654, %v956, 0
      %v1029 = vsel %vm654, %v958, 0
      %v1032 = vsel %vm654, %v960, 0
      %v1035 = vsel %vm654, %v962, 0
      %v1038 = vsel %vm654, %v964, 0
      %v1041 = vsel %vm654, %v966, 0
      %v1044 = vsel %vm654, %v968, 0
      %v1047 = vsel %vm654, %v970, 0
      %v1050 = vsel %vm654, %v972, 0
      %v1053 = vsel %vm654, %v974, 0
      %v1056 = vsel %vm654, %v976, 0
      %v1059 = vsel %vm654, %v978, 0
      %v1062 = vsel %vm654, %v980, 0
      %v1065 = vsel %vm654, %v982, 0
      %v1068 = vsel %vm654, %v984, 0
      %v1071 = vsel %vm654, %v986, 0
      %v1074 = vsel %vm654, %v988, 0
      %v1077 = vsel %vm654, %v990, 0
      %v1080 = vsel %vm654, %v992, 0
      %v1083 = vsel %vm654, %v994, 0
      %v1086 = vsel %vm654, %v996, 0
      %v1089 = vsel %vm654, %v998, 0
      %v1092 = vsel %vm654, %v1000, 0
      %v1095 = vsel %vm654, %v1002, 0
      %v1098 = vsel %vm654, %v1004, 0
      %v1101 = vsel %vm654, %v1006, 0
      %vm1103 = vcmask 1043456
      %v1105 = vsel %vm1103, %v296, 0
      %1107 = vmatprep.subr.mxu0 0.0
      %1108 = vmatpush1.msra.mxu0 %v1105
      %1109 = vmatprep.subr.mxu0 0.0
      %1110 = vmatpush1.msra.mxu0 0.0
      %1111 = vmatprep.subr.mxu0 0.0
      %1112 = vmatpush1.msra.mxu0 0.0
      %1113 = vmatprep.subr.mxu0 0.0
      %1114 = vmatpush1.msra.mxu0 0.0
      %1115 = vmatprep.subr.mxu0 0.0
      %1116 = vmatpush1.msra.mxu0 0.0
      %1117 = vmatprep.subr.mxu0 0.0
      %1118 = vmatpush1.msra.mxu0 0.0
      %1119 = vmatprep.subr.mxu0 0.0
      %1120 = vmatpush1.msra.mxu0 0.0
      %1121 = vmatprep.subr.mxu0 0.0
      %1122 = vmatpush1.msra.mxu0 0.0
      %1123 = vmatprep.subr.mxu0 0.0
      %1124 = vmatpush1.msra.mxu0 0.0
      %1125 = vmatprep.subr.mxu0 0.0
      %1126 = vmatpush1.msra.mxu0 0.0
      %1127 = vmatprep.subr.mxu0 0.0
      %1128 = vmatpush1.msra.mxu0 0.0
      %1129 = vmatprep.subr.mxu0 0.0
      %1130 = vmatpush1.msra.mxu0 0.0
      %1131 = vmatprep.subr.mxu0 0.0
      %1132 = vmatpush1.msra.mxu0 0.0
      %1133 = vmatprep.subr.mxu0 0.0
      %1134 = vmatpush1.msra.mxu0 0.0
      %1135 = vmatprep.subr.mxu0 0.0
      %1136 = vmatpush1.msra.mxu0 0.0
      %1137 = vmatprep.subr.mxu0 0.0
      %1138 = vmatpush1.msra.mxu0 0.0
      %1139 = vmatprep.subr.mxu0 0.0
      %1140 = vmatpush1.msra.mxu0 0.0
      %1141 = vmatprep.subr.mxu0 0.0
      %1142 = vmatpush1.msra.mxu0 0.0
      %1143 = vmatprep.subr.mxu0 0.0
      %1144 = vmatpush1.msra.mxu0 0.0
      %1145 = vmatprep.subr.mxu0 0.0
      %1146 = vmatpush1.msra.mxu0 0.0
      %1147 = vmatprep.subr.mxu0 0.0
      %1148 = vmatpush1.msra.mxu0 0.0
      %1149 = vmatprep.subr.mxu0 0.0
      %1150 = vmatpush1.msra.mxu0 0.0
      %1151 = vmatprep.subr.mxu0 0.0
      %1152 = vmatpush1.msra.mxu0 0.0
      %1153 = vmatprep.subr.mxu0 0.0
      %1154 = vmatpush1.msra.mxu0 0.0
      %1155 = vmatprep.subr.mxu0 0.0
      %1156 = vmatpush1.msra.mxu0 0.0
      %1157 = vmatprep.subr.mxu0 0.0
      %1158 = vmatpush1.msra.mxu0 0.0
      %1159 = vmatprep.subr.mxu0 0.0
      %1160 = vmatpush1.msra.mxu0 0.0
      %1161 = vmatprep.subr.mxu0 0.0
      %1162 = vmatpush1.msra.mxu0 0.0
      %1163 = vmatprep.subr.mxu0 0.0
      %1164 = vmatpush1.msra.mxu0 0.0
      %1165 = vmatprep.subr.mxu0 0.0
      %1166 = vmatpush1.msra.mxu0 0.0
      %1167 = vmatprep.subr.mxu0 0.0
      %1168 = vmatpush1.msra.mxu0 0.0
      %1169 = vmatprep.subr.mxu0 0.0
      %1170 = vmatpush1.msra.mxu0 0.0
      %1171 = vmatprep.mubr.f32.mxu0 0.0
      %1172 = vmatmul.mubr.f32.gmra.mrb[0].mxu0 %v1008
      %v1173 = vpop.f32.mrb[0].mxu0
      %v1174 = vadd.f32 0.0, %v1173
      %v1175 = vpop.f32.mrb[0].mxu0
      %1176 = vmatprep.mubr.f32.mxu0 0.0
      %1177 = vmatmul.mubr.f32.gmra.mrb[0].mxu0 %v1011
      %v1178 = vpop.f32.mrb[0].mxu0
      %v1179 = vadd.f32 0.0, %v1178
      %v1180 = vpop.f32.mrb[0].mxu0
      %1181 = vmatprep.mubr.f32.mxu0 0.0
      %1182 = vmatmul.mubr.f32.gmra.mrb[0].mxu0 %v1014
      %v1183 = vpop.f32.mrb[0].mxu0
      %v1184 = vadd.f32 0.0, %v1183
      %v1185 = vpop.f32.mrb[0].mxu0
      %1186 = vmatprep.mubr.f32.mxu0 0.0
      %1187 = vmatmul.mubr.f32.gmra.mrb[0].mxu0 %v1017
      %v1188 = vpop.f32.mrb[0].mxu0
      %v1189 = vadd.f32 0.0, %v1188
      %v1190 = vpop.f32.mrb[0].mxu0
      %1191 = vmatprep.mubr.f32.mxu0 0.0
      %1192 = vmatmul.mubr.f32.gmra.mrb[0].mxu0 %v1020
      %v1193 = vpop.f32.mrb[0].mxu0
      %v1194 = vadd.f32 0.0, %v1193
      %v1195 = vpop.f32.mrb[0].mxu0
      %1196 = vmatprep.mubr.f32.mxu0 0.0
      %1197 = vmatmul.mubr.f32.gmra.mrb[0].mxu0 %v1023
      %v1198 = vpop.f32.mrb[0].mxu0
      %v1199 = vadd.f32 0.0, %v1198
      %v1200 = vpop.f32.mrb[0].mxu0
      %1201 = vmatprep.mubr.f32.mxu0 0.0
      %1202 = vmatmul.mubr.f32.gmra.mrb[0].mxu0 %v1026
      %v1203 = vpop.f32.mrb[0].mxu0
      %v1204 = vadd.f32 0.0, %v1203
      %v1205 = vpop.f32.mrb[0].mxu0
      %1206 = vmatprep.mubr.f32.mxu0 0.0
      %1207 = vmatmul.mubr.f32.gmra.mrb[0].mxu0 %v1029
      %v1208 = vpop.f32.mrb[0].mxu0
      %v1209 = vadd.f32 0.0, %v1208
      %v1210 = vpop.f32.mrb[0].mxu0
      %1211 = vmatprep.mubr.f32.mxu0 0.0
      %1212 = vmatmul.mubr.f32.gmra.mrb[0].mxu0 %v1032
      %v1213 = vpop.f32.mrb[0].mxu0
      %v1214 = vadd.f32 0.0, %v1213
      %v1215 = vpop.f32.mrb[0].mxu0
      %1216 = vmatprep.mubr.f32.mxu0 0.0
      %1217 = vmatmul.mubr.f32.gmra.mrb[0].mxu0 %v1035
      %v1218 = vpop.f32.mrb[0].mxu0
      %v1219 = vadd.f32 0.0, %v1218
      %v1220 = vpop.f32.mrb[0].mxu0
      %1221 = vmatprep.mubr.f32.mxu0 0.0
      %1222 = vmatmul.mubr.f32.gmra.mrb[0].mxu0 %v1038
      %v1223 = vpop.f32.mrb[0].mxu0
      %v1224 = vadd.f32 0.0, %v1223
      %v1225 = vpop.f32.mrb[0].mxu0
      %1226 = vmatprep.mubr.f32.mxu0 0.0
      %1227 = vmatmul.mubr.f32.gmra.mrb[0].mxu0 %v1041
      %v1228 = vpop.f32.mrb[0].mxu0
      %v1229 = vadd.f32 0.0, %v1228
      %v1230 = vpop.f32.mrb[0].mxu0
      %1231 = vmatprep.mubr.f32.mxu0 0.0
      %1232 = vmatmul.mubr.f32.gmra.mrb[0].mxu0 %v1044
      %v1233 = vpop.f32.mrb[0].mxu0
      %v1234 = vadd.f32 0.0, %v1233
      %v1235 = vpop.f32.mrb[0].mxu0
      %1236 = vmatprep.mubr.f32.mxu0 0.0
      %1237 = vmatmul.mubr.f32.gmra.mrb[0].mxu0 %v1047
      %v1238 = vpop.f32.mrb[0].mxu0
      %v1239 = vadd.f32 0.0, %v1238
      %v1240 = vpop.f32.mrb[0].mxu0
      %1241 = vmatprep.mubr.f32.mxu0 0.0
      %1242 = vmatmul.mubr.f32.gmra.mrb[0].mxu0 %v1050
      %v1243 = vpop.f32.mrb[0].mxu0
      %v1244 = vadd.f32 0.0, %v1243
      %v1245 = vpop.f32.mrb[0].mxu0
      %1246 = vmatprep.mubr.f32.mxu0 0.0
      %1247 = vmatmul.mubr.f32.gmra.mrb[0].mxu0 %v1053
      %v1248 = vpop.f32.mrb[0].mxu0
      %v1249 = vadd.f32 0.0, %v1248
      %v1250 = vpop.f32.mrb[0].mxu0
      %1251 = vmatprep.mubr.f32.mxu0 0.0
      %1252 = vmatmul.mubr.f32.gmra.mrb[0].mxu0 %v1056
      %v1253 = vpop.f32.mrb[0].mxu0
      %v1254 = vadd.f32 0.0, %v1253
      %v1255 = vpop.f32.mrb[0].mxu0
      %1256 = vmatprep.mubr.f32.mxu0 0.0
      %1257 = vmatmul.mubr.f32.gmra.mrb[0].mxu0 %v1059
      %v1258 = vpop.f32.mrb[0].mxu0
      %v1259 = vadd.f32 0.0, %v1258
      %v1260 = vpop.f32.mrb[0].mxu0
      %1261 = vmatprep.mubr.f32.mxu0 0.0
      %1262 = vmatmul.mubr.f32.gmra.mrb[0].mxu0 %v1062
      %v1263 = vpop.f32.mrb[0].mxu0
      %v1264 = vadd.f32 0.0, %v1263
      %v1265 = vpop.f32.mrb[0].mxu0
      %1266 = vmatprep.mubr.f32.mxu0 0.0
      %1267 = vmatmul.mubr.f32.gmra.mrb[0].mxu0 %v1065
      %v1268 = vpop.f32.mrb[0].mxu0
      %v1269 = vadd.f32 0.0, %v1268
      %v1270 = vpop.f32.mrb[0].mxu0
      %1271 = vmatprep.mubr.f32.mxu0 0.0
      %1272 = vmatmul.mubr.f32.gmra.mrb[0].mxu0 %v1068
      %v1273 = vpop.f32.mrb[0].mxu0
      %v1274 = vadd.f32 0.0, %v1273
      %v1275 = vpop.f32.mrb[0].mxu0
      %1276 = vmatprep.mubr.f32.mxu0 0.0
      %1277 = vmatmul.mubr.f32.gmra.mrb[0].mxu0 %v1071
      %v1278 = vpop.f32.mrb[0].mxu0
      %v1279 = vadd.f32 0.0, %v1278
      %v1280 = vpop.f32.mrb[0].mxu0
      %1281 = vmatprep.mubr.f32.mxu0 0.0
      %1282 = vmatmul.mubr.f32.gmra.mrb[0].mxu0 %v1074
      %v1283 = vpop.f32.mrb[0].mxu0
      %v1284 = vadd.f32 0.0, %v1283
      %v1285 = vpop.f32.mrb[0].mxu0
      %1286 = vmatprep.mubr.f32.mxu0 0.0
      %1287 = vmatmul.mubr.f32.gmra.mrb[0].mxu0 %v1077
      %v1288 = vpop.f32.mrb[0].mxu0
      %v1289 = vadd.f32 0.0, %v1288
      %v1290 = vpop.f32.mrb[0].mxu0
      %1291 = vmatprep.mubr.f32.mxu0 0.0
      %1292 = vmatmul.mubr.f32.gmra.mrb[0].mxu0 %v1080
      %v1293 = vpop.f32.mrb[0].mxu0
      %v1294 = vadd.f32 0.0, %v1293
      %v1295 = vpop.f32.mrb[0].mxu0
      %1296 = vmatprep.mubr.f32.mxu0 0.0
      %1297 = vmatmul.mubr.f32.gmra.mrb[0].mxu0 %v1083
      %v1298 = vpop.f32.mrb[0].mxu0
      %v1299 = vadd.f32 0.0, %v1298
      %v1300 = vpop.f32.mrb[0].mxu0
      %1301 = vmatprep.mubr.f32.mxu0 0.0
      %1302 = vmatmul.mubr.f32.gmra.mrb[0].mxu0 %v1086
      %v1303 = vpop.f32.mrb[0].mxu0
      %v1304 = vadd.f32 0.0, %v1303
      %v1305 = vpop.f32.mrb[0].mxu0
      %1306 = vmatprep.mubr.f32.mxu0 0.0
      %1307 = vmatmul.mubr.f32.gmra.mrb[0].mxu0 %v1089
      %v1308 = vpop.f32.mrb[0].mxu0
      %v1309 = vadd.f32 0.0, %v1308
      %v1310 = vpop.f32.mrb[0].mxu0
      %1311 = vmatprep.mubr.f32.mxu0 0.0
      %1312 = vmatmul.mubr.f32.gmra.mrb[0].mxu0 %v1092
      %v1313 = vpop.f32.mrb[0].mxu0
      %v1314 = vadd.f32 0.0, %v1313
      %v1315 = vpop.f32.mrb[0].mxu0
      %1316 = vmatprep.mubr.f32.mxu0 0.0
      %1317 = vmatmul.mubr.f32.gmra.mrb[0].mxu0 %v1095
      %v1318 = vpop.f32.mrb[0].mxu0
      %v1319 = vadd.f32 0.0, %v1318
      %v1320 = vpop.f32.mrb[0].mxu0
      %1321 = vmatprep.mubr.f32.mxu0 0.0
      %1322 = vmatmul.mubr.f32.gmra.mrb[0].mxu0 %v1098
      %v1323 = vpop.f32.mrb[0].mxu0
      %v1324 = vadd.f32 0.0, %v1323
      %v1325 = vpop.f32.mrb[0].mxu0
      %1326 = vmatprep.mubr.f32.mxu0 0.0
      %1327 = vmatmul.mubr.f32.gmra.mrb[0].mxu0 %v1101
      %v1328 = vpop.f32.mrb[0].mxu0
      %v1329 = vadd.f32 0.0, %v1328
      %v1330 = vpop.f32.mrb[0].mxu0
      %1331 = vdwg.mxu0
      %1332 = vst.msk [vmem:[%s262] sm:$0xff] %vm297, %v1174
      %1333 = vst.msk [vmem:[%s262 + $0x8] sm:$0xff] %vm297, %v1179
      %1334 = vst.msk [vmem:[%s262 + $0x10] sm:$0xff] %vm297, %v1184
      %1335 = vst.msk [vmem:[%s262 + $0x18] sm:$0xff] %vm297, %v1189
      %1336 = vst.msk [vmem:[%s262 + $0x20] sm:$0xff] %vm297, %v1194
      %1337 = vst.msk [vmem:[%s262 + $0x28] sm:$0xff] %vm297, %v1199
      %1338 = vst.msk [vmem:[%s262 + $0x30] sm:$0xff] %vm297, %v1204
      %1339 = vst.msk [vmem:[%s262 + $0x38] sm:$0xff] %vm297, %v1209
      %1340 = vst.msk [vmem:[%s262 + $0x40] sm:$0xff] %vm297, %v1214
      %1341 = vst.msk [vmem:[%s262 + $0x48] sm:$0xff] %vm297, %v1219
      %1342 = vst.msk [vmem:[%s262 + $0x50] sm:$0xff] %vm297, %v1224
      %1343 = vst.msk [vmem:[%s262 + $0x58] sm:$0xff] %vm297, %v1229
      %1344 = vst.msk [vmem:[%s262 + $0x60] sm:$0xff] %vm297, %v1234
      %1345 = vst.msk [vmem:[%s262 + $0x68] sm:$0xff] %vm297, %v1239
      %1346 = vst.msk [vmem:[%s262 + $0x70] sm:$0xff] %vm297, %v1244
      %1347 = vst.msk [vmem:[%s262 + $0x78] sm:$0xff] %vm297, %v1249
      %1348 = vst.msk [vmem:[%s262 + $0x80] sm:$0xff] %vm297, %v1254
      %1349 = vst.msk [vmem:[%s262 + $0x88] sm:$0xff] %vm297, %v1259
      %1350 = vst.msk [vmem:[%s262 + $0x90] sm:$0xff] %vm297, %v1264
      %1351 = vst.msk [vmem:[%s262 + $0x98] sm:$0xff] %vm297, %v1269
      %1352 = vst.msk [vmem:[%s262 + $0xa0] sm:$0xff] %vm297, %v1274
      %1353 = vst.msk [vmem:[%s262 + $0xa8] sm:$0xff] %vm297, %v1279
      %1354 = vst.msk [vmem:[%s262 + $0xb0] sm:$0xff] %vm297, %v1284
      %1355 = vst.msk [vmem:[%s262 + $0xb8] sm:$0xff] %vm297, %v1289
      %1356 = vst.msk [vmem:[%s262 + $0xc0] sm:$0xff] %vm297, %v1294
      %1357 = vst.msk [vmem:[%s262 + $0xc8] sm:$0xff] %vm297, %v1299
      %1358 = vst.msk [vmem:[%s262 + $0xd0] sm:$0xff] %vm297, %v1304
      %1359 = vst.msk [vmem:[%s262 + $0xd8] sm:$0xff] %vm297, %v1309
      %1360 = vst.msk [vmem:[%s262 + $0xe0] sm:$0xff] %vm297, %v1314
      %1361 = vst.msk [vmem:[%s262 + $0xe8] sm:$0xff] %vm297, %v1319
      %1362 = vst.msk [vmem:[%s262 + $0xf0] sm:$0xff] %vm297, %v1324
      %1363 = vst.msk [vmem:[%s262 + $0xf8] sm:$0xff] %vm297, %v1329
      %p1364 = scmp.lt.s32.totalorder %s18, 1
      %s1365 = scalar_select %p1364, %s18, 1
      %p1366 = scmp.lt.s32.totalorder %s19, 0
      %s1367 = scalar_select %p1366, %s19, 0
      %s1368 = smul.addr %s1367, 32
      %s1369 = smul.addr %s1365, 32
      %s1370 = sadd.s32 %s1368, %s1369
      %s1371 = smul.addr %s1370, 8
      %s1372 = scalar_lea.vmem %s3, %s1371
      // Predicated region
      $region33: #{fwd_eval.30} parent=31 // pred_check
        %p1373 = pneg %p130
      $region34: #{fwd_eval.30} parent=31 // pred_check_branch
        %1375 = sbr.rel (%p1373) target = $region36
      $region35: #{fwd_eval.30} parent=31 // pred_region
        _
      $region36: #{fwd_eval.30} parent=31 // pred_fallthru
        _
    $region32: #{fwd_eval.30} parent=5 // pred_fallthru
      _
    %p1376 = scmp.le.s32.totalorder 2, %s9
    // Predicated region
    $region37: #{fwd_eval.30} parent=5 // pred_check
      %p1377 = pneg %p1376
    $region38: #{fwd_eval.30} parent=5 // pred_check_branch
      %1379 = sbr.rel (%p1377) target = $region40
    $region39: #{fwd_eval.30} parent=5 // pred_region
      %s1380 = ssub.s32 %s9, 2
      // Predicated region
      $region41: #{fwd_eval.30} parent=39 // pred_check
        %p1381 = pneg %p136
      $region42: #{fwd_eval.30} parent=39 // pred_check_branch
        %1383 = sbr.rel (%p1381) target = $region44
      $region43: #{fwd_eval.30} parent=39 // pred_region
        %p1384 = scmp.lt.s32.totalorder %s20, 1
        %s1385 = scalar_select %p1384, %s20, 1
        %p1386 = scmp.lt.s32.totalorder %s21, 0
        %s1387 = scalar_select %p1386, %s21, 0
        %s1388 = smul.addr %s1387, 32
        %s1389 = smul.addr %s1385, 32
        %s1390 = sadd.s32 %s1388, %s1389
        %s1391 = smul.addr %s1390, 8
        %s1392 = scalar_lea.vmem %s3, %s1391
      $region44: #{fwd_eval.30} parent=39 // pred_fallthru
        _
    $region40: #{fwd_eval.30} parent=5 // pred_fallthru
      _
  $region6: #{fwd_eval.30} parent=0 // loop_footer
    %s13 = sadd.s32 1, %s9
  $region7: #{fwd_eval.30} parent=0 // loop_footer_branch
    %8 = sbr.rel target = $region3
  $region8: #{fwd_eval.30} parent=0 // loop_exit
    _

// kernel: fwd_eval.32
$region0: #{fwd_eval.32}
  #allocation0 [shape = 'u32[]', space=smem, size = 0x4, offset = 0x4, fixed_abs, tag = 'smem constant byte address 0x4 - core index']
  #allocation1 [shape = 'u32[144,128]{1,0:T(1,128)}', space=vmem, size = 0x12000, scoped, tag = 'internal scratch']
  %s0 = inlined_call_operand.vmem [shape: f32[512,128], index: 0, kind: input, shape index: {}]
  %s1 = inlined_call_operand.vmem [shape: f32[512,128], index: 1, kind: output, shape index: {}]
  %s2 = sld [smem:[#allocation0]]
  $region14: #{fwd_eval.32} parent=0
    _
  %s4 = ssub.s32 1, %s2
  %s5 = scalar_select 0, %s4, %s2
  // Predicated region
  $region2: #{fwd_eval.32} parent=0 // pred_check
    _
  $region3: #{fwd_eval.32} parent=0 // pred_check_branch
    %7 = sbr.rel (0) target = $region5
  $region4: #{fwd_eval.32} parent=0 // pred_region
    _
  $region5: #{fwd_eval.32} parent=0 // pred_fallthru
    _
  %v8 = vld [vmem:[%s0] sm:$0xff]
  %v9 = vld [vmem:[%s0 + $0x8] sm:$0xff]
  %v10 = vld [vmem:[%s0 + $0x10] sm:$0xff]
  %v11 = vld [vmem:[%s0 + $0x18] sm:$0xff]
  %v12 = vld [vmem:[%s0 + $0x20] sm:$0xff]
  %v13 = vld [vmem:[%s0 + $0x28] sm:$0xff]
  %v14 = vld [vmem:[%s0 + $0x30] sm:$0xff]
  %v15 = vld [vmem:[%s0 + $0x38] sm:$0xff]
  %v16 = vld [vmem:[%s0 + $0x40] sm:$0xff]
  %v17 = vld [vmem:[%s0 + $0x48] sm:$0xff]
  %v18 = vld [vmem:[%s0 + $0x50] sm:$0xff]
  %v19 = vld [vmem:[%s0 + $0x58] sm:$0xff]
  %v20 = vld [vmem:[%s0 + $0x60] sm:$0xff]
  %v21 = vld [vmem:[%s0 + $0x68] sm:$0xff]
  %v22 = vld [vmem:[%s0 + $0x70] sm:$0xff]
  %v23 = vld [vmem:[%s0 + $0x78] sm:$0xff]
  %v24 = vld [vmem:[%s0 + $0x80] sm:$0xff]
  %v25 = vld [vmem:[%s0 + $0x88] sm:$0xff]
  %v26 = vld [vmem:[%s0 + $0x90] sm:$0xff]
  %v27 = vld [vmem:[%s0 + $0x98] sm:$0xff]
  %v28 = vld [vmem:[%s0 + $0xa0] sm:$0xff]
  %v29 = vld [vmem:[%s0 + $0xa8] sm:$0xff]
  %v30 = vld [vmem:[%s0 + $0xb0] sm:$0xff]
  %v31 = vld [vmem:[%s0 + $0xb8] sm:$0xff]
  %v32 = vld [vmem:[%s0 + $0xc0] sm:$0xff]
  %v33 = vld [vmem:[%s0 + $0xc8] sm:$0xff]
  %v34 = vld [vmem:[%s0 + $0xd0] sm:$0xff]
  %v35 = vld [vmem:[%s0 + $0xd8] sm:$0xff]
  %v36 = vld [vmem:[%s0 + $0xe0] sm:$0xff]
  %v37 = vld [vmem:[%s0 + $0xe8] sm:$0xff]
  %v38 = vld [vmem:[%s0 + $0xf0] sm:$0xff]
  %v39 = vld [vmem:[%s0 + $0xf8] sm:$0xff]
  %v40 = vld [vmem:[%s0 + $0x100] sm:$0xff]
  %v41 = vld [vmem:[%s0 + $0x108] sm:$0xff]
  %v42 = vld [vmem:[%s0 + $0x110] sm:$0xff]
  %v43 = vld [vmem:[%s0 + $0x118] sm:$0xff]
  %v44 = vld [vmem:[%s0 + $0x120] sm:$0xff]
  %v45 = vld [vmem:[%s0 + $0x128] sm:$0xff]
  %v46 = vld [vmem:[%s0 + $0x130] sm:$0xff]
  %v47 = vld [vmem:[%s0 + $0x138] sm:$0xff]
  %v48 = vld [vmem:[%s0 + $0x140] sm:$0xff]
  %v49 = vld [vmem:[%s0 + $0x148] sm:$0xff]
  %v50 = vld [vmem:[%s0 + $0x150] sm:$0xff]
  %v51 = vld [vmem:[%s0 + $0x158] sm:$0xff]
  %v52 = vld [vmem:[%s0 + $0x160] sm:$0xff]
  %v53 = vld [vmem:[%s0 + $0x168] sm:$0xff]
  %v54 = vld [vmem:[%s0 + $0x170] sm:$0xff]
  %v55 = vld [vmem:[%s0 + $0x178] sm:$0xff]
  %v56 = vld [vmem:[%s0 + $0x180] sm:$0xff]
  %v57 = vld [vmem:[%s0 + $0x188] sm:$0xff]
  %v58 = vld [vmem:[%s0 + $0x190] sm:$0xff]
  %v59 = vld [vmem:[%s0 + $0x198] sm:$0xff]
  %v60 = vld [vmem:[%s0 + $0x1a0] sm:$0xff]
  %v61 = vld [vmem:[%s0 + $0x1a8] sm:$0xff]
  %v62 = vld [vmem:[%s0 + $0x1b0] sm:$0xff]
  %v63 = vld [vmem:[%s0 + $0x1b8] sm:$0xff]
  %v64 = vld [vmem:[%s0 + $0x1c0] sm:$0xff]
  %v65 = vld [vmem:[%s0 + $0x1c8] sm:$0xff]
  %v66 = vld [vmem:[%s0 + $0x1d0] sm:$0xff]
  %v67 = vld [vmem:[%s0 + $0x1d8] sm:$0xff]
  %v68 = vld [vmem:[%s0 + $0x1e0] sm:$0xff]
  %v69 = vld [vmem:[%s0 + $0x1e8] sm:$0xff]
  %v70 = vld [vmem:[%s0 + $0x1f0] sm:$0xff]
  %v71 = vld [vmem:[%s0 + $0x1f8] sm:$0xff]
  %v72 = vmul.f32 %v8, 0.5
  %v73 = vmul.f32 %v9, 0.5
  %v74 = vmul.f32 %v10, 0.5
  %v75 = vmul.f32 %v11, 0.5
  %v76 = vmul.f32 %v12, 0.5
  %v77 = vmul.f32 %v13, 0.5
  %v78 = vmul.f32 %v14, 0.5
  %v79 = vmul.f32 %v15, 0.5
  %v80 = vmul.f32 %v16, 0.5
  %v81 = vmul.f32 %v17, 0.5
  %v82 = vmul.f32 %v18, 0.5
  %v83 = vmul.f32 %v19, 0.5
  %v84 = vmul.f32 %v20, 0.5
  %v85 = vmul.f32 %v21, 0.5
  %v86 = vmul.f32 %v22, 0.5
  %v87 = vmul.f32 %v23, 0.5
  %v88 = vmul.f32 %v24, 0.5
  %v89 = vmul.f32 %v25, 0.5
  %v90 = vmul.f32 %v26, 0.5
  %v91 = vmul.f32 %v27, 0.5
  %v92 = vmul.f32 %v28, 0.5
  %v93 = vmul.f32 %v29, 0.5
  %v94 = vmul.f32 %v30, 0.5
  %v95 = vmul.f32 %v31, 0.5
  %v96 = vmul.f32 %v32, 0.5
  %v97 = vmul.f32 %v33, 0.5
  %v98 = vmul.f32 %v34, 0.5
  %v99 = vmul.f32 %v35, 0.5
  %v100 = vmul.f32 %v36, 0.5
  %v101 = vmul.f32 %v37, 0.5
  %v102 = vmul.f32 %v38, 0.5
  %v103 = vmul.f32 %v39, 0.5
  %v104 = vmul.f32 %v40, 0.5
  %v105 = vmul.f32 %v41, 0.5
  %v106 = vmul.f32 %v42, 0.5
  %v107 = vmul.f32 %v43, 0.5
  %v108 = vmul.f32 %v44, 0.5
  %v109 = vmul.f32 %v45, 0.5
  %v110 = vmul.f32 %v46, 0.5
  %v111 = vmul.f32 %v47, 0.5
  %v112 = vmul.f32 %v48, 0.5
  %v113 = vmul.f32 %v49, 0.5
  %v114 = vmul.f32 %v50, 0.5
  %v115 = vmul.f32 %v51, 0.5
  %v116 = vmul.f32 %v52, 0.5
  %v117 = vmul.f32 %v53, 0.5
  %v118 = vmul.f32 %v54, 0.5
  %v119 = vmul.f32 %v55, 0.5
  %v120 = vmul.f32 %v56, 0.5
  %v121 = vmul.f32 %v57, 0.5
  %v122 = vmul.f32 %v58, 0.5
  %v123 = vmul.f32 %v59, 0.5
  %v124 = vmul.f32 %v60, 0.5
  %v125 = vmul.f32 %v61, 0.5
  %v126 = vmul.f32 %v62, 0.5
  %v127 = vmul.f32 %v63, 0.5
  %v128 = vmul.f32 %v64, 0.5
  %v129 = vmul.f32 %v65, 0.5
  %v130 = vmul.f32 %v66, 0.5
  %v131 = vmul.f32 %v67, 0.5
  %v132 = vmul.f32 %v68, 0.5
  %v133 = vmul.f32 %v69, 0.5
  %v134 = vmul.f32 %v70, 0.5
  %v135 = vmul.f32 %v71, 0.5
  %v136 = vmul.f32 %v8, 0.044715
  %v137 = vmul.f32 %v9, 0.044715
  %v138 = vmul.f32 %v10, 0.044715
  %v139 = vmul.f32 %v11, 0.044715
  %v140 = vmul.f32 %v12, 0.044715
  %v141 = vmul.f32 %v13, 0.044715
  %v142 = vmul.f32 %v14, 0.044715
  %v143 = vmul.f32 %v15, 0.044715
  %v144 = vmul.f32 %v16, 0.044715
  %v145 = vmul.f32 %v17, 0.044715
  %v146 = vmul.f32 %v18, 0.044715
  %v147 = vmul.f32 %v19, 0.044715
  %v148 = vmul.f32 %v20, 0.044715
  %v149 = vmul.f32 %v21, 0.044715
  %v150 = vmul.f32 %v22, 0.044715
  %v151 = vmul.f32 %v23, 0.044715
  %v152 = vmul.f32 %v24, 0.044715
  %v153 = vmul.f32 %v25, 0.044715
  %v154 = vmul.f32 %v26, 0.044715
  %v155 = vmul.f32 %v27, 0.044715
  %v156 = vmul.f32 %v28, 0.044715
  %v157 = vmul.f32 %v29, 0.044715
  %v158 = vmul.f32 %v30, 0.044715
  %v159 = vmul.f32 %v31, 0.044715
  %v160 = vmul.f32 %v32, 0.044715
  %v161 = vmul.f32 %v33, 0.044715
  %v162 = vmul.f32 %v34, 0.044715
  %v163 = vmul.f32 %v35, 0.044715
  %v164 = vmul.f32 %v36, 0.044715
  %v165 = vmul.f32 %v37, 0.044715
  %v166 = vmul.f32 %v38, 0.044715
  %v167 = vmul.f32 %v39, 0.044715
  %v168 = vmul.f32 %v40, 0.044715
  %v169 = vmul.f32 %v41, 0.044715
  %v170 = vmul.f32 %v42, 0.044715
  %v171 = vmul.f32 %v43, 0.044715
  %v172 = vmul.f32 %v44, 0.044715
  %v173 = vmul.f32 %v45, 0.044715
  %v174 = vmul.f32 %v46, 0.044715
  %v175 = vmul.f32 %v47, 0.044715
  %v176 = vmul.f32 %v48, 0.044715
  %v177 = vmul.f32 %v49, 0.044715
  %v178 = vmul.f32 %v50, 0.044715
  %v179 = vmul.f32 %v51, 0.044715
  %v180 = vmul.f32 %v52, 0.044715
  %v181 = vmul.f32 %v53, 0.044715
  %v182 = vmul.f32 %v54, 0.044715
  %v183 = vmul.f32 %v55, 0.044715
  %v184 = vmul.f32 %v56, 0.044715
  %v185 = vmul.f32 %v57, 0.044715
  %v186 = vmul.f32 %v58, 0.044715
  %v187 = vmul.f32 %v59, 0.044715
  %v188 = vmul.f32 %v60, 0.044715
  %v189 = vmul.f32 %v61, 0.044715
  %v190 = vmul.f32 %v62, 0.044715
  %v191 = vmul.f32 %v63, 0.044715
  %v192 = vmul.f32 %v64, 0.044715
  %v193 = vmul.f32 %v65, 0.044715
  %v194 = vmul.f32 %v66, 0.044715
  %v195 = vmul.f32 %v67, 0.044715
  %v196 = vmul.f32 %v68, 0.044715
  %v197 = vmul.f32 %v69, 0.044715
  %v198 = vmul.f32 %v70, 0.044715
  %v199 = vmul.f32 %v71, 0.044715
  %v200 = vmul.f32 %v136, %v8
  %v201 = vmul.f32 %v137, %v9
  %v202 = vmul.f32 %v138, %v10
  %v203 = vmul.f32 %v139, %v11
  %v204 = vmul.f32 %v140, %v12
  %v205 = vmul.f32 %v141, %v13
  %v206 = vmul.f32 %v142, %v14
  %v207 = vmul.f32 %v143, %v15
  %v208 = vmul.f32 %v144, %v16
  %v209 = vmul.f32 %v145, %v17
  %v210 = vmul.f32 %v146, %v18
  %v211 = vmul.f32 %v147, %v19
  %v212 = vmul.f32 %v148, %v20
  %v213 = vmul.f32 %v149, %v21
  %v214 = vmul.f32 %v150, %v22
  %v215 = vmul.f32 %v151, %v23
  %v216 = vmul.f32 %v152, %v24
  %v217 = vmul.f32 %v153, %v25
  %v218 = vmul.f32 %v154, %v26
  %v219 = vmul.f32 %v155, %v27
  %v220 = vmul.f32 %v156, %v28
  %v221 = vmul.f32 %v157, %v29
  %v222 = vmul.f32 %v158, %v30
  %v223 = vmul.f32 %v159, %v31
  %v224 = vmul.f32 %v160, %v32
  %v225 = vmul.f32 %v161, %v33
  %v226 = vmul.f32 %v162, %v34
  %v227 = vmul.f32 %v163, %v35
  %v228 = vmul.f32 %v164, %v36
  %v229 = vmul.f32 %v165, %v37
  %v230 = vmul.f32 %v166, %v38
  %v231 = vmul.f32 %v167, %v39
  %v232 = vmul.f32 %v168, %v40
  %v233 = vmul.f32 %v169, %v41
  %v234 = vmul.f32 %v170, %v42
  %v235 = vmul.f32 %v171, %v43
  %v236 = vmul.f32 %v172, %v44
  %v237 = vmul.f32 %v173, %v45
  %v238 = vmul.f32 %v174, %v46
  %v239 = vmul.f32 %v175, %v47
  %v240 = vmul.f32 %v176, %v48
  %v241 = vmul.f32 %v177, %v49
  %v242 = vmul.f32 %v178, %v50
  %v243 = vmul.f32 %v179, %v51
  %v244 = vmul.f32 %v180, %v52
  %v245 = vmul.f32 %v181, %v53
  %v246 = vmul.f32 %v182, %v54
  %v247 = vmul.f32 %v183, %v55
  %v248 = vmul.f32 %v184, %v56
  %v249 = vmul.f32 %v185, %v57
  %v250 = vmul.f32 %v186, %v58
  %v251 = vmul.f32 %v187, %v59
  %v252 = vmul.f32 %v188, %v60
  %v253 = vmul.f32 %v189, %v61
  %v254 = vmul.f32 %v190, %v62
  %v255 = vmul.f32 %v191, %v63
  %v256 = vmul.f32 %v192, %v64
  %v257 = vmul.f32 %v193, %v65
  %v258 = vmul.f32 %v194, %v66
  %v259 = vmul.f32 %v195, %v67
  %v260 = vmul.f32 %v196, %v68
  %v261 = vmul.f32 %v197, %v69
  %v262 = vmul.f32 %v198, %v70
  %v263 = vmul.f32 %v199, %v71
  %v264 = vmul.f32 %v200, %v8
  %v265 = vmul.f32 %v201, %v9
  %v266 = vmul.f32 %v202, %v10
  %v267 = vmul.f32 %v203, %v11
  %v268 = vmul.f32 %v204, %v12
  %v269 = vmul.f32 %v205, %v13
  %v270 = vmul.f32 %v206, %v14
  %v271 = vmul.f32 %v207, %v15
  %v272 = vmul.f32 %v208, %v16
  %v273 = vmul.f32 %v209, %v17
  %v274 = vmul.f32 %v210, %v18
  %v275 = vmul.f32 %v211, %v19
  %v276 = vmul.f32 %v212, %v20
  %v277 = vmul.f32 %v213, %v21
  %v278 = vmul.f32 %v214, %v22
  %v279 = vmul.f32 %v215, %v23
  %v280 = vmul.f32 %v216, %v24
  %v281 = vmul.f32 %v217, %v25
  %v282 = vmul.f32 %v218, %v26
  %v283 = vmul.f32 %v219, %v27
  %v284 = vmul.f32 %v220, %v28
  %v285 = vmul.f32 %v221, %v29
  %v286 = vmul.f32 %v222, %v30
  %v287 = vmul.f32 %v223, %v31
  %v288 = vmul.f32 %v224, %v32
  %v289 = vmul.f32 %v225, %v33
  %v290 = vmul.f32 %v226, %v34
  %v291 = vmul.f32 %v227, %v35
  %v292 = vmul.f32 %v228, %v36
  %v293 = vmul.f32 %v229, %v37
  %v294 = vmul.f32 %v230, %v38
  %v295 = vmul.f32 %v231, %v39
  %v296 = vmul.f32 %v232, %v40
  %v297 = vmul.f32 %v233, %v41
  %v298 = vmul.f32 %v234, %v42
  %v299 = vmul.f32 %v235, %v43
  %v300 = vmul.f32 %v236, %v44
  %v301 = vmul.f32 %v237, %v45
  %v302 = vmul.f32 %v238, %v46
  %v303 = vmul.f32 %v239, %v47
  %v304 = vmul.f32 %v240, %v48
  %v305 = vmul.f32 %v241, %v49
  %v306 = vmul.f32 %v242, %v50
  %v307 = vmul.f32 %v243, %v51
  %v308 = vmul.f32 %v244, %v52
  %v309 = vmul.f32 %v245, %v53
  %v310 = vmul.f32 %v246, %v54
  %v311 = vmul.f32 %v247, %v55
  %v312 = vmul.f32 %v248, %v56
  %v313 = vmul.f32 %v249, %v57
  %v314 = vmul.f32 %v250, %v58
  %v315 = vmul.f32 %v251, %v59
  %v316 = vmul.f32 %v252, %v60
  %v317 = vmul.f32 %v253, %v61
  %v318 = vmul.f32 %v254, %v62
  %v319 = vmul.f32 %v255, %v63
  %v320 = vmul.f32 %v256, %v64
  %v321 = vmul.f32 %v257, %v65
  %v322 = vmul.f32 %v258, %v66
  %v323 = vmul.f32 %v259, %v67
  %v324 = vmul.f32 %v260, %v68
  %v325 = vmul.f32 %v261, %v69
  %v326 = vmul.f32 %v262, %v70
  %v327 = vmul.f32 %v263, %v71
  %v328 = vadd.f32 %v8, %v264
  %v329 = vadd.f32 %v9, %v265
  %v330 = vadd.f32 %v10, %v266
  %v331 = vadd.f32 %v11, %v267
  %v332 = vadd.f32 %v12, %v268
  %v333 = vadd.f32 %v13, %v269
  %v334 = vadd.f32 %v14, %v270
  %v335 = vadd.f32 %v15, %v271
  %v336 = vadd.f32 %v16, %v272
  %v337 = vadd.f32 %v17, %v273
  %v338 = vadd.f32 %v18, %v274
  %v339 = vadd.f32 %v19, %v275
  %v340 = vadd.f32 %v20, %v276
  %v341 = vadd.f32 %v21, %v277
  %v342 = vadd.f32 %v22, %v278
  %v343 = vadd.f32 %v23, %v279
  %v344 = vadd.f32 %v24, %v280
  %v345 = vadd.f32 %v25, %v281
  %v346 = vadd.f32 %v26, %v282
  %v347 = vadd.f32 %v27, %v283
  %v348 = vadd.f32 %v28, %v284
  %v349 = vadd.f32 %v29, %v285
  %v350 = vadd.f32 %v30, %v286
  %v351 = vadd.f32 %v31, %v287
  %v352 = vadd.f32 %v32, %v288
  %v353 = vadd.f32 %v33, %v289
  %v354 = vadd.f32 %v34, %v290
  %v355 = vadd.f32 %v35, %v291
  %v356 = vadd.f32 %v36, %v292
  %v357 = vadd.f32 %v37, %v293
  %v358 = vadd.f32 %v38, %v294
  %v359 = vadd.f32 %v39, %v295
  %v360 = vadd.f32 %v40, %v296
  %v361 = vadd.f32 %v41, %v297
  %v362 = vadd.f32 %v42, %v298
  %v363 = vadd.f32 %v43, %v299
  %v364 = vadd.f32 %v44, %v300
  %v365 = vadd.f32 %v45, %v301
  %v366 = vadd.f32 %v46, %v302
  %v367 = vadd.f32 %v47, %v303
  %v368 = vadd.f32 %v48, %v304
  %v369 = vadd.f32 %v49, %v305
  %v370 = vadd.f32 %v50, %v306
  %v371 = vadd.f32 %v51, %v307
  %v372 = vadd.f32 %v52, %v308
  %v373 = vadd.f32 %v53, %v309
  %v374 = vadd.f32 %v54, %v310
  %v375 = vadd.f32 %v55, %v311
  %v376 = vadd.f32 %v56, %v312
  %v377 = vadd.f32 %v57, %v313
  %v378 = vadd.f32 %v58, %v314
  %v379 = vadd.f32 %v59, %v315
  %v380 = vadd.f32 %v60, %v316
  %v381 = vadd.f32 %v61, %v317
  %v382 = vadd.f32 %v62, %v318
  %v383 = vadd.f32 %v63, %v319
  %v384 = vadd.f32 %v64, %v320
  %v385 = vadd.f32 %v65, %v321
  %v386 = vadd.f32 %v66, %v322
  %v387 = vadd.f32 %v67, %v323
  %v388 = vadd.f32 %v68, %v324
  %v389 = vadd.f32 %v69, %v325
  %v390 = vadd.f32 %v70, %v326
  %v391 = vadd.f32 %v71, %v327
  %v392 = vmul.f32 %v328, 0.7978846
  %v393 = vmul.f32 %v329, 0.7978846
  %v394 = vmul.f32 %v330, 0.7978846
  %v395 = vmul.f32 %v331, 0.7978846
  %v396 = vmul.f32 %v332, 0.7978846
  %v397 = vmul.f32 %v333, 0.7978846
  %v398 = vmul.f32 %v334, 0.7978846
  %v399 = vmul.f32 %v335, 0.7978846
  %v400 = vmul.f32 %v336, 0.7978846
  %v401 = vmul.f32 %v337, 0.7978846
  %v402 = vmul.f32 %v338, 0.7978846
  %v403 = vmul.f32 %v339, 0.7978846
  %v404 = vmul.f32 %v340, 0.7978846
  %v405 = vmul.f32 %v341, 0.7978846
  %v406 = vmul.f32 %v342, 0.7978846
  %v407 = vmul.f32 %v343, 0.7978846
  %v408 = vmul.f32 %v344, 0.7978846
  %v409 = vmul.f32 %v345, 0.7978846
  %v410 = vmul.f32 %v346, 0.7978846
  %v411 = vmul.f32 %v347, 0.7978846
  %v412 = vmul.f32 %v348, 0.7978846
  %v413 = vmul.f32 %v349, 0.7978846
  %v414 = vmul.f32 %v350, 0.7978846
  %v415 = vmul.f32 %v351, 0.7978846
  %v416 = vmul.f32 %v352, 0.7978846
  %v417 = vmul.f32 %v353, 0.7978846
  %v418 = vmul.f32 %v354, 0.7978846
  %v419 = vmul.f32 %v355, 0.7978846
  %v420 = vmul.f32 %v356, 0.7978846
  %v421 = vmul.f32 %v357, 0.7978846
  %v422 = vmul.f32 %v358, 0.7978846
  %v423 = vmul.f32 %v359, 0.7978846
  %v424 = vmul.f32 %v360, 0.7978846
  %v425 = vmul.f32 %v361, 0.7978846
  %v426 = vmul.f32 %v362, 0.7978846
  %v427 = vmul.f32 %v363, 0.7978846
  %v428 = vmul.f32 %v364, 0.7978846
  %v429 = vmul.f32 %v365, 0.7978846
  %v430 = vmul.f32 %v366, 0.7978846
  %v431 = vmul.f32 %v367, 0.7978846
  %v432 = vmul.f32 %v368, 0.7978846
  %v433 = vmul.f32 %v369, 0.7978846
  %v434 = vmul.f32 %v370, 0.7978846
  %v435 = vmul.f32 %v371, 0.7978846
  %v436 = vmul.f32 %v372, 0.7978846
  %v437 = vmul.f32 %v373, 0.7978846
  %v438 = vmul.f32 %v374, 0.7978846
  %v439 = vmul.f32 %v375, 0.7978846
  %v440 = vmul.f32 %v376, 0.7978846
  %v441 = vmul.f32 %v377, 0.7978846
  %v442 = vmul.f32 %v378, 0.7978846
  %v443 = vmul.f32 %v379, 0.7978846
  %v444 = vmul.f32 %v380, 0.7978846
  %v445 = vmul.f32 %v381, 0.7978846
  %v446 = vmul.f32 %v382, 0.7978846
  %v447 = vmul.f32 %v383, 0.7978846
  %v448 = vmul.f32 %v384, 0.7978846
  %v449 = vmul.f32 %v385, 0.7978846
  %v450 = vmul.f32 %v386, 0.7978846
  %v451 = vmul.f32 %v387, 0.7978846
  %v452 = vmul.f32 %v388, 0.7978846
  %v453 = vmul.f32 %v389, 0.7978846
  %v454 = vmul.f32 %v390, 0.7978846
  %v455 = vmul.f32 %v391, 0.7978846
  %v456 = vtanh.pop %v392
  %v457 = vtanh.pop %v393
  %v458 = vtanh.pop %v394
  %v459 = vtanh.pop %v395
  %v460 = vtanh.pop %v396
  %v461 = vtanh.pop %v397
  %v462 = vtanh.pop %v398
  %v463 = vtanh.pop %v399
  %v464 = vtanh.pop %v400
  %v465 = vtanh.pop %v401
  %v466 = vtanh.pop %v402
  %v467 = vtanh.pop %v403
  %v468 = vtanh.pop %v404
  %v469 = vtanh.pop %v405
  %v470 = vtanh.pop %v406
  %v471 = vtanh.pop %v407
  %v472 = vtanh.pop %v408
  %v473 = vtanh.pop %v409
  %v474 = vtanh.pop %v410
  %v475 = vtanh.pop %v411
  %v476 = vtanh.pop %v412
  %v477 = vtanh.pop %v413
  %v478 = vtanh.pop %v414
  %v479 = vtanh.pop %v415
  %v480 = vtanh.pop %v416
  %v481 = vtanh.pop %v417
  %v482 = vtanh.pop %v418
  %v483 = vtanh.pop %v419
  %v484 = vtanh.pop %v420
  %v485 = vtanh.pop %v421
  %v486 = vtanh.pop %v422
  %v487 = vtanh.pop %v423
  %v488 = vtanh.pop %v424
  %v489 = vtanh.pop %v425
  %v490 = vtanh.pop %v426
  %v491 = vtanh.pop %v427
  %v492 = vtanh.pop %v428
  %v493 = vtanh.pop %v429
  %v494 = vtanh.pop %v430
  %v495 = vtanh.pop %v431
  %v496 = vtanh.pop %v432
  %v497 = vtanh.pop %v433
  %v498 = vtanh.pop %v434
  %v499 = vtanh.pop %v435
  %v500 = vtanh.pop %v436
  %v501 = vtanh.pop %v437
  %v502 = vtanh.pop %v438
  %v503 = vtanh.pop %v439
  %v504 = vtanh.pop %v440
  %v505 = vtanh.pop %v441
  %v506 = vtanh.pop %v442
  %v507 = vtanh.pop %v443
  %v508 = vtanh.pop %v444
  %v509 = vtanh.pop %v445
  %v510 = vtanh.pop %v446
  %v511 = vtanh.pop %v447
  %v512 = vtanh.pop %v448
  %v513 = vtanh.pop %v449
  %v514 = vtanh.pop %v450
  %v515 = vtanh.pop %v451
  %v516 = vtanh.pop %v452
  %v517 = vtanh.pop %v453
  %v518 = vtanh.pop %v454
  %v519 = vtanh.pop %v455
  %v520 = vadd.f32 %v456, 1.0
  %v521 = vadd.f32 %v457, 1.0
  %v522 = vadd.f32 %v458, 1.0
  %v523 = vadd.f32 %v459, 1.0
  %v524 = vadd.f32 %v460, 1.0
  %v525 = vadd.f32 %v461, 1.0
  %v526 = vadd.f32 %v462, 1.0
  %v527 = vadd.f32 %v463, 1.0
  %v528 = vadd.f32 %v464, 1.0
  %v529 = vadd.f32 %v465, 1.0
  %v530 = vadd.f32 %v466, 1.0
  %v531 = vadd.f32 %v467, 1.0
  %v532 = vadd.f32 %v468, 1.0
  %v533 = vadd.f32 %v469, 1.0
  %v534 = vadd.f32 %v470, 1.0
  %v535 = vadd.f32 %v471, 1.0
  %v536 = vadd.f32 %v472, 1.0
  %v537 = vadd.f32 %v473, 1.0
  %v538 = vadd.f32 %v474, 1.0
  %v539 = vadd.f32 %v475, 1.0
  %v540 = vadd.f32 %v476, 1.0
  %v541 = vadd.f32 %v477, 1.0
  %v542 = vadd.f32 %v478, 1.0
  %v543 = vadd.f32 %v479, 1.0
  %v544 = vadd.f32 %v480, 1.0
  %v545 = vadd.f32 %v481, 1.0
  %v546 = vadd.f32 %v482, 1.0
  %v547 = vadd.f32 %v483, 1.0
  %v548 = vadd.f32 %v484, 1.0
  %v549 = vadd.f32 %v485, 1.0
  %v550 = vadd.f32 %v486, 1.0
  %v551 = vadd.f32 %v487, 1.0
  %v552 = vadd.f32 %v488, 1.0
  %v553 = vadd.f32 %v489, 1.0
  %v554 = vadd.f32 %v490, 1.0
  %v555 = vadd.f32 %v491, 1.0
  %v556 = vadd.f32 %v492, 1.0
  %v557 = vadd.f32 %v493, 1.0
  %v558 = vadd.f32 %v494, 1.0
  %v559 = vadd.f32 %v495, 1.0
  %v560 = vadd.f32 %v496, 1.0
  %v561 = vadd.f32 %v497, 1.0
  %v562 = vadd.f32 %v498, 1.0
  %v563 = vadd.f32 %v499, 1.0
  %v564 = vadd.f32 %v500, 1.0
  %v565 = vadd.f32 %v501, 1.0
  %v566 = vadd.f32 %v502, 1.0
  %v567 = vadd.f32 %v503, 1.0
  %v568 = vadd.f32 %v504, 1.0
  %v569 = vadd.f32 %v505, 1.0
  %v570 = vadd.f32 %v506, 1.0
  %v571 = vadd.f32 %v507, 1.0
  %v572 = vadd.f32 %v508, 1.0
  %v573 = vadd.f32 %v509, 1.0
  %v574 = vadd.f32 %v510, 1.0
  %v575 = vadd.f32 %v511, 1.0
  %v576 = vadd.f32 %v512, 1.0
  %v577 = vadd.f32 %v513, 1.0
  %v578 = vadd.f32 %v514, 1.0
  %v579 = vadd.f32 %v515, 1.0
  %v580 = vadd.f32 %v516, 1.0
  %v581 = vadd.f32 %v517, 1.0
  %v582 = vadd.f32 %v518, 1.0
  %v583 = vadd.f32 %v519, 1.0
  %v584 = vmul.f32 %v72, %v520
  %v585 = vmul.f32 %v73, %v521
  %v586 = vmul.f32 %v74, %v522
  %v587 = vmul.f32 %v75, %v523
  %v588 = vmul.f32 %v76, %v524
  %v589 = vmul.f32 %v77, %v525
  %v590 = vmul.f32 %v78, %v526
  %v591 = vmul.f32 %v79, %v527
  %v592 = vmul.f32 %v80, %v528
  %v593 = vmul.f32 %v81, %v529
  %v594 = vmul.f32 %v82, %v530
  %v595 = vmul.f32 %v83, %v531
  %v596 = vmul.f32 %v84, %v532
  %v597 = vmul.f32 %v85, %v533
  %v598 = vmul.f32 %v86, %v534
  %v599 = vmul.f32 %v87, %v535
  %v600 = vmul.f32 %v88, %v536
  %v601 = vmul.f32 %v89, %v537
  %v602 = vmul.f32 %v90, %v538
  %v603 = vmul.f32 %v91, %v539
  %v604 = vmul.f32 %v92, %v540
  %v605 = vmul.f32 %v93, %v541
  %v606 = vmul.f32 %v94, %v542
  %v607 = vmul.f32 %v95, %v543
  %v608 = vmul.f32 %v96, %v544
  %v609 = vmul.f32 %v97, %v545
  %v610 = vmul.f32 %v98, %v546
  %v611 = vmul.f32 %v99, %v547
  %v612 = vmul.f32 %v100, %v548
  %v613 = vmul.f32 %v101, %v549
  %v614 = vmul.f32 %v102, %v550
  %v615 = vmul.f32 %v103, %v551
  %v616 = vmul.f32 %v104, %v552
  %v617 = vmul.f32 %v105, %v553
  %v618 = vmul.f32 %v106, %v554
  %v619 = vmul.f32 %v107, %v555
  %v620 = vmul.f32 %v108, %v556
  %v621 = vmul.f32 %v109, %v557
  %v622 = vmul.f32 %v110, %v558
  %v623 = vmul.f32 %v111, %v559
  %v624 = vmul.f32 %v112, %v560
  %v625 = vmul.f32 %v113, %v561
  %v626 = vmul.f32 %v114, %v562
  %v627 = vmul.f32 %v115, %v563
  %v628 = vmul.f32 %v116, %v564
  %v629 = vmul.f32 %v117, %v565
  %v630 = vmul.f32 %v118, %v566
  %v631 = vmul.f32 %v119, %v567
  %v632 = vmul.f32 %v120, %v568
  %v633 = vmul.f32 %v121, %v569
  %v634 = vmul.f32 %v122, %v570
  %v635 = vmul.f32 %v123, %v571
  %v636 = vmul.f32 %v124, %v572
  %v637 = vmul.f32 %v125, %v573
  %v638 = vmul.f32 %v126, %v574
  %v639 = vmul.f32 %v127, %v575
  %v640 = vmul.f32 %v128, %v576
  %v641 = vmul.f32 %v129, %v577
  %v642 = vmul.f32 %v130, %v578
  %v643 = vmul.f32 %v131, %v579
  %v644 = vmul.f32 %v132, %v580
  %v645 = vmul.f32 %v133, %v581
  %v646 = vmul.f32 %v134, %v582
  %v647 = vmul.f32 %v135, %v583
  %648 = vst [vmem:[%s1] sm:$0xff] %v584
  %649 = vst [vmem:[%s1 + $0x8] sm:$0xff] %v585
  %650 = vst [vmem:[%s1 + $0x10] sm:$0xff] %v586
  %651 = vst [vmem:[%s1 + $0x18] sm:$0xff] %v587
  %652 = vst [vmem:[%s1 + $0x20] sm:$0xff] %v588
  %653 = vst [vmem:[%s1 + $0x28] sm:$0xff] %v589
  %654 = vst [vmem:[%s1 + $0x30] sm:$0xff] %v590
  %655 = vst [vmem:[%s1 + $0x38] sm:$0xff] %v591
  %656 = vst [vmem:[%s1 + $0x40] sm:$0xff] %v592
  %657 = vst [vmem:[%s1 + $0x48] sm:$0xff] %v593
  %658 = vst [vmem:[%s1 + $0x50] sm:$0xff] %v594
  %659 = vst [vmem:[%s1 + $0x58] sm:$0xff] %v595
  %660 = vst [vmem:[%s1 + $0x60] sm:$0xff] %v596
  %661 = vst [vmem:[%s1 + $0x68] sm:$0xff] %v597
  %662 = vst [vmem:[%s1 + $0x70] sm:$0xff] %v598
  %663 = vst [vmem:[%s1 + $0x78] sm:$0xff] %v599
  %664 = vst [vmem:[%s1 + $0x80] sm:$0xff] %v600
  %665 = vst [vmem:[%s1 + $0x88] sm:$0xff] %v601
  %666 = vst [vmem:[%s1 + $0x90] sm:$0xff] %v602
  %667 = vst [vmem:[%s1 + $0x98] sm:$0xff] %v603
  %668 = vst [vmem:[%s1 + $0xa0] sm:$0xff] %v604
  %669 = vst [vmem:[%s1 + $0xa8] sm:$0xff] %v605
  %670 = vst [vmem:[%s1 + $0xb0] sm:$0xff] %v606
  %671 = vst [vmem:[%s1 + $0xb8] sm:$0xff] %v607
  %672 = vst [vmem:[%s1 + $0xc0] sm:$0xff] %v608
  %673 = vst [vmem:[%s1 + $0xc8] sm:$0xff] %v609
  %674 = vst [vmem:[%s1 + $0xd0] sm:$0xff] %v610
  %675 = vst [vmem:[%s1 + $0xd8] sm:$0xff] %v611
  %676 = vst [vmem:[%s1 + $0xe0] sm:$0xff] %v612
  %677 = vst [vmem:[%s1 + $0xe8] sm:$0xff] %v613
  %678 = vst [vmem:[%s1 + $0xf0] sm:$0xff] %v614
  %679 = vst [vmem:[%s1 + $0xf8] sm:$0xff] %v615
  %680 = vst [vmem:[%s1 + $0x100] sm:$0xff] %v616
  %681 = vst [vmem:[%s1 + $0x108] sm:$0xff] %v617
  %682 = vst [vmem:[%s1 + $0x110] sm:$0xff] %v618
  %683 = vst [vmem:[%s1 + $0x118] sm:$0xff] %v619
  %684 = vst [vmem:[%s1 + $0x120] sm:$0xff] %v620
  %685 = vst [vmem:[%s1 + $0x128] sm:$0xff] %v621
  %686 = vst [vmem:[%s1 + $0x130] sm:$0xff] %v622
  %687 = vst [vmem:[%s1 + $0x138] sm:$0xff] %v623
  %688 = vst [vmem:[%s1 + $0x140] sm:$0xff] %v624
  %689 = vst [vmem:[%s1 + $0x148] sm:$0xff] %v625
  %690 = vst [vmem:[%s1 + $0x150] sm:$0xff] %v626
  %691 = vst [vmem:[%s1 + $0x158] sm:$0xff] %v627
  %692 = vst [vmem:[%s1 + $0x160] sm:$0xff] %v628
  %693 = vst [vmem:[%s1 + $0x168] sm:$0xff] %v629
  %694 = vst [vmem:[%s1 + $0x170] sm:$0xff] %v630
  %695 = vst [vmem:[%s1 + $0x178] sm:$0xff] %v631
  %696 = vst [vmem:[%s1 + $0x180] sm:$0xff] %v632
  %697 = vst [vmem:[%s1 + $0x188] sm:$0xff] %v633
  %698 = vst [vmem:[%s1 + $0x190] sm:$0xff] %v634
  %699 = vst [vmem:[%s1 + $0x198] sm:$0xff] %v635
  %700 = vst [vmem:[%s1 + $0x1a0] sm:$0xff] %v636
  %701 = vst [vmem:[%s1 + $0x1a8] sm:$0xff] %v637
  %702 = vst [vmem:[%s1 + $0x1b0] sm:$0xff] %v638
  %703 = vst [vmem:[%s1 + $0x1b8] sm:$0xff] %v639
  %704 = vst [vmem:[%s1 + $0x1c0] sm:$0xff] %v640
  %705 = vst [vmem:[%s1 + $0x1c8] sm:$0xff] %v641
  %706 = vst [vmem:[%s1 + $0x1d0] sm:$0xff] %v642
  %707 = vst [vmem:[%s1 + $0x1d8] sm:$0xff] %v643
  %708 = vst [vmem:[%s1 + $0x1e0] sm:$0xff] %v644
  %709 = vst [vmem:[%s1 + $0x1e8] sm:$0xff] %v645
  %710 = vst [vmem:[%s1 + $0x1f0] sm:$0xff] %v646
  %711 = vst [vmem:[%s1 + $0x1f8] sm:$0xff] %v647
  // Predicated region
  $region6: #{fwd_eval.32} parent=0 // pred_check
    _
  $region7: #{fwd_eval.32} parent=0 // pred_check_branch
    %713 = sbr.rel (0) target = $region9
  $region8: #{fwd_eval.32} parent=0 // pred_region
    _
  $region9: #{fwd_eval.32} parent=0 // pred_fallthru
    _
  // Predicated region
  $region10: #{fwd_eval.32} parent=0 // pred_check
    _
  $region11: #{fwd_eval.32} parent=0 // pred_check_branch
    %715 = sbr.rel (0) target = $region13
  $region12: #{fwd_eval.32} parent=0 // pred_region
    _
  $region13: #{fwd_eval.32} parent=0 // pred_fallthru
    _

// kernel: fwd_eval.34
$region0: #{fwd_eval.34}
  #allocation0 [shape = 'u32[]', space=smem, size = 0x4, offset = 0x4, fixed_abs, tag = 'smem constant byte address 0x4 - core index']
  #allocation1 [shape = 'u32[144,128]{1,0:T(1,128)}', space=vmem, size = 0x12000, scoped, tag = 'internal scratch']
  %s0 = inlined_call_operand.vmem [shape: f32[128,64], index: 0, kind: input, shape index: {}]
  %s1 = inlined_call_operand.vmem [shape: f32[1,64], index: 1, kind: input, shape index: {}]
  %s2 = inlined_call_operand.vmem [shape: f32[1,64], index: 2, kind: input, shape index: {}]
  %s3 = inlined_call_operand.vmem [shape: f32[128,64], index: 3, kind: output, shape index: {}]
  %s4 = sld [smem:[#allocation0]]
  $region22: #{fwd_eval.34} parent=0
    _
  %s6 = ssub.s32 1, %s4
  %s7 = scalar_select 0, %s6, %s4
  // Predicated region
  $region2: #{fwd_eval.34} parent=0 // pred_check
    _
  $region3: #{fwd_eval.34} parent=0 // pred_check_branch
    %9 = sbr.rel (0) target = $region5
  $region4: #{fwd_eval.34} parent=0 // pred_region
    _
  $region5: #{fwd_eval.34} parent=0 // pred_fallthru
    _
  // Predicated region
  $region6: #{fwd_eval.34} parent=0 // pred_check
    _
  $region7: #{fwd_eval.34} parent=0 // pred_check_branch
    %11 = sbr.rel (0) target = $region9
  $region8: #{fwd_eval.34} parent=0 // pred_region
    _
  $region9: #{fwd_eval.34} parent=0 // pred_fallthru
    _
  // Predicated region
  $region10: #{fwd_eval.34} parent=0 // pred_check
    _
  $region11: #{fwd_eval.34} parent=0 // pred_check_branch
    %13 = sbr.rel (0) target = $region13
  $region12: #{fwd_eval.34} parent=0 // pred_region
    _
  $region13: #{fwd_eval.34} parent=0 // pred_fallthru
    _
  %v14 = vld [vmem:[%s0] sm:$0xff]
  %v15 = vld [vmem:[%s0 + $0x8] sm:$0xff]
  %v16 = vld [vmem:[%s0 + $0x10] sm:$0xff]
  %v17 = vld [vmem:[%s0 + $0x18] sm:$0xff]
  %v18 = vld [vmem:[%s0 + $0x20] sm:$0xff]
  %v19 = vld [vmem:[%s0 + $0x28] sm:$0xff]
  %v20 = vld [vmem:[%s0 + $0x30] sm:$0xff]
  %v21 = vld [vmem:[%s0 + $0x38] sm:$0xff]
  %v22 = vld [vmem:[%s0 + $0x40] sm:$0xff]
  %v23 = vld [vmem:[%s0 + $0x48] sm:$0xff]
  %v24 = vld [vmem:[%s0 + $0x50] sm:$0xff]
  %v25 = vld [vmem:[%s0 + $0x58] sm:$0xff]
  %v26 = vld [vmem:[%s0 + $0x60] sm:$0xff]
  %v27 = vld [vmem:[%s0 + $0x68] sm:$0xff]
  %v28 = vld [vmem:[%s0 + $0x70] sm:$0xff]
  %v29 = vld [vmem:[%s0 + $0x78] sm:$0xff]
  %vm30 = vcmask 523264
  %v31 = vsel %vm30, %v14, 0.0
  %32 = vadd.xlane.f32.xlu0 %v31
  %v33 = vpop.xlane.xlu0 %32
  %v34 = vsel %vm30, %v15, 0.0
  %35 = vadd.xlane.f32.xlu0 %v34
  %v36 = vpop.xlane.xlu0 %35
  %v37 = vsel %vm30, %v16, 0.0
  %38 = vadd.xlane.f32.xlu0 %v37
  %v39 = vpop.xlane.xlu0 %38
  %v40 = vsel %vm30, %v17, 0.0
  %41 = vadd.xlane.f32.xlu0 %v40
  %v42 = vpop.xlane.xlu0 %41
  %v43 = vsel %vm30, %v18, 0.0
  %44 = vadd.xlane.f32.xlu0 %v43
  %v45 = vpop.xlane.xlu0 %44
  %v46 = vsel %vm30, %v19, 0.0
  %47 = vadd.xlane.f32.xlu0 %v46
  %v48 = vpop.xlane.xlu0 %47
  %v49 = vsel %vm30, %v20, 0.0
  %50 = vadd.xlane.f32.xlu0 %v49
  %v51 = vpop.xlane.xlu0 %50
  %v52 = vsel %vm30, %v21, 0.0
  %53 = vadd.xlane.f32.xlu0 %v52
  %v54 = vpop.xlane.xlu0 %53
  %v55 = vsel %vm30, %v22, 0.0
  %56 = vadd.xlane.f32.xlu0 %v55
  %v57 = vpop.xlane.xlu0 %56
  %v58 = vsel %vm30, %v23, 0.0
  %59 = vadd.xlane.f32.xlu0 %v58
  %v60 = vpop.xlane.xlu0 %59
  %v61 = vsel %vm30, %v24, 0.0
  %62 = vadd.xlane.f32.xlu0 %v61
  %v63 = vpop.xlane.xlu0 %62
  %v64 = vsel %vm30, %v25, 0.0
  %65 = vadd.xlane.f32.xlu0 %v64
  %v66 = vpop.xlane.xlu0 %65
  %v67 = vsel %vm30, %v26, 0.0
  %68 = vadd.xlane.f32.xlu0 %v67
  %v69 = vpop.xlane.xlu0 %68
  %v70 = vsel %vm30, %v27, 0.0
  %71 = vadd.xlane.f32.xlu0 %v70
  %v72 = vpop.xlane.xlu0 %71
  %v73 = vsel %vm30, %v28, 0.0
  %74 = vadd.xlane.f32.xlu0 %v73
  %v75 = vpop.xlane.xlu0 %74
  %v76 = vsel %vm30, %v29, 0.0
  %77 = vadd.xlane.f32.xlu0 %v76
  %v78 = vpop.xlane.xlu0 %77
  %v79 = vrcp.pop 64.0
  %v80 = vmul.f32 %v33, %v79
  %v81 = vmul.f32 %v36, %v79
  %v82 = vmul.f32 %v39, %v79
  %v83 = vmul.f32 %v42, %v79
  %v84 = vmul.f32 %v45, %v79
  %v85 = vmul.f32 %v48, %v79
  %v86 = vmul.f32 %v51, %v79
  %v87 = vmul.f32 %v54, %v79
  %v88 = vmul.f32 %v57, %v79
  %v89 = vmul.f32 %v60, %v79
  %v90 = vmul.f32 %v63, %v79
  %v91 = vmul.f32 %v66, %v79
  %v92 = vmul.f32 %v69, %v79
  %v93 = vmul.f32 %v72, %v79
  %v94 = vmul.f32 %v75, %v79
  %v95 = vmul.f32 %v78, %v79
  %v96 = vsub.f32 %v14, %v80
  %v97 = vsub.f32 %v15, %v81
  %v98 = vsub.f32 %v16, %v82
  %v99 = vsub.f32 %v17, %v83
  %v100 = vsub.f32 %v18, %v84
  %v101 = vsub.f32 %v19, %v85
  %v102 = vsub.f32 %v20, %v86
  %v103 = vsub.f32 %v21, %v87
  %v104 = vsub.f32 %v22, %v88
  %v105 = vsub.f32 %v23, %v89
  %v106 = vsub.f32 %v24, %v90
  %v107 = vsub.f32 %v25, %v91
  %v108 = vsub.f32 %v26, %v92
  %v109 = vsub.f32 %v27, %v93
  %v110 = vsub.f32 %v28, %v94
  %v111 = vsub.f32 %v29, %v95
  %v112 = vmul.f32 %v96, %v96
  %v113 = vmul.f32 %v97, %v97
  %v114 = vmul.f32 %v98, %v98
  %v115 = vmul.f32 %v99, %v99
  %v116 = vmul.f32 %v100, %v100
  %v117 = vmul.f32 %v101, %v101
  %v118 = vmul.f32 %v102, %v102
  %v119 = vmul.f32 %v103, %v103
  %v120 = vmul.f32 %v104, %v104
  %v121 = vmul.f32 %v105, %v105
  %v122 = vmul.f32 %v106, %v106
  %v123 = vmul.f32 %v107, %v107
  %v124 = vmul.f32 %v108, %v108
  %v125 = vmul.f32 %v109, %v109
  %v126 = vmul.f32 %v110, %v110
  %v127 = vmul.f32 %v111, %v111
  %v128 = vsel %vm30, %v112, 0.0
  %129 = vadd.xlane.f32.xlu0 %v128
  %v130 = vpop.xlane.xlu0 %129
  %v131 = vsel %vm30, %v113, 0.0
  %132 = vadd.xlane.f32.xlu0 %v131
  %v133 = vpop.xlane.xlu0 %132
  %v134 = vsel %vm30, %v114, 0.0
  %135 = vadd.xlane.f32.xlu0 %v134
  %v136 = vpop.xlane.xlu0 %135
  %v137 = vsel %vm30, %v115, 0.0
  %138 = vadd.xlane.f32.xlu0 %v137
  %v139 = vpop.xlane.xlu0 %138
  %v140 = vsel %vm30, %v116, 0.0
  %141 = vadd.xlane.f32.xlu0 %v140
  %v142 = vpop.xlane.xlu0 %141
  %v143 = vsel %vm30, %v117, 0.0
  %144 = vadd.xlane.f32.xlu0 %v143
  %v145 = vpop.xlane.xlu0 %144
  %v146 = vsel %vm30, %v118, 0.0
  %147 = vadd.xlane.f32.xlu0 %v146
  %v148 = vpop.xlane.xlu0 %147
  %v149 = vsel %vm30, %v119, 0.0
  %150 = vadd.xlane.f32.xlu0 %v149
  %v151 = vpop.xlane.xlu0 %150
  %v152 = vsel %vm30, %v120, 0.0
  %153 = vadd.xlane.f32.xlu0 %v152
  %v154 = vpop.xlane.xlu0 %153
  %v155 = vsel %vm30, %v121, 0.0
  %156 = vadd.xlane.f32.xlu0 %v155
  %v157 = vpop.xlane.xlu0 %156
  %v158 = vsel %vm30, %v122, 0.0
  %159 = vadd.xlane.f32.xlu0 %v158
  %v160 = vpop.xlane.xlu0 %159
  %v161 = vsel %vm30, %v123, 0.0
  %162 = vadd.xlane.f32.xlu0 %v161
  %v163 = vpop.xlane.xlu0 %162
  %v164 = vsel %vm30, %v124, 0.0
  %165 = vadd.xlane.f32.xlu0 %v164
  %v166 = vpop.xlane.xlu0 %165
  %v167 = vsel %vm30, %v125, 0.0
  %168 = vadd.xlane.f32.xlu0 %v167
  %v169 = vpop.xlane.xlu0 %168
  %v170 = vsel %vm30, %v126, 0.0
  %171 = vadd.xlane.f32.xlu0 %v170
  %v172 = vpop.xlane.xlu0 %171
  %v173 = vsel %vm30, %v127, 0.0
  %174 = vadd.xlane.f32.xlu0 %v173
  %v175 = vpop.xlane.xlu0 %174
  %v176 = vmul.f32 %v130, %v79
  %v177 = vmul.f32 %v133, %v79
  %v178 = vmul.f32 %v136, %v79
  %v179 = vmul.f32 %v139, %v79
  %v180 = vmul.f32 %v142, %v79
  %v181 = vmul.f32 %v145, %v79
  %v182 = vmul.f32 %v148, %v79
  %v183 = vmul.f32 %v151, %v79
  %v184 = vmul.f32 %v154, %v79
  %v185 = vmul.f32 %v157, %v79
  %v186 = vmul.f32 %v160, %v79
  %v187 = vmul.f32 %v163, %v79
  %v188 = vmul.f32 %v166, %v79
  %v189 = vmul.f32 %v169, %v79
  %v190 = vmul.f32 %v172, %v79
  %v191 = vmul.f32 %v175, %v79
  %v192 = vadd.f32 %v176, 1e-05
  %v193 = vadd.f32 %v177, 1e-05
  %v194 = vadd.f32 %v178, 1e-05
  %v195 = vadd.f32 %v179, 1e-05
  %v196 = vadd.f32 %v180, 1e-05
  %v197 = vadd.f32 %v181, 1e-05
  %v198 = vadd.f32 %v182, 1e-05
  %v199 = vadd.f32 %v183, 1e-05
  %v200 = vadd.f32 %v184, 1e-05
  %v201 = vadd.f32 %v185, 1e-05
  %v202 = vadd.f32 %v186, 1e-05
  %v203 = vadd.f32 %v187, 1e-05
  %v204 = vadd.f32 %v188, 1e-05
  %v205 = vadd.f32 %v189, 1e-05
  %v206 = vadd.f32 %v190, 1e-05
  %v207 = vadd.f32 %v191, 1e-05
  %v208 = vrsqrt.pop %v192
  %v209 = vrsqrt.pop %v193
  %v210 = vrsqrt.pop %v194
  %v211 = vrsqrt.pop %v195
  %v212 = vrsqrt.pop %v196
  %v213 = vrsqrt.pop %v197
  %v214 = vrsqrt.pop %v198
  %v215 = vrsqrt.pop %v199
  %v216 = vrsqrt.pop %v200
  %v217 = vrsqrt.pop %v201
  %v218 = vrsqrt.pop %v202
  %v219 = vrsqrt.pop %v203
  %v220 = vrsqrt.pop %v204
  %v221 = vrsqrt.pop %v205
  %v222 = vrsqrt.pop %v206
  %v223 = vrsqrt.pop %v207
  %v224 = vmul.f32 %v96, %v208
  %v225 = vmul.f32 %v97, %v209
  %v226 = vmul.f32 %v98, %v210
  %v227 = vmul.f32 %v99, %v211
  %v228 = vmul.f32 %v100, %v212
  %v229 = vmul.f32 %v101, %v213
  %v230 = vmul.f32 %v102, %v214
  %v231 = vmul.f32 %v103, %v215
  %v232 = vmul.f32 %v104, %v216
  %v233 = vmul.f32 %v105, %v217
  %v234 = vmul.f32 %v106, %v218
  %v235 = vmul.f32 %v107, %v219
  %v236 = vmul.f32 %v108, %v220
  %v237 = vmul.f32 %v109, %v221
  %v238 = vmul.f32 %v110, %v222
  %v239 = vmul.f32 %v111, %v223
  %v240 = vld [vmem:[%s1] sm:$0x1]
  %v242 = vlaneseq
  %v243 = vshrl.u32 %v242, 7
  %v244 = vsub.s32 0, %v243
  %v245 = vrot.slane %v240, %v244
  %v247 = vmul.f32 %v224, %v245
  %v248 = vmul.f32 %v225, %v245
  %v249 = vmul.f32 %v226, %v245
  %v250 = vmul.f32 %v227, %v245
  %v251 = vmul.f32 %v228, %v245
  %v252 = vmul.f32 %v229, %v245
  %v253 = vmul.f32 %v230, %v245
  %v254 = vmul.f32 %v231, %v245
  %v255 = vmul.f32 %v232, %v245
  %v256 = vmul.f32 %v233, %v245
  %v257 = vmul.f32 %v234, %v245
  %v258 = vmul.f32 %v235, %v245
  %v259 = vmul.f32 %v236, %v245
  %v260 = vmul.f32 %v237, %v245
  %v261 = vmul.f32 %v238, %v245
  %v262 = vmul.f32 %v239, %v245
  %v263 = vld [vmem:[%s2] sm:$0x1]
  %v265 = vlaneseq
  %v266 = vshrl.u32 %v265, 7
  %v267 = vsub.s32 0, %v266
  %v268 = vrot.slane %v263, %v267
  %v270 = vadd.f32 %v247, %v268
  %v271 = vadd.f32 %v248, %v268
  %v272 = vadd.f32 %v249, %v268
  %v273 = vadd.f32 %v250, %v268
  %v274 = vadd.f32 %v251, %v268
  %v275 = vadd.f32 %v252, %v268
  %v276 = vadd.f32 %v253, %v268
  %v277 = vadd.f32 %v254, %v268
  %v278 = vadd.f32 %v255, %v268
  %v279 = vadd.f32 %v256, %v268
  %v280 = vadd.f32 %v257, %v268
  %v281 = vadd.f32 %v258, %v268
  %v282 = vadd.f32 %v259, %v268
  %v283 = vadd.f32 %v260, %v268
  %v284 = vadd.f32 %v261, %v268
  %v285 = vadd.f32 %v262, %v268
  %286 = vst.msk [vmem:[%s3] sm:$0xff] %vm30, %v270
  %287 = vst.msk [vmem:[%s3 + $0x8] sm:$0xff] %vm30, %v271
  %288 = vst.msk [vmem:[%s3 + $0x10] sm:$0xff] %vm30, %v272
  %289 = vst.msk [vmem:[%s3 + $0x18] sm:$0xff] %vm30, %v273
  %290 = vst.msk [vmem:[%s3 + $0x20] sm:$0xff] %vm30, %v274
  %291 = vst.msk [vmem:[%s3 + $0x28] sm:$0xff] %vm30, %v275
  %292 = vst.msk [vmem:[%s3 + $0x30] sm:$0xff] %vm30, %v276
  %293 = vst.msk [vmem:[%s3 + $0x38] sm:$0xff] %vm30, %v277
  %294 = vst.msk [vmem:[%s3 + $0x40] sm:$0xff] %vm30, %v278
  %295 = vst.msk [vmem:[%s3 + $0x48] sm:$0xff] %vm30, %v279
  %296 = vst.msk [vmem:[%s3 + $0x50] sm:$0xff] %vm30, %v280
  %297 = vst.msk [vmem:[%s3 + $0x58] sm:$0xff] %vm30, %v281
  %298 = vst.msk [vmem:[%s3 + $0x60] sm:$0xff] %vm30, %v282
  %299 = vst.msk [vmem:[%s3 + $0x68] sm:$0xff] %vm30, %v283
  %300 = vst.msk [vmem:[%s3 + $0x70] sm:$0xff] %vm30, %v284
  %301 = vst.msk [vmem:[%s3 + $0x78] sm:$0xff] %vm30, %v285
  // Predicated region
  $region14: #{fwd_eval.34} parent=0 // pred_check
    _
  $region15: #{fwd_eval.34} parent=0 // pred_check_branch
    %303 = sbr.rel (0) target = $region17
  $region16: #{fwd_eval.34} parent=0 // pred_region
    _
  $region17: #{fwd_eval.34} parent=0 // pred_fallthru
    _
  // Predicated region
  $region18: #{fwd_eval.34} parent=0 // pred_check
    _
  $region19: #{fwd_eval.34} parent=0 // pred_check_branch
    %305 = sbr.rel (0) target = $region21
  $region20: #{fwd_eval.34} parent=0 // pred_region
    _
  $region21: #{fwd_eval.34} parent=0 // pred_fallthru
    _

// kernel: fwd_eval.36
$region0: #{fwd_eval.36}
  #allocation0 [shape = 'u32[]', space=smem, size = 0x4, offset = 0x4, fixed_abs, tag = 'smem constant byte address 0x4 - core index']
  #allocation1 [shape = 'u32[144,128]{1,0:T(1,128)}', space=vmem, size = 0x12000, scoped, tag = 'internal scratch']
  %s0 = inlined_call_operand.vmem [shape: f32[8,64], index: 0, kind: input, shape index: {}]
  %s1 = inlined_call_operand.vmem [shape: f32[1,64], index: 1, kind: input, shape index: {}]
  %s2 = inlined_call_operand.vmem [shape: f32[1,64], index: 2, kind: input, shape index: {}]
  %s3 = inlined_call_operand.vmem [shape: f32[8,64], index: 3, kind: output, shape index: {}]
  %s4 = sld [smem:[#allocation0]]
  $region22: #{fwd_eval.36} parent=0
    _
  %s6 = ssub.s32 1, %s4
  %s7 = scalar_select 0, %s6, %s4
  // Predicated region
  $region2: #{fwd_eval.36} parent=0 // pred_check
    _
  $region3: #{fwd_eval.36} parent=0 // pred_check_branch
    %9 = sbr.rel (0) target = $region5
  $region4: #{fwd_eval.36} parent=0 // pred_region
    _
  $region5: #{fwd_eval.36} parent=0 // pred_fallthru
    _
  // Predicated region
  $region6: #{fwd_eval.36} parent=0 // pred_check
    _
  $region7: #{fwd_eval.36} parent=0 // pred_check_branch
    %11 = sbr.rel (0) target = $region9
  $region8: #{fwd_eval.36} parent=0 // pred_region
    _
  $region9: #{fwd_eval.36} parent=0 // pred_fallthru
    _
  // Predicated region
  $region10: #{fwd_eval.36} parent=0 // pred_check
    _
  $region11: #{fwd_eval.36} parent=0 // pred_check_branch
    %13 = sbr.rel (0) target = $region13
  $region12: #{fwd_eval.36} parent=0 // pred_region
    _
  $region13: #{fwd_eval.36} parent=0 // pred_fallthru
    _
  %v14 = vld [vmem:[%s0] sm:$0xff]
  %vm15 = vcmask 523264
  %v16 = vsel %vm15, %v14, 0.0
  %17 = vadd.xlane.f32.xlu0 %v16
  %v18 = vpop.xlane.xlu0 %17
  %v19 = vrcp.pop 64.0
  %v20 = vmul.f32 %v18, %v19
  %v21 = vsub.f32 %v14, %v20
  %v22 = vmul.f32 %v21, %v21
  %v23 = vsel %vm15, %v22, 0.0
  %24 = vadd.xlane.f32.xlu0 %v23
  %v25 = vpop.xlane.xlu0 %24
  %v26 = vmul.f32 %v25, %v19
  %v27 = vadd.f32 %v26, 1e-05
  %v28 = vrsqrt.pop %v27
  %v29 = vmul.f32 %v21, %v28
  %v30 = vld [vmem:[%s1] sm:$0x1]
  %v32 = vlaneseq
  %v33 = vshrl.u32 %v32, 7
  %v34 = vsub.s32 0, %v33
  %v35 = vrot.slane %v30, %v34
  %v37 = vmul.f32 %v29, %v35
  %v38 = vld [vmem:[%s2] sm:$0x1]
  %v40 = vlaneseq
  %v41 = vshrl.u32 %v40, 7
  %v42 = vsub.s32 0, %v41
  %v43 = vrot.slane %v38, %v42
  %v45 = vadd.f32 %v37, %v43
  %46 = vst.msk [vmem:[%s3] sm:$0xff] %vm15, %v45
  // Predicated region
  $region14: #{fwd_eval.36} parent=0 // pred_check
    _
  $region15: #{fwd_eval.36} parent=0 // pred_check_branch
    %48 = sbr.rel (0) target = $region17
  $region16: #{fwd_eval.36} parent=0 // pred_region
    _
  $region17: #{fwd_eval.36} parent=0 // pred_fallthru
    _
  // Predicated region
  $region18: #{fwd_eval.36} parent=0 // pred_check
    _
  $region19: #{fwd_eval.36} parent=0 // pred_check_branch
    %50 = sbr.rel (0) target = $region21
  $region20: #{fwd_eval.36} parent=0 // pred_region
    _
  $region21: #{fwd_eval.36} parent=0 // pred_fallthru
    _

// kernel: fwd_eval.37
$region0: #{fwd_eval.37}
  #allocation0 [shape = 'u32[]', space=smem, size = 0x4, offset = 0x4, fixed_abs, tag = 'smem constant byte address 0x4 - core index']
  #allocation1 [shape = 'u32[144,128]{1,0:T(1,128)}', space=vmem, size = 0x12000, scoped, tag = 'internal scratch']
  %s0 = inlined_call_operand.vmem [shape: f32[2,2,64,32], index: 0, kind: input, shape index: {}]
  %s1 = inlined_call_operand.vmem [shape: f32[2,2,4,32], index: 1, kind: input, shape index: {}]
  %s2 = inlined_call_operand.vmem [shape: f32[2,2,4,32], index: 2, kind: input, shape index: {}]
  %s3 = inlined_call_operand.vmem [shape: f32[2,2,64,32], index: 3, kind: output, shape index: {}]
  %s4 = sld [smem:[#allocation0]]
  $region45: #{fwd_eval.37} parent=0
    _
  %s6 = ssub.s32 1, %s4
  %s7 = scalar_select 0, %s6, %s4
  loop: start=0, step=1, limit=6
  $region2: #{fwd_eval.37} parent=0 // loop_pre_header
    _
  $region3: #{fwd_eval.37} parent=0 // loop_header
    %s9 = sphi 0, %s13
    %p10 = scmp.ge.s32.totalorder %s9, 6
    %s16 = sphi 0, %s28
    %s17 = sphi 0, %s24
    %s18 = sphi 0, %s16
    %s19 = sphi 0, %s17
    %s20 = sphi 0, %s18
    %s21 = sphi 0, %s19
    %s33 = sphi 0, %s35
    %s36 = sphi 0, %s33
    %s37 = sphi 0, %s36
    %s53 = sphi 0, %s37
    %s61 = sphi 0, %s63
    %s64 = sphi 0, %s61
    %s65 = sphi 0, %s64
    %s81 = sphi 0, %s65
    %s89 = sphi 0, %s91
    %s92 = sphi 0, %s89
    %s93 = sphi 0, %s92
    %s109 = sphi 0, %s93
    %s117 = sphi 0, %s119
    %s120 = sphi 0, %s117
    %s121 = sphi 0, %s120
    %s137 = sphi 0, %s121
  $region4: #{fwd_eval.37} parent=0 // loop_header_branch
    %12 = sbr.rel (%p10) target = $region8
  $region5: #{fwd_eval.37} parent=0 // loop_body
    %s14 = ssub.s32 %s9, 1
    %s15 = ssub.s32 %s9, 2
    %s22 = sadd.s32 1, %s17
    %p23 = scmp.ge.s32.totalorder %s22, 2
    %s24 = scalar_select %p23, 0, %s22
    %s25 = sadd.s32 1, %s16
    %s26 = scalar_select %p23, %s25, %s16
    %p27 = scmp.ge.s32.totalorder %s26, 2
    %s28 = scalar_select %p27, 0, %s26
    %s29 = ssub.s32 %s16, %s28
    %s30 = ssub.s32 %s17, %s24
    %s31 = sor.u32 %s29, %s30
    %p32 = scmp.eq.s32.totalorder %s31, 0
    %s34 = sadd.s32 %s33, 1
    %s35 = scalar_select %p32, %s33, %s34
    %p38 = pneg %p32
    %p39 = scmp.eq.s32.totalorder %s9, 3
    %p40 = por %p38, %p39
    %p41 = scmp.ne.s32.totalorder %s33, %s36
    %p42 = scmp.eq.s32.totalorder %s9, 0
    %p43 = por %p41, %p42
    %p44 = scmp.ne.s32.totalorder %s33, %s36
    %p45 = scmp.eq.s32.totalorder %s14, 3
    %p46 = por %p44, %p45
    %p47 = scmp.ne.s32.totalorder %s36, %s37
    %p48 = scmp.eq.s32.totalorder %s14, 0
    %p49 = por %p47, %p48
    %p50 = scmp.ne.s32.totalorder %s36, %s37
    %p51 = scmp.eq.s32.totalorder %s15, 3
    %p52 = por %p50, %p51
    %p54 = scmp.ne.s32.totalorder %s37, %s53
    %p55 = scmp.eq.s32.totalorder %s15, 0
    %p56 = por %p54, %p55
    %s57 = ssub.s32 %s16, %s28
    %s58 = ssub.s32 %s17, %s24
    %s59 = sor.u32 %s57, %s58
    %p60 = scmp.eq.s32.totalorder %s59, 0
    %s62 = sadd.s32 %s61, 1
    %s63 = scalar_select %p60, %s61, %s62
    %p66 = pneg %p60
    %p67 = scmp.eq.s32.totalorder %s9, 3
    %p68 = por %p66, %p67
    %p69 = scmp.ne.s32.totalorder %s61, %s64
    %p70 = scmp.eq.s32.totalorder %s9, 0
    %p71 = por %p69, %p70
    %p72 = scmp.ne.s32.totalorder %s61, %s64
    %p73 = scmp.eq.s32.totalorder %s14, 3
    %p74 = por %p72, %p73
    %p75 = scmp.ne.s32.totalorder %s64, %s65
    %p76 = scmp.eq.s32.totalorder %s14, 0
    %p77 = por %p75, %p76
    %p78 = scmp.ne.s32.totalorder %s64, %s65
    %p79 = scmp.eq.s32.totalorder %s15, 3
    %p80 = por %p78, %p79
    %p82 = scmp.ne.s32.totalorder %s65, %s81
    %p83 = scmp.eq.s32.totalorder %s15, 0
    %p84 = por %p82, %p83
    %s85 = ssub.s32 %s16, %s28
    %s86 = ssub.s32 %s17, %s24
    %s87 = sor.u32 %s85, %s86
    %p88 = scmp.eq.s32.totalorder %s87, 0
    %s90 = sadd.s32 %s89, 1
    %s91 = scalar_select %p88, %s89, %s90
    %p94 = pneg %p88
    %p95 = scmp.eq.s32.totalorder %s9, 3
    %p96 = por %p94, %p95
    %p97 = scmp.ne.s32.totalorder %s89, %s92
    %p98 = scmp.eq.s32.totalorder %s9, 0
    %p99 = por %p97, %p98
    %p100 = scmp.ne.s32.totalorder %s89, %s92
    %p101 = scmp.eq.s32.totalorder %s14, 3
    %p102 = por %p100, %p101
    %p103 = scmp.ne.s32.totalorder %s92, %s93
    %p104 = scmp.eq.s32.totalorder %s14, 0
    %p105 = por %p103, %p104
    %p106 = scmp.ne.s32.totalorder %s92, %s93
    %p107 = scmp.eq.s32.totalorder %s15, 3
    %p108 = por %p106, %p107
    %p110 = scmp.ne.s32.totalorder %s93, %s109
    %p111 = scmp.eq.s32.totalorder %s15, 0
    %p112 = por %p110, %p111
    %s113 = ssub.s32 %s16, %s28
    %s114 = ssub.s32 %s17, %s24
    %s115 = sor.u32 %s113, %s114
    %p116 = scmp.eq.s32.totalorder %s115, 0
    %s118 = sadd.s32 %s117, 1
    %s119 = scalar_select %p116, %s117, %s118
    %p122 = pneg %p116
    %p123 = scmp.eq.s32.totalorder %s9, 3
    %p124 = por %p122, %p123
    %p125 = scmp.ne.s32.totalorder %s117, %s120
    %p126 = scmp.eq.s32.totalorder %s9, 0
    %p127 = por %p125, %p126
    %p128 = scmp.ne.s32.totalorder %s117, %s120
    %p129 = scmp.eq.s32.totalorder %s14, 3
    %p130 = por %p128, %p129
    %p131 = scmp.ne.s32.totalorder %s120, %s121
    %p132 = scmp.eq.s32.totalorder %s14, 0
    %p133 = por %p131, %p132
    %p134 = scmp.ne.s32.totalorder %s120, %s121
    %p135 = scmp.eq.s32.totalorder %s15, 3
    %p136 = por %p134, %p135
    %p138 = scmp.ne.s32.totalorder %s121, %s137
    %p139 = scmp.eq.s32.totalorder %s15, 0
    %p140 = por %p138, %p139
    %p141 = scmp.le.s32.totalorder 1, %s9
    %p142 = scmp.lt.s32.totalorder %s9, 5
    %p143 = pnand %p141, %p142
    %p144 = pneg %p143
    // Predicated region
    $region9: #{fwd_eval.37} parent=5 // pred_check
      _
    $region10: #{fwd_eval.37} parent=5 // pred_check_branch
      %146 = sbr.rel (%p143) target = $region12
    $region11: #{fwd_eval.37} parent=5 // pred_region
      %s147 = ssub.s32 %s9, 1
    $region12: #{fwd_eval.37} parent=5 // pred_fallthru
      _
    %p148 = scmp.lt.s32.totalorder %s9, 4
    // Predicated region
    $region13: #{fwd_eval.37} parent=5 // pred_check
      %p149 = pneg %p148
    $region14: #{fwd_eval.37} parent=5 // pred_check_branch
      %151 = sbr.rel (%p149) target = $region16
    $region15: #{fwd_eval.37} parent=5 // pred_region
      // Predicated region
      $region17: #{fwd_eval.37} parent=15 // pred_check
        %p152 = pneg %p43
      $region18: #{fwd_eval.37} parent=15 // pred_check_branch
        %154 = sbr.rel (%p152) target = $region20
      $region19: #{fwd_eval.37} parent=15 // pred_region
        %p155 = scmp.lt.s32.totalorder %s16, 1
        %s156 = scalar_select %p155, %s16, 1
        %p157 = scmp.lt.s32.totalorder %s17, 1
        %s158 = scalar_select %p157, %s17, 1
        %s159 = smul.addr %s158, 8
        %s160 = smul.addr %s156, 16
        %s161 = sadd.s32 %s159, %s160
        %s162 = smul.addr %s161, 8
        %s163 = scalar_lea.vmem %s0, %s162
      $region20: #{fwd_eval.37} parent=15 // pred_fallthru
        _
      // Predicated region
      $region21: #{fwd_eval.37} parent=15 // pred_check
        %p164 = pneg %p71
      $region22: #{fwd_eval.37} parent=15 // pred_check_branch
        %166 = sbr.rel (%p164) target = $region24
      $region23: #{fwd_eval.37} parent=15 // pred_region
        %p167 = scmp.lt.s32.totalorder %s16, 1
        %s168 = scalar_select %p167, %s16, 1
        %p169 = scmp.lt.s32.totalorder %s17, 1
        %s170 = scalar_select %p169, %s17, 1
        %s171 = smul.addr %s168, 2
        %s172 = sadd.s32 %s170, %s171
        %s173 = smul.addr %s172, 4
        %s174 = scalar_lea.vmem %s1, %s173
      $region24: #{fwd_eval.37} parent=15 // pred_fallthru
        _
      // Predicated region
      $region25: #{fwd_eval.37} parent=15 // pred_check
        %p175 = pneg %p99
      $region26: #{fwd_eval.37} parent=15 // pred_check_branch
        %177 = sbr.rel (%p175) target = $region28
      $region27: #{fwd_eval.37} parent=15 // pred_region
        %p178 = scmp.lt.s32.totalorder %s16, 1
        %s179 = scalar_select %p178, %s16, 1
        %p180 = scmp.lt.s32.totalorder %s17, 1
        %s181 = scalar_select %p180, %s17, 1
        %s182 = smul.addr %s179, 2
        %s183 = sadd.s32 %s181, %s182
        %s184 = smul.addr %s183, 4
        %s185 = scalar_lea.vmem %s2, %s184
      $region28: #{fwd_eval.37} parent=15 // pred_fallthru
        _
    $region16: #{fwd_eval.37} parent=5 // pred_fallthru
      _
    %p186 = scmp.le.s32.totalorder 1, %s9
    %p187 = scmp.lt.s32.totalorder %s9, 5
    %p188 = pnand %p186, %p187
    %p189 = pneg %p188
    // Predicated region
    $region29: #{fwd_eval.37} parent=5 // pred_check
      _
    $region30: #{fwd_eval.37} parent=5 // pred_check_branch
      %191 = sbr.rel (%p188) target = $region32
    $region31: #{fwd_eval.37} parent=5 // pred_region
      %s192 = ssub.s32 %s9, 1
      %p193 = scmp.lt.s32.totalorder %s18, 1
      %s194 = scalar_select %p193, %s18, 1
      %p195 = scmp.lt.s32.totalorder %s19, 1
      %s196 = scalar_select %p195, %s19, 1
      %s197 = smul.addr %s196, 8
      %s198 = smul.addr %s194, 16
      %s199 = sadd.s32 %s197, %s198
      %s200 = smul.addr %s199, 8
      %s201 = scalar_lea.vmem %s0, %s200
      %p202 = pneg %p49
      %p203 = pneg %p46
      %p204 = scmp.lt.s32.totalorder %s18, 1
      %s205 = scalar_select %p204, %s18, 1
      %p206 = scmp.lt.s32.totalorder %s19, 1
      %s207 = scalar_select %p206, %s19, 1
      %s208 = smul.addr %s205, 2
      %s209 = sadd.s32 %s207, %s208
      %s210 = smul.addr %s209, 4
      %s211 = scalar_lea.vmem %s1, %s210
      %p212 = pneg %p77
      %p213 = pneg %p74
      %p214 = scmp.lt.s32.totalorder %s18, 1
      %s215 = scalar_select %p214, %s18, 1
      %p216 = scmp.lt.s32.totalorder %s19, 1
      %s217 = scalar_select %p216, %s19, 1
      %s218 = smul.addr %s215, 2
      %s219 = sadd.s32 %s217, %s218
      %s220 = smul.addr %s219, 4
      %s221 = scalar_lea.vmem %s2, %s220
      %p222 = pneg %p105
      %p223 = pneg %p102
      %p224 = pneg %p133
      %p225 = pneg %p130
      %p226 = scmp.lt.s32.totalorder %s18, 1
      %s227 = scalar_select %p226, %s18, 1
      %p228 = scmp.lt.s32.totalorder %s19, 1
      %s229 = scalar_select %p228, %s19, 1
      %s230 = smul.addr %s229, 8
      %s231 = smul.addr %s227, 16
      %s232 = sadd.s32 %s230, %s231
      %s233 = smul.addr %s232, 8
      %s234 = scalar_lea.vmem %s3, %s233
      %p235 = scmp.lt.s32.totalorder %s18, 1
      %s236 = scalar_select %p235, %s18, 1
      %p237 = scmp.lt.s32.totalorder %s19, 1
      %s238 = scalar_select %p237, %s19, 1
      %s239 = smul.addr %s238, 8
      %s240 = smul.addr %s236, 16
      %s241 = sadd.s32 %s239, %s240
      %s242 = smul.addr %s241, 8
      %s243 = scalar_lea.vmem %s0, %s242
      %p244 = scmp.lt.s32.totalorder %s18, 1
      %s245 = scalar_select %p244, %s18, 1
      %p246 = scmp.lt.s32.totalorder %s19, 1
      %s247 = scalar_select %p246, %s19, 1
      %s248 = smul.addr %s245, 2
      %s249 = sadd.s32 %s247, %s248
      %s250 = smul.addr %s249, 4
      %s251 = scalar_lea.vmem %s1, %s250
      %p252 = scmp.lt.s32.totalorder %s18, 1
      %s253 = scalar_select %p252, %s18, 1
      %p254 = scmp.lt.s32.totalorder %s19, 1
      %s255 = scalar_select %p254, %s19, 1
      %s256 = smul.addr %s253, 2
      %s257 = sadd.s32 %s255, %s256
      %s258 = smul.addr %s257, 4
      %s259 = scalar_lea.vmem %s2, %s258
      %p260 = scmp.lt.s32.totalorder %s18, 1
      %s261 = scalar_select %p260, %s18, 1
      %p262 = scmp.lt.s32.totalorder %s19, 1
      %s263 = scalar_select %p262, %s19, 1
      %s264 = smul.addr %s263, 8
      %s265 = smul.addr %s261, 16
      %s266 = sadd.s32 %s264, %s265
      %s267 = smul.addr %s266, 8
      %s268 = scalar_lea.vmem %s3, %s267
      %v269 = vld [vmem:[%s243] sm:$0xff]
      %v270 = vld [vmem:[%s243 + $0x8] sm:$0xff]
      %v271 = vld [vmem:[%s243 + $0x10] sm:$0xff]
      %v272 = vld [vmem:[%s243 + $0x18] sm:$0xff]
      %v273 = vld [vmem:[%s243 + $0x20] sm:$0xff]
      %v274 = vld [vmem:[%s243 + $0x28] sm:$0xff]
      %v275 = vld [vmem:[%s243 + $0x30] sm:$0xff]
      %v276 = vld [vmem:[%s243 + $0x38] sm:$0xff]
      %v277 = vld [vmem:[%s251] sm:$0xf]
      %v278 = vld [vmem:[%s259] sm:$0xf]
      %vm279 = vcmask 261120
      %v281 = vsel %vm279, %v269, 0
      %v284 = vsel %vm279, %v270, 0
      %v287 = vsel %vm279, %v271, 0
      %v290 = vsel %vm279, %v272, 0
      %v293 = vsel %vm279, %v273, 0
      %v296 = vsel %vm279, %v274, 0
      %v299 = vsel %vm279, %v275, 0
      %v302 = vsel %vm279, %v276, 0
      %v305 = vsel %vm279, %v277, 0
      %307 = vmatprep.subr.mxu0 0.0
      %308 = vmatpush1.xpose.msra.mxu0 %v305
      %309 = vmatprep.subr.mxu0 0.0
      %310 = vmatpush1.xpose.msra.mxu0 0.0
      %311 = vmatprep.subr.mxu0 0.0
      %312 = vmatpush1.xpose.msra.mxu0 0.0
      %313 = vmatprep.subr.mxu0 0.0
      %314 = vmatpush1.xpose.msra.mxu0 0.0
      %315 = vmatprep.subr.mxu0 0.0
      %316 = vmatpush1.xpose.msra.mxu0 0.0
      %317 = vmatprep.subr.mxu0 0.0
      %318 = vmatpush1.xpose.msra.mxu0 0.0
      %319 = vmatprep.subr.mxu0 0.0
      %320 = vmatpush1.xpose.msra.mxu0 0.0
      %321 = vmatprep.subr.mxu0 0.0
      %322 = vmatpush1.xpose.msra.mxu0 0.0
      %323 = vmatprep.subr.mxu0 0.0
      %324 = vmatpush1.xpose.msra.mxu0 0.0
      %325 = vmatprep.subr.mxu0 0.0
      %326 = vmatpush1.xpose.msra.mxu0 0.0
      %327 = vmatprep.subr.mxu0 0.0
      %328 = vmatpush1.xpose.msra.mxu0 0.0
      %329 = vmatprep.subr.mxu0 0.0
      %330 = vmatpush1.xpose.msra.mxu0 0.0
      %331 = vmatprep.subr.mxu0 0.0
      %332 = vmatpush1.xpose.msra.mxu0 0.0
      %333 = vmatprep.subr.mxu0 0.0
      %334 = vmatpush1.xpose.msra.mxu0 0.0
      %335 = vmatprep.subr.mxu0 0.0
      %336 = vmatpush1.xpose.msra.mxu0 0.0
      %337 = vmatprep.subr.mxu0 0.0
      %338 = vmatpush1.xpose.msra.mxu0 0.0
      %339 = vmatprep.subr.mxu0 0.0
      %340 = vmatpush1.xpose.msra.mxu0 0.0
      %341 = vmatprep.subr.mxu0 0.0
      %342 = vmatpush1.xpose.msra.mxu0 0.0
      %343 = vmatprep.subr.mxu0 0.0
      %344 = vmatpush1.xpose.msra.mxu0 0.0
      %345 = vmatprep.subr.mxu0 0.0
      %346 = vmatpush1.xpose.msra.mxu0 0.0
      %347 = vmatprep.subr.mxu0 0.0
      %348 = vmatpush1.xpose.msra.mxu0 0.0
      %349 = vmatprep.subr.mxu0 0.0
      %350 = vmatpush1.xpose.msra.mxu0 0.0
      %351 = vmatprep.subr.mxu0 0.0
      %352 = vmatpush1.xpose.msra.mxu0 0.0
      %353 = vmatprep.subr.mxu0 0.0
      %354 = vmatpush1.xpose.msra.mxu0 0.0
      %355 = vmatprep.subr.mxu0 0.0
      %356 = vmatpush1.xpose.msra.mxu0 0.0
      %357 = vmatprep.subr.mxu0 0.0
      %358 = vmatpush1.xpose.msra.mxu0 0.0
      %359 = vmatprep.subr.mxu0 0.0
      %360 = vmatpush1.xpose.msra.mxu0 0.0
      %361 = vmatprep.subr.mxu0 0.0
      %362 = vmatpush1.xpose.msra.mxu0 0.0
      %363 = vmatprep.subr.mxu0 0.0
      %364 = vmatpush1.xpose.msra.mxu0 0.0
      %365 = vmatprep.subr.mxu0 0.0
      %366 = vmatpush1.xpose.msra.mxu0 0.0
      %367 = vmatprep.subr.mxu0 0.0
      %368 = vmatpush1.xpose.msra.mxu0 0.0
      %369 = vmatprep.subr.mxu0 0.0
      %370 = vmatpush1.xpose.msra.mxu0 0.0
      %371 = vmatprep.mubr.f32.mxu0 0.0
      %372 = vmatmul.mubr.f32.gmra.mrb[0].mxu0 %v281
      %v373 = vpop.f32.mrb[0].mxu0
      %v374 = vadd.f32 0.0, %v373
      %v375 = vpop.f32.mrb[0].mxu0
      %376 = vmatprep.mubr.f32.mxu0 0.0
      %377 = vmatmul.mubr.f32.gmra.mrb[0].mxu0 %v284
      %v378 = vpop.f32.mrb[0].mxu0
      %v379 = vadd.f32 0.0, %v378
      %v380 = vpop.f32.mrb[0].mxu0
      %381 = vmatprep.mubr.f32.mxu0 0.0
      %382 = vmatmul.mubr.f32.gmra.mrb[0].mxu0 %v287
      %v383 = vpop.f32.mrb[0].mxu0
      %v384 = vadd.f32 0.0, %v383
      %v385 = vpop.f32.mrb[0].mxu0
      %386 = vmatprep.mubr.f32.mxu0 0.0
      %387 = vmatmul.mubr.f32.gmra.mrb[0].mxu0 %v290
      %v388 = vpop.f32.mrb[0].mxu0
      %v389 = vadd.f32 0.0, %v388
      %v390 = vpop.f32.mrb[0].mxu0
      %391 = vmatprep.mubr.f32.mxu0 0.0
      %392 = vmatmul.mubr.f32.gmra.mrb[0].mxu0 %v293
      %v393 = vpop.f32.mrb[0].mxu0
      %v394 = vadd.f32 0.0, %v393
      %v395 = vpop.f32.mrb[0].mxu0
      %396 = vmatprep.mubr.f32.mxu0 0.0
      %397 = vmatmul.mubr.f32.gmra.mrb[0].mxu0 %v296
      %v398 = vpop.f32.mrb[0].mxu0
      %v399 = vadd.f32 0.0, %v398
      %v400 = vpop.f32.mrb[0].mxu0
      %401 = vmatprep.mubr.f32.mxu0 0.0
      %402 = vmatmul.mubr.f32.gmra.mrb[0].mxu0 %v299
      %v403 = vpop.f32.mrb[0].mxu0
      %v404 = vadd.f32 0.0, %v403
      %v405 = vpop.f32.mrb[0].mxu0
      %406 = vmatprep.mubr.f32.mxu0 0.0
      %407 = vmatmul.mubr.f32.gmra.mrb[0].mxu0 %v302
      %v408 = vpop.f32.mrb[0].mxu0
      %v409 = vadd.f32 0.0, %v408
      %v410 = vpop.f32.mrb[0].mxu0
      %411 = vdwg.mxu0
      %v412 = vmul.f32 %v374, 0.17677669
      %v413 = vmul.f32 %v379, 0.17677669
      %v414 = vmul.f32 %v384, 0.17677669
      %v415 = vmul.f32 %v389, 0.17677669
      %v416 = vmul.f32 %v394, 0.17677669
      %v417 = vmul.f32 %v399, 0.17677669
      %v418 = vmul.f32 %v404, 0.17677669
      %v419 = vmul.f32 %v409, 0.17677669
      %vm420 = vcmask 31744
      %v421 = vsel %vm420, %v412, -inf
      %422 = vmax.xlane.f32.xlu0 %v421
      %v423 = vpop.xlane.xlu0 %422
      %v424 = vsel %vm420, %v413, -inf
      %425 = vmax.xlane.f32.xlu0 %v424
      %v426 = vpop.xlane.xlu0 %425
      %v427 = vsel %vm420, %v414, -inf
      %428 = vmax.xlane.f32.xlu0 %v427
      %v429 = vpop.xlane.xlu0 %428
      %v430 = vsel %vm420, %v415, -inf
      %431 = vmax.xlane.f32.xlu0 %v430
      %v432 = vpop.xlane.xlu0 %431
      %v433 = vsel %vm420, %v416, -inf
      %434 = vmax.xlane.f32.xlu0 %v433
      %v435 = vpop.xlane.xlu0 %434
      %v436 = vsel %vm420, %v417, -inf
      %437 = vmax.xlane.f32.xlu0 %v436
      %v438 = vpop.xlane.xlu0 %437
      %v439 = vsel %vm420, %v418, -inf
      %440 = vmax.xlane.f32.xlu0 %v439
      %v441 = vpop.xlane.xlu0 %440
      %v442 = vsel %vm420, %v419, -inf
      %443 = vmax.xlane.f32.xlu0 %v442
      %v444 = vpop.xlane.xlu0 %443
      %v445 = vsub.f32 %v412, %v423
      %v446 = vsub.f32 %v413, %v426
      %v447 = vsub.f32 %v414, %v429
      %v448 = vsub.f32 %v415, %v432
      %v449 = vsub.f32 %v416, %v435
      %v450 = vsub.f32 %v417, %v438
      %v451 = vsub.f32 %v418, %v441
      %v452 = vsub.f32 %v419, %v444
      %v453 = vmul.f32 %v445, 1.442695
      %v454 = vpow.pop %v453
      %v455 = vmul.f32 %v446, 1.442695
      %v456 = vpow.pop %v455
      %v457 = vmul.f32 %v447, 1.442695
      %v458 = vpow.pop %v457
      %v459 = vmul.f32 %v448, 1.442695
      %v460 = vpow.pop %v459
      %v461 = vmul.f32 %v449, 1.442695
      %v462 = vpow.pop %v461
      %v463 = vmul.f32 %v450, 1.442695
      %v464 = vpow.pop %v463
      %v465 = vmul.f32 %v451, 1.442695
      %v466 = vpow.pop %v465
      %v467 = vmul.f32 %v452, 1.442695
      %v468 = vpow.pop %v467
      %v469 = vsel %vm420, %v454, 0.0
      %470 = vadd.xlane.f32.xlu0 %v469
      %v471 = vpop.xlane.xlu0 %470
      %v472 = vsel %vm420, %v456, 0.0
      %473 = vadd.xlane.f32.xlu0 %v472
      %v474 = vpop.xlane.xlu0 %473
      %v475 = vsel %vm420, %v458, 0.0
      %476 = vadd.xlane.f32.xlu0 %v475
      %v477 = vpop.xlane.xlu0 %476
      %v478 = vsel %vm420, %v460, 0.0
      %479 = vadd.xlane.f32.xlu0 %v478
      %v480 = vpop.xlane.xlu0 %479
      %v481 = vsel %vm420, %v462, 0.0
      %482 = vadd.xlane.f32.xlu0 %v481
      %v483 = vpop.xlane.xlu0 %482
      %v484 = vsel %vm420, %v464, 0.0
      %485 = vadd.xlane.f32.xlu0 %v484
      %v486 = vpop.xlane.xlu0 %485
      %v487 = vsel %vm420, %v466, 0.0
      %488 = vadd.xlane.f32.xlu0 %v487
      %v489 = vpop.xlane.xlu0 %488
      %v490 = vsel %vm420, %v468, 0.0
      %491 = vadd.xlane.f32.xlu0 %v490
      %v492 = vpop.xlane.xlu0 %491
      %v493 = vrcp.pop %v471
      %v494 = vmul.f32 %v454, %v493
      %v495 = vrcp.pop %v474
      %v496 = vmul.f32 %v456, %v495
      %v497 = vrcp.pop %v477
      %v498 = vmul.f32 %v458, %v497
      %v499 = vrcp.pop %v480
      %v500 = vmul.f32 %v460, %v499
      %v501 = vrcp.pop %v483
      %v502 = vmul.f32 %v462, %v501
      %v503 = vrcp.pop %v486
      %v504 = vmul.f32 %v464, %v503
      %v505 = vrcp.pop %v489
      %v506 = vmul.f32 %v466, %v505
      %v507 = vrcp.pop %v492
      %v508 = vmul.f32 %v468, %v507
      %v510 = vsel %vm420, %v494, 0
      %v513 = vsel %vm420, %v496, 0
      %v516 = vsel %vm420, %v498, 0
      %v519 = vsel %vm420, %v500, 0
      %v522 = vsel %vm420, %v502, 0
      %v525 = vsel %vm420, %v504, 0
      %v528 = vsel %vm420, %v506, 0
      %v531 = vsel %vm420, %v508, 0
      %vm533 = vcmask 1043456
      %v535 = vsel %vm533, %v278, 0
      %537 = vmatprep.subr.mxu0 0.0
      %538 = vmatpush1.msra.mxu0 %v535
      %539 = vmatprep.subr.mxu0 0.0
      %540 = vmatpush1.msra.mxu0 0.0
      %541 = vmatprep.subr.mxu0 0.0
      %542 = vmatpush1.msra.mxu0 0.0
      %543 = vmatprep.subr.mxu0 0.0
      %544 = vmatpush1.msra.mxu0 0.0
      %545 = vmatprep.subr.mxu0 0.0
      %546 = vmatpush1.msra.mxu0 0.0
      %547 = vmatprep.subr.mxu0 0.0
      %548 = vmatpush1.msra.mxu0 0.0
      %549 = vmatprep.subr.mxu0 0.0
      %550 = vmatpush1.msra.mxu0 0.0
      %551 = vmatprep.subr.mxu0 0.0
      %552 = vmatpush1.msra.mxu0 0.0
      %553 = vmatprep.subr.mxu0 0.0
      %554 = vmatpush1.msra.mxu0 0.0
      %555 = vmatprep.subr.mxu0 0.0
      %556 = vmatpush1.msra.mxu0 0.0
      %557 = vmatprep.subr.mxu0 0.0
      %558 = vmatpush1.msra.mxu0 0.0
      %559 = vmatprep.subr.mxu0 0.0
      %560 = vmatpush1.msra.mxu0 0.0
      %561 = vmatprep.subr.mxu0 0.0
      %562 = vmatpush1.msra.mxu0 0.0
      %563 = vmatprep.subr.mxu0 0.0
      %564 = vmatpush1.msra.mxu0 0.0
      %565 = vmatprep.subr.mxu0 0.0
      %566 = vmatpush1.msra.mxu0 0.0
      %567 = vmatprep.subr.mxu0 0.0
      %568 = vmatpush1.msra.mxu0 0.0
      %569 = vmatprep.subr.mxu0 0.0
      %570 = vmatpush1.msra.mxu0 0.0
      %571 = vmatprep.subr.mxu0 0.0
      %572 = vmatpush1.msra.mxu0 0.0
      %573 = vmatprep.subr.mxu0 0.0
      %574 = vmatpush1.msra.mxu0 0.0
      %575 = vmatprep.subr.mxu0 0.0
      %576 = vmatpush1.msra.mxu0 0.0
      %577 = vmatprep.subr.mxu0 0.0
      %578 = vmatpush1.msra.mxu0 0.0
      %579 = vmatprep.subr.mxu0 0.0
      %580 = vmatpush1.msra.mxu0 0.0
      %581 = vmatprep.subr.mxu0 0.0
      %582 = vmatpush1.msra.mxu0 0.0
      %583 = vmatprep.subr.mxu0 0.0
      %584 = vmatpush1.msra.mxu0 0.0
      %585 = vmatprep.subr.mxu0 0.0
      %586 = vmatpush1.msra.mxu0 0.0
      %587 = vmatprep.subr.mxu0 0.0
      %588 = vmatpush1.msra.mxu0 0.0
      %589 = vmatprep.subr.mxu0 0.0
      %590 = vmatpush1.msra.mxu0 0.0
      %591 = vmatprep.subr.mxu0 0.0
      %592 = vmatpush1.msra.mxu0 0.0
      %593 = vmatprep.subr.mxu0 0.0
      %594 = vmatpush1.msra.mxu0 0.0
      %595 = vmatprep.subr.mxu0 0.0
      %596 = vmatpush1.msra.mxu0 0.0
      %597 = vmatprep.subr.mxu0 0.0
      %598 = vmatpush1.msra.mxu0 0.0
      %599 = vmatprep.subr.mxu0 0.0
      %600 = vmatpush1.msra.mxu0 0.0
      %601 = vmatprep.mubr.f32.mxu0 0.0
      %602 = vmatmul.mubr.f32.gmra.mrb[0].mxu0 %v510
      %v603 = vpop.f32.mrb[0].mxu0
      %v604 = vadd.f32 0.0, %v603
      %v605 = vpop.f32.mrb[0].mxu0
      %606 = vmatprep.mubr.f32.mxu0 0.0
      %607 = vmatmul.mubr.f32.gmra.mrb[0].mxu0 %v513
      %v608 = vpop.f32.mrb[0].mxu0
      %v609 = vadd.f32 0.0, %v608
      %v610 = vpop.f32.mrb[0].mxu0
      %611 = vmatprep.mubr.f32.mxu0 0.0
      %612 = vmatmul.mubr.f32.gmra.mrb[0].mxu0 %v516
      %v613 = vpop.f32.mrb[0].mxu0
      %v614 = vadd.f32 0.0, %v613
      %v615 = vpop.f32.mrb[0].mxu0
      %616 = vmatprep.mubr.f32.mxu0 0.0
      %617 = vmatmul.mubr.f32.gmra.mrb[0].mxu0 %v519
      %v618 = vpop.f32.mrb[0].mxu0
      %v619 = vadd.f32 0.0, %v618
      %v620 = vpop.f32.mrb[0].mxu0
      %621 = vmatprep.mubr.f32.mxu0 0.0
      %622 = vmatmul.mubr.f32.gmra.mrb[0].mxu0 %v522
      %v623 = vpop.f32.mrb[0].mxu0
      %v624 = vadd.f32 0.0, %v623
      %v625 = vpop.f32.mrb[0].mxu0
      %626 = vmatprep.mubr.f32.mxu0 0.0
      %627 = vmatmul.mubr.f32.gmra.mrb[0].mxu0 %v525
      %v628 = vpop.f32.mrb[0].mxu0
      %v629 = vadd.f32 0.0, %v628
      %v630 = vpop.f32.mrb[0].mxu0
      %631 = vmatprep.mubr.f32.mxu0 0.0
      %632 = vmatmul.mubr.f32.gmra.mrb[0].mxu0 %v528
      %v633 = vpop.f32.mrb[0].mxu0
      %v634 = vadd.f32 0.0, %v633
      %v635 = vpop.f32.mrb[0].mxu0
      %636 = vmatprep.mubr.f32.mxu0 0.0
      %637 = vmatmul.mubr.f32.gmra.mrb[0].mxu0 %v531
      %v638 = vpop.f32.mrb[0].mxu0
      %v639 = vadd.f32 0.0, %v638
      %v640 = vpop.f32.mrb[0].mxu0
      %641 = vdwg.mxu0
      %642 = vst.msk [vmem:[%s268] sm:$0xff] %vm279, %v604
      %643 = vst.msk [vmem:[%s268 + $0x8] sm:$0xff] %vm279, %v609
      %644 = vst.msk [vmem:[%s268 + $0x10] sm:$0xff] %vm279, %v614
      %645 = vst.msk [vmem:[%s268 + $0x18] sm:$0xff] %vm279, %v619
      %646 = vst.msk [vmem:[%s268 + $0x20] sm:$0xff] %vm279, %v624
      %647 = vst.msk [vmem:[%s268 + $0x28] sm:$0xff] %vm279, %v629
      %648 = vst.msk [vmem:[%s268 + $0x30] sm:$0xff] %vm279, %v634
      %649 = vst.msk [vmem:[%s268 + $0x38] sm:$0xff] %vm279, %v639
      %p650 = scmp.lt.s32.totalorder %s18, 1
      %s651 = scalar_select %p650, %s18, 1
      %p652 = scmp.lt.s32.totalorder %s19, 1
      %s653 = scalar_select %p652, %s19, 1
      %s654 = smul.addr %s653, 8
      %s655 = smul.addr %s651, 16
      %s656 = sadd.s32 %s654, %s655
      %s657 = smul.addr %s656, 8
      %s658 = scalar_lea.vmem %s3, %s657
      // Predicated region
      $region33: #{fwd_eval.37} parent=31 // pred_check
        %p659 = pneg %p130
      $region34: #{fwd_eval.37} parent=31 // pred_check_branch
        %661 = sbr.rel (%p659) target = $region36
      $region35: #{fwd_eval.37} parent=31 // pred_region
        _
      $region36: #{fwd_eval.37} parent=31 // pred_fallthru
        _
    $region32: #{fwd_eval.37} parent=5 // pred_fallthru
      _
    %p662 = scmp.le.s32.totalorder 2, %s9
    // Predicated region
    $region37: #{fwd_eval.37} parent=5 // pred_check
      %p663 = pneg %p662
    $region38: #{fwd_eval.37} parent=5 // pred_check_branch
      %665 = sbr.rel (%p663) target = $region40
    $region39: #{fwd_eval.37} parent=5 // pred_region
      %s666 = ssub.s32 %s9, 2
      // Predicated region
      $region41: #{fwd_eval.37} parent=39 // pred_check
        %p667 = pneg %p136
      $region42: #{fwd_eval.37} parent=39 // pred_check_branch
        %669 = sbr.rel (%p667) target = $region44
      $region43: #{fwd_eval.37} parent=39 // pred_region
        %p670 = scmp.lt.s32.totalorder %s20, 1
        %s671 = scalar_select %p670, %s20, 1
        %p672 = scmp.lt.s32.totalorder %s21, 1
        %s673 = scalar_select %p672, %s21, 1
        %s674 = smul.addr %s673, 8
        %s675 = smul.addr %s671, 16
        %s676 = sadd.s32 %s674, %s675
        %s677 = smul.addr %s676, 8
        %s678 = scalar_lea.vmem %s3, %s677
      $region44: #{fwd_eval.37} parent=39 // pred_fallthru
        _
    $region40: #{fwd_eval.37} parent=5 // pred_fallthru
      _
  $region6: #{fwd_eval.37} parent=0 // loop_footer
    %s13 = sadd.s32 1, %s9
  $region7: #{fwd_eval.37} parent=0 // loop_footer_branch
    %8 = sbr.rel target = $region3
  $region8: #{fwd_eval.37} parent=0 // loop_exit
    _

// kernel: fwd_eval.39
$region0: #{fwd_eval.39}
  #allocation0 [shape = 'u32[]', space=smem, size = 0x4, offset = 0x4, fixed_abs, tag = 'smem constant byte address 0x4 - core index']
  #allocation1 [shape = 'u32[144,128]{1,0:T(1,128)}', space=vmem, size = 0x12000, scoped, tag = 'internal scratch']
  %s0 = inlined_call_operand.vmem [shape: f32[128,256], index: 0, kind: input, shape index: {}]
  %s1 = inlined_call_operand.vmem [shape: f32[128,256], index: 1, kind: output, shape index: {}]
  %s2 = sld [smem:[#allocation0]]
  $region14: #{fwd_eval.39} parent=0
    _
  %s4 = ssub.s32 1, %s2
  %s5 = scalar_select 0, %s4, %s2
  // Predicated region
  $region2: #{fwd_eval.39} parent=0 // pred_check
    _
  $region3: #{fwd_eval.39} parent=0 // pred_check_branch
    %7 = sbr.rel (0) target = $region5
  $region4: #{fwd_eval.39} parent=0 // pred_region
    _
  $region5: #{fwd_eval.39} parent=0 // pred_fallthru
    _
  %v8 = vld [vmem:[%s0] sm:$0xff]
  %v9 = vld [vmem:[%s0 + $0x8] sm:$0xff]
  %v10 = vld [vmem:[%s0 + $0x10] sm:$0xff]
  %v11 = vld [vmem:[%s0 + $0x18] sm:$0xff]
  %v12 = vld [vmem:[%s0 + $0x20] sm:$0xff]
  %v13 = vld [vmem:[%s0 + $0x28] sm:$0xff]
  %v14 = vld [vmem:[%s0 + $0x30] sm:$0xff]
  %v15 = vld [vmem:[%s0 + $0x38] sm:$0xff]
  %v16 = vld [vmem:[%s0 + $0x40] sm:$0xff]
  %v17 = vld [vmem:[%s0 + $0x48] sm:$0xff]
  %v18 = vld [vmem:[%s0 + $0x50] sm:$0xff]
  %v19 = vld [vmem:[%s0 + $0x58] sm:$0xff]
  %v20 = vld [vmem:[%s0 + $0x60] sm:$0xff]
  %v21 = vld [vmem:[%s0 + $0x68] sm:$0xff]
  %v22 = vld [vmem:[%s0 + $0x70] sm:$0xff]
  %v23 = vld [vmem:[%s0 + $0x78] sm:$0xff]
  %v24 = vld [vmem:[%s0 + $0x80] sm:$0xff]
  %v25 = vld [vmem:[%s0 + $0x88] sm:$0xff]
  %v26 = vld [vmem:[%s0 + $0x90] sm:$0xff]
  %v27 = vld [vmem:[%s0 + $0x98] sm:$0xff]
  %v28 = vld [vmem:[%s0 + $0xa0] sm:$0xff]
  %v29 = vld [vmem:[%s0 + $0xa8] sm:$0xff]
  %v30 = vld [vmem:[%s0 + $0xb0] sm:$0xff]
  %v31 = vld [vmem:[%s0 + $0xb8] sm:$0xff]
  %v32 = vld [vmem:[%s0 + $0xc0] sm:$0xff]
  %v33 = vld [vmem:[%s0 + $0xc8] sm:$0xff]
  %v34 = vld [vmem:[%s0 + $0xd0] sm:$0xff]
  %v35 = vld [vmem:[%s0 + $0xd8] sm:$0xff]
  %v36 = vld [vmem:[%s0 + $0xe0] sm:$0xff]
  %v37 = vld [vmem:[%s0 + $0xe8] sm:$0xff]
  %v38 = vld [vmem:[%s0 + $0xf0] sm:$0xff]
  %v39 = vld [vmem:[%s0 + $0xf8] sm:$0xff]
  %v40 = vmul.f32 %v8, 0.5
  %v41 = vmul.f32 %v9, 0.5
  %v42 = vmul.f32 %v10, 0.5
  %v43 = vmul.f32 %v11, 0.5
  %v44 = vmul.f32 %v12, 0.5
  %v45 = vmul.f32 %v13, 0.5
  %v46 = vmul.f32 %v14, 0.5
  %v47 = vmul.f32 %v15, 0.5
  %v48 = vmul.f32 %v16, 0.5
  %v49 = vmul.f32 %v17, 0.5
  %v50 = vmul.f32 %v18, 0.5
  %v51 = vmul.f32 %v19, 0.5
  %v52 = vmul.f32 %v20, 0.5
  %v53 = vmul.f32 %v21, 0.5
  %v54 = vmul.f32 %v22, 0.5
  %v55 = vmul.f32 %v23, 0.5
  %v56 = vmul.f32 %v24, 0.5
  %v57 = vmul.f32 %v25, 0.5
  %v58 = vmul.f32 %v26, 0.5
  %v59 = vmul.f32 %v27, 0.5
  %v60 = vmul.f32 %v28, 0.5
  %v61 = vmul.f32 %v29, 0.5
  %v62 = vmul.f32 %v30, 0.5
  %v63 = vmul.f32 %v31, 0.5
  %v64 = vmul.f32 %v32, 0.5
  %v65 = vmul.f32 %v33, 0.5
  %v66 = vmul.f32 %v34, 0.5
  %v67 = vmul.f32 %v35, 0.5
  %v68 = vmul.f32 %v36, 0.5
  %v69 = vmul.f32 %v37, 0.5
  %v70 = vmul.f32 %v38, 0.5
  %v71 = vmul.f32 %v39, 0.5
  %v72 = vmul.f32 %v8, 0.044715
  %v73 = vmul.f32 %v9, 0.044715
  %v74 = vmul.f32 %v10, 0.044715
  %v75 = vmul.f32 %v11, 0.044715
  %v76 = vmul.f32 %v12, 0.044715
  %v77 = vmul.f32 %v13, 0.044715
  %v78 = vmul.f32 %v14, 0.044715
  %v79 = vmul.f32 %v15, 0.044715
  %v80 = vmul.f32 %v16, 0.044715
  %v81 = vmul.f32 %v17, 0.044715
  %v82 = vmul.f32 %v18, 0.044715
  %v83 = vmul.f32 %v19, 0.044715
  %v84 = vmul.f32 %v20, 0.044715
  %v85 = vmul.f32 %v21, 0.044715
  %v86 = vmul.f32 %v22, 0.044715
  %v87 = vmul.f32 %v23, 0.044715
  %v88 = vmul.f32 %v24, 0.044715
  %v89 = vmul.f32 %v25, 0.044715
  %v90 = vmul.f32 %v26, 0.044715
  %v91 = vmul.f32 %v27, 0.044715
  %v92 = vmul.f32 %v28, 0.044715
  %v93 = vmul.f32 %v29, 0.044715
  %v94 = vmul.f32 %v30, 0.044715
  %v95 = vmul.f32 %v31, 0.044715
  %v96 = vmul.f32 %v32, 0.044715
  %v97 = vmul.f32 %v33, 0.044715
  %v98 = vmul.f32 %v34, 0.044715
  %v99 = vmul.f32 %v35, 0.044715
  %v100 = vmul.f32 %v36, 0.044715
  %v101 = vmul.f32 %v37, 0.044715
  %v102 = vmul.f32 %v38, 0.044715
  %v103 = vmul.f32 %v39, 0.044715
  %v104 = vmul.f32 %v72, %v8
  %v105 = vmul.f32 %v73, %v9
  %v106 = vmul.f32 %v74, %v10
  %v107 = vmul.f32 %v75, %v11
  %v108 = vmul.f32 %v76, %v12
  %v109 = vmul.f32 %v77, %v13
  %v110 = vmul.f32 %v78, %v14
  %v111 = vmul.f32 %v79, %v15
  %v112 = vmul.f32 %v80, %v16
  %v113 = vmul.f32 %v81, %v17
  %v114 = vmul.f32 %v82, %v18
  %v115 = vmul.f32 %v83, %v19
  %v116 = vmul.f32 %v84, %v20
  %v117 = vmul.f32 %v85, %v21
  %v118 = vmul.f32 %v86, %v22
  %v119 = vmul.f32 %v87, %v23
  %v120 = vmul.f32 %v88, %v24
  %v121 = vmul.f32 %v89, %v25
  %v122 = vmul.f32 %v90, %v26
  %v123 = vmul.f32 %v91, %v27
  %v124 = vmul.f32 %v92, %v28
  %v125 = vmul.f32 %v93, %v29
  %v126 = vmul.f32 %v94, %v30
  %v127 = vmul.f32 %v95, %v31
  %v128 = vmul.f32 %v96, %v32
  %v129 = vmul.f32 %v97, %v33
  %v130 = vmul.f32 %v98, %v34
  %v131 = vmul.f32 %v99, %v35
  %v132 = vmul.f32 %v100, %v36
  %v133 = vmul.f32 %v101, %v37
  %v134 = vmul.f32 %v102, %v38
  %v135 = vmul.f32 %v103, %v39
  %v136 = vmul.f32 %v104, %v8
  %v137 = vmul.f32 %v105, %v9
  %v138 = vmul.f32 %v106, %v10
  %v139 = vmul.f32 %v107, %v11
  %v140 = vmul.f32 %v108, %v12
  %v141 = vmul.f32 %v109, %v13
  %v142 = vmul.f32 %v110, %v14
  %v143 = vmul.f32 %v111, %v15
  %v144 = vmul.f32 %v112, %v16
  %v145 = vmul.f32 %v113, %v17
  %v146 = vmul.f32 %v114, %v18
  %v147 = vmul.f32 %v115, %v19
  %v148 = vmul.f32 %v116, %v20
  %v149 = vmul.f32 %v117, %v21
  %v150 = vmul.f32 %v118, %v22
  %v151 = vmul.f32 %v119, %v23
  %v152 = vmul.f32 %v120, %v24
  %v153 = vmul.f32 %v121, %v25
  %v154 = vmul.f32 %v122, %v26
  %v155 = vmul.f32 %v123, %v27
  %v156 = vmul.f32 %v124, %v28
  %v157 = vmul.f32 %v125, %v29
  %v158 = vmul.f32 %v126, %v30
  %v159 = vmul.f32 %v127, %v31
  %v160 = vmul.f32 %v128, %v32
  %v161 = vmul.f32 %v129, %v33
  %v162 = vmul.f32 %v130, %v34
  %v163 = vmul.f32 %v131, %v35
  %v164 = vmul.f32 %v132, %v36
  %v165 = vmul.f32 %v133, %v37
  %v166 = vmul.f32 %v134, %v38
  %v167 = vmul.f32 %v135, %v39
  %v168 = vadd.f32 %v8, %v136
  %v169 = vadd.f32 %v9, %v137
  %v170 = vadd.f32 %v10, %v138
  %v171 = vadd.f32 %v11, %v139
  %v172 = vadd.f32 %v12, %v140
  %v173 = vadd.f32 %v13, %v141
  %v174 = vadd.f32 %v14, %v142
  %v175 = vadd.f32 %v15, %v143
  %v176 = vadd.f32 %v16, %v144
  %v177 = vadd.f32 %v17, %v145
  %v178 = vadd.f32 %v18, %v146
  %v179 = vadd.f32 %v19, %v147
  %v180 = vadd.f32 %v20, %v148
  %v181 = vadd.f32 %v21, %v149
  %v182 = vadd.f32 %v22, %v150
  %v183 = vadd.f32 %v23, %v151
  %v184 = vadd.f32 %v24, %v152
  %v185 = vadd.f32 %v25, %v153
  %v186 = vadd.f32 %v26, %v154
  %v187 = vadd.f32 %v27, %v155
  %v188 = vadd.f32 %v28, %v156
  %v189 = vadd.f32 %v29, %v157
  %v190 = vadd.f32 %v30, %v158
  %v191 = vadd.f32 %v31, %v159
  %v192 = vadd.f32 %v32, %v160
  %v193 = vadd.f32 %v33, %v161
  %v194 = vadd.f32 %v34, %v162
  %v195 = vadd.f32 %v35, %v163
  %v196 = vadd.f32 %v36, %v164
  %v197 = vadd.f32 %v37, %v165
  %v198 = vadd.f32 %v38, %v166
  %v199 = vadd.f32 %v39, %v167
  %v200 = vmul.f32 %v168, 0.7978846
  %v201 = vmul.f32 %v169, 0.7978846
  %v202 = vmul.f32 %v170, 0.7978846
  %v203 = vmul.f32 %v171, 0.7978846
  %v204 = vmul.f32 %v172, 0.7978846
  %v205 = vmul.f32 %v173, 0.7978846
  %v206 = vmul.f32 %v174, 0.7978846
  %v207 = vmul.f32 %v175, 0.7978846
  %v208 = vmul.f32 %v176, 0.7978846
  %v209 = vmul.f32 %v177, 0.7978846
  %v210 = vmul.f32 %v178, 0.7978846
  %v211 = vmul.f32 %v179, 0.7978846
  %v212 = vmul.f32 %v180, 0.7978846
  %v213 = vmul.f32 %v181, 0.7978846
  %v214 = vmul.f32 %v182, 0.7978846
  %v215 = vmul.f32 %v183, 0.7978846
  %v216 = vmul.f32 %v184, 0.7978846
  %v217 = vmul.f32 %v185, 0.7978846
  %v218 = vmul.f32 %v186, 0.7978846
  %v219 = vmul.f32 %v187, 0.7978846
  %v220 = vmul.f32 %v188, 0.7978846
  %v221 = vmul.f32 %v189, 0.7978846
  %v222 = vmul.f32 %v190, 0.7978846
  %v223 = vmul.f32 %v191, 0.7978846
  %v224 = vmul.f32 %v192, 0.7978846
  %v225 = vmul.f32 %v193, 0.7978846
  %v226 = vmul.f32 %v194, 0.7978846
  %v227 = vmul.f32 %v195, 0.7978846
  %v228 = vmul.f32 %v196, 0.7978846
  %v229 = vmul.f32 %v197, 0.7978846
  %v230 = vmul.f32 %v198, 0.7978846
  %v231 = vmul.f32 %v199, 0.7978846
  %v232 = vtanh.pop %v200
  %v233 = vtanh.pop %v201
  %v234 = vtanh.pop %v202
  %v235 = vtanh.pop %v203
  %v236 = vtanh.pop %v204
  %v237 = vtanh.pop %v205
  %v238 = vtanh.pop %v206
  %v239 = vtanh.pop %v207
  %v240 = vtanh.pop %v208
  %v241 = vtanh.pop %v209
  %v242 = vtanh.pop %v210
  %v243 = vtanh.pop %v211
  %v244 = vtanh.pop %v212
  %v245 = vtanh.pop %v213
  %v246 = vtanh.pop %v214
  %v247 = vtanh.pop %v215
  %v248 = vtanh.pop %v216
  %v249 = vtanh.pop %v217
  %v250 = vtanh.pop %v218
  %v251 = vtanh.pop %v219
  %v252 = vtanh.pop %v220
  %v253 = vtanh.pop %v221
  %v254 = vtanh.pop %v222
  %v255 = vtanh.pop %v223
  %v256 = vtanh.pop %v224
  %v257 = vtanh.pop %v225
  %v258 = vtanh.pop %v226
  %v259 = vtanh.pop %v227
  %v260 = vtanh.pop %v228
  %v261 = vtanh.pop %v229
  %v262 = vtanh.pop %v230
  %v263 = vtanh.pop %v231
  %v264 = vadd.f32 %v232, 1.0
  %v265 = vadd.f32 %v233, 1.0
  %v266 = vadd.f32 %v234, 1.0
  %v267 = vadd.f32 %v235, 1.0
  %v268 = vadd.f32 %v236, 1.0
  %v269 = vadd.f32 %v237, 1.0
  %v270 = vadd.f32 %v238, 1.0
  %v271 = vadd.f32 %v239, 1.0
  %v272 = vadd.f32 %v240, 1.0
  %v273 = vadd.f32 %v241, 1.0
  %v274 = vadd.f32 %v242, 1.0
  %v275 = vadd.f32 %v243, 1.0
  %v276 = vadd.f32 %v244, 1.0
  %v277 = vadd.f32 %v245, 1.0
  %v278 = vadd.f32 %v246, 1.0
  %v279 = vadd.f32 %v247, 1.0
  %v280 = vadd.f32 %v248, 1.0
  %v281 = vadd.f32 %v249, 1.0
  %v282 = vadd.f32 %v250, 1.0
  %v283 = vadd.f32 %v251, 1.0
  %v284 = vadd.f32 %v252, 1.0
  %v285 = vadd.f32 %v253, 1.0
  %v286 = vadd.f32 %v254, 1.0
  %v287 = vadd.f32 %v255, 1.0
  %v288 = vadd.f32 %v256, 1.0
  %v289 = vadd.f32 %v257, 1.0
  %v290 = vadd.f32 %v258, 1.0
  %v291 = vadd.f32 %v259, 1.0
  %v292 = vadd.f32 %v260, 1.0
  %v293 = vadd.f32 %v261, 1.0
  %v294 = vadd.f32 %v262, 1.0
  %v295 = vadd.f32 %v263, 1.0
  %v296 = vmul.f32 %v40, %v264
  %v297 = vmul.f32 %v41, %v265
  %v298 = vmul.f32 %v42, %v266
  %v299 = vmul.f32 %v43, %v267
  %v300 = vmul.f32 %v44, %v268
  %v301 = vmul.f32 %v45, %v269
  %v302 = vmul.f32 %v46, %v270
  %v303 = vmul.f32 %v47, %v271
  %v304 = vmul.f32 %v48, %v272
  %v305 = vmul.f32 %v49, %v273
  %v306 = vmul.f32 %v50, %v274
  %v307 = vmul.f32 %v51, %v275
  %v308 = vmul.f32 %v52, %v276
  %v309 = vmul.f32 %v53, %v277
  %v310 = vmul.f32 %v54, %v278
  %v311 = vmul.f32 %v55, %v279
  %v312 = vmul.f32 %v56, %v280
  %v313 = vmul.f32 %v57, %v281
  %v314 = vmul.f32 %v58, %v282
  %v315 = vmul.f32 %v59, %v283
  %v316 = vmul.f32 %v60, %v284
  %v317 = vmul.f32 %v61, %v285
  %v318 = vmul.f32 %v62, %v286
  %v319 = vmul.f32 %v63, %v287
  %v320 = vmul.f32 %v64, %v288
  %v321 = vmul.f32 %v65, %v289
  %v322 = vmul.f32 %v66, %v290
  %v323 = vmul.f32 %v67, %v291
  %v324 = vmul.f32 %v68, %v292
  %v325 = vmul.f32 %v69, %v293
  %v326 = vmul.f32 %v70, %v294
  %v327 = vmul.f32 %v71, %v295
  %328 = vst [vmem:[%s1] sm:$0xff] %v296
  %329 = vst [vmem:[%s1 + $0x8] sm:$0xff] %v297
  %330 = vst [vmem:[%s1 + $0x10] sm:$0xff] %v298
  %331 = vst [vmem:[%s1 + $0x18] sm:$0xff] %v299
  %332 = vst [vmem:[%s1 + $0x20] sm:$0xff] %v300
  %333 = vst [vmem:[%s1 + $0x28] sm:$0xff] %v301
  %334 = vst [vmem:[%s1 + $0x30] sm:$0xff] %v302
  %335 = vst [vmem:[%s1 + $0x38] sm:$0xff] %v303
  %336 = vst [vmem:[%s1 + $0x40] sm:$0xff] %v304
  %337 = vst [vmem:[%s1 + $0x48] sm:$0xff] %v305
  %338 = vst [vmem:[%s1 + $0x50] sm:$0xff] %v306
  %339 = vst [vmem:[%s1 + $0x58] sm:$0xff] %v307
  %340 = vst [vmem:[%s1 + $0x60] sm:$0xff] %v308
  %341 = vst [vmem:[%s1 + $0x68] sm:$0xff] %v309
  %342 = vst [vmem:[%s1 + $0x70] sm:$0xff] %v310
  %343 = vst [vmem:[%s1 + $0x78] sm:$0xff] %v311
  %344 = vst [vmem:[%s1 + $0x80] sm:$0xff] %v312
  %345 = vst [vmem:[%s1 + $0x88] sm:$0xff] %v313
  %346 = vst [vmem:[%s1 + $0x90] sm:$0xff] %v314
  %347 = vst [vmem:[%s1 + $0x98] sm:$0xff] %v315
  %348 = vst [vmem:[%s1 + $0xa0] sm:$0xff] %v316
  %349 = vst [vmem:[%s1 + $0xa8] sm:$0xff] %v317
  %350 = vst [vmem:[%s1 + $0xb0] sm:$0xff] %v318
  %351 = vst [vmem:[%s1 + $0xb8] sm:$0xff] %v319
  %352 = vst [vmem:[%s1 + $0xc0] sm:$0xff] %v320
  %353 = vst [vmem:[%s1 + $0xc8] sm:$0xff] %v321
  %354 = vst [vmem:[%s1 + $0xd0] sm:$0xff] %v322
  %355 = vst [vmem:[%s1 + $0xd8] sm:$0xff] %v323
  %356 = vst [vmem:[%s1 + $0xe0] sm:$0xff] %v324
  %357 = vst [vmem:[%s1 + $0xe8] sm:$0xff] %v325
  %358 = vst [vmem:[%s1 + $0xf0] sm:$0xff] %v326
  %359 = vst [vmem:[%s1 + $0xf8] sm:$0xff] %v327
  // Predicated region
  $region6: #{fwd_eval.39} parent=0 // pred_check
    _
  $region7: #{fwd_eval.39} parent=0 // pred_check_branch
    %361 = sbr.rel (0) target = $region9
  $region8: #{fwd_eval.39} parent=0 // pred_region
    _
  $region9: #{fwd_eval.39} parent=0 // pred_fallthru
    _
  // Predicated region
  $region10: #{fwd_eval.39} parent=0 // pred_check
    _
  $region11: #{fwd_eval.39} parent=0 // pred_check_branch
    %363 = sbr.rel (0) target = $region13
  $region12: #{fwd_eval.39} parent=0 // pred_region
    _
  $region13: #{fwd_eval.39} parent=0 // pred_fallthru
    _

// kernel: fwd_eval.41
$region0: #{fwd_eval.41}
  #allocation0 [shape = 'u32[]', space=smem, size = 0x4, offset = 0x4, fixed_abs, tag = 'smem constant byte address 0x4 - core index']
  #allocation1 [shape = 'u32[144,128]{1,0:T(1,128)}', space=vmem, size = 0x12000, scoped, tag = 'internal scratch']
  %s0 = inlined_call_operand.vmem [shape: f32[32,160], index: 0, kind: input, shape index: {}]
  %s1 = inlined_call_operand.vmem [shape: f32[1,160], index: 1, kind: input, shape index: {}]
  %s2 = inlined_call_operand.vmem [shape: f32[1,160], index: 2, kind: input, shape index: {}]
  %s3 = inlined_call_operand.vmem [shape: f32[32,160], index: 3, kind: output, shape index: {}]
  %s4 = sld [smem:[#allocation0]]
  $region22: #{fwd_eval.41} parent=0
    _
  %s6 = ssub.s32 1, %s4
  %s7 = scalar_select 0, %s6, %s4
  // Predicated region
  $region2: #{fwd_eval.41} parent=0 // pred_check
    _
  $region3: #{fwd_eval.41} parent=0 // pred_check_branch
    %9 = sbr.rel (0) target = $region5
  $region4: #{fwd_eval.41} parent=0 // pred_region
    _
  $region5: #{fwd_eval.41} parent=0 // pred_fallthru
    _
  // Predicated region
  $region6: #{fwd_eval.41} parent=0 // pred_check
    _
  $region7: #{fwd_eval.41} parent=0 // pred_check_branch
    %11 = sbr.rel (0) target = $region9
  $region8: #{fwd_eval.41} parent=0 // pred_region
    _
  $region9: #{fwd_eval.41} parent=0 // pred_fallthru
    _
  // Predicated region
  $region10: #{fwd_eval.41} parent=0 // pred_check
    _
  $region11: #{fwd_eval.41} parent=0 // pred_check_branch
    %13 = sbr.rel (0) target = $region13
  $region12: #{fwd_eval.41} parent=0 // pred_region
    _
  $region13: #{fwd_eval.41} parent=0 // pred_fallthru
    _
  %v14 = vld [vmem:[%s0] sm:$0xff]
  %v15 = vld [vmem:[%s0 + $0x8] sm:$0xff]
  %v16 = vld [vmem:[%s0 + $0x10] sm:$0xff]
  %v17 = vld [vmem:[%s0 + $0x18] sm:$0xff]
  %v18 = vld [vmem:[%s0 + $0x20] sm:$0xff]
  %v19 = vld [vmem:[%s0 + $0x28] sm:$0xff]
  %v20 = vld [vmem:[%s0 + $0x30] sm:$0xff]
  %v21 = vld [vmem:[%s0 + $0x38] sm:$0xff]
  %vm22 = vcmask 261120
  %v23 = vsel %vm22, %v15, 0.0
  %v24 = vadd.f32 %v14, %v23
  %25 = vadd.xlane.f32.xlu0 %v24
  %v26 = vpop.xlane.xlu0 %25
  %v27 = vsel %vm22, %v17, 0.0
  %v28 = vadd.f32 %v16, %v27
  %29 = vadd.xlane.f32.xlu0 %v28
  %v30 = vpop.xlane.xlu0 %29
  %v31 = vsel %vm22, %v19, 0.0
  %v32 = vadd.f32 %v18, %v31
  %33 = vadd.xlane.f32.xlu0 %v32
  %v34 = vpop.xlane.xlu0 %33
  %v35 = vsel %vm22, %v21, 0.0
  %v36 = vadd.f32 %v20, %v35
  %37 = vadd.xlane.f32.xlu0 %v36
  %v38 = vpop.xlane.xlu0 %37
  %v39 = vrcp.pop 160.0
  %v40 = vmul.f32 %v26, %v39
  %v41 = vmul.f32 %v30, %v39
  %v42 = vmul.f32 %v34, %v39
  %v43 = vmul.f32 %v38, %v39
  %v44 = vsub.f32 %v14, %v40
  %v45 = vsub.f32 %v15, %v40
  %v46 = vsub.f32 %v16, %v41
  %v47 = vsub.f32 %v17, %v41
  %v48 = vsub.f32 %v18, %v42
  %v49 = vsub.f32 %v19, %v42
  %v50 = vsub.f32 %v20, %v43
  %v51 = vsub.f32 %v21, %v43
  %v52 = vmul.f32 %v44, %v44
  %v53 = vmul.f32 %v45, %v45
  %v54 = vmul.f32 %v46, %v46
  %v55 = vmul.f32 %v47, %v47
  %v56 = vmul.f32 %v48, %v48
  %v57 = vmul.f32 %v49, %v49
  %v58 = vmul.f32 %v50, %v50
  %v59 = vmul.f32 %v51, %v51
  %v60 = vsel %vm22, %v53, 0.0
  %v61 = vadd.f32 %v52, %v60
  %62 = vadd.xlane.f32.xlu0 %v61
  %v63 = vpop.xlane.xlu0 %62
  %v64 = vsel %vm22, %v55, 0.0
  %v65 = vadd.f32 %v54, %v64
  %66 = vadd.xlane.f32.xlu0 %v65
  %v67 = vpop.xlane.xlu0 %66
  %v68 = vsel %vm22, %v57, 0.0
  %v69 = vadd.f32 %v56, %v68
  %70 = vadd.xlane.f32.xlu0 %v69
  %v71 = vpop.xlane.xlu0 %70
  %v72 = vsel %vm22, %v59, 0.0
  %v73 = vadd.f32 %v58, %v72
  %74 = vadd.xlane.f32.xlu0 %v73
  %v75 = vpop.xlane.xlu0 %74
  %v76 = vmul.f32 %v63, %v39
  %v77 = vmul.f32 %v67, %v39
  %v78 = vmul.f32 %v71, %v39
  %v79 = vmul.f32 %v75, %v39
  %v80 = vadd.f32 %v76, 1e-05
  %v81 = vadd.f32 %v77, 1e-05
  %v82 = vadd.f32 %v78, 1e-05
  %v83 = vadd.f32 %v79, 1e-05
  %v84 = vrsqrt.pop %v80
  %v85 = vrsqrt.pop %v81
  %v86 = vrsqrt.pop %v82
  %v87 = vrsqrt.pop %v83
  %v88 = vmul.f32 %v44, %v84
  %v89 = vmul.f32 %v45, %v84
  %v90 = vmul.f32 %v46, %v85
  %v91 = vmul.f32 %v47, %v85
  %v92 = vmul.f32 %v48, %v86
  %v93 = vmul.f32 %v49, %v86
  %v94 = vmul.f32 %v50, %v87
  %v95 = vmul.f32 %v51, %v87
  %v96 = vld [vmem:[%s1] sm:$0x3]
  %v98 = vlaneseq
  %v99 = vshrl.u32 %v98, 7
  %v100 = vsub.s32 0, %v99
  %v101 = vrot.slane %v96, %v100
  %v102 = vlaneseq
  %v103 = vshrl.u32 %v102, 7
  %v104 = vsub.s32 1, %v103
  %v105 = vrot.slane %v96, %v104
  %v108 = vmul.f32 %v88, %v101
  %v109 = vmul.f32 %v89, %v105
  %v110 = vmul.f32 %v90, %v101
  %v111 = vmul.f32 %v91, %v105
  %v112 = vmul.f32 %v92, %v101
  %v113 = vmul.f32 %v93, %v105
  %v114 = vmul.f32 %v94, %v101
  %v115 = vmul.f32 %v95, %v105
  %v116 = vld [vmem:[%s2] sm:$0x3]
  %v118 = vlaneseq
  %v119 = vshrl.u32 %v118, 7
  %v120 = vsub.s32 0, %v119
  %v121 = vrot.slane %v116, %v120
  %v122 = vlaneseq
  %v123 = vshrl.u32 %v122, 7
  %v124 = vsub.s32 1, %v123
  %v125 = vrot.slane %v116, %v124
  %v128 = vadd.f32 %v108, %v121
  %v129 = vadd.f32 %v109, %v125
  %v130 = vadd.f32 %v110, %v121
  %v131 = vadd.f32 %v111, %v125
  %v132 = vadd.f32 %v112, %v121
  %v133 = vadd.f32 %v113, %v125
  %v134 = vadd.f32 %v114, %v121
  %v135 = vadd.f32 %v115, %v125
  %136 = vst [vmem:[%s3] sm:$0xff] %v128
  %137 = vst.msk [vmem:[%s3 + $0x8] sm:$0xff] %vm22, %v129
  %138 = vst [vmem:[%s3 + $0x10] sm:$0xff] %v130
  %139 = vst.msk [vmem:[%s3 + $0x18] sm:$0xff] %vm22, %v131
  %140 = vst [vmem:[%s3 + $0x20] sm:$0xff] %v132
  %141 = vst.msk [vmem:[%s3 + $0x28] sm:$0xff] %vm22, %v133
  %142 = vst [vmem:[%s3 + $0x30] sm:$0xff] %v134
  %143 = vst.msk [vmem:[%s3 + $0x38] sm:$0xff] %vm22, %v135
  // Predicated region
  $region14: #{fwd_eval.41} parent=0 // pred_check
    _
  $region15: #{fwd_eval.41} parent=0 // pred_check_branch
    %145 = sbr.rel (0) target = $region17
  $region16: #{fwd_eval.41} parent=0 // pred_region
    _
  $region17: #{fwd_eval.41} parent=0 // pred_fallthru
    _
  // Predicated region
  $region18: #{fwd_eval.41} parent=0 // pred_check
    _
  $region19: #{fwd_eval.41} parent=0 // pred_check_branch
    %147 = sbr.rel (0) target = $region21
  $region20: #{fwd_eval.41} parent=0 // pred_region
    _
  $region21: #{fwd_eval.41} parent=0 // pred_fallthru
    _

// kernel: fwd_eval.43
$region0: #{fwd_eval.43}
  #allocation0 [shape = 'u32[]', space=smem, size = 0x4, offset = 0x4, fixed_abs, tag = 'smem constant byte address 0x4 - core index']
  #allocation1 [shape = 'u32[144,128]{1,0:T(1,128)}', space=vmem, size = 0x12000, scoped, tag = 'internal scratch']
  %s0 = inlined_call_operand.vmem [shape: f32[8,160], index: 0, kind: input, shape index: {}]
  %s1 = inlined_call_operand.vmem [shape: f32[1,160], index: 1, kind: input, shape index: {}]
  %s2 = inlined_call_operand.vmem [shape: f32[1,160], index: 2, kind: input, shape index: {}]
  %s3 = inlined_call_operand.vmem [shape: f32[8,160], index: 3, kind: output, shape index: {}]
  %s4 = sld [smem:[#allocation0]]
  $region22: #{fwd_eval.43} parent=0
    _
  %s6 = ssub.s32 1, %s4
  %s7 = scalar_select 0, %s6, %s4
  // Predicated region
  $region2: #{fwd_eval.43} parent=0 // pred_check
    _
  $region3: #{fwd_eval.43} parent=0 // pred_check_branch
    %9 = sbr.rel (0) target = $region5
  $region4: #{fwd_eval.43} parent=0 // pred_region
    _
  $region5: #{fwd_eval.43} parent=0 // pred_fallthru
    _
  // Predicated region
  $region6: #{fwd_eval.43} parent=0 // pred_check
    _
  $region7: #{fwd_eval.43} parent=0 // pred_check_branch
    %11 = sbr.rel (0) target = $region9
  $region8: #{fwd_eval.43} parent=0 // pred_region
    _
  $region9: #{fwd_eval.43} parent=0 // pred_fallthru
    _
  // Predicated region
  $region10: #{fwd_eval.43} parent=0 // pred_check
    _
  $region11: #{fwd_eval.43} parent=0 // pred_check_branch
    %13 = sbr.rel (0) target = $region13
  $region12: #{fwd_eval.43} parent=0 // pred_region
    _
  $region13: #{fwd_eval.43} parent=0 // pred_fallthru
    _
  %v14 = vld [vmem:[%s0] sm:$0xff]
  %v15 = vld [vmem:[%s0 + $0x8] sm:$0xff]
  %vm16 = vcmask 261120
  %v17 = vsel %vm16, %v15, 0.0
  %v18 = vadd.f32 %v14, %v17
  %19 = vadd.xlane.f32.xlu0 %v18
  %v20 = vpop.xlane.xlu0 %19
  %v21 = vrcp.pop 160.0
  %v22 = vmul.f32 %v20, %v21
  %v23 = vsub.f32 %v14, %v22
  %v24 = vsub.f32 %v15, %v22
  %v25 = vmul.f32 %v23, %v23
  %v26 = vmul.f32 %v24, %v24
  %v27 = vsel %vm16, %v26, 0.0
  %v28 = vadd.f32 %v25, %v27
  %29 = vadd.xlane.f32.xlu0 %v28
  %v30 = vpop.xlane.xlu0 %29
  %v31 = vmul.f32 %v30, %v21
  %v32 = vadd.f32 %v31, 1e-05
  %v33 = vrsqrt.pop %v32
  %v34 = vmul.f32 %v23, %v33
  %v35 = vmul.f32 %v24, %v33
  %v36 = vld [vmem:[%s1] sm:$0x3]
  %v38 = vlaneseq
  %v39 = vshrl.u32 %v38, 7
  %v40 = vsub.s32 0, %v39
  %v41 = vrot.slane %v36, %v40
  %v42 = vlaneseq
  %v43 = vshrl.u32 %v42, 7
  %v44 = vsub.s32 1, %v43
  %v45 = vrot.slane %v36, %v44
  %v48 = vmul.f32 %v34, %v41
  %v49 = vmul.f32 %v35, %v45
  %v50 = vld [vmem:[%s2] sm:$0x3]
  %v52 = vlaneseq
  %v53 = vshrl.u32 %v52, 7
  %v54 = vsub.s32 0, %v53
  %v55 = vrot.slane %v50, %v54
  %v56 = vlaneseq
  %v57 = vshrl.u32 %v56, 7
  %v58 = vsub.s32 1, %v57
  %v59 = vrot.slane %v50, %v58
  %v62 = vadd.f32 %v48, %v55
  %v63 = vadd.f32 %v49, %v59
  %64 = vst [vmem:[%s3] sm:$0xff] %v62
  %65 = vst.msk [vmem:[%s3 + $0x8] sm:$0xff] %vm16, %v63
  // Predicated region
  $region14: #{fwd_eval.43} parent=0 // pred_check
    _
  $region15: #{fwd_eval.43} parent=0 // pred_check_branch
    %67 = sbr.rel (0) target = $region17
  $region16: #{fwd_eval.43} parent=0 // pred_region
    _
  $region17: #{fwd_eval.43} parent=0 // pred_fallthru
    _
  // Predicated region
  $region18: #{fwd_eval.43} parent=0 // pred_check
    _
  $region19: #{fwd_eval.43} parent=0 // pred_check_branch
    %69 = sbr.rel (0) target = $region21
  $region20: #{fwd_eval.43} parent=0 // pred_region
    _
  $region21: #{fwd_eval.43} parent=0 // pred_fallthru
    _

// kernel: fwd_eval.44
$region0: #{fwd_eval.44}
  #allocation0 [shape = 'u32[]', space=smem, size = 0x4, offset = 0x4, fixed_abs, tag = 'smem constant byte address 0x4 - core index']
  #allocation1 [shape = 'u32[144,128]{1,0:T(1,128)}', space=vmem, size = 0x12000, scoped, tag = 'internal scratch']
  %s0 = inlined_call_operand.vmem [shape: f32[2,5,16,32], index: 0, kind: input, shape index: {}]
  %s1 = inlined_call_operand.vmem [shape: f32[2,5,4,32], index: 1, kind: input, shape index: {}]
  %s2 = inlined_call_operand.vmem [shape: f32[2,5,4,32], index: 2, kind: input, shape index: {}]
  %s3 = inlined_call_operand.vmem [shape: f32[2,5,16,32], index: 3, kind: output, shape index: {}]
  %s4 = sld [smem:[#allocation0]]
  $region45: #{fwd_eval.44} parent=0
    _
  %s6 = ssub.s32 1, %s4
  %s7 = scalar_select 0, %s6, %s4
  loop: start=0, step=1, limit=12
  $region2: #{fwd_eval.44} parent=0 // loop_pre_header
    _
  $region3: #{fwd_eval.44} parent=0 // loop_header
    %s9 = sphi 0, %s13
    %p10 = scmp.ge.s32.totalorder %s9, 12
    %s16 = sphi 0, %s28
    %s17 = sphi 0, %s24
    %s18 = sphi 0, %s16
    %s19 = sphi 0, %s17
    %s20 = sphi 0, %s18
    %s21 = sphi 0, %s19
    %s33 = sphi 0, %s35
    %s36 = sphi 0, %s33
    %s37 = sphi 0, %s36
    %s53 = sphi 0, %s37
    %s61 = sphi 0, %s63
    %s64 = sphi 0, %s61
    %s65 = sphi 0, %s64
    %s81 = sphi 0, %s65
    %s89 = sphi 0, %s91
    %s92 = sphi 0, %s89
    %s93 = sphi 0, %s92
    %s109 = sphi 0, %s93
    %s117 = sphi 0, %s119
    %s120 = sphi 0, %s117
    %s121 = sphi 0, %s120
    %s137 = sphi 0, %s121
  $region4: #{fwd_eval.44} parent=0 // loop_header_branch
    %12 = sbr.rel (%p10) target = $region8
  $region5: #{fwd_eval.44} parent=0 // loop_body
    %s14 = ssub.s32 %s9, 1
    %s15 = ssub.s32 %s9, 2
    %s22 = sadd.s32 1, %s17
    %p23 = scmp.ge.s32.totalorder %s22, 5
    %s24 = scalar_select %p23, 0, %s22
    %s25 = sadd.s32 1, %s16
    %s26 = scalar_select %p23, %s25, %s16
    %p27 = scmp.ge.s32.totalorder %s26, 2
    %s28 = scalar_select %p27, 0, %s26
    %s29 = ssub.s32 %s16, %s28
    %s30 = ssub.s32 %s17, %s24
    %s31 = sor.u32 %s29, %s30
    %p32 = scmp.eq.s32.totalorder %s31, 0
    %s34 = sadd.s32 %s33, 1
    %s35 = scalar_select %p32, %s33, %s34
    %p38 = pneg %p32
    %p39 = scmp.eq.s32.totalorder %s9, 9
    %p40 = por %p38, %p39
    %p41 = scmp.ne.s32.totalorder %s33, %s36
    %p42 = scmp.eq.s32.totalorder %s9, 0
    %p43 = por %p41, %p42
    %p44 = scmp.ne.s32.totalorder %s33, %s36
    %p45 = scmp.eq.s32.totalorder %s14, 9
    %p46 = por %p44, %p45
    %p47 = scmp.ne.s32.totalorder %s36, %s37
    %p48 = scmp.eq.s32.totalorder %s14, 0
    %p49 = por %p47, %p48
    %p50 = scmp.ne.s32.totalorder %s36, %s37
    %p51 = scmp.eq.s32.totalorder %s15, 9
    %p52 = por %p50, %p51
    %p54 = scmp.ne.s32.totalorder %s37, %s53
    %p55 = scmp.eq.s32.totalorder %s15, 0
    %p56 = por %p54, %p55
    %s57 = ssub.s32 %s16, %s28
    %s58 = ssub.s32 %s17, %s24
    %s59 = sor.u32 %s57, %s58
    %p60 = scmp.eq.s32.totalorder %s59, 0
    %s62 = sadd.s32 %s61, 1
    %s63 = scalar_select %p60, %s61, %s62
    %p66 = pneg %p60
    %p67 = scmp.eq.s32.totalorder %s9, 9
    %p68 = por %p66, %p67
    %p69 = scmp.ne.s32.totalorder %s61, %s64
    %p70 = scmp.eq.s32.totalorder %s9, 0
    %p71 = por %p69, %p70
    %p72 = scmp.ne.s32.totalorder %s61, %s64
    %p73 = scmp.eq.s32.totalorder %s14, 9
    %p74 = por %p72, %p73
    %p75 = scmp.ne.s32.totalorder %s64, %s65
    %p76 = scmp.eq.s32.totalorder %s14, 0
    %p77 = por %p75, %p76
    %p78 = scmp.ne.s32.totalorder %s64, %s65
    %p79 = scmp.eq.s32.totalorder %s15, 9
    %p80 = por %p78, %p79
    %p82 = scmp.ne.s32.totalorder %s65, %s81
    %p83 = scmp.eq.s32.totalorder %s15, 0
    %p84 = por %p82, %p83
    %s85 = ssub.s32 %s16, %s28
    %s86 = ssub.s32 %s17, %s24
    %s87 = sor.u32 %s85, %s86
    %p88 = scmp.eq.s32.totalorder %s87, 0
    %s90 = sadd.s32 %s89, 1
    %s91 = scalar_select %p88, %s89, %s90
    %p94 = pneg %p88
    %p95 = scmp.eq.s32.totalorder %s9, 9
    %p96 = por %p94, %p95
    %p97 = scmp.ne.s32.totalorder %s89, %s92
    %p98 = scmp.eq.s32.totalorder %s9, 0
    %p99 = por %p97, %p98
    %p100 = scmp.ne.s32.totalorder %s89, %s92
    %p101 = scmp.eq.s32.totalorder %s14, 9
    %p102 = por %p100, %p101
    %p103 = scmp.ne.s32.totalorder %s92, %s93
    %p104 = scmp.eq.s32.totalorder %s14, 0
    %p105 = por %p103, %p104
    %p106 = scmp.ne.s32.totalorder %s92, %s93
    %p107 = scmp.eq.s32.totalorder %s15, 9
    %p108 = por %p106, %p107
    %p110 = scmp.ne.s32.totalorder %s93, %s109
    %p111 = scmp.eq.s32.totalorder %s15, 0
    %p112 = por %p110, %p111
    %s113 = ssub.s32 %s16, %s28
    %s114 = ssub.s32 %s17, %s24
    %s115 = sor.u32 %s113, %s114
    %p116 = scmp.eq.s32.totalorder %s115, 0
    %s118 = sadd.s32 %s117, 1
    %s119 = scalar_select %p116, %s117, %s118
    %p122 = pneg %p116
    %p123 = scmp.eq.s32.totalorder %s9, 9
    %p124 = por %p122, %p123
    %p125 = scmp.ne.s32.totalorder %s117, %s120
    %p126 = scmp.eq.s32.totalorder %s9, 0
    %p127 = por %p125, %p126
    %p128 = scmp.ne.s32.totalorder %s117, %s120
    %p129 = scmp.eq.s32.totalorder %s14, 9
    %p130 = por %p128, %p129
    %p131 = scmp.ne.s32.totalorder %s120, %s121
    %p132 = scmp.eq.s32.totalorder %s14, 0
    %p133 = por %p131, %p132
    %p134 = scmp.ne.s32.totalorder %s120, %s121
    %p135 = scmp.eq.s32.totalorder %s15, 9
    %p136 = por %p134, %p135
    %p138 = scmp.ne.s32.totalorder %s121, %s137
    %p139 = scmp.eq.s32.totalorder %s15, 0
    %p140 = por %p138, %p139
    %p141 = scmp.le.s32.totalorder 1, %s9
    %p142 = scmp.lt.s32.totalorder %s9, 11
    %p143 = pnand %p141, %p142
    %p144 = pneg %p143
    // Predicated region
    $region9: #{fwd_eval.44} parent=5 // pred_check
      _
    $region10: #{fwd_eval.44} parent=5 // pred_check_branch
      %146 = sbr.rel (%p143) target = $region12
    $region11: #{fwd_eval.44} parent=5 // pred_region
      %s147 = ssub.s32 %s9, 1
    $region12: #{fwd_eval.44} parent=5 // pred_fallthru
      _
    %p148 = scmp.lt.s32.totalorder %s9, 10
    // Predicated region
    $region13: #{fwd_eval.44} parent=5 // pred_check
      %p149 = pneg %p148
    $region14: #{fwd_eval.44} parent=5 // pred_check_branch
      %151 = sbr.rel (%p149) target = $region16
    $region15: #{fwd_eval.44} parent=5 // pred_region
      // Predicated region
      $region17: #{fwd_eval.44} parent=15 // pred_check
        %p152 = pneg %p43
      $region18: #{fwd_eval.44} parent=15 // pred_check_branch
        %154 = sbr.rel (%p152) target = $region20
      $region19: #{fwd_eval.44} parent=15 // pred_region
        %p155 = scmp.lt.s32.totalorder %s16, 1
        %s156 = scalar_select %p155, %s16, 1
        %p157 = scmp.lt.s32.totalorder %s17, 4
        %s158 = scalar_select %p157, %s17, 4
        %s159 = smul.addr %s158, 2
        %s160 = smul.addr %s156, 10
        %s161 = sadd.s32 %s159, %s160
        %s162 = smul.addr %s161, 8
        %s163 = scalar_lea.vmem %s0, %s162
      $region20: #{fwd_eval.44} parent=15 // pred_fallthru
        _
      // Predicated region
      $region21: #{fwd_eval.44} parent=15 // pred_check
        %p164 = pneg %p71
      $region22: #{fwd_eval.44} parent=15 // pred_check_branch
        %166 = sbr.rel (%p164) target = $region24
      $region23: #{fwd_eval.44} parent=15 // pred_region
        %p167 = scmp.lt.s32.totalorder %s16, 1
        %s168 = scalar_select %p167, %s16, 1
        %p169 = scmp.lt.s32.totalorder %s17, 4
        %s170 = scalar_select %p169, %s17, 4
        %s171 = smul.addr %s168, 5
        %s172 = sadd.s32 %s170, %s171
        %s173 = smul.addr %s172, 4
        %s174 = scalar_lea.vmem %s1, %s173
      $region24: #{fwd_eval.44} parent=15 // pred_fallthru
        _
      // Predicated region
      $region25: #{fwd_eval.44} parent=15 // pred_check
        %p175 = pneg %p99
      $region26: #{fwd_eval.44} parent=15 // pred_check_branch
        %177 = sbr.rel (%p175) target = $region28
      $region27: #{fwd_eval.44} parent=15 // pred_region
        %p178 = scmp.lt.s32.totalorder %s16, 1
        %s179 = scalar_select %p178, %s16, 1
        %p180 = scmp.lt.s32.totalorder %s17, 4
        %s181 = scalar_select %p180, %s17, 4
        %s182 = smul.addr %s179, 5
        %s183 = sadd.s32 %s181, %s182
        %s184 = smul.addr %s183, 4
        %s185 = scalar_lea.vmem %s2, %s184
      $region28: #{fwd_eval.44} parent=15 // pred_fallthru
        _
    $region16: #{fwd_eval.44} parent=5 // pred_fallthru
      _
    %p186 = scmp.le.s32.totalorder 1, %s9
    %p187 = scmp.lt.s32.totalorder %s9, 11
    %p188 = pnand %p186, %p187
    %p189 = pneg %p188
    // Predicated region
    $region29: #{fwd_eval.44} parent=5 // pred_check
      _
    $region30: #{fwd_eval.44} parent=5 // pred_check_branch
      %191 = sbr.rel (%p188) target = $region32
    $region31: #{fwd_eval.44} parent=5 // pred_region
      %s192 = ssub.s32 %s9, 1
      %p193 = scmp.lt.s32.totalorder %s18, 1
      %s194 = scalar_select %p193, %s18, 1
      %p195 = scmp.lt.s32.totalorder %s19, 4
      %s196 = scalar_select %p195, %s19, 4
      %s197 = smul.addr %s196, 2
      %s198 = smul.addr %s194, 10
      %s199 = sadd.s32 %s197, %s198
      %s200 = smul.addr %s199, 8
      %s201 = scalar_lea.vmem %s0, %s200
      %p202 = pneg %p49
      %p203 = pneg %p46
      %p204 = scmp.lt.s32.totalorder %s18, 1
      %s205 = scalar_select %p204, %s18, 1
      %p206 = scmp.lt.s32.totalorder %s19, 4
      %s207 = scalar_select %p206, %s19, 4
      %s208 = smul.addr %s205, 5
      %s209 = sadd.s32 %s207, %s208
      %s210 = smul.addr %s209, 4
      %s211 = scalar_lea.vmem %s1, %s210
      %p212 = pneg %p77
      %p213 = pneg %p74
      %p214 = scmp.lt.s32.totalorder %s18, 1
      %s215 = scalar_select %p214, %s18, 1
      %p216 = scmp.lt.s32.totalorder %s19, 4
      %s217 = scalar_select %p216, %s19, 4
      %s218 = smul.addr %s215, 5
      %s219 = sadd.s32 %s217, %s218
      %s220 = smul.addr %s219, 4
      %s221 = scalar_lea.vmem %s2, %s220
      %p222 = pneg %p105
      %p223 = pneg %p102
      %p224 = pneg %p133
      %p225 = pneg %p130
      %p226 = scmp.lt.s32.totalorder %s18, 1
      %s227 = scalar_select %p226, %s18, 1
      %p228 = scmp.lt.s32.totalorder %s19, 4
      %s229 = scalar_select %p228, %s19, 4
      %s230 = smul.addr %s229, 2
      %s231 = smul.addr %s227, 10
      %s232 = sadd.s32 %s230, %s231
      %s233 = smul.addr %s232, 8
      %s234 = scalar_lea.vmem %s3, %s233
      %p235 = scmp.lt.s32.totalorder %s18, 1
      %s236 = scalar_select %p235, %s18, 1
      %p237 = scmp.lt.s32.totalorder %s19, 4
      %s238 = scalar_select %p237, %s19, 4
      %s239 = smul.addr %s238, 2
      %s240 = smul.addr %s236, 10
      %s241 = sadd.s32 %s239, %s240
      %s242 = smul.addr %s241, 8
      %s243 = scalar_lea.vmem %s0, %s242
      %p244 = scmp.lt.s32.totalorder %s18, 1
      %s245 = scalar_select %p244, %s18, 1
      %p246 = scmp.lt.s32.totalorder %s19, 4
      %s247 = scalar_select %p246, %s19, 4
      %s248 = smul.addr %s245, 5
      %s249 = sadd.s32 %s247, %s248
      %s250 = smul.addr %s249, 4
      %s251 = scalar_lea.vmem %s1, %s250
      %p252 = scmp.lt.s32.totalorder %s18, 1
      %s253 = scalar_select %p252, %s18, 1
      %p254 = scmp.lt.s32.totalorder %s19, 4
      %s255 = scalar_select %p254, %s19, 4
      %s256 = smul.addr %s253, 5
      %s257 = sadd.s32 %s255, %s256
      %s258 = smul.addr %s257, 4
      %s259 = scalar_lea.vmem %s2, %s258
      %p260 = scmp.lt.s32.totalorder %s18, 1
      %s261 = scalar_select %p260, %s18, 1
      %p262 = scmp.lt.s32.totalorder %s19, 4
      %s263 = scalar_select %p262, %s19, 4
      %s264 = smul.addr %s263, 2
      %s265 = smul.addr %s261, 10
      %s266 = sadd.s32 %s264, %s265
      %s267 = smul.addr %s266, 8
      %s268 = scalar_lea.vmem %s3, %s267
      %v269 = vld [vmem:[%s243] sm:$0xff]
      %v270 = vld [vmem:[%s243 + $0x8] sm:$0xff]
      %v271 = vld [vmem:[%s251] sm:$0xf]
      %v272 = vld [vmem:[%s259] sm:$0xf]
      %vm273 = vcmask 261120
      %v275 = vsel %vm273, %v269, 0
      %v278 = vsel %vm273, %v270, 0
      %v281 = vsel %vm273, %v271, 0
      %283 = vmatprep.subr.mxu0 0.0
      %284 = vmatpush1.xpose.msra.mxu0 %v281
      %285 = vmatprep.subr.mxu0 0.0
      %286 = vmatpush1.xpose.msra.mxu0 0.0
      %287 = vmatprep.subr.mxu0 0.0
      %288 = vmatpush1.xpose.msra.mxu0 0.0
      %289 = vmatprep.subr.mxu0 0.0
      %290 = vmatpush1.xpose.msra.mxu0 0.0
      %291 = vmatprep.subr.mxu0 0.0
      %292 = vmatpush1.xpose.msra.mxu0 0.0
      %293 = vmatprep.subr.mxu0 0.0
      %294 = vmatpush1.xpose.msra.mxu0 0.0
      %295 = vmatprep.subr.mxu0 0.0
      %296 = vmatpush1.xpose.msra.mxu0 0.0
      %297 = vmatprep.subr.mxu0 0.0
      %298 = vmatpush1.xpose.msra.mxu0 0.0
      %299 = vmatprep.subr.mxu0 0.0
      %300 = vmatpush1.xpose.msra.mxu0 0.0
      %301 = vmatprep.subr.mxu0 0.0
      %302 = vmatpush1.xpose.msra.mxu0 0.0
      %303 = vmatprep.subr.mxu0 0.0
      %304 = vmatpush1.xpose.msra.mxu0 0.0
      %305 = vmatprep.subr.mxu0 0.0
      %306 = vmatpush1.xpose.msra.mxu0 0.0
      %307 = vmatprep.subr.mxu0 0.0
      %308 = vmatpush1.xpose.msra.mxu0 0.0
      %309 = vmatprep.subr.mxu0 0.0
      %310 = vmatpush1.xpose.msra.mxu0 0.0
      %311 = vmatprep.subr.mxu0 0.0
      %312 = vmatpush1.xpose.msra.mxu0 0.0
      %313 = vmatprep.subr.mxu0 0.0
      %314 = vmatpush1.xpose.msra.mxu0 0.0
      %315 = vmatprep.subr.mxu0 0.0
      %316 = vmatpush1.xpose.msra.mxu0 0.0
      %317 = vmatprep.subr.mxu0 0.0
      %318 = vmatpush1.xpose.msra.mxu0 0.0
      %319 = vmatprep.subr.mxu0 0.0
      %320 = vmatpush1.xpose.msra.mxu0 0.0
      %321 = vmatprep.subr.mxu0 0.0
      %322 = vmatpush1.xpose.msra.mxu0 0.0
      %323 = vmatprep.subr.mxu0 0.0
      %324 = vmatpush1.xpose.msra.mxu0 0.0
      %325 = vmatprep.subr.mxu0 0.0
      %326 = vmatpush1.xpose.msra.mxu0 0.0
      %327 = vmatprep.subr.mxu0 0.0
      %328 = vmatpush1.xpose.msra.mxu0 0.0
      %329 = vmatprep.subr.mxu0 0.0
      %330 = vmatpush1.xpose.msra.mxu0 0.0
      %331 = vmatprep.subr.mxu0 0.0
      %332 = vmatpush1.xpose.msra.mxu0 0.0
      %333 = vmatprep.subr.mxu0 0.0
      %334 = vmatpush1.xpose.msra.mxu0 0.0
      %335 = vmatprep.subr.mxu0 0.0
      %336 = vmatpush1.xpose.msra.mxu0 0.0
      %337 = vmatprep.subr.mxu0 0.0
      %338 = vmatpush1.xpose.msra.mxu0 0.0
      %339 = vmatprep.subr.mxu0 0.0
      %340 = vmatpush1.xpose.msra.mxu0 0.0
      %341 = vmatprep.subr.mxu0 0.0
      %342 = vmatpush1.xpose.msra.mxu0 0.0
      %343 = vmatprep.subr.mxu0 0.0
      %344 = vmatpush1.xpose.msra.mxu0 0.0
      %345 = vmatprep.subr.mxu0 0.0
      %346 = vmatpush1.xpose.msra.mxu0 0.0
      %347 = vmatprep.mubr.f32.mxu0 0.0
      %348 = vmatmul.mubr.f32.gmra.mrb[0].mxu0 %v275
      %v349 = vpop.f32.mrb[0].mxu0
      %v350 = vadd.f32 0.0, %v349
      %v351 = vpop.f32.mrb[0].mxu0
      %352 = vmatprep.mubr.f32.mxu0 0.0
      %353 = vmatmul.mubr.f32.gmra.mrb[0].mxu0 %v278
      %v354 = vpop.f32.mrb[0].mxu0
      %v355 = vadd.f32 0.0, %v354
      %v356 = vpop.f32.mrb[0].mxu0
      %357 = vdwg.mxu0
      %v358 = vmul.f32 %v350, 0.17677669
      %v359 = vmul.f32 %v355, 0.17677669
      %vm360 = vcmask 31744
      %v361 = vsel %vm360, %v358, -inf
      %362 = vmax.xlane.f32.xlu0 %v361
      %v363 = vpop.xlane.xlu0 %362
      %v364 = vsel %vm360, %v359, -inf
      %365 = vmax.xlane.f32.xlu0 %v364
      %v366 = vpop.xlane.xlu0 %365
      %v367 = vsub.f32 %v358, %v363
      %v368 = vsub.f32 %v359, %v366
      %v369 = vmul.f32 %v367, 1.442695
      %v370 = vpow.pop %v369
      %v371 = vmul.f32 %v368, 1.442695
      %v372 = vpow.pop %v371
      %v373 = vsel %vm360, %v370, 0.0
      %374 = vadd.xlane.f32.xlu0 %v373
      %v375 = vpop.xlane.xlu0 %374
      %v376 = vsel %vm360, %v372, 0.0
      %377 = vadd.xlane.f32.xlu0 %v376
      %v378 = vpop.xlane.xlu0 %377
      %v379 = vrcp.pop %v375
      %v380 = vmul.f32 %v370, %v379
      %v381 = vrcp.pop %v378
      %v382 = vmul.f32 %v372, %v381
      %v384 = vsel %vm360, %v380, 0
      %v387 = vsel %vm360, %v382, 0
      %vm389 = vcmask 1043456
      %v391 = vsel %vm389, %v272, 0
      %393 = vmatprep.subr.mxu0 0.0
      %394 = vmatpush1.msra.mxu0 %v391
      %395 = vmatprep.subr.mxu0 0.0
      %396 = vmatpush1.msra.mxu0 0.0
      %397 = vmatprep.subr.mxu0 0.0
      %398 = vmatpush1.msra.mxu0 0.0
      %399 = vmatprep.subr.mxu0 0.0
      %400 = vmatpush1.msra.mxu0 0.0
      %401 = vmatprep.subr.mxu0 0.0
      %402 = vmatpush1.msra.mxu0 0.0
      %403 = vmatprep.subr.mxu0 0.0
      %404 = vmatpush1.msra.mxu0 0.0
      %405 = vmatprep.subr.mxu0 0.0
      %406 = vmatpush1.msra.mxu0 0.0
      %407 = vmatprep.subr.mxu0 0.0
      %408 = vmatpush1.msra.mxu0 0.0
      %409 = vmatprep.subr.mxu0 0.0
      %410 = vmatpush1.msra.mxu0 0.0
      %411 = vmatprep.subr.mxu0 0.0
      %412 = vmatpush1.msra.mxu0 0.0
      %413 = vmatprep.subr.mxu0 0.0
      %414 = vmatpush1.msra.mxu0 0.0
      %415 = vmatprep.subr.mxu0 0.0
      %416 = vmatpush1.msra.mxu0 0.0
      %417 = vmatprep.subr.mxu0 0.0
      %418 = vmatpush1.msra.mxu0 0.0
      %419 = vmatprep.subr.mxu0 0.0
      %420 = vmatpush1.msra.mxu0 0.0
      %421 = vmatprep.subr.mxu0 0.0
      %422 = vmatpush1.msra.mxu0 0.0
      %423 = vmatprep.subr.mxu0 0.0
      %424 = vmatpush1.msra.mxu0 0.0
      %425 = vmatprep.subr.mxu0 0.0
      %426 = vmatpush1.msra.mxu0 0.0
      %427 = vmatprep.subr.mxu0 0.0
      %428 = vmatpush1.msra.mxu0 0.0
      %429 = vmatprep.subr.mxu0 0.0
      %430 = vmatpush1.msra.mxu0 0.0
      %431 = vmatprep.subr.mxu0 0.0
      %432 = vmatpush1.msra.mxu0 0.0
      %433 = vmatprep.subr.mxu0 0.0
      %434 = vmatpush1.msra.mxu0 0.0
      %435 = vmatprep.subr.mxu0 0.0
      %436 = vmatpush1.msra.mxu0 0.0
      %437 = vmatprep.subr.mxu0 0.0
      %438 = vmatpush1.msra.mxu0 0.0
      %439 = vmatprep.subr.mxu0 0.0
      %440 = vmatpush1.msra.mxu0 0.0
      %441 = vmatprep.subr.mxu0 0.0
      %442 = vmatpush1.msra.mxu0 0.0
      %443 = vmatprep.subr.mxu0 0.0
      %444 = vmatpush1.msra.mxu0 0.0
      %445 = vmatprep.subr.mxu0 0.0
      %446 = vmatpush1.msra.mxu0 0.0
      %447 = vmatprep.subr.mxu0 0.0
      %448 = vmatpush1.msra.mxu0 0.0
      %449 = vmatprep.subr.mxu0 0.0
      %450 = vmatpush1.msra.mxu0 0.0
      %451 = vmatprep.subr.mxu0 0.0
      %452 = vmatpush1.msra.mxu0 0.0
      %453 = vmatprep.subr.mxu0 0.0
      %454 = vmatpush1.msra.mxu0 0.0
      %455 = vmatprep.subr.mxu0 0.0
      %456 = vmatpush1.msra.mxu0 0.0
      %457 = vmatprep.mubr.f32.mxu0 0.0
      %458 = vmatmul.mubr.f32.gmra.mrb[0].mxu0 %v384
      %v459 = vpop.f32.mrb[0].mxu0
      %v460 = vadd.f32 0.0, %v459
      %v461 = vpop.f32.mrb[0].mxu0
      %462 = vmatprep.mubr.f32.mxu0 0.0
      %463 = vmatmul.mubr.f32.gmra.mrb[0].mxu0 %v387
      %v464 = vpop.f32.mrb[0].mxu0
      %v465 = vadd.f32 0.0, %v464
      %v466 = vpop.f32.mrb[0].mxu0
      %467 = vdwg.mxu0
      %468 = vst.msk [vmem:[%s268] sm:$0xff] %vm273, %v460
      %469 = vst.msk [vmem:[%s268 + $0x8] sm:$0xff] %vm273, %v465
      %p470 = scmp.lt.s32.totalorder %s18, 1
      %s471 = scalar_select %p470, %s18, 1
      %p472 = scmp.lt.s32.totalorder %s19, 4
      %s473 = scalar_select %p472, %s19, 4
      %s474 = smul.addr %s473, 2
      %s475 = smul.addr %s471, 10
      %s476 = sadd.s32 %s474, %s475
      %s477 = smul.addr %s476, 8
      %s478 = scalar_lea.vmem %s3, %s477
      // Predicated region
      $region33: #{fwd_eval.44} parent=31 // pred_check
        %p479 = pneg %p130
      $region34: #{fwd_eval.44} parent=31 // pred_check_branch
        %481 = sbr.rel (%p479) target = $region36
      $region35: #{fwd_eval.44} parent=31 // pred_region
        _
      $region36: #{fwd_eval.44} parent=31 // pred_fallthru
        _
    $region32: #{fwd_eval.44} parent=5 // pred_fallthru
      _
    %p482 = scmp.le.s32.totalorder 2, %s9
    // Predicated region
    $region37: #{fwd_eval.44} parent=5 // pred_check
      %p483 = pneg %p482
    $region38: #{fwd_eval.44} parent=5 // pred_check_branch
      %485 = sbr.rel (%p483) target = $region40
    $region39: #{fwd_eval.44} parent=5 // pred_region
      %s486 = ssub.s32 %s9, 2
      // Predicated region
      $region41: #{fwd_eval.44} parent=39 // pred_check
        %p487 = pneg %p136
      $region42: #{fwd_eval.44} parent=39 // pred_check_branch
        %489 = sbr.rel (%p487) target = $region44
      $region43: #{fwd_eval.44} parent=39 // pred_region
        %p490 = scmp.lt.s32.totalorder %s20, 1
        %s491 = scalar_select %p490, %s20, 1
        %p492 = scmp.lt.s32.totalorder %s21, 4
        %s493 = scalar_select %p492, %s21, 4
        %s494 = smul.addr %s493, 2
        %s495 = smul.addr %s491, 10
        %s496 = sadd.s32 %s494, %s495
        %s497 = smul.addr %s496, 8
        %s498 = scalar_lea.vmem %s3, %s497
      $region44: #{fwd_eval.44} parent=39 // pred_fallthru
        _
    $region40: #{fwd_eval.44} parent=5 // pred_fallthru
      _
  $region6: #{fwd_eval.44} parent=0 // loop_footer
    %s13 = sadd.s32 1, %s9
  $region7: #{fwd_eval.44} parent=0 // loop_footer_branch
    %8 = sbr.rel target = $region3
  $region8: #{fwd_eval.44} parent=0 // loop_exit
    _

// kernel: fwd_eval.46
$region0: #{fwd_eval.46}
  #allocation0 [shape = 'u32[]', space=smem, size = 0x4, offset = 0x4, fixed_abs, tag = 'smem constant byte address 0x4 - core index']
  #allocation1 [shape = 'u32[144,128]{1,0:T(1,128)}', space=vmem, size = 0x12000, scoped, tag = 'internal scratch']
  %s0 = inlined_call_operand.vmem [shape: f32[32,640], index: 0, kind: input, shape index: {}]
  %s1 = inlined_call_operand.vmem [shape: f32[32,640], index: 1, kind: output, shape index: {}]
  %s2 = sld [smem:[#allocation0]]
  $region14: #{fwd_eval.46} parent=0
    _
  %s4 = ssub.s32 1, %s2
  %s5 = scalar_select 0, %s4, %s2
  // Predicated region
  $region2: #{fwd_eval.46} parent=0 // pred_check
    _
  $region3: #{fwd_eval.46} parent=0 // pred_check_branch
    %7 = sbr.rel (0) target = $region5
  $region4: #{fwd_eval.46} parent=0 // pred_region
    _
  $region5: #{fwd_eval.46} parent=0 // pred_fallthru
    _
  %v8 = vld [vmem:[%s0] sm:$0xff]
  %v9 = vld [vmem:[%s0 + $0x8] sm:$0xff]
  %v10 = vld [vmem:[%s0 + $0x10] sm:$0xff]
  %v11 = vld [vmem:[%s0 + $0x18] sm:$0xff]
  %v12 = vld [vmem:[%s0 + $0x20] sm:$0xff]
  %v13 = vld [vmem:[%s0 + $0x28] sm:$0xff]
  %v14 = vld [vmem:[%s0 + $0x30] sm:$0xff]
  %v15 = vld [vmem:[%s0 + $0x38] sm:$0xff]
  %v16 = vld [vmem:[%s0 + $0x40] sm:$0xff]
  %v17 = vld [vmem:[%s0 + $0x48] sm:$0xff]
  %v18 = vld [vmem:[%s0 + $0x50] sm:$0xff]
  %v19 = vld [vmem:[%s0 + $0x58] sm:$0xff]
  %v20 = vld [vmem:[%s0 + $0x60] sm:$0xff]
  %v21 = vld [vmem:[%s0 + $0x68] sm:$0xff]
  %v22 = vld [vmem:[%s0 + $0x70] sm:$0xff]
  %v23 = vld [vmem:[%s0 + $0x78] sm:$0xff]
  %v24 = vld [vmem:[%s0 + $0x80] sm:$0xff]
  %v25 = vld [vmem:[%s0 + $0x88] sm:$0xff]
  %v26 = vld [vmem:[%s0 + $0x90] sm:$0xff]
  %v27 = vld [vmem:[%s0 + $0x98] sm:$0xff]
  %v28 = vmul.f32 %v8, 0.5
  %v29 = vmul.f32 %v9, 0.5
  %v30 = vmul.f32 %v10, 0.5
  %v31 = vmul.f32 %v11, 0.5
  %v32 = vmul.f32 %v12, 0.5
  %v33 = vmul.f32 %v13, 0.5
  %v34 = vmul.f32 %v14, 0.5
  %v35 = vmul.f32 %v15, 0.5
  %v36 = vmul.f32 %v16, 0.5
  %v37 = vmul.f32 %v17, 0.5
  %v38 = vmul.f32 %v18, 0.5
  %v39 = vmul.f32 %v19, 0.5
  %v40 = vmul.f32 %v20, 0.5
  %v41 = vmul.f32 %v21, 0.5
  %v42 = vmul.f32 %v22, 0.5
  %v43 = vmul.f32 %v23, 0.5
  %v44 = vmul.f32 %v24, 0.5
  %v45 = vmul.f32 %v25, 0.5
  %v46 = vmul.f32 %v26, 0.5
  %v47 = vmul.f32 %v27, 0.5
  %v48 = vmul.f32 %v8, 0.044715
  %v49 = vmul.f32 %v9, 0.044715
  %v50 = vmul.f32 %v10, 0.044715
  %v51 = vmul.f32 %v11, 0.044715
  %v52 = vmul.f32 %v12, 0.044715
  %v53 = vmul.f32 %v13, 0.044715
  %v54 = vmul.f32 %v14, 0.044715
  %v55 = vmul.f32 %v15, 0.044715
  %v56 = vmul.f32 %v16, 0.044715
  %v57 = vmul.f32 %v17, 0.044715
  %v58 = vmul.f32 %v18, 0.044715
  %v59 = vmul.f32 %v19, 0.044715
  %v60 = vmul.f32 %v20, 0.044715
  %v61 = vmul.f32 %v21, 0.044715
  %v62 = vmul.f32 %v22, 0.044715
  %v63 = vmul.f32 %v23, 0.044715
  %v64 = vmul.f32 %v24, 0.044715
  %v65 = vmul.f32 %v25, 0.044715
  %v66 = vmul.f32 %v26, 0.044715
  %v67 = vmul.f32 %v27, 0.044715
  %v68 = vmul.f32 %v48, %v8
  %v69 = vmul.f32 %v49, %v9
  %v70 = vmul.f32 %v50, %v10
  %v71 = vmul.f32 %v51, %v11
  %v72 = vmul.f32 %v52, %v12
  %v73 = vmul.f32 %v53, %v13
  %v74 = vmul.f32 %v54, %v14
  %v75 = vmul.f32 %v55, %v15
  %v76 = vmul.f32 %v56, %v16
  %v77 = vmul.f32 %v57, %v17
  %v78 = vmul.f32 %v58, %v18
  %v79 = vmul.f32 %v59, %v19
  %v80 = vmul.f32 %v60, %v20
  %v81 = vmul.f32 %v61, %v21
  %v82 = vmul.f32 %v62, %v22
  %v83 = vmul.f32 %v63, %v23
  %v84 = vmul.f32 %v64, %v24
  %v85 = vmul.f32 %v65, %v25
  %v86 = vmul.f32 %v66, %v26
  %v87 = vmul.f32 %v67, %v27
  %v88 = vmul.f32 %v68, %v8
  %v89 = vmul.f32 %v69, %v9
  %v90 = vmul.f32 %v70, %v10
  %v91 = vmul.f32 %v71, %v11
  %v92 = vmul.f32 %v72, %v12
  %v93 = vmul.f32 %v73, %v13
  %v94 = vmul.f32 %v74, %v14
  %v95 = vmul.f32 %v75, %v15
  %v96 = vmul.f32 %v76, %v16
  %v97 = vmul.f32 %v77, %v17
  %v98 = vmul.f32 %v78, %v18
  %v99 = vmul.f32 %v79, %v19
  %v100 = vmul.f32 %v80, %v20
  %v101 = vmul.f32 %v81, %v21
  %v102 = vmul.f32 %v82, %v22
  %v103 = vmul.f32 %v83, %v23
  %v104 = vmul.f32 %v84, %v24
  %v105 = vmul.f32 %v85, %v25
  %v106 = vmul.f32 %v86, %v26
  %v107 = vmul.f32 %v87, %v27
  %v108 = vadd.f32 %v8, %v88
  %v109 = vadd.f32 %v9, %v89
  %v110 = vadd.f32 %v10, %v90
  %v111 = vadd.f32 %v11, %v91
  %v112 = vadd.f32 %v12, %v92
  %v113 = vadd.f32 %v13, %v93
  %v114 = vadd.f32 %v14, %v94
  %v115 = vadd.f32 %v15, %v95
  %v116 = vadd.f32 %v16, %v96
  %v117 = vadd.f32 %v17, %v97
  %v118 = vadd.f32 %v18, %v98
  %v119 = vadd.f32 %v19, %v99
  %v120 = vadd.f32 %v20, %v100
  %v121 = vadd.f32 %v21, %v101
  %v122 = vadd.f32 %v22, %v102
  %v123 = vadd.f32 %v23, %v103
  %v124 = vadd.f32 %v24, %v104
  %v125 = vadd.f32 %v25, %v105
  %v126 = vadd.f32 %v26, %v106
  %v127 = vadd.f32 %v27, %v107
  %v128 = vmul.f32 %v108, 0.7978846
  %v129 = vmul.f32 %v109, 0.7978846
  %v130 = vmul.f32 %v110, 0.7978846
  %v131 = vmul.f32 %v111, 0.7978846
  %v132 = vmul.f32 %v112, 0.7978846
  %v133 = vmul.f32 %v113, 0.7978846
  %v134 = vmul.f32 %v114, 0.7978846
  %v135 = vmul.f32 %v115, 0.7978846
  %v136 = vmul.f32 %v116, 0.7978846
  %v137 = vmul.f32 %v117, 0.7978846
  %v138 = vmul.f32 %v118, 0.7978846
  %v139 = vmul.f32 %v119, 0.7978846
  %v140 = vmul.f32 %v120, 0.7978846
  %v141 = vmul.f32 %v121, 0.7978846
  %v142 = vmul.f32 %v122, 0.7978846
  %v143 = vmul.f32 %v123, 0.7978846
  %v144 = vmul.f32 %v124, 0.7978846
  %v145 = vmul.f32 %v125, 0.7978846
  %v146 = vmul.f32 %v126, 0.7978846
  %v147 = vmul.f32 %v127, 0.7978846
  %v148 = vtanh.pop %v128
  %v149 = vtanh.pop %v129
  %v150 = vtanh.pop %v130
  %v151 = vtanh.pop %v131
  %v152 = vtanh.pop %v132
  %v153 = vtanh.pop %v133
  %v154 = vtanh.pop %v134
  %v155 = vtanh.pop %v135
  %v156 = vtanh.pop %v136
  %v157 = vtanh.pop %v137
  %v158 = vtanh.pop %v138
  %v159 = vtanh.pop %v139
  %v160 = vtanh.pop %v140
  %v161 = vtanh.pop %v141
  %v162 = vtanh.pop %v142
  %v163 = vtanh.pop %v143
  %v164 = vtanh.pop %v144
  %v165 = vtanh.pop %v145
  %v166 = vtanh.pop %v146
  %v167 = vtanh.pop %v147
  %v168 = vadd.f32 %v148, 1.0
  %v169 = vadd.f32 %v149, 1.0
  %v170 = vadd.f32 %v150, 1.0
  %v171 = vadd.f32 %v151, 1.0
  %v172 = vadd.f32 %v152, 1.0
  %v173 = vadd.f32 %v153, 1.0
  %v174 = vadd.f32 %v154, 1.0
  %v175 = vadd.f32 %v155, 1.0
  %v176 = vadd.f32 %v156, 1.0
  %v177 = vadd.f32 %v157, 1.0
  %v178 = vadd.f32 %v158, 1.0
  %v179 = vadd.f32 %v159, 1.0
  %v180 = vadd.f32 %v160, 1.0
  %v181 = vadd.f32 %v161, 1.0
  %v182 = vadd.f32 %v162, 1.0
  %v183 = vadd.f32 %v163, 1.0
  %v184 = vadd.f32 %v164, 1.0
  %v185 = vadd.f32 %v165, 1.0
  %v186 = vadd.f32 %v166, 1.0
  %v187 = vadd.f32 %v167, 1.0
  %v188 = vmul.f32 %v28, %v168
  %v189 = vmul.f32 %v29, %v169
  %v190 = vmul.f32 %v30, %v170
  %v191 = vmul.f32 %v31, %v171
  %v192 = vmul.f32 %v32, %v172
  %v193 = vmul.f32 %v33, %v173
  %v194 = vmul.f32 %v34, %v174
  %v195 = vmul.f32 %v35, %v175
  %v196 = vmul.f32 %v36, %v176
  %v197 = vmul.f32 %v37, %v177
  %v198 = vmul.f32 %v38, %v178
  %v199 = vmul.f32 %v39, %v179
  %v200 = vmul.f32 %v40, %v180
  %v201 = vmul.f32 %v41, %v181
  %v202 = vmul.f32 %v42, %v182
  %v203 = vmul.f32 %v43, %v183
  %v204 = vmul.f32 %v44, %v184
  %v205 = vmul.f32 %v45, %v185
  %v206 = vmul.f32 %v46, %v186
  %v207 = vmul.f32 %v47, %v187
  %208 = vst [vmem:[%s1] sm:$0xff] %v188
  %209 = vst [vmem:[%s1 + $0x8] sm:$0xff] %v189
  %210 = vst [vmem:[%s1 + $0x10] sm:$0xff] %v190
  %211 = vst [vmem:[%s1 + $0x18] sm:$0xff] %v191
  %212 = vst [vmem:[%s1 + $0x20] sm:$0xff] %v192
  %213 = vst [vmem:[%s1 + $0x28] sm:$0xff] %v193
  %214 = vst [vmem:[%s1 + $0x30] sm:$0xff] %v194
  %215 = vst [vmem:[%s1 + $0x38] sm:$0xff] %v195
  %216 = vst [vmem:[%s1 + $0x40] sm:$0xff] %v196
  %217 = vst [vmem:[%s1 + $0x48] sm:$0xff] %v197
  %218 = vst [vmem:[%s1 + $0x50] sm:$0xff] %v198
  %219 = vst [vmem:[%s1 + $0x58] sm:$0xff] %v199
  %220 = vst [vmem:[%s1 + $0x60] sm:$0xff] %v200
  %221 = vst [vmem:[%s1 + $0x68] sm:$0xff] %v201
  %222 = vst [vmem:[%s1 + $0x70] sm:$0xff] %v202
  %223 = vst [vmem:[%s1 + $0x78] sm:$0xff] %v203
  %224 = vst [vmem:[%s1 + $0x80] sm:$0xff] %v204
  %225 = vst [vmem:[%s1 + $0x88] sm:$0xff] %v205
  %226 = vst [vmem:[%s1 + $0x90] sm:$0xff] %v206
  %227 = vst [vmem:[%s1 + $0x98] sm:$0xff] %v207
  // Predicated region
  $region6: #{fwd_eval.46} parent=0 // pred_check
    _
  $region7: #{fwd_eval.46} parent=0 // pred_check_branch
    %229 = sbr.rel (0) target = $region9
  $region8: #{fwd_eval.46} parent=0 // pred_region
    _
  $region9: #{fwd_eval.46} parent=0 // pred_fallthru
    _
  // Predicated region
  $region10: #{fwd_eval.46} parent=0 // pred_check
    _
  $region11: #{fwd_eval.46} parent=0 // pred_check_branch
    %231 = sbr.rel (0) target = $region13
  $region12: #{fwd_eval.46} parent=0 // pred_region
    _
  $region13: #{fwd_eval.46} parent=0 // pred_fallthru
    _

// kernel: fwd_eval.48
$region0: #{fwd_eval.48}
  #allocation0 [shape = 'u32[]', space=smem, size = 0x4, offset = 0x4, fixed_abs, tag = 'smem constant byte address 0x4 - core index']
  #allocation1 [shape = 'u32[144,128]{1,0:T(1,128)}', space=vmem, size = 0x12000, scoped, tag = 'internal scratch']
  %s0 = inlined_call_operand.vmem [shape: f32[8,256], index: 0, kind: input, shape index: {}]
  %s1 = inlined_call_operand.vmem [shape: f32[1,256], index: 1, kind: input, shape index: {}]
  %s2 = inlined_call_operand.vmem [shape: f32[1,256], index: 2, kind: input, shape index: {}]
  %s3 = inlined_call_operand.vmem [shape: f32[8,256], index: 3, kind: output, shape index: {}]
  %s4 = sld [smem:[#allocation0]]
  $region22: #{fwd_eval.48} parent=0
    _
  %s6 = ssub.s32 1, %s4
  %s7 = scalar_select 0, %s6, %s4
  // Predicated region
  $region2: #{fwd_eval.48} parent=0 // pred_check
    _
  $region3: #{fwd_eval.48} parent=0 // pred_check_branch
    %9 = sbr.rel (0) target = $region5
  $region4: #{fwd_eval.48} parent=0 // pred_region
    _
  $region5: #{fwd_eval.48} parent=0 // pred_fallthru
    _
  // Predicated region
  $region6: #{fwd_eval.48} parent=0 // pred_check
    _
  $region7: #{fwd_eval.48} parent=0 // pred_check_branch
    %11 = sbr.rel (0) target = $region9
  $region8: #{fwd_eval.48} parent=0 // pred_region
    _
  $region9: #{fwd_eval.48} parent=0 // pred_fallthru
    _
  // Predicated region
  $region10: #{fwd_eval.48} parent=0 // pred_check
    _
  $region11: #{fwd_eval.48} parent=0 // pred_check_branch
    %13 = sbr.rel (0) target = $region13
  $region12: #{fwd_eval.48} parent=0 // pred_region
    _
  $region13: #{fwd_eval.48} parent=0 // pred_fallthru
    _
  %v14 = vld [vmem:[%s0] sm:$0xff]
  %v15 = vld [vmem:[%s0 + $0x8] sm:$0xff]
  %v16 = vadd.f32 %v14, %v15
  %17 = vadd.xlane.f32.xlu0 %v16
  %v18 = vpop.xlane.xlu0 %17
  %v19 = vrcp.pop 256.0
  %v20 = vmul.f32 %v18, %v19
  %v21 = vsub.f32 %v14, %v20
  %v22 = vsub.f32 %v15, %v20
  %v23 = vmul.f32 %v21, %v21
  %v24 = vmul.f32 %v22, %v22
  %v25 = vadd.f32 %v23, %v24
  %26 = vadd.xlane.f32.xlu0 %v25
  %v27 = vpop.xlane.xlu0 %26
  %v28 = vmul.f32 %v27, %v19
  %v29 = vadd.f32 %v28, 1e-05
  %v30 = vrsqrt.pop %v29
  %v31 = vmul.f32 %v21, %v30
  %v32 = vmul.f32 %v22, %v30
  %v33 = vld [vmem:[%s1] sm:$0x3]
  %v35 = vlaneseq
  %v36 = vshrl.u32 %v35, 7
  %v37 = vsub.s32 0, %v36
  %v38 = vrot.slane %v33, %v37
  %v39 = vlaneseq
  %v40 = vshrl.u32 %v39, 7
  %v41 = vsub.s32 1, %v40
  %v42 = vrot.slane %v33, %v41
  %v45 = vmul.f32 %v31, %v38
  %v46 = vmul.f32 %v32, %v42
  %v47 = vld [vmem:[%s2] sm:$0x3]
  %v49 = vlaneseq
  %v50 = vshrl.u32 %v49, 7
  %v51 = vsub.s32 0, %v50
  %v52 = vrot.slane %v47, %v51
  %v53 = vlaneseq
  %v54 = vshrl.u32 %v53, 7
  %v55 = vsub.s32 1, %v54
  %v56 = vrot.slane %v47, %v55
  %v59 = vadd.f32 %v45, %v52
  %v60 = vadd.f32 %v46, %v56
  %61 = vst [vmem:[%s3] sm:$0xff] %v59
  %62 = vst [vmem:[%s3 + $0x8] sm:$0xff] %v60
  // Predicated region
  $region14: #{fwd_eval.48} parent=0 // pred_check
    _
  $region15: #{fwd_eval.48} parent=0 // pred_check_branch
    %64 = sbr.rel (0) target = $region17
  $region16: #{fwd_eval.48} parent=0 // pred_region
    _
  $region17: #{fwd_eval.48} parent=0 // pred_fallthru
    _
  // Predicated region
  $region18: #{fwd_eval.48} parent=0 // pred_check
    _
  $region19: #{fwd_eval.48} parent=0 // pred_check_branch
    %66 = sbr.rel (0) target = $region21
  $region20: #{fwd_eval.48} parent=0 // pred_region
    _
  $region21: #{fwd_eval.48} parent=0 // pred_fallthru
    _

// kernel: fwd_eval.50
$region0: #{fwd_eval.50}
  #allocation0 [shape = 'u32[]', space=smem, size = 0x4, offset = 0x4, fixed_abs, tag = 'smem constant byte address 0x4 - core index']
  #allocation1 [shape = 'u32[144,128]{1,0:T(1,128)}', space=vmem, size = 0x12000, scoped, tag = 'internal scratch']
  %s0 = inlined_call_operand.vmem [shape: f32[2,8,4,32], index: 0, kind: input, shape index: {}]
  %s1 = inlined_call_operand.vmem [shape: f32[2,8,4,32], index: 1, kind: input, shape index: {}]
  %s2 = inlined_call_operand.vmem [shape: f32[2,8,4,32], index: 2, kind: input, shape index: {}]
  %s3 = inlined_call_operand.vmem [shape: f32[2,8,4,32], index: 3, kind: output, shape index: {}]
  %s4 = sld [smem:[#allocation0]]
  $region45: #{fwd_eval.50} parent=0
    _
  %s6 = ssub.s32 1, %s4
  %s7 = scalar_select 0, %s6, %s4
  loop: start=0, step=1, limit=18
  $region2: #{fwd_eval.50} parent=0 // loop_pre_header
    _
  $region3: #{fwd_eval.50} parent=0 // loop_header
    %s9 = sphi 0, %s13
    %p10 = scmp.ge.s32.totalorder %s9, 18
    %s16 = sphi 0, %s28
    %s17 = sphi 0, %s24
    %s18 = sphi 0, %s16
    %s19 = sphi 0, %s17
    %s20 = sphi 0, %s18
    %s21 = sphi 0, %s19
    %s33 = sphi 0, %s35
    %s36 = sphi 0, %s33
    %s37 = sphi 0, %s36
    %s53 = sphi 0, %s37
    %s61 = sphi 0, %s63
    %s64 = sphi 0, %s61
    %s65 = sphi 0, %s64
    %s81 = sphi 0, %s65
    %s89 = sphi 0, %s91
    %s92 = sphi 0, %s89
    %s93 = sphi 0, %s92
    %s109 = sphi 0, %s93
    %s117 = sphi 0, %s119
    %s120 = sphi 0, %s117
    %s121 = sphi 0, %s120
    %s137 = sphi 0, %s121
  $region4: #{fwd_eval.50} parent=0 // loop_header_branch
    %12 = sbr.rel (%p10) target = $region8
  $region5: #{fwd_eval.50} parent=0 // loop_body
    %s14 = ssub.s32 %s9, 1
    %s15 = ssub.s32 %s9, 2
    %s22 = sadd.s32 1, %s17
    %p23 = scmp.ge.s32.totalorder %s22, 8
    %s24 = scalar_select %p23, 0, %s22
    %s25 = sadd.s32 1, %s16
    %s26 = scalar_select %p23, %s25, %s16
    %p27 = scmp.ge.s32.totalorder %s26, 2
    %s28 = scalar_select %p27, 0, %s26
    %s29 = ssub.s32 %s16, %s28
    %s30 = ssub.s32 %s17, %s24
    %s31 = sor.u32 %s29, %s30
    %p32 = scmp.eq.s32.totalorder %s31, 0
    %s34 = sadd.s32 %s33, 1
    %s35 = scalar_select %p32, %s33, %s34
    %p38 = pneg %p32
    %p39 = scmp.eq.s32.totalorder %s9, 15
    %p40 = por %p38, %p39
    %p41 = scmp.ne.s32.totalorder %s33, %s36
    %p42 = scmp.eq.s32.totalorder %s9, 0
    %p43 = por %p41, %p42
    %p44 = scmp.ne.s32.totalorder %s33, %s36
    %p45 = scmp.eq.s32.totalorder %s14, 15
    %p46 = por %p44, %p45
    %p47 = scmp.ne.s32.totalorder %s36, %s37
    %p48 = scmp.eq.s32.totalorder %s14, 0
    %p49 = por %p47, %p48
    %p50 = scmp.ne.s32.totalorder %s36, %s37
    %p51 = scmp.eq.s32.totalorder %s15, 15
    %p52 = por %p50, %p51
    %p54 = scmp.ne.s32.totalorder %s37, %s53
    %p55 = scmp.eq.s32.totalorder %s15, 0
    %p56 = por %p54, %p55
    %s57 = ssub.s32 %s16, %s28
    %s58 = ssub.s32 %s17, %s24
    %s59 = sor.u32 %s57, %s58
    %p60 = scmp.eq.s32.totalorder %s59, 0
    %s62 = sadd.s32 %s61, 1
    %s63 = scalar_select %p60, %s61, %s62
    %p66 = pneg %p60
    %p67 = scmp.eq.s32.totalorder %s9, 15
    %p68 = por %p66, %p67
    %p69 = scmp.ne.s32.totalorder %s61, %s64
    %p70 = scmp.eq.s32.totalorder %s9, 0
    %p71 = por %p69, %p70
    %p72 = scmp.ne.s32.totalorder %s61, %s64
    %p73 = scmp.eq.s32.totalorder %s14, 15
    %p74 = por %p72, %p73
    %p75 = scmp.ne.s32.totalorder %s64, %s65
    %p76 = scmp.eq.s32.totalorder %s14, 0
    %p77 = por %p75, %p76
    %p78 = scmp.ne.s32.totalorder %s64, %s65
    %p79 = scmp.eq.s32.totalorder %s15, 15
    %p80 = por %p78, %p79
    %p82 = scmp.ne.s32.totalorder %s65, %s81
    %p83 = scmp.eq.s32.totalorder %s15, 0
    %p84 = por %p82, %p83
    %s85 = ssub.s32 %s16, %s28
    %s86 = ssub.s32 %s17, %s24
    %s87 = sor.u32 %s85, %s86
    %p88 = scmp.eq.s32.totalorder %s87, 0
    %s90 = sadd.s32 %s89, 1
    %s91 = scalar_select %p88, %s89, %s90
    %p94 = pneg %p88
    %p95 = scmp.eq.s32.totalorder %s9, 15
    %p96 = por %p94, %p95
    %p97 = scmp.ne.s32.totalorder %s89, %s92
    %p98 = scmp.eq.s32.totalorder %s9, 0
    %p99 = por %p97, %p98
    %p100 = scmp.ne.s32.totalorder %s89, %s92
    %p101 = scmp.eq.s32.totalorder %s14, 15
    %p102 = por %p100, %p101
    %p103 = scmp.ne.s32.totalorder %s92, %s93
    %p104 = scmp.eq.s32.totalorder %s14, 0
    %p105 = por %p103, %p104
    %p106 = scmp.ne.s32.totalorder %s92, %s93
    %p107 = scmp.eq.s32.totalorder %s15, 15
    %p108 = por %p106, %p107
    %p110 = scmp.ne.s32.totalorder %s93, %s109
    %p111 = scmp.eq.s32.totalorder %s15, 0
    %p112 = por %p110, %p111
    %s113 = ssub.s32 %s16, %s28
    %s114 = ssub.s32 %s17, %s24
    %s115 = sor.u32 %s113, %s114
    %p116 = scmp.eq.s32.totalorder %s115, 0
    %s118 = sadd.s32 %s117, 1
    %s119 = scalar_select %p116, %s117, %s118
    %p122 = pneg %p116
    %p123 = scmp.eq.s32.totalorder %s9, 15
    %p124 = por %p122, %p123
    %p125 = scmp.ne.s32.totalorder %s117, %s120
    %p126 = scmp.eq.s32.totalorder %s9, 0
    %p127 = por %p125, %p126
    %p128 = scmp.ne.s32.totalorder %s117, %s120
    %p129 = scmp.eq.s32.totalorder %s14, 15
    %p130 = por %p128, %p129
    %p131 = scmp.ne.s32.totalorder %s120, %s121
    %p132 = scmp.eq.s32.totalorder %s14, 0
    %p133 = por %p131, %p132
    %p134 = scmp.ne.s32.totalorder %s120, %s121
    %p135 = scmp.eq.s32.totalorder %s15, 15
    %p136 = por %p134, %p135
    %p138 = scmp.ne.s32.totalorder %s121, %s137
    %p139 = scmp.eq.s32.totalorder %s15, 0
    %p140 = por %p138, %p139
    %p141 = scmp.le.s32.totalorder 1, %s9
    %p142 = scmp.lt.s32.totalorder %s9, 17
    %p143 = pnand %p141, %p142
    %p144 = pneg %p143
    // Predicated region
    $region9: #{fwd_eval.50} parent=5 // pred_check
      _
    $region10: #{fwd_eval.50} parent=5 // pred_check_branch
      %146 = sbr.rel (%p143) target = $region12
    $region11: #{fwd_eval.50} parent=5 // pred_region
      %s147 = ssub.s32 %s9, 1
    $region12: #{fwd_eval.50} parent=5 // pred_fallthru
      _
    %p148 = scmp.lt.s32.totalorder %s9, 16
    // Predicated region
    $region13: #{fwd_eval.50} parent=5 // pred_check
      %p149 = pneg %p148
    $region14: #{fwd_eval.50} parent=5 // pred_check_branch
      %151 = sbr.rel (%p149) target = $region16
    $region15: #{fwd_eval.50} parent=5 // pred_region
      // Predicated region
      $region17: #{fwd_eval.50} parent=15 // pred_check
        %p152 = pneg %p43
      $region18: #{fwd_eval.50} parent=15 // pred_check_branch
        %154 = sbr.rel (%p152) target = $region20
      $region19: #{fwd_eval.50} parent=15 // pred_region
        %p155 = scmp.lt.s32.totalorder %s16, 1
        %s156 = scalar_select %p155, %s16, 1
        %p157 = scmp.lt.s32.totalorder %s17, 7
        %s158 = scalar_select %p157, %s17, 7
        %s159 = smul.addr %s156, 8
        %s160 = sadd.s32 %s158, %s159
        %s161 = smul.addr %s160, 4
        %s162 = scalar_lea.vmem %s0, %s161
      $region20: #{fwd_eval.50} parent=15 // pred_fallthru
        _
      // Predicated region
      $region21: #{fwd_eval.50} parent=15 // pred_check
        %p163 = pneg %p71
      $region22: #{fwd_eval.50} parent=15 // pred_check_branch
        %165 = sbr.rel (%p163) target = $region24
      $region23: #{fwd_eval.50} parent=15 // pred_region
        %p166 = scmp.lt.s32.totalorder %s16, 1
        %s167 = scalar_select %p166, %s16, 1
        %p168 = scmp.lt.s32.totalorder %s17, 7
        %s169 = scalar_select %p168, %s17, 7
        %s170 = smul.addr %s167, 8
        %s171 = sadd.s32 %s169, %s170
        %s172 = smul.addr %s171, 4
        %s173 = scalar_lea.vmem %s1, %s172
      $region24: #{fwd_eval.50} parent=15 // pred_fallthru
        _
      // Predicated region
      $region25: #{fwd_eval.50} parent=15 // pred_check
        %p174 = pneg %p99
      $region26: #{fwd_eval.50} parent=15 // pred_check_branch
        %176 = sbr.rel (%p174) target = $region28
      $region27: #{fwd_eval.50} parent=15 // pred_region
        %p177 = scmp.lt.s32.totalorder %s16, 1
        %s178 = scalar_select %p177, %s16, 1
        %p179 = scmp.lt.s32.totalorder %s17, 7
        %s180 = scalar_select %p179, %s17, 7
        %s181 = smul.addr %s178, 8
        %s182 = sadd.s32 %s180, %s181
        %s183 = smul.addr %s182, 4
        %s184 = scalar_lea.vmem %s2, %s183
      $region28: #{fwd_eval.50} parent=15 // pred_fallthru
        _
    $region16: #{fwd_eval.50} parent=5 // pred_fallthru
      _
    %p185 = scmp.le.s32.totalorder 1, %s9
    %p186 = scmp.lt.s32.totalorder %s9, 17
    %p187 = pnand %p185, %p186
    %p188 = pneg %p187
    // Predicated region
    $region29: #{fwd_eval.50} parent=5 // pred_check
      _
    $region30: #{fwd_eval.50} parent=5 // pred_check_branch
      %190 = sbr.rel (%p187) target = $region32
    $region31: #{fwd_eval.50} parent=5 // pred_region
      %s191 = ssub.s32 %s9, 1
      %p192 = scmp.lt.s32.totalorder %s18, 1
      %s193 = scalar_select %p192, %s18, 1
      %p194 = scmp.lt.s32.totalorder %s19, 7
      %s195 = scalar_select %p194, %s19, 7
      %s196 = smul.addr %s193, 8
      %s197 = sadd.s32 %s195, %s196
      %s198 = smul.addr %s197, 4
      %s199 = scalar_lea.vmem %s0, %s198
      %p200 = pneg %p49
      %p201 = pneg %p46
      %p202 = scmp.lt.s32.totalorder %s18, 1
      %s203 = scalar_select %p202, %s18, 1
      %p204 = scmp.lt.s32.totalorder %s19, 7
      %s205 = scalar_select %p204, %s19, 7
      %s206 = smul.addr %s203, 8
      %s207 = sadd.s32 %s205, %s206
      %s208 = smul.addr %s207, 4
      %s209 = scalar_lea.vmem %s1, %s208
      %p210 = pneg %p77
      %p211 = pneg %p74
      %p212 = scmp.lt.s32.totalorder %s18, 1
      %s213 = scalar_select %p212, %s18, 1
      %p214 = scmp.lt.s32.totalorder %s19, 7
      %s215 = scalar_select %p214, %s19, 7
      %s216 = smul.addr %s213, 8
      %s217 = sadd.s32 %s215, %s216
      %s218 = smul.addr %s217, 4
      %s219 = scalar_lea.vmem %s2, %s218
      %p220 = pneg %p105
      %p221 = pneg %p102
      %p222 = pneg %p133
      %p223 = pneg %p130
      %p224 = scmp.lt.s32.totalorder %s18, 1
      %s225 = scalar_select %p224, %s18, 1
      %p226 = scmp.lt.s32.totalorder %s19, 7
      %s227 = scalar_select %p226, %s19, 7
      %s228 = smul.addr %s225, 8
      %s229 = sadd.s32 %s227, %s228
      %s230 = smul.addr %s229, 4
      %s231 = scalar_lea.vmem %s3, %s230
      %p232 = scmp.lt.s32.totalorder %s18, 1
      %s233 = scalar_select %p232, %s18, 1
      %p234 = scmp.lt.s32.totalorder %s19, 7
      %s235 = scalar_select %p234, %s19, 7
      %s236 = smul.addr %s233, 8
      %s237 = sadd.s32 %s235, %s236
      %s238 = smul.addr %s237, 4
      %s239 = scalar_lea.vmem %s0, %s238
      %p240 = scmp.lt.s32.totalorder %s18, 1
      %s241 = scalar_select %p240, %s18, 1
      %p242 = scmp.lt.s32.totalorder %s19, 7
      %s243 = scalar_select %p242, %s19, 7
      %s244 = smul.addr %s241, 8
      %s245 = sadd.s32 %s243, %s244
      %s246 = smul.addr %s245, 4
      %s247 = scalar_lea.vmem %s1, %s246
      %p248 = scmp.lt.s32.totalorder %s18, 1
      %s249 = scalar_select %p248, %s18, 1
      %p250 = scmp.lt.s32.totalorder %s19, 7
      %s251 = scalar_select %p250, %s19, 7
      %s252 = smul.addr %s249, 8
      %s253 = sadd.s32 %s251, %s252
      %s254 = smul.addr %s253, 4
      %s255 = scalar_lea.vmem %s2, %s254
      %p256 = scmp.lt.s32.totalorder %s18, 1
      %s257 = scalar_select %p256, %s18, 1
      %p258 = scmp.lt.s32.totalorder %s19, 7
      %s259 = scalar_select %p258, %s19, 7
      %s260 = smul.addr %s257, 8
      %s261 = sadd.s32 %s259, %s260
      %s262 = smul.addr %s261, 4
      %s263 = scalar_lea.vmem %s3, %s262
      %v264 = vld [vmem:[%s239] sm:$0xf]
      %v265 = vld [vmem:[%s247] sm:$0xf]
      %v266 = vld [vmem:[%s255] sm:$0xf]
      %vm267 = vcmask 261120
      %v269 = vsel %vm267, %v264, 0
      %v272 = vsel %vm267, %v265, 0
      %274 = vmatprep.subr.mxu0 0.0
      %275 = vmatpush1.xpose.msra.mxu0 %v272
      %276 = vmatprep.subr.mxu0 0.0
      %277 = vmatpush1.xpose.msra.mxu0 0.0
      %278 = vmatprep.subr.mxu0 0.0
      %279 = vmatpush1.xpose.msra.mxu0 0.0
      %280 = vmatprep.subr.mxu0 0.0
      %281 = vmatpush1.xpose.msra.mxu0 0.0
      %282 = vmatprep.subr.mxu0 0.0
      %283 = vmatpush1.xpose.msra.mxu0 0.0
      %284 = vmatprep.subr.mxu0 0.0
      %285 = vmatpush1.xpose.msra.mxu0 0.0
      %286 = vmatprep.subr.mxu0 0.0
      %287 = vmatpush1.xpose.msra.mxu0 0.0
      %288 = vmatprep.subr.mxu0 0.0
      %289 = vmatpush1.xpose.msra.mxu0 0.0
      %290 = vmatprep.subr.mxu0 0.0
      %291 = vmatpush1.xpose.msra.mxu0 0.0
      %292 = vmatprep.subr.mxu0 0.0
      %293 = vmatpush1.xpose.msra.mxu0 0.0
      %294 = vmatprep.subr.mxu0 0.0
      %295 = vmatpush1.xpose.msra.mxu0 0.0
      %296 = vmatprep.subr.mxu0 0.0
      %297 = vmatpush1.xpose.msra.mxu0 0.0
      %298 = vmatprep.subr.mxu0 0.0
      %299 = vmatpush1.xpose.msra.mxu0 0.0
      %300 = vmatprep.subr.mxu0 0.0
      %301 = vmatpush1.xpose.msra.mxu0 0.0
      %302 = vmatprep.subr.mxu0 0.0
      %303 = vmatpush1.xpose.msra.mxu0 0.0
      %304 = vmatprep.subr.mxu0 0.0
      %305 = vmatpush1.xpose.msra.mxu0 0.0
      %306 = vmatprep.subr.mxu0 0.0
      %307 = vmatpush1.xpose.msra.mxu0 0.0
      %308 = vmatprep.subr.mxu0 0.0
      %309 = vmatpush1.xpose.msra.mxu0 0.0
      %310 = vmatprep.subr.mxu0 0.0
      %311 = vmatpush1.xpose.msra.mxu0 0.0
      %312 = vmatprep.subr.mxu0 0.0
      %313 = vmatpush1.xpose.msra.mxu0 0.0
      %314 = vmatprep.subr.mxu0 0.0
      %315 = vmatpush1.xpose.msra.mxu0 0.0
      %316 = vmatprep.subr.mxu0 0.0
      %317 = vmatpush1.xpose.msra.mxu0 0.0
      %318 = vmatprep.subr.mxu0 0.0
      %319 = vmatpush1.xpose.msra.mxu0 0.0
      %320 = vmatprep.subr.mxu0 0.0
      %321 = vmatpush1.xpose.msra.mxu0 0.0
      %322 = vmatprep.subr.mxu0 0.0
      %323 = vmatpush1.xpose.msra.mxu0 0.0
      %324 = vmatprep.subr.mxu0 0.0
      %325 = vmatpush1.xpose.msra.mxu0 0.0
      %326 = vmatprep.subr.mxu0 0.0
      %327 = vmatpush1.xpose.msra.mxu0 0.0
      %328 = vmatprep.subr.mxu0 0.0
      %329 = vmatpush1.xpose.msra.mxu0 0.0
      %330 = vmatprep.subr.mxu0 0.0
      %331 = vmatpush1.xpose.msra.mxu0 0.0
      %332 = vmatprep.subr.mxu0 0.0
      %333 = vmatpush1.xpose.msra.mxu0 0.0
      %334 = vmatprep.subr.mxu0 0.0
      %335 = vmatpush1.xpose.msra.mxu0 0.0
      %336 = vmatprep.subr.mxu0 0.0
      %337 = vmatpush1.xpose.msra.mxu0 0.0
      %338 = vmatprep.mubr.f32.mxu0 0.0
      %339 = vmatmul.mubr.f32.gmra.mrb[0].mxu0 %v269
      %v340 = vpop.f32.mrb[0].mxu0
      %v341 = vadd.f32 0.0, %v340
      %v342 = vpop.f32.mrb[0].mxu0
      %343 = vdwg.mxu0
      %v344 = vmul.f32 %v341, 0.17677669
      %vm345 = vcmask 27648
      %v346 = vsel %vm345, %v344, -inf
      %347 = vmax.xlane.f32.xlu0 %v346
      %v348 = vpop.xlane.xlu0 %347
      %v349 = vsub.f32 %v344, %v348
      %v350 = vmul.f32 %v349, 1.442695
      %v351 = vpow.pop %v350
      %v352 = vsel %vm345, %v351, 0.0
      %353 = vadd.xlane.f32.xlu0 %v352
      %v354 = vpop.xlane.xlu0 %353
      %v355 = vrcp.pop %v354
      %v356 = vmul.f32 %v351, %v355
      %vm357 = vcmask 31744
      %v359 = vsel %vm357, %v356, 0
      %vm361 = vcmask 1043456
      %v363 = vsel %vm361, %v266, 0
      %365 = vmatprep.subr.mxu0 0.0
      %366 = vmatpush1.msra.mxu0 %v363
      %367 = vmatprep.subr.mxu0 0.0
      %368 = vmatpush1.msra.mxu0 0.0
      %369 = vmatprep.subr.mxu0 0.0
      %370 = vmatpush1.msra.mxu0 0.0
      %371 = vmatprep.subr.mxu0 0.0
      %372 = vmatpush1.msra.mxu0 0.0
      %373 = vmatprep.subr.mxu0 0.0
      %374 = vmatpush1.msra.mxu0 0.0
      %375 = vmatprep.subr.mxu0 0.0
      %376 = vmatpush1.msra.mxu0 0.0
      %377 = vmatprep.subr.mxu0 0.0
      %378 = vmatpush1.msra.mxu0 0.0
      %379 = vmatprep.subr.mxu0 0.0
      %380 = vmatpush1.msra.mxu0 0.0
      %381 = vmatprep.subr.mxu0 0.0
      %382 = vmatpush1.msra.mxu0 0.0
      %383 = vmatprep.subr.mxu0 0.0
      %384 = vmatpush1.msra.mxu0 0.0
      %385 = vmatprep.subr.mxu0 0.0
      %386 = vmatpush1.msra.mxu0 0.0
      %387 = vmatprep.subr.mxu0 0.0
      %388 = vmatpush1.msra.mxu0 0.0
      %389 = vmatprep.subr.mxu0 0.0
      %390 = vmatpush1.msra.mxu0 0.0
      %391 = vmatprep.subr.mxu0 0.0
      %392 = vmatpush1.msra.mxu0 0.0
      %393 = vmatprep.subr.mxu0 0.0
      %394 = vmatpush1.msra.mxu0 0.0
      %395 = vmatprep.subr.mxu0 0.0
      %396 = vmatpush1.msra.mxu0 0.0
      %397 = vmatprep.subr.mxu0 0.0
      %398 = vmatpush1.msra.mxu0 0.0
      %399 = vmatprep.subr.mxu0 0.0
      %400 = vmatpush1.msra.mxu0 0.0
      %401 = vmatprep.subr.mxu0 0.0
      %402 = vmatpush1.msra.mxu0 0.0
      %403 = vmatprep.subr.mxu0 0.0
      %404 = vmatpush1.msra.mxu0 0.0
      %405 = vmatprep.subr.mxu0 0.0
      %406 = vmatpush1.msra.mxu0 0.0
      %407 = vmatprep.subr.mxu0 0.0
      %408 = vmatpush1.msra.mxu0 0.0
      %409 = vmatprep.subr.mxu0 0.0
      %410 = vmatpush1.msra.mxu0 0.0
      %411 = vmatprep.subr.mxu0 0.0
      %412 = vmatpush1.msra.mxu0 0.0
      %413 = vmatprep.subr.mxu0 0.0
      %414 = vmatpush1.msra.mxu0 0.0
      %415 = vmatprep.subr.mxu0 0.0
      %416 = vmatpush1.msra.mxu0 0.0
      %417 = vmatprep.subr.mxu0 0.0
      %418 = vmatpush1.msra.mxu0 0.0
      %419 = vmatprep.subr.mxu0 0.0
      %420 = vmatpush1.msra.mxu0 0.0
      %421 = vmatprep.subr.mxu0 0.0
      %422 = vmatpush1.msra.mxu0 0.0
      %423 = vmatprep.subr.mxu0 0.0
      %424 = vmatpush1.msra.mxu0 0.0
      %425 = vmatprep.subr.mxu0 0.0
      %426 = vmatpush1.msra.mxu0 0.0
      %427 = vmatprep.subr.mxu0 0.0
      %428 = vmatpush1.msra.mxu0 0.0
      %429 = vmatprep.mubr.f32.mxu0 0.0
      %430 = vmatmul.mubr.f32.gmra.mrb[0].mxu0 %v359
      %v431 = vpop.f32.mrb[0].mxu0
      %v432 = vadd.f32 0.0, %v431
      %v433 = vpop.f32.mrb[0].mxu0
      %434 = vdwg.mxu0
      %vm435 = vcmask 257024
      %436 = vst.msk [vmem:[%s263] sm:$0xf] %vm435, %v432
      %p437 = scmp.lt.s32.totalorder %s18, 1
      %s438 = scalar_select %p437, %s18, 1
      %p439 = scmp.lt.s32.totalorder %s19, 7
      %s440 = scalar_select %p439, %s19, 7
      %s441 = smul.addr %s438, 8
      %s442 = sadd.s32 %s440, %s441
      %s443 = smul.addr %s442, 4
      %s444 = scalar_lea.vmem %s3, %s443
      // Predicated region
      $region33: #{fwd_eval.50} parent=31 // pred_check
        %p445 = pneg %p130
      $region34: #{fwd_eval.50} parent=31 // pred_check_branch
        %447 = sbr.rel (%p445) target = $region36
      $region35: #{fwd_eval.50} parent=31 // pred_region
        _
      $region36: #{fwd_eval.50} parent=31 // pred_fallthru
        _
    $region32: #{fwd_eval.50} parent=5 // pred_fallthru
      _
    %p448 = scmp.le.s32.totalorder 2, %s9
    // Predicated region
    $region37: #{fwd_eval.50} parent=5 // pred_check
      %p449 = pneg %p448
    $region38: #{fwd_eval.50} parent=5 // pred_check_branch
      %451 = sbr.rel (%p449) target = $region40
    $region39: #{fwd_eval.50} parent=5 // pred_region
      %s452 = ssub.s32 %s9, 2
      // Predicated region
      $region41: #{fwd_eval.50} parent=39 // pred_check
        %p453 = pneg %p136
      $region42: #{fwd_eval.50} parent=39 // pred_check_branch
        %455 = sbr.rel (%p453) target = $region44
      $region43: #{fwd_eval.50} parent=39 // pred_region
        %p456 = scmp.lt.s32.totalorder %s20, 1
        %s457 = scalar_select %p456, %s20, 1
        %p458 = scmp.lt.s32.totalorder %s21, 7
        %s459 = scalar_select %p458, %s21, 7
        %s460 = smul.addr %s457, 8
        %s461 = sadd.s32 %s459, %s460
        %s462 = smul.addr %s461, 4
        %s463 = scalar_lea.vmem %s3, %s462
      $region44: #{fwd_eval.50} parent=39 // pred_fallthru
        _
    $region40: #{fwd_eval.50} parent=5 // pred_fallthru
      _
  $region6: #{fwd_eval.50} parent=0 // loop_footer
    %s13 = sadd.s32 1, %s9
  $region7: #{fwd_eval.50} parent=0 // loop_footer_branch
    %8 = sbr.rel target = $region3
  $region8: #{fwd_eval.50} parent=0 // loop_exit
    _

// kernel: fwd_eval.52
$region0: #{fwd_eval.52}
  #allocation0 [shape = 'u32[]', space=smem, size = 0x4, offset = 0x4, fixed_abs, tag = 'smem constant byte address 0x4 - core index']
  #allocation1 [shape = 'u32[144,128]{1,0:T(1,128)}', space=vmem, size = 0x12000, scoped, tag = 'internal scratch']
  %s0 = inlined_call_operand.vmem [shape: f32[8,1024], index: 0, kind: input, shape index: {}]
  %s1 = inlined_call_operand.vmem [shape: f32[8,1024], index: 1, kind: output, shape index: {}]
  %s2 = sld [smem:[#allocation0]]
  $region14: #{fwd_eval.52} parent=0
    _
  %s4 = ssub.s32 1, %s2
  %s5 = scalar_select 0, %s4, %s2
  // Predicated region
  $region2: #{fwd_eval.52} parent=0 // pred_check
    _
  $region3: #{fwd_eval.52} parent=0 // pred_check_branch
    %7 = sbr.rel (0) target = $region5
  $region4: #{fwd_eval.52} parent=0 // pred_region
    _
  $region5: #{fwd_eval.52} parent=0 // pred_fallthru
    _
  %v8 = vld [vmem:[%s0] sm:$0xff]
  %v9 = vld [vmem:[%s0 + $0x8] sm:$0xff]
  %v10 = vld [vmem:[%s0 + $0x10] sm:$0xff]
  %v11 = vld [vmem:[%s0 + $0x18] sm:$0xff]
  %v12 = vld [vmem:[%s0 + $0x20] sm:$0xff]
  %v13 = vld [vmem:[%s0 + $0x28] sm:$0xff]
  %v14 = vld [vmem:[%s0 + $0x30] sm:$0xff]
  %v15 = vld [vmem:[%s0 + $0x38] sm:$0xff]
  %v16 = vmul.f32 %v8, 0.5
  %v17 = vmul.f32 %v9, 0.5
  %v18 = vmul.f32 %v10, 0.5
  %v19 = vmul.f32 %v11, 0.5
  %v20 = vmul.f32 %v12, 0.5
  %v21 = vmul.f32 %v13, 0.5
  %v22 = vmul.f32 %v14, 0.5
  %v23 = vmul.f32 %v15, 0.5
  %v24 = vmul.f32 %v8, 0.044715
  %v25 = vmul.f32 %v9, 0.044715
  %v26 = vmul.f32 %v10, 0.044715
  %v27 = vmul.f32 %v11, 0.044715
  %v28 = vmul.f32 %v12, 0.044715
  %v29 = vmul.f32 %v13, 0.044715
  %v30 = vmul.f32 %v14, 0.044715
  %v31 = vmul.f32 %v15, 0.044715
  %v32 = vmul.f32 %v24, %v8
  %v33 = vmul.f32 %v25, %v9
  %v34 = vmul.f32 %v26, %v10
  %v35 = vmul.f32 %v27, %v11
  %v36 = vmul.f32 %v28, %v12
  %v37 = vmul.f32 %v29, %v13
  %v38 = vmul.f32 %v30, %v14
  %v39 = vmul.f32 %v31, %v15
  %v40 = vmul.f32 %v32, %v8
  %v41 = vmul.f32 %v33, %v9
  %v42 = vmul.f32 %v34, %v10
  %v43 = vmul.f32 %v35, %v11
  %v44 = vmul.f32 %v36, %v12
  %v45 = vmul.f32 %v37, %v13
  %v46 = vmul.f32 %v38, %v14
  %v47 = vmul.f32 %v39, %v15
  %v48 = vadd.f32 %v8, %v40
  %v49 = vadd.f32 %v9, %v41
  %v50 = vadd.f32 %v10, %v42
  %v51 = vadd.f32 %v11, %v43
  %v52 = vadd.f32 %v12, %v44
  %v53 = vadd.f32 %v13, %v45
  %v54 = vadd.f32 %v14, %v46
  %v55 = vadd.f32 %v15, %v47
  %v56 = vmul.f32 %v48, 0.7978846
  %v57 = vmul.f32 %v49, 0.7978846
  %v58 = vmul.f32 %v50, 0.7978846
  %v59 = vmul.f32 %v51, 0.7978846
  %v60 = vmul.f32 %v52, 0.7978846
  %v61 = vmul.f32 %v53, 0.7978846
  %v62 = vmul.f32 %v54, 0.7978846
  %v63 = vmul.f32 %v55, 0.7978846
  %v64 = vtanh.pop %v56
  %v65 = vtanh.pop %v57
  %v66 = vtanh.pop %v58
  %v67 = vtanh.pop %v59
  %v68 = vtanh.pop %v60
  %v69 = vtanh.pop %v61
  %v70 = vtanh.pop %v62
  %v71 = vtanh.pop %v63
  %v72 = vadd.f32 %v64, 1.0
  %v73 = vadd.f32 %v65, 1.0
  %v74 = vadd.f32 %v66, 1.0
  %v75 = vadd.f32 %v67, 1.0
  %v76 = vadd.f32 %v68, 1.0
  %v77 = vadd.f32 %v69, 1.0
  %v78 = vadd.f32 %v70, 1.0
  %v79 = vadd.f32 %v71, 1.0
  %v80 = vmul.f32 %v16, %v72
  %v81 = vmul.f32 %v17, %v73
  %v82 = vmul.f32 %v18, %v74
  %v83 = vmul.f32 %v19, %v75
  %v84 = vmul.f32 %v20, %v76
  %v85 = vmul.f32 %v21, %v77
  %v86 = vmul.f32 %v22, %v78
  %v87 = vmul.f32 %v23, %v79
  %88 = vst [vmem:[%s1] sm:$0xff] %v80
  %89 = vst [vmem:[%s1 + $0x8] sm:$0xff] %v81
  %90 = vst [vmem:[%s1 + $0x10] sm:$0xff] %v82
  %91 = vst [vmem:[%s1 + $0x18] sm:$0xff] %v83
  %92 = vst [vmem:[%s1 + $0x20] sm:$0xff] %v84
  %93 = vst [vmem:[%s1 + $0x28] sm:$0xff] %v85
  %94 = vst [vmem:[%s1 + $0x30] sm:$0xff] %v86
  %95 = vst [vmem:[%s1 + $0x38] sm:$0xff] %v87
  // Predicated region
  $region6: #{fwd_eval.52} parent=0 // pred_check
    _
  $region7: #{fwd_eval.52} parent=0 // pred_check_branch
    %97 = sbr.rel (0) target = $region9
  $region8: #{fwd_eval.52} parent=0 // pred_region
    _
  $region9: #{fwd_eval.52} parent=0 // pred_fallthru
    _
  // Predicated region
  $region10: #{fwd_eval.52} parent=0 // pred_check
    _
  $region11: #{fwd_eval.52} parent=0 // pred_check_branch
    %99 = sbr.rel (0) target = $region13
  $region12: #{fwd_eval.52} parent=0 // pred_region
    _
  $region13: #{fwd_eval.52} parent=0 // pred_fallthru
    _

</llo_original>
